<compile_context>
chip_gen: v6e
topology: v6e:2x2x1
jax: 0.10.0
libtpu: 0.0.40
codegen_flags: <defaults>
</compile_context>

<pallas_src>
import functools

import jax
import jax.numpy as jnp
from jax.experimental import pallas as pl
from jax.experimental.pallas import tpu as pltpu


# ----------------------------------------------------------------------------
# Fused matmul + bias + leaky-relu (+ residual) Pallas kernel
# ----------------------------------------------------------------------------
def _mm_bias_act_kernel(*refs, apply_act, negative_slope, has_residual):
    if has_residual:
        a_ref, b_ref, t_ref, r_ref, o_ref, acc_ref = refs
    else:
        a_ref, b_ref, t_ref, o_ref, acc_ref = refs
        r_ref = None

    @pl.when(pl.program_id(2) == 0)
    def _():
        acc_ref[...] = jnp.zeros_like(acc_ref)

    acc_ref[...] += jnp.dot(a_ref[...], b_ref[...],
                            preferred_element_type=jnp.float32)

    @pl.when(pl.program_id(2) == pl.num_programs(2) - 1)
    def _():
        y = acc_ref[...] + t_ref[...]                      # bias (BN beta)
        if apply_act:
            y = jnp.where(y >= 0.0, y, y * negative_slope)  # leaky-relu 0.1
        if has_residual:
            y = y + r_ref[...].astype(jnp.float32)          # fused shortcut
        o_ref[...] = y.astype(o_ref.dtype)


def _round_up(x, m):
    return ((x + m - 1) // m) * m


def _pick_tile(dim, max_tile, align):
    """Tile size (multiple of `align`, <= max_tile) minimizing padded size;
    prefers the largest such tile (fewer grid steps) on ties."""
    best_pad, best_t = None, align
    for t in range(align, max_tile + 1, align):
        padded = _round_up(dim, t)
        if best_pad is None or padded < best_pad or (padded == best_pad and t > best_t):
            best_pad, best_t = padded, t
    return best_t


def _conv_tiles(K, N):
    tk = _pick_tile(K, 512, 128)
    tn = _pick_tile(N, 256, 128)
    return tk, tn, _round_up(K, tk), _round_up(N, tn)


_PALLAS_MIN_M = 64      # below this the grid/pipeline overhead dominates


def fused_matmul_bias_act(A, Bp, bias, apply_act, residual=None,
                          negative_slope=0.1):
    """out = act((A @ B) + bias) [+ residual]; B pre-folded/padded/bf16."""
    M, K = A.shape
    N = bias.shape[0]
    Kp, Np = Bp.shape
    tk, tn, Kp_chk, Np_chk = _conv_tiles(K, N)
    assert (Kp, Np) == (Kp_chk, Np_chk), (K, N, Kp, Np)

    A = A.astype(jnp.bfloat16)

    if M < _PALLAS_MIN_M:
        # Tiny matmul (detection heads / deepest stages): plain XLA dot.
        y = jnp.dot(A, Bp[:K, :N], preferred_element_type=jnp.float32)
        y = y + bias[None, :]
        if apply_act:
            y = jnp.where(y >= 0.0, y, y * negative_slope)
        if residual is not None:
            y = y + residual.astype(jnp.float32)
        return y.astype(jnp.bfloat16)

    tm = min(256, _round_up(M, 16))
    Mp = _round_up(M, tm)

    Ap = A if (Mp == M and Kp == K) else jnp.pad(A, ((0, Mp - M), (0, Kp - K)))
    bias_p = bias if Np == N else jnp.pad(bias, (0, Np - N))
    bias_p = bias_p.reshape(1, Np).astype(jnp.float32)

    has_residual = residual is not None
    inputs = [Ap, Bp, bias_p]
    in_specs = [
        pl.BlockSpec((tm, tk), lambda i, j, k: (i, k)),
        pl.BlockSpec((tk, tn), lambda i, j, k: (k, j)),
        pl.BlockSpec((1, tn), lambda i, j, k: (0, j)),
    ]
    if has_residual:
        R = residual.astype(jnp.bfloat16)
        if Mp != M or Np != N:
            R = jnp.pad(R, ((0, Mp - M), (0, Np - N)))
        inputs.append(R)
        in_specs.append(pl.BlockSpec((tm, tn), lambda i, j, k: (i, j)))

    grid = (Mp // tm, Np // tn, Kp // tk)
    kernel = functools.partial(_mm_bias_act_kernel,
                               apply_act=apply_act,
                               negative_slope=negative_slope,
                               has_residual=has_residual)

    out = pl.pallas_call(
        kernel,
        out_shape=jax.ShapeDtypeStruct((Mp, Np), jnp.bfloat16),
        grid_spec=pltpu.PrefetchScalarGridSpec(
            num_scalar_prefetch=0,
            grid=grid,
            in_specs=in_specs,
            out_specs=pl.BlockSpec((tm, tn), lambda i, j, k: (i, j)),
            scratch_shapes=[pltpu.VMEM((tm, tn), jnp.float32)],
        ),
        compiler_params=pltpu.CompilerParams(
            dimension_semantics=("parallel", "parallel", "arbitrary")),
    )(*inputs)

    if Mp != M or Np != N:
        out = out[:M, :N]
    return out


# ----------------------------------------------------------------------------
# Convolution wrappers (im2col only for k>1; 1x1 is a pure reshape)
# ----------------------------------------------------------------------------
def _extract_patches(x, kh, kw, stride, padding):
    # x: (N, H, W, C) -> (N, Ho, Wo, kh*kw*C)  (kh-major, kw, then C ordering)
    N, H, W, C = x.shape
    xp = jnp.pad(x, ((0, 0), (padding, padding), (padding, padding), (0, 0)))
    Ho = (H + 2 * padding - kh) // stride + 1
    Wo = (W + 2 * padding - kw) // stride + 1
    cols = []
    for di in range(kh):
        for dj in range(kw):
            cols.append(xp[:,
                           di:di + stride * (Ho - 1) + 1:stride,
                           dj:dj + stride * (Wo - 1) + 1:stride, :])
    return jnp.concatenate(cols, axis=-1)


def _conv2d(x, p, k, stride, padding, apply_act, residual=None):
    n, h, w, cin = x.shape
    if k == 1 and stride == 1 and padding == 0:
        A = x.reshape(n * h * w, cin)
        ho, wo = h, w
    else:
        patches = _extract_patches(x, k, k, stride, padding)
        _, ho, wo, kk = patches.shape
        A = patches.reshape(n * ho * wo, kk)
    r2 = None if residual is None else residual.reshape(A.shape[0], -1)
    out = fused_matmul_bias_act(A, p["Bp"], p["bias"],
                                apply_act=apply_act, residual=r2)
    return out.reshape(n, ho, wo, out.shape[-1])


def conv_bn_lrelu(x, p, k, stride, padding, residual=None):
    return _conv2d(x, p, k, stride, padding, apply_act=True, residual=residual)


def conv_plain(x, p, k, stride, padding):
    return _conv2d(x, p, k, stride, padding, apply_act=False)


def upsample2_nearest(x):
    # NHWC nearest-neighbor x2 (matches F.upsample(scale_factor=2, mode='nearest'))
    return jnp.repeat(jnp.repeat(x, 2, axis=1), 2, axis=2)


# ----------------------------------------------------------------------------
# Parameter construction (deterministic, synthetic); BN fold + padding OFFLINE
# ----------------------------------------------------------------------------
class ParamGen:
    def __init__(self, seed=0):
        self.key = jax.random.PRNGKey(seed)

    def normal(self, shape, scale=1.0):
        self.key, sub = jax.random.split(self.key)
        return jax.random.normal(sub, shape, jnp.float32) * scale


def _pack_conv(w, bias):
    """Reshape/pad/cast the weight once at build time."""
    kh, kw, cin, cout = w.shape
    K, N = kh * kw * cin, cout
    _, _, Kp, Np = _conv_tiles(K, N)
    B2 = jnp.asarray(w, jnp.float32).reshape(K, N)
    Bp = jnp.pad(B2, ((0, Kp - K), (0, Np - N))).astype(jnp.bfloat16)
    return {"Bp": Bp, "bias": jnp.asarray(bias, jnp.float32)}


def make_convbn(pg, cin, cout, k):
    fan_in = cin * k * k
    w = pg.normal((k, k, cin, cout), float(fan_in) ** -0.5)
    gamma = 1.0 + 0.1 * pg.normal((cout,))
    beta = 0.1 * pg.normal((cout,))
    # eval-mode BN (running_mean=0, running_var=1): fold gamma/sqrt(1+eps) into W
    scale = gamma / jnp.sqrt(1.0 + 1e-5)
    return _pack_conv(w * scale, beta)


def make_conv(pg, cin, cout, k):
    fan_in = cin * k * k
    w = pg.normal((k, k, cin, cout), float(fan_in) ** -0.5)
    b = 0.1 * pg.normal((cout,))
    return _pack_conv(w, b)


def make_predict_list(pg, c_big, c_small, c_in, out_ch):
    return [
        make_convbn(pg, c_in, c_small, 1),
        make_convbn(pg, c_small, c_big, 3),
        make_convbn(pg, c_big, c_small, 1),
        make_convbn(pg, c_small, c_big, 3),
        make_convbn(pg, c_big, c_small, 1),
        make_convbn(pg, c_small, c_big, 3),
        make_conv(pg, c_big, out_ch, 1),
    ]


def build_params(num_blocks, num_classes, seed=0):
    pg = ParamGen(seed)
    out_ch = (5 + num_classes) * 3
    params = {"conv": make_convbn(pg, 3, 32, 3), "layers": []}
    ch = 32
    for nb in num_blocks:
        layer = {"down": make_convbn(pg, ch, ch * 2, 3), "blocks": []}
        for _ in range(nb):
            layer["blocks"].append({
                "c1": make_convbn(pg, ch * 2, ch, 1),
                "c2": make_convbn(pg, ch, ch * 2, 3),
            })
        params["layers"].append(layer)
        ch *= 2
    params["plist1"] = make_predict_list(pg, 1024, 512, 1024, out_ch)
    params["smooth1"] = make_convbn(pg, 512, 256, 1)
    params["plist2"] = make_predict_list(pg, 512, 256, 768, out_ch)
    params["smooth2"] = make_convbn(pg, 256, 128, 1)
    params["plist3"] = make_predict_list(pg, 256, 128, 384, out_ch)
    return params


# ----------------------------------------------------------------------------
# YOLO detection transform (standard YOLOv3 predict_transform, plain JAX glue)
# ----------------------------------------------------------------------------
def predict_transform(pred_nchw, inp_dim, anchors, num_classes):
    B, C, H, W = pred_nchw.shape
    grid_size = H
    stride = inp_dim // grid_size
    bbox_attrs = 5 + num_classes
    num_anchors = len(anchors)

    p = pred_nchw.astype(jnp.float32)
    p = p.reshape(B, bbox_attrs * num_anchors, grid_size * grid_size)
    p = jnp.transpose(p, (0, 2, 1))
    p = p.reshape(B, grid_size * grid_size * num_anchors, bbox_attrs)

    anchors_s = jnp.array([(a[0] / stride, a[1] / stride) for a in anchors],
                          dtype=jnp.float32)

    g = jnp.arange(grid_size, dtype=jnp.float32)
    a_off, b_off = jnp.meshgrid(g, g)                       # 'xy' indexing
    xy_off = jnp.concatenate([a_off.reshape(-1, 1), b_off.reshape(-1, 1)], 1)
    xy_off = jnp.tile(xy_off, (1, num_anchors)).reshape(-1, 2)[None]
    anchors_t = jnp.tile(anchors_s, (grid_size * grid_size, 1))[None]

    xy = jax.nn.sigmoid(p[..., 0:2]) + xy_off
    wh = jnp.exp(p[..., 2:4]) * anchors_t
    obj = jax.nn.sigmoid(p[..., 4:5])
    cls = jax.nn.sigmoid(p[..., 5:5 + num_classes])
    box = jnp.concatenate([xy, wh], axis=-1) * float(stride)
    return jnp.concatenate([box, obj, cls], axis=-1)


# ----------------------------------------------------------------------------
# Full Darknet53 forward
# ----------------------------------------------------------------------------
_PLIST_K = (1, 3, 1, 3, 1, 3, 1)
_PLIST_PAD = (0, 1, 0, 1, 0, 1, 0)


def darknet53_forward(params, x_nchw, anchors, input_dim, num_classes):
    x = jnp.transpose(x_nchw, (0, 2, 3, 1)).astype(jnp.bfloat16)  # NCHW -> NHWC

    out = conv_bn_lrelu(x, params["conv"], k=3, stride=1, padding=1)

    feats = []
    c = out
    for lp in params["layers"]:
        c = conv_bn_lrelu(c, lp["down"], k=3, stride=2, padding=1)
        for bp in lp["blocks"]:
            h = conv_bn_lrelu(c, bp["c1"], k=1, stride=1, padding=0)
            # residual add fused into the second conv's epilogue
            c = conv_bn_lrelu(h, bp["c2"], k=3, stride=1, padding=1, residual=c)
        feats.append(c)
    c1, c2, c3, c4, c5 = feats

    def run_head(xh, plist, upto):
        for i in range(upto):
            xh = conv_bn_lrelu(xh, plist[i], k=_PLIST_K[i], stride=1,
                               padding=_PLIST_PAD[i])
        return xh

    def finish_head(xh, plist):
        xh = conv_bn_lrelu(xh, plist[5], k=_PLIST_K[5], stride=1,
                           padding=_PLIST_PAD[5])
        xh = conv_plain(xh, plist[6], k=_PLIST_K[6], stride=1,
                        padding=_PLIST_PAD[6])
        return xh

    # head 1
    xh = run_head(c5, params["plist1"], 5)
    smt1 = conv_bn_lrelu(xh, params["smooth1"], k=1, stride=1, padding=0)
    smt1 = upsample2_nearest(smt1)
    smt1 = jnp.concatenate([smt1, c4], axis=-1)
    out1 = finish_head(xh, params["plist1"])

    # head 2
    xh = run_head(smt1, params["plist2"], 5)
    smt2 = conv_bn_lrelu(xh, params["smooth2"], k=1, stride=1, padding=0)
    smt2 = upsample2_nearest(smt2)
    smt2 = jnp.concatenate([smt2, c3], axis=-1)
    out2 = finish_head(xh, params["plist2"])

    # head 3
    xh = run_head(smt2, params["plist3"], 5)
    out3 = finish_head(xh, params["plist3"])

    # back to NCHW for the detection transform (PyTorch semantics)
    out1 = jnp.transpose(out1.astype(jnp.float32), (0, 3, 1, 2))
    out2 = jnp.transpose(out2.astype(jnp.float32), (0, 3, 1, 2))
    out3 = jnp.transpose(out3.astype(jnp.float32), (0, 3, 1, 2))

    p1 = predict_transform(out1, input_dim, anchors[0], num_classes)
    p2 = predict_transform(out2, input_dim, anchors[1], num_classes)
    p3 = predict_transform(out3, input_dim, anchors[2], num_classes)
    return jnp.concatenate([p1, p2, p3], axis=1)


# ----------------------------------------------------------------------------
if __name__ == "__main__":
    num_blocks = [1, 1, 1, 1, 1]      # small config (original: [1,2,8,8,4])
    num_classes = 2
    input_dim = 32                    # 32 / 2^5 = 1  -> grid sizes 1, 2, 4
    anchors = [
        [(116, 90), (156, 198), (373, 326)],
        [(30, 61), (62, 45), (59, 119)],
        [(10, 13), (16, 30), (33, 23)],
    ]

    params = build_params(num_blocks, num_classes, seed=0)

    key = jax.random.PRNGKey(0)
    x = jax.random.normal(key, (2, 3, input_dim, input_dim), jnp.float32)  # NCHW

    fwd = jax.jit(functools.partial(darknet53_forward,
                                    anchors=anchors,
                                    input_dim=input_dim,
                                    num_classes=num_classes))
    dets = fwd(params, x)
    dets = jax.block_until_ready(dets)

    # (B, (1*1 + 2*2 + 4*4) * 3, 5 + num_classes) = (2, 63, 7)
    assert dets.shape == (2, (1 + 4 + 16) * 3, 5 + num_classes), dets.shape
    assert bool(jnp.all(jnp.isfinite(dets)))
    print("KERNEL_OK")
</pallas_src>

<mosaic_0001>
module attributes {stable_mosaic.version = 11 : i64} {
  func.func @_mm_bias_act_kernel(%arg0: i32, %arg1: i32, %arg2: i32, %arg3: memref<256x128xbf16, #tpu.memory_space<vmem>>, %arg4: memref<128x128xbf16, #tpu.memory_space<vmem>>, %arg5: memref<1x128xf32, #tpu.memory_space<vmem>>, %arg6: memref<256x128xbf16, #tpu.memory_space<vmem>>, %arg7: memref<256x128xf32, #tpu.memory_space<vmem>>) attributes {dimension_semantics = [#tpu.dimension_semantics<parallel>, #tpu.dimension_semantics<parallel>, #tpu.dimension_semantics<arbitrary>], iteration_bounds = array<i64: 8, 1, 1>, scalar_prefetch = 0 : i64, scratch_operands = 1 : i64, tpu.core_type = #tpu.core_type<tc>, window_params = [{transform_indices = @transform_0, window_bounds = array<i64: 256, 128>}, {transform_indices = @transform_1, window_bounds = array<i64: 128, 128>}, {transform_indices = @transform_2, window_bounds = array<i64: 1, 128>}, {transform_indices = @transform_3, window_bounds = array<i64: 256, 128>}]} {
    %c0_i32 = arith.constant 0 : i32
    %0 = arith.cmpi eq, %arg2, %c0_i32 : i32
    %1 = arith.extui %0 : i1 to i32
    %c0_i32_0 = arith.constant 0 : i32
    %2 = arith.cmpi ne, %1, %c0_i32_0 : i32
    scf.if %2 {
      %cst_10 = arith.constant 0.000000e+00 : f32
      %12 = vector.broadcast %cst_10 : f32 to vector<256x128xf32>
      %c0_11 = arith.constant 0 : index
      %c0_12 = arith.constant 0 : index
      %13 = vector.load %arg7[%c0_11, %c0_12] : memref<256x128xf32, #tpu.memory_space<vmem>>, vector<256x128xf32>
      tpu.vector_store %arg7[%c0_11, %c0_12], %12 {strides = array<i32>} : memref<256x128xf32, #tpu.memory_space<vmem>>, vector<256x128xf32>,
    } else {
    }
    %c0 = arith.constant 0 : index
    %c0_1 = arith.constant 0 : index
    %3 = vector.load %arg7[%c0, %c0_1] : memref<256x128xf32, #tpu.memory_space<vmem>>, vector<256x128xf32>
    %c0_2 = arith.constant 0 : index
    %c0_3 = arith.constant 0 : index
    %4 = vector.load %arg3[%c0_2, %c0_3] : memref<256x128xbf16, #tpu.memory_space<vmem>>, vector<256x128xbf16>
    %c0_4 = arith.constant 0 : index
    %c0_5 = arith.constant 0 : index
    %5 = vector.load %arg4[%c0_4, %c0_5] : memref<128x128xbf16, #tpu.memory_space<vmem>>, vector<128x128xbf16>
    %cst = arith.constant dense<0.000000e+00> : vector<256x128xf32>
    %6 = tpu.matmul %4, %5, %cst {dimension_numbers = #tpu.dot_dimension_numbers<[1], [0], [0], [1], [0, 0, 1, 1], [], []>} : vector<256x128xbf16>, vector<128x128xbf16>, vector<256x128xf32> -> vector<256x128xf32>
    %7 = arith.addf %3, %6 : vector<256x128xf32>
    %c0_6 = arith.constant 0 : index
    %c0_7 = arith.constant 0 : index
    %8 = vector.load %arg7[%c0_6, %c0_7] : memref<256x128xf32, #tpu.memory_space<vmem>>, vector<256x128xf32>
    tpu.vector_store %arg7[%c0_6, %c0_7], %7 {strides = array<i32>} : memref<256x128xf32, #tpu.memory_space<vmem>>, vector<256x128xf32>,
    %c0_i32_8 = arith.constant 0 : i32
    %9 = arith.cmpi eq, %arg2, %c0_i32_8 : i32
    %10 = arith.extui %9 : i1 to i32
    %c0_i32_9 = arith.constant 0 : i32
    %11 = arith.cmpi ne, %10, %c0_i32_9 : i32
    scf.if %11 {
      %c0_10 = arith.constant 0 : index
      %c0_11 = arith.constant 0 : index
      %12 = vector.load %arg7[%c0_10, %c0_11] : memref<256x128xf32, #tpu.memory_space<vmem>>, vector<256x128xf32>
      %c0_12 = arith.constant 0 : index
      %c0_13 = arith.constant 0 : index
      %13 = vector.load %arg5[%c0_12, %c0_13] : memref<1x128xf32, #tpu.memory_space<vmem>>, vector<1x128xf32>
      %14 = vector.broadcast %13 : vector<1x128xf32> to vector<256x128xf32>
      %15 = arith.addf %12, %14 : vector<256x128xf32>
      %cst_14 = arith.constant 0.000000e+00 : f32
      %16 = vector.broadcast %cst_14 : f32 to vector<256x128xf32>
      %17 = arith.cmpf oge, %15, %16 : vector<256x128xf32>
      %cst_15 = arith.constant 1.000000e-01 : f32
      %18 = vector.broadcast %cst_15 : f32 to vector<256x128xf32>
      %19 = arith.mulf %15, %18 : vector<256x128xf32>
      %20 = arith.select %17, %15, %19 : vector<256x128xi1>, vector<256x128xf32>
      %21 = arith.truncf %20 : vector<256x128xf32> to vector<256x128xbf16>
      %c0_16 = arith.constant 0 : index
      %c0_17 = arith.constant 0 : index
      %22 = vector.load %arg6[%c0_16, %c0_17] : memref<256x128xbf16, #tpu.memory_space<vmem>>, vector<256x128xbf16>
      tpu.vector_store %arg6[%c0_16, %c0_17], %21 {strides = array<i32>} : memref<256x128xbf16, #tpu.memory_space<vmem>>, vector<256x128xbf16>,
    } else {
    }
    return
  }
  func.func @transform_0(%arg0: i32, %arg1: i32, %arg2: i32) -> (i32, i32) {
    %c0_i32 = arith.constant 0 : i32
    return %arg0, %arg2 : i32, i32
  }
  func.func @transform_1(%arg0: i32, %arg1: i32, %arg2: i32) -> (i32, i32) {
    %c0_i32 = arith.constant 0 : i32
    return %arg2, %arg1 : i32, i32
  }
  func.func @transform_2(%arg0: i32, %arg1: i32, %arg2: i32) -> (i32, i32) {
    %c0_i32 = arith.constant 0 : i32
    %c0_i32_0 = arith.constant 0 : i32
    return %c0_i32, %arg1 : i32, i32
  }
  func.func @transform_3(%arg0: i32, %arg1: i32, %arg2: i32) -> (i32, i32) {
    %c0_i32 = arith.constant 0 : i32
    return %arg0, %arg1 : i32, i32
  }
}

module attributes {stable_mosaic.version = 11 : i64} {
  func.func @_mm_bias_act_kernel(%arg0: i32, %arg1: i32, %arg2: i32, %arg3: memref<256x384xbf16, #tpu.memory_space<vmem>>, %arg4: memref<384x128xbf16, #tpu.memory_space<vmem>>, %arg5: memref<1x128xf32, #tpu.memory_space<vmem>>, %arg6: memref<256x128xbf16, #tpu.memory_space<vmem>>, %arg7: memref<256x128xf32, #tpu.memory_space<vmem>>) attributes {dimension_semantics = [#tpu.dimension_semantics<parallel>, #tpu.dimension_semantics<parallel>, #tpu.dimension_semantics<arbitrary>], iteration_bounds = array<i64: 2, 1, 1>, scalar_prefetch = 0 : i64, scratch_operands = 1 : i64, tpu.core_type = #tpu.core_type<tc>, window_params = [{transform_indices = @transform_0, window_bounds = array<i64: 256, 384>}, {transform_indices = @transform_1, window_bounds = array<i64: 384, 128>}, {transform_indices = @transform_2, window_bounds = array<i64: 1, 128>}, {transform_indices = @transform_3, window_bounds = array<i64: 256, 128>}]} {
    %c0_i32 = arith.constant 0 : i32
    %0 = arith.cmpi eq, %arg2, %c0_i32 : i32
    %1 = arith.extui %0 : i1 to i32
    %c0_i32_0 = arith.constant 0 : i32
    %2 = arith.cmpi ne, %1, %c0_i32_0 : i32
    scf.if %2 {
      %cst_10 = arith.constant 0.000000e+00 : f32
      %12 = vector.broadcast %cst_10 : f32 to vector<256x128xf32>
      %c0_11 = arith.constant 0 : index
      %c0_12 = arith.constant 0 : index
      %13 = vector.load %arg7[%c0_11, %c0_12] : memref<256x128xf32, #tpu.memory_space<vmem>>, vector<256x128xf32>
      tpu.vector_store %arg7[%c0_11, %c0_12], %12 {strides = array<i32>} : memref<256x128xf32, #tpu.memory_space<vmem>>, vector<256x128xf32>,
    } else {
    }
    %c0 = arith.constant 0 : index
    %c0_1 = arith.constant 0 : index
    %3 = vector.load %arg7[%c0, %c0_1] : memref<256x128xf32, #tpu.memory_space<vmem>>, vector<256x128xf32>
    %c0_2 = arith.constant 0 : index
    %c0_3 = arith.constant 0 : index
    %4 = vector.load %arg3[%c0_2, %c0_3] : memref<256x384xbf16, #tpu.memory_space<vmem>>, vector<256x384xbf16>
    %c0_4 = arith.constant 0 : index
    %c0_5 = arith.constant 0 : index
    %5 = vector.load %arg4[%c0_4, %c0_5] : memref<384x128xbf16, #tpu.memory_space<vmem>>, vector<384x128xbf16>
    %cst = arith.constant dense<0.000000e+00> : vector<256x128xf32>
    %6 = tpu.matmul %4, %5, %cst {dimension_numbers = #tpu.dot_dimension_numbers<[1], [0], [0], [1], [0, 0, 1, 1], [], []>} : vector<256x384xbf16>, vector<384x128xbf16>, vector<256x128xf32> -> vector<256x128xf32>
    %7 = arith.addf %3, %6 : vector<256x128xf32>
    %c0_6 = arith.constant 0 : index
    %c0_7 = arith.constant 0 : index
    %8 = vector.load %arg7[%c0_6, %c0_7] : memref<256x128xf32, #tpu.memory_space<vmem>>, vector<256x128xf32>
    tpu.vector_store %arg7[%c0_6, %c0_7], %7 {strides = array<i32>} : memref<256x128xf32, #tpu.memory_space<vmem>>, vector<256x128xf32>,
    %c0_i32_8 = arith.constant 0 : i32
    %9 = arith.cmpi eq, %arg2, %c0_i32_8 : i32
    %10 = arith.extui %9 : i1 to i32
    %c0_i32_9 = arith.constant 0 : i32
    %11 = arith.cmpi ne, %10, %c0_i32_9 : i32
    scf.if %11 {
      %c0_10 = arith.constant 0 : index
      %c0_11 = arith.constant 0 : index
      %12 = vector.load %arg7[%c0_10, %c0_11] : memref<256x128xf32, #tpu.memory_space<vmem>>, vector<256x128xf32>
      %c0_12 = arith.constant 0 : index
      %c0_13 = arith.constant 0 : index
      %13 = vector.load %arg5[%c0_12, %c0_13] : memref<1x128xf32, #tpu.memory_space<vmem>>, vector<1x128xf32>
      %14 = vector.broadcast %13 : vector<1x128xf32> to vector<256x128xf32>
      %15 = arith.addf %12, %14 : vector<256x128xf32>
      %cst_14 = arith.constant 0.000000e+00 : f32
      %16 = vector.broadcast %cst_14 : f32 to vector<256x128xf32>
      %17 = arith.cmpf oge, %15, %16 : vector<256x128xf32>
      %cst_15 = arith.constant 1.000000e-01 : f32
      %18 = vector.broadcast %cst_15 : f32 to vector<256x128xf32>
      %19 = arith.mulf %15, %18 : vector<256x128xf32>
      %20 = arith.select %17, %15, %19 : vector<256x128xi1>, vector<256x128xf32>
      %21 = arith.truncf %20 : vector<256x128xf32> to vector<256x128xbf16>
      %c0_16 = arith.constant 0 : index
      %c0_17 = arith.constant 0 : index
      %22 = vector.load %arg6[%c0_16, %c0_17] : memref<256x128xbf16, #tpu.memory_space<vmem>>, vector<256x128xbf16>
      tpu.vector_store %arg6[%c0_16, %c0_17], %21 {strides = array<i32>} : memref<256x128xbf16, #tpu.memory_space<vmem>>, vector<256x128xbf16>,
    } else {
    }
    return
  }
  func.func @transform_0(%arg0: i32, %arg1: i32, %arg2: i32) -> (i32, i32) {
    %c0_i32 = arith.constant 0 : i32
    return %arg0, %arg2 : i32, i32
  }
  func.func @transform_1(%arg0: i32, %arg1: i32, %arg2: i32) -> (i32, i32) {
    %c0_i32 = arith.constant 0 : i32
    return %arg2, %arg1 : i32, i32
  }
  func.func @transform_2(%arg0: i32, %arg1: i32, %arg2: i32) -> (i32, i32) {
    %c0_i32 = arith.constant 0 : i32
    %c0_i32_0 = arith.constant 0 : i32
    return %c0_i32, %arg1 : i32, i32
  }
  func.func @transform_3(%arg0: i32, %arg1: i32, %arg2: i32) -> (i32, i32) {
    %c0_i32 = arith.constant 0 : i32
    return %arg0, %arg1 : i32, i32
  }
}

module attributes {stable_mosaic.version = 11 : i64} {
  func.func @_mm_bias_act_kernel(%arg0: i32, %arg1: i32, %arg2: i32, %arg3: memref<256x128xbf16, #tpu.memory_space<vmem>>, %arg4: memref<128x128xbf16, #tpu.memory_space<vmem>>, %arg5: memref<1x128xf32, #tpu.memory_space<vmem>>, %arg6: memref<256x128xbf16, #tpu.memory_space<vmem>>, %arg7: memref<256x128xf32, #tpu.memory_space<vmem>>) attributes {dimension_semantics = [#tpu.dimension_semantics<parallel>, #tpu.dimension_semantics<parallel>, #tpu.dimension_semantics<arbitrary>], iteration_bounds = array<i64: 2, 1, 1>, scalar_prefetch = 0 : i64, scratch_operands = 1 : i64, tpu.core_type = #tpu.core_type<tc>, window_params = [{transform_indices = @transform_0, window_bounds = array<i64: 256, 128>}, {transform_indices = @transform_1, window_bounds = array<i64: 128, 128>}, {transform_indices = @transform_2, window_bounds = array<i64: 1, 128>}, {transform_indices = @transform_3, window_bounds = array<i64: 256, 128>}]} {
    %c0_i32 = arith.constant 0 : i32
    %0 = arith.cmpi eq, %arg2, %c0_i32 : i32
    %1 = arith.extui %0 : i1 to i32
    %c0_i32_0 = arith.constant 0 : i32
    %2 = arith.cmpi ne, %1, %c0_i32_0 : i32
    scf.if %2 {
      %cst_10 = arith.constant 0.000000e+00 : f32
      %12 = vector.broadcast %cst_10 : f32 to vector<256x128xf32>
      %c0_11 = arith.constant 0 : index
      %c0_12 = arith.constant 0 : index
      %13 = vector.load %arg7[%c0_11, %c0_12] : memref<256x128xf32, #tpu.memory_space<vmem>>, vector<256x128xf32>
      tpu.vector_store %arg7[%c0_11, %c0_12], %12 {strides = array<i32>} : memref<256x128xf32, #tpu.memory_space<vmem>>, vector<256x128xf32>,
    } else {
    }
    %c0 = arith.constant 0 : index
    %c0_1 = arith.constant 0 : index
    %3 = vector.load %arg7[%c0, %c0_1] : memref<256x128xf32, #tpu.memory_space<vmem>>, vector<256x128xf32>
    %c0_2 = arith.constant 0 : index
    %c0_3 = arith.constant 0 : index
    %4 = vector.load %arg3[%c0_2, %c0_3] : memref<256x128xbf16, #tpu.memory_space<vmem>>, vector<256x128xbf16>
    %c0_4 = arith.constant 0 : index
    %c0_5 = arith.constant 0 : index
    %5 = vector.load %arg4[%c0_4, %c0_5] : memref<128x128xbf16, #tpu.memory_space<vmem>>, vector<128x128xbf16>
    %cst = arith.constant dense<0.000000e+00> : vector<256x128xf32>
    %6 = tpu.matmul %4, %5, %cst {dimension_numbers = #tpu.dot_dimension_numbers<[1], [0], [0], [1], [0, 0, 1, 1], [], []>} : vector<256x128xbf16>, vector<128x128xbf16>, vector<256x128xf32> -> vector<256x128xf32>
    %7 = arith.addf %3, %6 : vector<256x128xf32>
    %c0_6 = arith.constant 0 : index
    %c0_7 = arith.constant 0 : index
    %8 = vector.load %arg7[%c0_6, %c0_7] : memref<256x128xf32, #tpu.memory_space<vmem>>, vector<256x128xf32>
    tpu.vector_store %arg7[%c0_6, %c0_7], %7 {strides = array<i32>} : memref<256x128xf32, #tpu.memory_space<vmem>>, vector<256x128xf32>,
    %c0_i32_8 = arith.constant 0 : i32
    %9 = arith.cmpi eq, %arg2, %c0_i32_8 : i32
    %10 = arith.extui %9 : i1 to i32
    %c0_i32_9 = arith.constant 0 : i32
    %11 = arith.cmpi ne, %10, %c0_i32_9 : i32
    scf.if %11 {
      %c0_10 = arith.constant 0 : index
      %c0_11 = arith.constant 0 : index
      %12 = vector.load %arg7[%c0_10, %c0_11] : memref<256x128xf32, #tpu.memory_space<vmem>>, vector<256x128xf32>
      %c0_12 = arith.constant 0 : index
      %c0_13 = arith.constant 0 : index
      %13 = vector.load %arg5[%c0_12, %c0_13] : memref<1x128xf32, #tpu.memory_space<vmem>>, vector<1x128xf32>
      %14 = vector.broadcast %13 : vector<1x128xf32> to vector<256x128xf32>
      %15 = arith.addf %12, %14 : vector<256x128xf32>
      %cst_14 = arith.constant 0.000000e+00 : f32
      %16 = vector.broadcast %cst_14 : f32 to vector<256x128xf32>
      %17 = arith.cmpf oge, %15, %16 : vector<256x128xf32>
      %cst_15 = arith.constant 1.000000e-01 : f32
      %18 = vector.broadcast %cst_15 : f32 to vector<256x128xf32>
      %19 = arith.mulf %15, %18 : vector<256x128xf32>
      %20 = arith.select %17, %15, %19 : vector<256x128xi1>, vector<256x128xf32>
      %21 = arith.truncf %20 : vector<256x128xf32> to vector<256x128xbf16>
      %c0_16 = arith.constant 0 : index
      %c0_17 = arith.constant 0 : index
      %22 = vector.load %arg6[%c0_16, %c0_17] : memref<256x128xbf16, #tpu.memory_space<vmem>>, vector<256x128xbf16>
      tpu.vector_store %arg6[%c0_16, %c0_17], %21 {strides = array<i32>} : memref<256x128xbf16, #tpu.memory_space<vmem>>, vector<256x128xbf16>,
    } else {
    }
    return
  }
  func.func @transform_0(%arg0: i32, %arg1: i32, %arg2: i32) -> (i32, i32) {
    %c0_i32 = arith.constant 0 : i32
    return %arg0, %arg2 : i32, i32
  }
  func.func @transform_1(%arg0: i32, %arg1: i32, %arg2: i32) -> (i32, i32) {
    %c0_i32 = arith.constant 0 : i32
    return %arg2, %arg1 : i32, i32
  }
  func.func @transform_2(%arg0: i32, %arg1: i32, %arg2: i32) -> (i32, i32) {
    %c0_i32 = arith.constant 0 : i32
    %c0_i32_0 = arith.constant 0 : i32
    return %c0_i32, %arg1 : i32, i32
  }
  func.func @transform_3(%arg0: i32, %arg1: i32, %arg2: i32) -> (i32, i32) {
    %c0_i32 = arith.constant 0 : i32
    return %arg0, %arg1 : i32, i32
  }
}

module attributes {stable_mosaic.version = 11 : i64} {
  func.func @_mm_bias_act_kernel(%arg0: i32, %arg1: i32, %arg2: i32, %arg3: memref<256x384xbf16, #tpu.memory_space<vmem>>, %arg4: memref<384x128xbf16, #tpu.memory_space<vmem>>, %arg5: memref<1x128xf32, #tpu.memory_space<vmem>>, %arg6: memref<256x128xbf16, #tpu.memory_space<vmem>>, %arg7: memref<256x128xbf16, #tpu.memory_space<vmem>>, %arg8: memref<256x128xf32, #tpu.memory_space<vmem>>) attributes {dimension_semantics = [#tpu.dimension_semantics<parallel>, #tpu.dimension_semantics<parallel>, #tpu.dimension_semantics<arbitrary>], iteration_bounds = array<i64: 2, 1, 1>, scalar_prefetch = 0 : i64, scratch_operands = 1 : i64, tpu.core_type = #tpu.core_type<tc>, window_params = [{transform_indices = @transform_0, window_bounds = array<i64: 256, 384>}, {transform_indices = @transform_1, window_bounds = array<i64: 384, 128>}, {transform_indices = @transform_2, window_bounds = array<i64: 1, 128>}, {transform_indices = @transform_3, window_bounds = array<i64: 256, 128>}, {transform_indices = @transform_4, window_bounds = array<i64: 256, 128>}]} {
    %c0_i32 = arith.constant 0 : i32
    %0 = arith.cmpi eq, %arg2, %c0_i32 : i32
    %1 = arith.extui %0 : i1 to i32
    %c0_i32_0 = arith.constant 0 : i32
    %2 = arith.cmpi ne, %1, %c0_i32_0 : i32
    scf.if %2 {
      %cst_10 = arith.constant 0.000000e+00 : f32
      %12 = vector.broadcast %cst_10 : f32 to vector<256x128xf32>
      %c0_11 = arith.constant 0 : index
      %c0_12 = arith.constant 0 : index
      %13 = vector.load %arg8[%c0_11, %c0_12] : memref<256x128xf32, #tpu.memory_space<vmem>>, vector<256x128xf32>
      tpu.vector_store %arg8[%c0_11, %c0_12], %12 {strides = array<i32>} : memref<256x128xf32, #tpu.memory_space<vmem>>, vector<256x128xf32>,
    } else {
    }
    %c0 = arith.constant 0 : index
    %c0_1 = arith.constant 0 : index
    %3 = vector.load %arg8[%c0, %c0_1] : memref<256x128xf32, #tpu.memory_space<vmem>>, vector<256x128xf32>
    %c0_2 = arith.constant 0 : index
    %c0_3 = arith.constant 0 : index
    %4 = vector.load %arg3[%c0_2, %c0_3] : memref<256x384xbf16, #tpu.memory_space<vmem>>, vector<256x384xbf16>
    %c0_4 = arith.constant 0 : index
    %c0_5 = arith.constant 0 : index
    %5 = vector.load %arg4[%c0_4, %c0_5] : memref<384x128xbf16, #tpu.memory_space<vmem>>, vector<384x128xbf16>
    %cst = arith.constant dense<0.000000e+00> : vector<256x128xf32>
    %6 = tpu.matmul %4, %5, %cst {dimension_numbers = #tpu.dot_dimension_numbers<[1], [0], [0], [1], [0, 0, 1, 1], [], []>} : vector<256x384xbf16>, vector<384x128xbf16>, vector<256x128xf32> -> vector<256x128xf32>
    %7 = arith.addf %3, %6 : vector<256x128xf32>
    %c0_6 = arith.constant 0 : index
    %c0_7 = arith.constant 0 : index
    %8 = vector.load %arg8[%c0_6, %c0_7] : memref<256x128xf32, #tpu.memory_space<vmem>>, vector<256x128xf32>
    tpu.vector_store %arg8[%c0_6, %c0_7], %7 {strides = array<i32>} : memref<256x128xf32, #tpu.memory_space<vmem>>, vector<256x128xf32>,
    %c0_i32_8 = arith.constant 0 : i32
    %9 = arith.cmpi eq, %arg2, %c0_i32_8 : i32
    %10 = arith.extui %9 : i1 to i32
    %c0_i32_9 = arith.constant 0 : i32
    %11 = arith.cmpi ne, %10, %c0_i32_9 : i32
    scf.if %11 {
      %c0_10 = arith.constant 0 : index
      %c0_11 = arith.constant 0 : index
      %12 = vector.load %arg8[%c0_10, %c0_11] : memref<256x128xf32, #tpu.memory_space<vmem>>, vector<256x128xf32>
      %c0_12 = arith.constant 0 : index
      %c0_13 = arith.constant 0 : index
      %13 = vector.load %arg5[%c0_12, %c0_13] : memref<1x128xf32, #tpu.memory_space<vmem>>, vector<1x128xf32>
      %14 = vector.broadcast %13 : vector<1x128xf32> to vector<256x128xf32>
      %15 = arith.addf %12, %14 : vector<256x128xf32>
      %cst_14 = arith.constant 0.000000e+00 : f32
      %16 = vector.broadcast %cst_14 : f32 to vector<256x128xf32>
      %17 = arith.cmpf oge, %15, %16 : vector<256x128xf32>
      %cst_15 = arith.constant 1.000000e-01 : f32
      %18 = vector.broadcast %cst_15 : f32 to vector<256x128xf32>
      %19 = arith.mulf %15, %18 : vector<256x128xf32>
      %20 = arith.select %17, %15, %19 : vector<256x128xi1>, vector<256x128xf32>
      %c0_16 = arith.constant 0 : index
      %c0_17 = arith.constant 0 : index
      %21 = vector.load %arg6[%c0_16, %c0_17] : memref<256x128xbf16, #tpu.memory_space<vmem>>, vector<256x128xbf16>
      %22 = arith.extf %21 : vector<256x128xbf16> to vector<256x128xf32>
      %23 = arith.addf %20, %22 : vector<256x128xf32>
      %24 = arith.truncf %23 : vector<256x128xf32> to vector<256x128xbf16>
      %c0_18 = arith.constant 0 : index
      %c0_19 = arith.constant 0 : index
      %25 = vector.load %arg7[%c0_18, %c0_19] : memref<256x128xbf16, #tpu.memory_space<vmem>>, vector<256x128xbf16>
      tpu.vector_store %arg7[%c0_18, %c0_19], %24 {strides = array<i32>} : memref<256x128xbf16, #tpu.memory_space<vmem>>, vector<256x128xbf16>,
    } else {
    }
    return
  }
  func.func @transform_0(%arg0: i32, %arg1: i32, %arg2: i32) -> (i32, i32) {
    %c0_i32 = arith.constant 0 : i32
    return %arg0, %arg2 : i32, i32
  }
  func.func @transform_1(%arg0: i32, %arg1: i32, %arg2: i32) -> (i32, i32) {
    %c0_i32 = arith.constant 0 : i32
    return %arg2, %arg1 : i32, i32
  }
  func.func @transform_2(%arg0: i32, %arg1: i32, %arg2: i32) -> (i32, i32) {
    %c0_i32 = arith.constant 0 : i32
    %c0_i32_0 = arith.constant 0 : i32
    return %c0_i32, %arg1 : i32, i32
  }
  func.func @transform_3(%arg0: i32, %arg1: i32, %arg2: i32) -> (i32, i32) {
    %c0_i32 = arith.constant 0 : i32
    return %arg0, %arg1 : i32, i32
  }
  func.func @transform_4(%arg0: i32, %arg1: i32, %arg2: i32) -> (i32, i32) {
    %c0_i32 = arith.constant 0 : i32
    return %arg0, %arg1 : i32, i32
  }
}

module attributes {stable_mosaic.version = 11 : i64} {
  func.func @_mm_bias_act_kernel(%arg0: i32, %arg1: i32, %arg2: i32, %arg3: memref<128x128xbf16, #tpu.memory_space<vmem>>, %arg4: memref<128x128xbf16, #tpu.memory_space<vmem>>, %arg5: memref<1x128xf32, #tpu.memory_space<vmem>>, %arg6: memref<128x128xbf16, #tpu.memory_space<vmem>>, %arg7: memref<128x128xf32, #tpu.memory_space<vmem>>) attributes {dimension_semantics = [#tpu.dimension_semantics<parallel>, #tpu.dimension_semantics<parallel>, #tpu.dimension_semantics<arbitrary>], iteration_bounds = array<i64: 1, 1, 5>, scalar_prefetch = 0 : i64, scratch_operands = 1 : i64, tpu.core_type = #tpu.core_type<tc>, window_params = [{transform_indices = @transform_0, window_bounds = array<i64: 128, 128>}, {transform_indices = @transform_1, window_bounds = array<i64: 128, 128>}, {transform_indices = @transform_2, window_bounds = array<i64: 1, 128>}, {transform_indices = @transform_3, window_bounds = array<i64: 128, 128>}]} {
    %c0_i32 = arith.constant 0 : i32
    %0 = arith.cmpi eq, %arg2, %c0_i32 : i32
    %1 = arith.extui %0 : i1 to i32
    %c0_i32_0 = arith.constant 0 : i32
    %2 = arith.cmpi ne, %1, %c0_i32_0 : i32
    scf.if %2 {
      %cst_9 = arith.constant 0.000000e+00 : f32
      %12 = vector.broadcast %cst_9 : f32 to vector<128x128xf32>
      %c0_10 = arith.constant 0 : index
      %c0_11 = arith.constant 0 : index
      %13 = vector.load %arg7[%c0_10, %c0_11] : memref<128x128xf32, #tpu.memory_space<vmem>>, vector<128x128xf32>
      tpu.vector_store %arg7[%c0_10, %c0_11], %12 {strides = array<i32>} : memref<128x128xf32, #tpu.memory_space<vmem>>, vector<128x128xf32>,
    } else {
    }
    %c0 = arith.constant 0 : index
    %c0_1 = arith.constant 0 : index
    %3 = vector.load %arg7[%c0, %c0_1] : memref<128x128xf32, #tpu.memory_space<vmem>>, vector<128x128xf32>
    %c0_2 = arith.constant 0 : index
    %c0_3 = arith.constant 0 : index
    %4 = vector.load %arg3[%c0_2, %c0_3] : memref<128x128xbf16, #tpu.memory_space<vmem>>, vector<128x128xbf16>
    %c0_4 = arith.constant 0 : index
    %c0_5 = arith.constant 0 : index
    %5 = vector.load %arg4[%c0_4, %c0_5] : memref<128x128xbf16, #tpu.memory_space<vmem>>, vector<128x128xbf16>
    %cst = arith.constant dense<0.000000e+00> : vector<128x128xf32>
    %6 = tpu.matmul %4, %5, %cst {dimension_numbers = #tpu.dot_dimension_numbers<[1], [0], [0], [1], [0, 0, 1, 1], [], []>} : vector<128x128xbf16>, vector<128x128xbf16>, vector<128x128xf32> -> vector<128x128xf32>
    %7 = arith.addf %3, %6 : vector<128x128xf32>
    %c0_6 = arith.constant 0 : index
    %c0_7 = arith.constant 0 : index
    %8 = vector.load %arg7[%c0_6, %c0_7] : memref<128x128xf32, #tpu.memory_space<vmem>>, vector<128x128xf32>
    tpu.vector_store %arg7[%c0_6, %c0_7], %7 {strides = array<i32>} : memref<128x128xf32, #tpu.memory_space<vmem>>, vector<128x128xf32>,
    %c4_i32 = arith.constant 4 : i32
    %9 = arith.cmpi eq, %arg2, %c4_i32 : i32
    %10 = arith.extui %9 : i1 to i32
    %c0_i32_8 = arith.constant 0 : i32
    %11 = arith.cmpi ne, %10, %c0_i32_8 : i32
    scf.if %11 {
      %c0_9 = arith.constant 0 : index
      %c0_10 = arith.constant 0 : index
      %12 = vector.load %arg7[%c0_9, %c0_10] : memref<128x128xf32, #tpu.memory_space<vmem>>, vector<128x128xf32>
      %c0_11 = arith.constant 0 : index
      %c0_12 = arith.constant 0 : index
      %13 = vector.load %arg5[%c0_11, %c0_12] : memref<1x128xf32, #tpu.memory_space<vmem>>, vector<1x128xf32>
      %14 = vector.broadcast %13 : vector<1x128xf32> to vector<128x128xf32>
      %15 = arith.addf %12, %14 : vector<128x128xf32>
      %cst_13 = arith.constant 0.000000e+00 : f32
      %16 = vector.broadcast %cst_13 : f32 to vector<128x128xf32>
      %17 = arith.cmpf oge, %15, %16 : vector<128x128xf32>
      %cst_14 = arith.constant 1.000000e-01 : f32
      %18 = vector.broadcast %cst_14 : f32 to vector<128x128xf32>
      %19 = arith.mulf %15, %18 : vector<128x128xf32>
      %20 = arith.select %17, %15, %19 : vector<128x128xi1>, vector<128x128xf32>
      %21 = arith.truncf %20 : vector<128x128xf32> to vector<128x128xbf16>
      %c0_15 = arith.constant 0 : index
      %c0_16 = arith.constant 0 : index
      %22 = vector.load %arg6[%c0_15, %c0_16] : memref<128x128xbf16, #tpu.memory_space<vmem>>, vector<128x128xbf16>
      tpu.vector_store %arg6[%c0_15, %c0_16], %21 {strides = array<i32>} : memref<128x128xbf16, #tpu.memory_space<vmem>>, vector<128x128xbf16>,
    } else {
    }
    return
  }
  func.func @transform_0(%arg0: i32, %arg1: i32, %arg2: i32) -> (i32, i32) {
    %c0_i32 = arith.constant 0 : i32
    return %arg0, %arg2 : i32, i32
  }
  func.func @transform_1(%arg0: i32, %arg1: i32, %arg2: i32) -> (i32, i32) {
    %c0_i32 = arith.constant 0 : i32
    return %arg2, %arg1 : i32, i32
  }
  func.func @transform_2(%arg0: i32, %arg1: i32, %arg2: i32) -> (i32, i32) {
    %c0_i32 = arith.constant 0 : i32
    %c0_i32_0 = arith.constant 0 : i32
    return %c0_i32, %arg1 : i32, i32
  }
  func.func @transform_3(%arg0: i32, %arg1: i32, %arg2: i32) -> (i32, i32) {
    %c0_i32 = arith.constant 0 : i32
    return %arg0, %arg1 : i32, i32
  }
}

module attributes {stable_mosaic.version = 11 : i64} {
  func.func @_mm_bias_act_kernel(%arg0: i32, %arg1: i32, %arg2: i32, %arg3: memref<128x128xbf16, #tpu.memory_space<vmem>>, %arg4: memref<128x128xbf16, #tpu.memory_space<vmem>>, %arg5: memref<1x128xf32, #tpu.memory_space<vmem>>, %arg6: memref<128x128xbf16, #tpu.memory_space<vmem>>, %arg7: memref<128x128xf32, #tpu.memory_space<vmem>>) attributes {dimension_semantics = [#tpu.dimension_semantics<parallel>, #tpu.dimension_semantics<parallel>, #tpu.dimension_semantics<arbitrary>], iteration_bounds = array<i64: 1, 1, 1>, scalar_prefetch = 0 : i64, scratch_operands = 1 : i64, tpu.core_type = #tpu.core_type<tc>, window_params = [{transform_indices = @transform_0, window_bounds = array<i64: 128, 128>}, {transform_indices = @transform_1, window_bounds = array<i64: 128, 128>}, {transform_indices = @transform_2, window_bounds = array<i64: 1, 128>}, {transform_indices = @transform_3, window_bounds = array<i64: 128, 128>}]} {
    %c0_i32 = arith.constant 0 : i32
    %0 = arith.cmpi eq, %arg2, %c0_i32 : i32
    %1 = arith.extui %0 : i1 to i32
    %c0_i32_0 = arith.constant 0 : i32
    %2 = arith.cmpi ne, %1, %c0_i32_0 : i32
    scf.if %2 {
      %cst_10 = arith.constant 0.000000e+00 : f32
      %12 = vector.broadcast %cst_10 : f32 to vector<128x128xf32>
      %c0_11 = arith.constant 0 : index
      %c0_12 = arith.constant 0 : index
      %13 = vector.load %arg7[%c0_11, %c0_12] : memref<128x128xf32, #tpu.memory_space<vmem>>, vector<128x128xf32>
      tpu.vector_store %arg7[%c0_11, %c0_12], %12 {strides = array<i32>} : memref<128x128xf32, #tpu.memory_space<vmem>>, vector<128x128xf32>,
    } else {
    }
    %c0 = arith.constant 0 : index
    %c0_1 = arith.constant 0 : index
    %3 = vector.load %arg7[%c0, %c0_1] : memref<128x128xf32, #tpu.memory_space<vmem>>, vector<128x128xf32>
    %c0_2 = arith.constant 0 : index
    %c0_3 = arith.constant 0 : index
    %4 = vector.load %arg3[%c0_2, %c0_3] : memref<128x128xbf16, #tpu.memory_space<vmem>>, vector<128x128xbf16>
    %c0_4 = arith.constant 0 : index
    %c0_5 = arith.constant 0 : index
    %5 = vector.load %arg4[%c0_4, %c0_5] : memref<128x128xbf16, #tpu.memory_space<vmem>>, vector<128x128xbf16>
    %cst = arith.constant dense<0.000000e+00> : vector<128x128xf32>
    %6 = tpu.matmul %4, %5, %cst {dimension_numbers = #tpu.dot_dimension_numbers<[1], [0], [0], [1], [0, 0, 1, 1], [], []>} : vector<128x128xbf16>, vector<128x128xbf16>, vector<128x128xf32> -> vector<128x128xf32>
    %7 = arith.addf %3, %6 : vector<128x128xf32>
    %c0_6 = arith.constant 0 : index
    %c0_7 = arith.constant 0 : index
    %8 = vector.load %arg7[%c0_6, %c0_7] : memref<128x128xf32, #tpu.memory_space<vmem>>, vector<128x128xf32>
    tpu.vector_store %arg7[%c0_6, %c0_7], %7 {strides = array<i32>} : memref<128x128xf32, #tpu.memory_space<vmem>>, vector<128x128xf32>,
    %c0_i32_8 = arith.constant 0 : i32
    %9 = arith.cmpi eq, %arg2, %c0_i32_8 : i32
    %10 = arith.extui %9 : i1 to i32
    %c0_i32_9 = arith.constant 0 : i32
    %11 = arith.cmpi ne, %10, %c0_i32_9 : i32
    scf.if %11 {
      %c0_10 = arith.constant 0 : index
      %c0_11 = arith.constant 0 : index
      %12 = vector.load %arg7[%c0_10, %c0_11] : memref<128x128xf32, #tpu.memory_space<vmem>>, vector<128x128xf32>
      %c0_12 = arith.constant 0 : index
      %c0_13 = arith.constant 0 : index
      %13 = vector.load %arg5[%c0_12, %c0_13] : memref<1x128xf32, #tpu.memory_space<vmem>>, vector<1x128xf32>
      %14 = vector.broadcast %13 : vector<1x128xf32> to vector<128x128xf32>
      %15 = arith.addf %12, %14 : vector<128x128xf32>
      %cst_14 = arith.constant 0.000000e+00 : f32
      %16 = vector.broadcast %cst_14 : f32 to vector<128x128xf32>
      %17 = arith.cmpf oge, %15, %16 : vector<128x128xf32>
      %cst_15 = arith.constant 1.000000e-01 : f32
      %18 = vector.broadcast %cst_15 : f32 to vector<128x128xf32>
      %19 = arith.mulf %15, %18 : vector<128x128xf32>
      %20 = arith.select %17, %15, %19 : vector<128x128xi1>, vector<128x128xf32>
      %21 = arith.truncf %20 : vector<128x128xf32> to vector<128x128xbf16>
      %c0_16 = arith.constant 0 : index
      %c0_17 = arith.constant 0 : index
      %22 = vector.load %arg6[%c0_16, %c0_17] : memref<128x128xbf16, #tpu.memory_space<vmem>>, vector<128x128xbf16>
      tpu.vector_store %arg6[%c0_16, %c0_17], %21 {strides = array<i32>} : memref<128x128xbf16, #tpu.memory_space<vmem>>, vector<128x128xbf16>,
    } else {
    }
    return
  }
  func.func @transform_0(%arg0: i32, %arg1: i32, %arg2: i32) -> (i32, i32) {
    %c0_i32 = arith.constant 0 : i32
    return %arg0, %arg2 : i32, i32
  }
  func.func @transform_1(%arg0: i32, %arg1: i32, %arg2: i32) -> (i32, i32) {
    %c0_i32 = arith.constant 0 : i32
    return %arg2, %arg1 : i32, i32
  }
  func.func @transform_2(%arg0: i32, %arg1: i32, %arg2: i32) -> (i32, i32) {
    %c0_i32 = arith.constant 0 : i32
    %c0_i32_0 = arith.constant 0 : i32
    return %c0_i32, %arg1 : i32, i32
  }
  func.func @transform_3(%arg0: i32, %arg1: i32, %arg2: i32) -> (i32, i32) {
    %c0_i32 = arith.constant 0 : i32
    return %arg0, %arg1 : i32, i32
  }
}

module attributes {stable_mosaic.version = 11 : i64} {
  func.func @_mm_bias_act_kernel(%arg0: i32, %arg1: i32, %arg2: i32, %arg3: memref<128x128xbf16, #tpu.memory_space<vmem>>, %arg4: memref<128x128xbf16, #tpu.memory_space<vmem>>, %arg5: memref<1x128xf32, #tpu.memory_space<vmem>>, %arg6: memref<128x128xbf16, #tpu.memory_space<vmem>>, %arg7: memref<128x128xbf16, #tpu.memory_space<vmem>>, %arg8: memref<128x128xf32, #tpu.memory_space<vmem>>) attributes {dimension_semantics = [#tpu.dimension_semantics<parallel>, #tpu.dimension_semantics<parallel>, #tpu.dimension_semantics<arbitrary>], iteration_bounds = array<i64: 1, 1, 5>, scalar_prefetch = 0 : i64, scratch_operands = 1 : i64, tpu.core_type = #tpu.core_type<tc>, window_params = [{transform_indices = @transform_0, window_bounds = array<i64: 128, 128>}, {transform_indices = @transform_1, window_bounds = array<i64: 128, 128>}, {transform_indices = @transform_2, window_bounds = array<i64: 1, 128>}, {transform_indices = @transform_3, window_bounds = array<i64: 128, 128>}, {transform_indices = @transform_4, window_bounds = array<i64: 128, 128>}]} {
    %c0_i32 = arith.constant 0 : i32
    %0 = arith.cmpi eq, %arg2, %c0_i32 : i32
    %1 = arith.extui %0 : i1 to i32
    %c0_i32_0 = arith.constant 0 : i32
    %2 = arith.cmpi ne, %1, %c0_i32_0 : i32
    scf.if %2 {
      %cst_9 = arith.constant 0.000000e+00 : f32
      %12 = vector.broadcast %cst_9 : f32 to vector<128x128xf32>
      %c0_10 = arith.constant 0 : index
      %c0_11 = arith.constant 0 : index
      %13 = vector.load %arg8[%c0_10, %c0_11] : memref<128x128xf32, #tpu.memory_space<vmem>>, vector<128x128xf32>
      tpu.vector_store %arg8[%c0_10, %c0_11], %12 {strides = array<i32>} : memref<128x128xf32, #tpu.memory_space<vmem>>, vector<128x128xf32>,
    } else {
    }
    %c0 = arith.constant 0 : index
    %c0_1 = arith.constant 0 : index
    %3 = vector.load %arg8[%c0, %c0_1] : memref<128x128xf32, #tpu.memory_space<vmem>>, vector<128x128xf32>
    %c0_2 = arith.constant 0 : index
    %c0_3 = arith.constant 0 : index
    %4 = vector.load %arg3[%c0_2, %c0_3] : memref<128x128xbf16, #tpu.memory_space<vmem>>, vector<128x128xbf16>
    %c0_4 = arith.constant 0 : index
    %c0_5 = arith.constant 0 : index
    %5 = vector.load %arg4[%c0_4, %c0_5] : memref<128x128xbf16, #tpu.memory_space<vmem>>, vector<128x128xbf16>
    %cst = arith.constant dense<0.000000e+00> : vector<128x128xf32>
    %6 = tpu.matmul %4, %5, %cst {dimension_numbers = #tpu.dot_dimension_numbers<[1], [0], [0], [1], [0, 0, 1, 1], [], []>} : vector<128x128xbf16>, vector<128x128xbf16>, vector<128x128xf32> -> vector<128x128xf32>
    %7 = arith.addf %3, %6 : vector<128x128xf32>
    %c0_6 = arith.constant 0 : index
    %c0_7 = arith.constant 0 : index
    %8 = vector.load %arg8[%c0_6, %c0_7] : memref<128x128xf32, #tpu.memory_space<vmem>>, vector<128x128xf32>
    tpu.vector_store %arg8[%c0_6, %c0_7], %7 {strides = array<i32>} : memref<128x128xf32, #tpu.memory_space<vmem>>, vector<128x128xf32>,
    %c4_i32 = arith.constant 4 : i32
    %9 = arith.cmpi eq, %arg2, %c4_i32 : i32
    %10 = arith.extui %9 : i1 to i32
    %c0_i32_8 = arith.constant 0 : i32
    %11 = arith.cmpi ne, %10, %c0_i32_8 : i32
    scf.if %11 {
      %c0_9 = arith.constant 0 : index
      %c0_10 = arith.constant 0 : index
      %12 = vector.load %arg8[%c0_9, %c0_10] : memref<128x128xf32, #tpu.memory_space<vmem>>, vector<128x128xf32>
      %c0_11 = arith.constant 0 : index
      %c0_12 = arith.constant 0 : index
      %13 = vector.load %arg5[%c0_11, %c0_12] : memref<1x128xf32, #tpu.memory_space<vmem>>, vector<1x128xf32>
      %14 = vector.broadcast %13 : vector<1x128xf32> to vector<128x128xf32>
      %15 = arith.addf %12, %14 : vector<128x128xf32>
      %cst_13 = arith.constant 0.000000e+00 : f32
      %16 = vector.broadcast %cst_13 : f32 to vector<128x128xf32>
      %17 = arith.cmpf oge, %15, %16 : vector<128x128xf32>
      %cst_14 = arith.constant 1.000000e-01 : f32
      %18 = vector.broadcast %cst_14 : f32 to vector<128x128xf32>
      %19 = arith.mulf %15, %18 : vector<128x128xf32>
      %20 = arith.select %17, %15, %19 : vector<128x128xi1>, vector<128x128xf32>
      %c0_15 = arith.constant 0 : index
      %c0_16 = arith.constant 0 : index
      %21 = vector.load %arg6[%c0_15, %c0_16] : memref<128x128xbf16, #tpu.memory_space<vmem>>, vector<128x128xbf16>
      %22 = arith.extf %21 : vector<128x128xbf16> to vector<128x128xf32>
      %23 = arith.addf %20, %22 : vector<128x128xf32>
      %24 = arith.truncf %23 : vector<128x128xf32> to vector<128x128xbf16>
      %c0_17 = arith.constant 0 : index
      %c0_18 = arith.constant 0 : index
      %25 = vector.load %arg7[%c0_17, %c0_18] : memref<128x128xbf16, #tpu.memory_space<vmem>>, vector<128x128xbf16>
      tpu.vector_store %arg7[%c0_17, %c0_18], %24 {strides = array<i32>} : memref<128x128xbf16, #tpu.memory_space<vmem>>, vector<128x128xbf16>,
    } else {
    }
    return
  }
  func.func @transform_0(%arg0: i32, %arg1: i32, %arg2: i32) -> (i32, i32) {
    %c0_i32 = arith.constant 0 : i32
    return %arg0, %arg2 : i32, i32
  }
  func.func @transform_1(%arg0: i32, %arg1: i32, %arg2: i32) -> (i32, i32) {
    %c0_i32 = arith.constant 0 : i32
    return %arg2, %arg1 : i32, i32
  }
  func.func @transform_2(%arg0: i32, %arg1: i32, %arg2: i32) -> (i32, i32) {
    %c0_i32 = arith.constant 0 : i32
    %c0_i32_0 = arith.constant 0 : i32
    return %c0_i32, %arg1 : i32, i32
  }
  func.func @transform_3(%arg0: i32, %arg1: i32, %arg2: i32) -> (i32, i32) {
    %c0_i32 = arith.constant 0 : i32
    return %arg0, %arg1 : i32, i32
  }
  func.func @transform_4(%arg0: i32, %arg1: i32, %arg2: i32) -> (i32, i32) {
    %c0_i32 = arith.constant 0 : i32
    return %arg0, %arg1 : i32, i32
  }
}

</mosaic_0001>

<llo_original>
// kernel: darknet53_forward.7
$region0: #{darknet53_forward.7}
  #allocation0 [shape = 'u32[]', space=smem, size = 0x4, offset = 0x4, fixed_abs, tag = 'smem constant byte address 0x4 - core index']
  #allocation1 [shape = 'u32[144,128]{1,0:T(1,128)}', space=vmem, size = 0x12000, scoped, tag = 'internal scratch']
  #allocation2 [shape = 'f32[256,128]{1,0:T(8,128)}', space=vmem, size = 0x20000, scoped, tag = 'scratch operand']
  %s0 = inlined_call_operand.vmem [shape: bf16[2048,128], index: 0, kind: input, shape index: {}]
  %s1 = inlined_call_operand.hbm [shape: bf16[128,128], index: 1, kind: input, shape index: {}]
  %s2 = inlined_call_operand.vmem [shape: f32[1,128], index: 2, kind: input, shape index: {}]
  %s3 = inlined_call_operand.vmem [shape: bf16[2048,128], index: 3, kind: output, shape index: {}]
  %s4 = sld [smem:[#allocation0]]
  $region57: #{darknet53_forward.7} parent=0
    _
  %s6 = ssub.s32 1, %s4
  %s7 = scalar_select 0, %s6, %s4
  $region1: #{darknet53_forward.7} parent=0
    #allocation3 [shape = 'u8[32768]{0}', space=vmem, size = 0x8000, scoped, tag = 'input window, operand 1, single buffered']
    #allocation4 [shape = 's32[2]{0}', space=sflag, size = 0x8, scoped, tag = 'scoped memory for darknet53_forward.7']
    %8 = vsyncpa [#allocation4], 0
    loop: start=0, step=1, limit=10
    $region2: #{darknet53_forward.7} parent=1 // loop_pre_header
      _
    $region3: #{darknet53_forward.7} parent=1 // loop_header
      %s10 = sphi 0, %s14
      %p11 = scmp.ge.s32.totalorder %s10, 10
      %s17 = sphi 0, %s36
      %s18 = sphi 0, %s32
      %s19 = sphi 0, %s28
      %s20 = sphi 0, %s17
      %s21 = sphi 0, %s18
      %s22 = sphi 0, %s19
      %s23 = sphi 0, %s20
      %s24 = sphi 0, %s21
      %s25 = sphi 0, %s22
      %s41 = sphi 0, %s43
      %s44 = sphi 0, %s41
      %s45 = sphi 0, %s44
      %s61 = sphi 0, %s45
      %s69 = sphi 0, %s71
      %s72 = sphi 0, %s69
      %s73 = sphi 0, %s72
      %s89 = sphi 0, %s73
      %s95 = sphi 0, %s97
      %s98 = sphi 0, %s95
      %s99 = sphi 0, %s98
      %s115 = sphi 0, %s99
      %s123 = sphi 0, %s125
      %s126 = sphi 0, %s123
      %s127 = sphi 0, %s126
      %s143 = sphi 0, %s127
    $region4: #{darknet53_forward.7} parent=1 // loop_header_branch
      %13 = sbr.rel (%p11) target = $region8
    $region5: #{darknet53_forward.7} parent=1 // loop_body
      %s15 = ssub.s32 %s10, 1
      %s16 = ssub.s32 %s10, 2
      %s26 = sadd.s32 1, %s19
      %p27 = scmp.ge.s32.totalorder %s26, 1
      %s28 = scalar_select %p27, 0, %s26
      %s29 = sadd.s32 1, %s18
      %s30 = scalar_select %p27, %s29, %s18
      %p31 = scmp.ge.s32.totalorder %s30, 1
      %s32 = scalar_select %p31, 0, %s30
      %s33 = sadd.s32 1, %s17
      %s34 = scalar_select %p31, %s33, %s17
      %p35 = scmp.ge.s32.totalorder %s34, 8
      %s36 = scalar_select %p35, 0, %s34
      %s37 = ssub.s32 %s17, %s36
      %s38 = ssub.s32 %s19, %s28
      %s39 = sor.u32 %s37, %s38
      %p40 = scmp.eq.s32.totalorder %s39, 0
      %s42 = sadd.s32 %s41, 1
      %s43 = scalar_select %p40, %s41, %s42
      %p46 = pneg %p40
      %p47 = scmp.eq.s32.totalorder %s10, 7
      %p48 = por %p46, %p47
      %p49 = scmp.ne.s32.totalorder %s41, %s44
      %p50 = scmp.eq.s32.totalorder %s10, 0
      %p51 = por %p49, %p50
      %p52 = scmp.ne.s32.totalorder %s41, %s44
      %p53 = scmp.eq.s32.totalorder %s15, 7
      %p54 = por %p52, %p53
      %p55 = scmp.ne.s32.totalorder %s44, %s45
      %p56 = scmp.eq.s32.totalorder %s15, 0
      %p57 = por %p55, %p56
      %p58 = scmp.ne.s32.totalorder %s44, %s45
      %p59 = scmp.eq.s32.totalorder %s16, 7
      %p60 = por %p58, %p59
      %p62 = scmp.ne.s32.totalorder %s45, %s61
      %p63 = scmp.eq.s32.totalorder %s16, 0
      %p64 = por %p62, %p63
      %s65 = ssub.s32 %s19, %s28
      %s66 = ssub.s32 %s18, %s32
      %s67 = sor.u32 %s65, %s66
      %p68 = scmp.eq.s32.totalorder %s67, 0
      %s70 = sadd.s32 %s69, 1
      %s71 = scalar_select %p68, %s69, %s70
      %p74 = pneg %p68
      %p75 = scmp.eq.s32.totalorder %s10, 7
      %p76 = por %p74, %p75
      %p77 = scmp.ne.s32.totalorder %s69, %s72
      %p78 = scmp.eq.s32.totalorder %s10, 0
      %p79 = por %p77, %p78
      %p80 = scmp.ne.s32.totalorder %s69, %s72
      %p81 = scmp.eq.s32.totalorder %s15, 7
      %p82 = por %p80, %p81
      %p83 = scmp.ne.s32.totalorder %s72, %s73
      %p84 = scmp.eq.s32.totalorder %s15, 0
      %p85 = por %p83, %p84
      %p86 = scmp.ne.s32.totalorder %s72, %s73
      %p87 = scmp.eq.s32.totalorder %s16, 7
      %p88 = por %p86, %p87
      %p90 = scmp.ne.s32.totalorder %s73, %s89
      %p91 = scmp.eq.s32.totalorder %s16, 0
      %p92 = por %p90, %p91
      %s93 = ssub.s32 %s18, %s32
      %p94 = scmp.eq.s32.totalorder %s93, 0
      %s96 = sadd.s32 %s95, 1
      %s97 = scalar_select %p94, %s95, %s96
      %p100 = pneg %p94
      %p101 = scmp.eq.s32.totalorder %s10, 7
      %p102 = por %p100, %p101
      %p103 = scmp.ne.s32.totalorder %s95, %s98
      %p104 = scmp.eq.s32.totalorder %s10, 0
      %p105 = por %p103, %p104
      %p106 = scmp.ne.s32.totalorder %s95, %s98
      %p107 = scmp.eq.s32.totalorder %s15, 7
      %p108 = por %p106, %p107
      %p109 = scmp.ne.s32.totalorder %s98, %s99
      %p110 = scmp.eq.s32.totalorder %s15, 0
      %p111 = por %p109, %p110
      %p112 = scmp.ne.s32.totalorder %s98, %s99
      %p113 = scmp.eq.s32.totalorder %s16, 7
      %p114 = por %p112, %p113
      %p116 = scmp.ne.s32.totalorder %s99, %s115
      %p117 = scmp.eq.s32.totalorder %s16, 0
      %p118 = por %p116, %p117
      %s119 = ssub.s32 %s17, %s36
      %s120 = ssub.s32 %s18, %s32
      %s121 = sor.u32 %s119, %s120
      %p122 = scmp.eq.s32.totalorder %s121, 0
      %s124 = sadd.s32 %s123, 1
      %s125 = scalar_select %p122, %s123, %s124
      %p128 = pneg %p122
      %p129 = scmp.eq.s32.totalorder %s10, 7
      %p130 = por %p128, %p129
      %p131 = scmp.ne.s32.totalorder %s123, %s126
      %p132 = scmp.eq.s32.totalorder %s10, 0
      %p133 = por %p131, %p132
      %p134 = scmp.ne.s32.totalorder %s123, %s126
      %p135 = scmp.eq.s32.totalorder %s15, 7
      %p136 = por %p134, %p135
      %p137 = scmp.ne.s32.totalorder %s126, %s127
      %p138 = scmp.eq.s32.totalorder %s15, 0
      %p139 = por %p137, %p138
      %p140 = scmp.ne.s32.totalorder %s126, %s127
      %p141 = scmp.eq.s32.totalorder %s16, 7
      %p142 = por %p140, %p141
      %p144 = scmp.ne.s32.totalorder %s127, %s143
      %p145 = scmp.eq.s32.totalorder %s16, 0
      %p146 = por %p144, %p145
      %p147 = scmp.le.s32.totalorder 1, %s10
      %p148 = scmp.lt.s32.totalorder %s10, 9
      %p149 = pnand %p147, %p148
      %p150 = pneg %p149
      // Predicated region
      $region9: #{darknet53_forward.7} parent=5 // pred_check
        _
      $region10: #{darknet53_forward.7} parent=5 // pred_check_branch
        %152 = sbr.rel (%p149) target = $region12
      $region11: #{darknet53_forward.7} parent=5 // pred_region
        %s153 = ssub.s32 %s10, 1
        // Predicated region
        $region13: #{darknet53_forward.7} parent=11 // pred_check
          %p154 = pneg %p85
        $region14: #{darknet53_forward.7} parent=11 // pred_check_branch
          %156 = sbr.rel (%p154) target = $region16
        $region15: #{darknet53_forward.7} parent=11 // pred_region
          %s157 = smul.u32 16, %s22
          %s159 = ssub.s32 1024, 1024
          %160 = vsyncadd [#allocation4], %s159
          %s161 = sadd.s32 %s21, %s157
          %s162 = smul.addr %s161, 64
          %s163 = scalar_lea.hbm %s1, %s162
          %s164 = sshll.u32 [#allocation3], 4
          %s165 = int_to_ptr.vmem [resolvable:$true] %s164
          %170 = dma.hbm_to_vmem [thread:$0]  %s163, 1024, %s165, [#allocation4], 64, 64, 4
        $region16: #{darknet53_forward.7} parent=11 // pred_fallthru
          _
        // Predicated region
        $region17: #{darknet53_forward.7} parent=11 // pred_check
          %p171 = pneg %p111
        $region18: #{darknet53_forward.7} parent=11 // pred_check_branch
          %173 = sbr.rel (%p171) target = $region20
        $region19: #{darknet53_forward.7} parent=11 // pred_region
          %p174 = scmp.lt.s32.totalorder %s21, 0
          %s175 = scalar_select %p174, %s21, 0
          %s176 = scalar_lea.vmem %s2, %s175
        $region20: #{darknet53_forward.7} parent=11 // pred_fallthru
          _
      $region12: #{darknet53_forward.7} parent=5 // pred_fallthru
        _
      %p177 = scmp.lt.s32.totalorder %s10, 8
      // Predicated region
      $region21: #{darknet53_forward.7} parent=5 // pred_check
        %p178 = pneg %p177
      $region22: #{darknet53_forward.7} parent=5 // pred_check_branch
        %180 = sbr.rel (%p178) target = $region24
      $region23: #{darknet53_forward.7} parent=5 // pred_region
        // Predicated region
        $region25: #{darknet53_forward.7} parent=23 // pred_check
          %p181 = pneg %p51
        $region26: #{darknet53_forward.7} parent=23 // pred_check_branch
          %183 = sbr.rel (%p181) target = $region28
        $region27: #{darknet53_forward.7} parent=23 // pred_region
          %s184 = smul.u32 32, %s17
          %p185 = scmp.lt.s32.totalorder %s184, 255
          %s186 = scalar_select %p185, %s184, 255
          %p187 = scmp.lt.s32.totalorder %s19, 0
          %s188 = scalar_select %p187, %s19, 0
          %s189 = sadd.s32 %s188, %s186
          %s190 = smul.addr %s189, 4
          %s191 = scalar_lea.vmem %s0, %s190
          %s192 = smul.u32 32, %s17
        $region28: #{darknet53_forward.7} parent=23 // pred_fallthru
          _
      $region24: #{darknet53_forward.7} parent=5 // pred_fallthru
        _
      %p193 = scmp.le.s32.totalorder 1, %s10
      %p194 = scmp.lt.s32.totalorder %s10, 9
      %p195 = pnand %p193, %p194
      %p196 = pneg %p195
      // Predicated region
      $region29: #{darknet53_forward.7} parent=5 // pred_check
        _
      $region30: #{darknet53_forward.7} parent=5 // pred_check_branch
        %198 = sbr.rel (%p195) target = $region32
      $region31: #{darknet53_forward.7} parent=5 // pred_region
        %s199 = ssub.s32 %s10, 1
        // Predicated region
        $region33: #{darknet53_forward.7} parent=31 // pred_check
          %p200 = pneg %p85
        $region34: #{darknet53_forward.7} parent=31 // pred_check_branch
          %202 = sbr.rel (%p200) target = $region36
        $region35: #{darknet53_forward.7} parent=31 // pred_region
          %203 = dma.done [#allocation4], 1024
        $region36: #{darknet53_forward.7} parent=31 // pred_fallthru
          _
        %s204 = smul.u32 32, %s20
        %p205 = scmp.lt.s32.totalorder %s204, 255
        %s206 = scalar_select %p205, %s204, 255
        %p207 = scmp.lt.s32.totalorder %s22, 0
        %s208 = scalar_select %p207, %s22, 0
        %s209 = sadd.s32 %s208, %s206
        %s210 = smul.addr %s209, 4
        %s211 = scalar_lea.vmem %s0, %s210
        %p212 = pneg %p57
        %p213 = pneg %p54
        %p214 = pneg %p85
        %p215 = pneg %p82
        %p216 = scmp.lt.s32.totalorder %s21, 0
        %s217 = scalar_select %p216, %s21, 0
        %s218 = scalar_lea.vmem %s2, %s217
        %p219 = pneg %p111
        %p220 = pneg %p108
        %p221 = pneg %p139
        %p222 = pneg %p136
        %s223 = smul.u32 32, %s20
        %p224 = scmp.lt.s32.totalorder %s223, 255
        %s225 = scalar_select %p224, %s223, 255
        %p226 = scmp.lt.s32.totalorder %s21, 0
        %s227 = scalar_select %p226, %s21, 0
        %s228 = sadd.s32 %s227, %s225
        %s229 = smul.addr %s228, 4
        %s230 = scalar_lea.vmem %s3, %s229
        %s231 = smul.u32 32, %s20
        %p232 = scmp.lt.s32.totalorder %s231, 255
        %s233 = scalar_select %p232, %s231, 255
        %p234 = scmp.lt.s32.totalorder %s22, 0
        %s235 = scalar_select %p234, %s22, 0
        %s236 = sadd.s32 %s235, %s233
        %s237 = smul.addr %s236, 4
        %s238 = scalar_lea.vmem %s0, %s237
        %s239 = smul.u32 32, %s20
        %s240 = smul.u32 16, %s22
        %p241 = scmp.lt.s32.totalorder %s21, 0
        %s242 = scalar_select %p241, %s21, 0
        %s243 = scalar_lea.vmem %s2, %s242
        %s244 = smul.u32 32, %s20
        %p245 = scmp.lt.s32.totalorder %s244, 255
        %s246 = scalar_select %p245, %s244, 255
        %p247 = scmp.lt.s32.totalorder %s21, 0
        %s248 = scalar_select %p247, %s21, 0
        %s249 = sadd.s32 %s248, %s246
        %s250 = smul.addr %s249, 4
        %s251 = scalar_lea.vmem %s3, %s250
        %s252 = smul.u32 32, %s20
        %p254 = scmp.eq.s32.totalorder %s22, 0
        // Predicated region
        $region37: #{darknet53_forward.7} parent=31 // pred_check
          %p255 = pneg %p254
        $region38: #{darknet53_forward.7} parent=31 // pred_check_branch
          %257 = sbr.rel (%p255) target = $region40
        $region39: #{darknet53_forward.7} parent=31 // pred_region
          %258 = vst [vmem:[#allocation2] sm:$0xff] 0.0
          %259 = vst [vmem:[#allocation2 + $0x8] sm:$0xff] 0.0
          %260 = vst [vmem:[#allocation2 + $0x10] sm:$0xff] 0.0
          %261 = vst [vmem:[#allocation2 + $0x18] sm:$0xff] 0.0
          %262 = vst [vmem:[#allocation2 + $0x20] sm:$0xff] 0.0
          %263 = vst [vmem:[#allocation2 + $0x28] sm:$0xff] 0.0
          %264 = vst [vmem:[#allocation2 + $0x30] sm:$0xff] 0.0
          %265 = vst [vmem:[#allocation2 + $0x38] sm:$0xff] 0.0
          %266 = vst [vmem:[#allocation2 + $0x40] sm:$0xff] 0.0
          %267 = vst [vmem:[#allocation2 + $0x48] sm:$0xff] 0.0
          %268 = vst [vmem:[#allocation2 + $0x50] sm:$0xff] 0.0
          %269 = vst [vmem:[#allocation2 + $0x58] sm:$0xff] 0.0
          %270 = vst [vmem:[#allocation2 + $0x60] sm:$0xff] 0.0
          %271 = vst [vmem:[#allocation2 + $0x68] sm:$0xff] 0.0
          %272 = vst [vmem:[#allocation2 + $0x70] sm:$0xff] 0.0
          %273 = vst [vmem:[#allocation2 + $0x78] sm:$0xff] 0.0
          %274 = vst [vmem:[#allocation2 + $0x80] sm:$0xff] 0.0
          %275 = vst [vmem:[#allocation2 + $0x88] sm:$0xff] 0.0
          %276 = vst [vmem:[#allocation2 + $0x90] sm:$0xff] 0.0
          %277 = vst [vmem:[#allocation2 + $0x98] sm:$0xff] 0.0
          %278 = vst [vmem:[#allocation2 + $0xa0] sm:$0xff] 0.0
          %279 = vst [vmem:[#allocation2 + $0xa8] sm:$0xff] 0.0
          %280 = vst [vmem:[#allocation2 + $0xb0] sm:$0xff] 0.0
          %281 = vst [vmem:[#allocation2 + $0xb8] sm:$0xff] 0.0
          %282 = vst [vmem:[#allocation2 + $0xc0] sm:$0xff] 0.0
          %283 = vst [vmem:[#allocation2 + $0xc8] sm:$0xff] 0.0
          %284 = vst [vmem:[#allocation2 + $0xd0] sm:$0xff] 0.0
          %285 = vst [vmem:[#allocation2 + $0xd8] sm:$0xff] 0.0
          %286 = vst [vmem:[#allocation2 + $0xe0] sm:$0xff] 0.0
          %287 = vst [vmem:[#allocation2 + $0xe8] sm:$0xff] 0.0
          %288 = vst [vmem:[#allocation2 + $0xf0] sm:$0xff] 0.0
          %289 = vst [vmem:[#allocation2 + $0xf8] sm:$0xff] 0.0
        $region40: #{darknet53_forward.7} parent=31 // pred_fallthru
          _
        %v290 = vld [vmem:[#allocation2] sm:$0xff]
        %v291 = vld [vmem:[#allocation2 + $0x8] sm:$0xff]
        %v292 = vld [vmem:[#allocation2 + $0x10] sm:$0xff]
        %v293 = vld [vmem:[#allocation2 + $0x18] sm:$0xff]
        %v294 = vld [vmem:[#allocation2 + $0x20] sm:$0xff]
        %v295 = vld [vmem:[#allocation2 + $0x28] sm:$0xff]
        %v296 = vld [vmem:[#allocation2 + $0x30] sm:$0xff]
        %v297 = vld [vmem:[#allocation2 + $0x38] sm:$0xff]
        %v298 = vld [vmem:[#allocation2 + $0x40] sm:$0xff]
        %v299 = vld [vmem:[#allocation2 + $0x48] sm:$0xff]
        %v300 = vld [vmem:[#allocation2 + $0x50] sm:$0xff]
        %v301 = vld [vmem:[#allocation2 + $0x58] sm:$0xff]
        %v302 = vld [vmem:[#allocation2 + $0x60] sm:$0xff]
        %v303 = vld [vmem:[#allocation2 + $0x68] sm:$0xff]
        %v304 = vld [vmem:[#allocation2 + $0x70] sm:$0xff]
        %v305 = vld [vmem:[#allocation2 + $0x78] sm:$0xff]
        %v306 = vld [vmem:[#allocation2 + $0x80] sm:$0xff]
        %v307 = vld [vmem:[#allocation2 + $0x88] sm:$0xff]
        %v308 = vld [vmem:[#allocation2 + $0x90] sm:$0xff]
        %v309 = vld [vmem:[#allocation2 + $0x98] sm:$0xff]
        %v310 = vld [vmem:[#allocation2 + $0xa0] sm:$0xff]
        %v311 = vld [vmem:[#allocation2 + $0xa8] sm:$0xff]
        %v312 = vld [vmem:[#allocation2 + $0xb0] sm:$0xff]
        %v313 = vld [vmem:[#allocation2 + $0xb8] sm:$0xff]
        %v314 = vld [vmem:[#allocation2 + $0xc0] sm:$0xff]
        %v315 = vld [vmem:[#allocation2 + $0xc8] sm:$0xff]
        %v316 = vld [vmem:[#allocation2 + $0xd0] sm:$0xff]
        %v317 = vld [vmem:[#allocation2 + $0xd8] sm:$0xff]
        %v318 = vld [vmem:[#allocation2 + $0xe0] sm:$0xff]
        %v319 = vld [vmem:[#allocation2 + $0xe8] sm:$0xff]
        %v320 = vld [vmem:[#allocation2 + $0xf0] sm:$0xff]
        %v321 = vld [vmem:[#allocation2 + $0xf8] sm:$0xff]
        %v322 = vld [vmem:[%s238] sm:$0xf]
        %v323 = vld [vmem:[%s238 + $0x4] sm:$0xf]
        %v324 = vld [vmem:[%s238 + $0x8] sm:$0xf]
        %v325 = vld [vmem:[%s238 + $0xc] sm:$0xf]
        %v326 = vld [vmem:[%s238 + $0x10] sm:$0xf]
        %v327 = vld [vmem:[%s238 + $0x14] sm:$0xf]
        %v328 = vld [vmem:[%s238 + $0x18] sm:$0xf]
        %v329 = vld [vmem:[%s238 + $0x1c] sm:$0xf]
        %v330 = vld [vmem:[%s238 + $0x20] sm:$0xf]
        %v331 = vld [vmem:[%s238 + $0x24] sm:$0xf]
        %v332 = vld [vmem:[%s238 + $0x28] sm:$0xf]
        %v333 = vld [vmem:[%s238 + $0x2c] sm:$0xf]
        %v334 = vld [vmem:[%s238 + $0x30] sm:$0xf]
        %v335 = vld [vmem:[%s238 + $0x34] sm:$0xf]
        %v336 = vld [vmem:[%s238 + $0x38] sm:$0xf]
        %v337 = vld [vmem:[%s238 + $0x3c] sm:$0xf]
        %v338 = vld [vmem:[%s238 + $0x40] sm:$0xf]
        %v339 = vld [vmem:[%s238 + $0x44] sm:$0xf]
        %v340 = vld [vmem:[%s238 + $0x48] sm:$0xf]
        %v341 = vld [vmem:[%s238 + $0x4c] sm:$0xf]
        %v342 = vld [vmem:[%s238 + $0x50] sm:$0xf]
        %v343 = vld [vmem:[%s238 + $0x54] sm:$0xf]
        %v344 = vld [vmem:[%s238 + $0x58] sm:$0xf]
        %v345 = vld [vmem:[%s238 + $0x5c] sm:$0xf]
        %v346 = vld [vmem:[%s238 + $0x60] sm:$0xf]
        %v347 = vld [vmem:[%s238 + $0x64] sm:$0xf]
        %v348 = vld [vmem:[%s238 + $0x68] sm:$0xf]
        %v349 = vld [vmem:[%s238 + $0x6c] sm:$0xf]
        %v350 = vld [vmem:[%s238 + $0x70] sm:$0xf]
        %v351 = vld [vmem:[%s238 + $0x74] sm:$0xf]
        %v352 = vld [vmem:[%s238 + $0x78] sm:$0xf]
        %v353 = vld [vmem:[%s238 + $0x7c] sm:$0xf]
        %v354 = vld [vmem:[#allocation3] sm:$0xf]
        %v355 = vld [vmem:[#allocation3 + $0x4] sm:$0xf]
        %v356 = vld [vmem:[#allocation3 + $0x8] sm:$0xf]
        %v357 = vld [vmem:[#allocation3 + $0xc] sm:$0xf]
        %v358 = vld [vmem:[#allocation3 + $0x10] sm:$0xf]
        %v359 = vld [vmem:[#allocation3 + $0x14] sm:$0xf]
        %v360 = vld [vmem:[#allocation3 + $0x18] sm:$0xf]
        %v361 = vld [vmem:[#allocation3 + $0x1c] sm:$0xf]
        %v362 = vld [vmem:[#allocation3 + $0x20] sm:$0xf]
        %v363 = vld [vmem:[#allocation3 + $0x24] sm:$0xf]
        %v364 = vld [vmem:[#allocation3 + $0x28] sm:$0xf]
        %v365 = vld [vmem:[#allocation3 + $0x2c] sm:$0xf]
        %v366 = vld [vmem:[#allocation3 + $0x30] sm:$0xf]
        %v367 = vld [vmem:[#allocation3 + $0x34] sm:$0xf]
        %v368 = vld [vmem:[#allocation3 + $0x38] sm:$0xf]
        %v369 = vld [vmem:[#allocation3 + $0x3c] sm:$0xf]
        %v402 = vunpack.c.l.b16 %v322
        %v403 = vunpack.c.l.b16 %v323
        %v404 = vunpack.c.l.b16 %v324
        %v405 = vunpack.c.l.b16 %v325
        %v406 = vunpack.c.l.b16 %v326
        %v407 = vunpack.c.l.b16 %v327
        %v408 = vunpack.c.l.b16 %v328
        %v409 = vunpack.c.l.b16 %v329
        %v410 = vunpack.c.l.b16 %v330
        %v411 = vunpack.c.l.b16 %v331
        %v412 = vunpack.c.l.b16 %v332
        %v413 = vunpack.c.l.b16 %v333
        %v414 = vunpack.c.l.b16 %v334
        %v415 = vunpack.c.l.b16 %v335
        %v416 = vunpack.c.l.b16 %v336
        %v417 = vunpack.c.l.b16 %v337
        %v418 = vunpack.c.l.b16 %v338
        %v419 = vunpack.c.l.b16 %v339
        %v420 = vunpack.c.l.b16 %v340
        %v421 = vunpack.c.l.b16 %v341
        %v422 = vunpack.c.l.b16 %v342
        %v423 = vunpack.c.l.b16 %v343
        %v424 = vunpack.c.l.b16 %v344
        %v425 = vunpack.c.l.b16 %v345
        %v426 = vunpack.c.l.b16 %v346
        %v427 = vunpack.c.l.b16 %v347
        %v428 = vunpack.c.l.b16 %v348
        %v429 = vunpack.c.l.b16 %v349
        %v430 = vunpack.c.l.b16 %v350
        %v431 = vunpack.c.l.b16 %v351
        %v432 = vunpack.c.l.b16 %v352
        %v433 = vunpack.c.l.b16 %v353
        %v434 = vpack.c.b16 %v403, %v402
        %v435 = vpack.c.b16 %v405, %v404
        %v436 = vpack.c.b16 %v407, %v406
        %v437 = vpack.c.b16 %v409, %v408
        %v438 = vpack.c.b16 %v411, %v410
        %v439 = vpack.c.b16 %v413, %v412
        %v440 = vpack.c.b16 %v415, %v414
        %v441 = vpack.c.b16 %v417, %v416
        %v442 = vpack.c.b16 %v419, %v418
        %v443 = vpack.c.b16 %v421, %v420
        %v444 = vpack.c.b16 %v423, %v422
        %v445 = vpack.c.b16 %v425, %v424
        %v446 = vpack.c.b16 %v427, %v426
        %v447 = vpack.c.b16 %v429, %v428
        %v448 = vpack.c.b16 %v431, %v430
        %v449 = vpack.c.b16 %v433, %v432
        %v482 = vunpack.c.l.b16 %v354
        %v483 = vunpack.c.l.b16 %v355
        %v484 = vunpack.c.l.b16 %v356
        %v485 = vunpack.c.l.b16 %v357
        %v486 = vunpack.c.l.b16 %v358
        %v487 = vunpack.c.l.b16 %v359
        %v488 = vunpack.c.l.b16 %v360
        %v489 = vunpack.c.l.b16 %v361
        %v490 = vunpack.c.l.b16 %v362
        %v491 = vunpack.c.l.b16 %v363
        %v492 = vunpack.c.l.b16 %v364
        %v493 = vunpack.c.l.b16 %v365
        %v494 = vunpack.c.l.b16 %v366
        %v495 = vunpack.c.l.b16 %v367
        %v496 = vunpack.c.l.b16 %v368
        %v497 = vunpack.c.l.b16 %v369
        %v498 = vpack.c.b16 %v483, %v482
        %v499 = vpack.c.b16 %v485, %v484
        %v500 = vpack.c.b16 %v487, %v486
        %v501 = vpack.c.b16 %v489, %v488
        %v502 = vpack.c.b16 %v491, %v490
        %v503 = vpack.c.b16 %v493, %v492
        %v504 = vpack.c.b16 %v495, %v494
        %v505 = vpack.c.b16 %v497, %v496
        %514 = vmatprep.subr.bf16.mxu0 0
        %515 = vmatpush1.bf16.msra.mxu0 %v505
        %516 = vmatprep.subr.bf16.mxu0 0
        %517 = vmatpush1.bf16.msra.mxu0 %v504
        %518 = vmatprep.subr.bf16.mxu0 0
        %519 = vmatpush1.bf16.msra.mxu0 %v503
        %520 = vmatprep.subr.bf16.mxu0 0
        %521 = vmatpush1.bf16.msra.mxu0 %v502
        %522 = vmatprep.subr.bf16.mxu0 0
        %523 = vmatpush1.bf16.msra.mxu0 %v501
        %524 = vmatprep.subr.bf16.mxu0 0
        %525 = vmatpush1.bf16.msra.mxu0 %v500
        %526 = vmatprep.subr.bf16.mxu0 0
        %527 = vmatpush1.bf16.msra.mxu0 %v499
        %528 = vmatprep.subr.bf16.mxu0 0
        %529 = vmatpush1.bf16.msra.mxu0 %v498
        %530 = vmatprep.subr.bf16.mxu0 0
        %531 = vmatpush2.bf16.msra.mxu0 0
        %532 = vmatprep.subr.bf16.mxu0 0
        %533 = vmatpush2.bf16.msra.mxu0 0
        %534 = vmatprep.subr.bf16.mxu0 0
        %535 = vmatpush2.bf16.msra.mxu0 0
        %536 = vmatprep.subr.bf16.mxu0 0
        %537 = vmatpush2.bf16.msra.mxu0 0
        %538 = vmatprep.subr.bf16.mxu0 0
        %539 = vmatpush2.bf16.msra.mxu0 0
        %540 = vmatprep.subr.bf16.mxu0 0
        %541 = vmatpush2.bf16.msra.mxu0 0
        %542 = vmatprep.subr.bf16.mxu0 0
        %543 = vmatpush2.bf16.msra.mxu0 0
        %544 = vmatprep.subr.bf16.mxu0 0
        %545 = vmatpush2.bf16.msra.mxu0 0
        %546 = vmatprep.mubr.bf16.mxu0 0
        %547 = vmatmul.mubr.bf16.gmra.mxu0 %v434
        %v548 = vpop.f32.mrf.mxu0
        %v549 = vadd.f32 0.0, %v548
        %v550 = vpop.f32.mrf.mxu0
        %v551 = vpop.f32.mrf.mxu0
        %v552 = vadd.f32 0.0, %v551
        %v553 = vpop.f32.mrf.mxu0
        %554 = vmatprep.mubr.bf16.mxu0 0
        %555 = vmatmul.mubr.bf16.gmra.mxu0 %v435
        %v556 = vpop.f32.mrf.mxu0
        %v557 = vadd.f32 0.0, %v556
        %v558 = vpop.f32.mrf.mxu0
        %v559 = vpop.f32.mrf.mxu0
        %v560 = vadd.f32 0.0, %v559
        %v561 = vpop.f32.mrf.mxu0
        %562 = vmatprep.mubr.bf16.mxu0 0
        %563 = vmatmul.mubr.bf16.gmra.mxu0 %v436
        %v564 = vpop.f32.mrf.mxu0
        %v565 = vadd.f32 0.0, %v564
        %v566 = vpop.f32.mrf.mxu0
        %v567 = vpop.f32.mrf.mxu0
        %v568 = vadd.f32 0.0, %v567
        %v569 = vpop.f32.mrf.mxu0
        %570 = vmatprep.mubr.bf16.mxu0 0
        %571 = vmatmul.mubr.bf16.gmra.mxu0 %v437
        %v572 = vpop.f32.mrf.mxu0
        %v573 = vadd.f32 0.0, %v572
        %v574 = vpop.f32.mrf.mxu0
        %v575 = vpop.f32.mrf.mxu0
        %v576 = vadd.f32 0.0, %v575
        %v577 = vpop.f32.mrf.mxu0
        %578 = vmatprep.mubr.bf16.mxu0 0
        %579 = vmatmul.mubr.bf16.gmra.mxu0 %v438
        %v580 = vpop.f32.mrf.mxu0
        %v581 = vadd.f32 0.0, %v580
        %v582 = vpop.f32.mrf.mxu0
        %v583 = vpop.f32.mrf.mxu0
        %v584 = vadd.f32 0.0, %v583
        %v585 = vpop.f32.mrf.mxu0
        %586 = vmatprep.mubr.bf16.mxu0 0
        %587 = vmatmul.mubr.bf16.gmra.mxu0 %v439
        %v588 = vpop.f32.mrf.mxu0
        %v589 = vadd.f32 0.0, %v588
        %v590 = vpop.f32.mrf.mxu0
        %v591 = vpop.f32.mrf.mxu0
        %v592 = vadd.f32 0.0, %v591
        %v593 = vpop.f32.mrf.mxu0
        %594 = vmatprep.mubr.bf16.mxu0 0
        %595 = vmatmul.mubr.bf16.gmra.mxu0 %v440
        %v596 = vpop.f32.mrf.mxu0
        %v597 = vadd.f32 0.0, %v596
        %v598 = vpop.f32.mrf.mxu0
        %v599 = vpop.f32.mrf.mxu0
        %v600 = vadd.f32 0.0, %v599
        %v601 = vpop.f32.mrf.mxu0
        %602 = vmatprep.mubr.bf16.mxu0 0
        %603 = vmatmul.mubr.bf16.gmra.mxu0 %v441
        %v604 = vpop.f32.mrf.mxu0
        %v605 = vadd.f32 0.0, %v604
        %v606 = vpop.f32.mrf.mxu0
        %v607 = vpop.f32.mrf.mxu0
        %v608 = vadd.f32 0.0, %v607
        %v609 = vpop.f32.mrf.mxu0
        %610 = vmatprep.mubr.bf16.mxu0 0
        %611 = vmatmul.mubr.bf16.gmra.mxu0 %v442
        %v612 = vpop.f32.mrf.mxu0
        %v613 = vadd.f32 0.0, %v612
        %v614 = vpop.f32.mrf.mxu0
        %v615 = vpop.f32.mrf.mxu0
        %v616 = vadd.f32 0.0, %v615
        %v617 = vpop.f32.mrf.mxu0
        %618 = vmatprep.mubr.bf16.mxu0 0
        %619 = vmatmul.mubr.bf16.gmra.mxu0 %v443
        %v620 = vpop.f32.mrf.mxu0
        %v621 = vadd.f32 0.0, %v620
        %v622 = vpop.f32.mrf.mxu0
        %v623 = vpop.f32.mrf.mxu0
        %v624 = vadd.f32 0.0, %v623
        %v625 = vpop.f32.mrf.mxu0
        %626 = vmatprep.mubr.bf16.mxu0 0
        %627 = vmatmul.mubr.bf16.gmra.mxu0 %v444
        %v628 = vpop.f32.mrf.mxu0
        %v629 = vadd.f32 0.0, %v628
        %v630 = vpop.f32.mrf.mxu0
        %v631 = vpop.f32.mrf.mxu0
        %v632 = vadd.f32 0.0, %v631
        %v633 = vpop.f32.mrf.mxu0
        %634 = vmatprep.mubr.bf16.mxu0 0
        %635 = vmatmul.mubr.bf16.gmra.mxu0 %v445
        %v636 = vpop.f32.mrf.mxu0
        %v637 = vadd.f32 0.0, %v636
        %v638 = vpop.f32.mrf.mxu0
        %v639 = vpop.f32.mrf.mxu0
        %v640 = vadd.f32 0.0, %v639
        %v641 = vpop.f32.mrf.mxu0
        %642 = vmatprep.mubr.bf16.mxu0 0
        %643 = vmatmul.mubr.bf16.gmra.mxu0 %v446
        %v644 = vpop.f32.mrf.mxu0
        %v645 = vadd.f32 0.0, %v644
        %v646 = vpop.f32.mrf.mxu0
        %v647 = vpop.f32.mrf.mxu0
        %v648 = vadd.f32 0.0, %v647
        %v649 = vpop.f32.mrf.mxu0
        %650 = vmatprep.mubr.bf16.mxu0 0
        %651 = vmatmul.mubr.bf16.gmra.mxu0 %v447
        %v652 = vpop.f32.mrf.mxu0
        %v653 = vadd.f32 0.0, %v652
        %v654 = vpop.f32.mrf.mxu0
        %v655 = vpop.f32.mrf.mxu0
        %v656 = vadd.f32 0.0, %v655
        %v657 = vpop.f32.mrf.mxu0
        %658 = vmatprep.mubr.bf16.mxu0 0
        %659 = vmatmul.mubr.bf16.gmra.mxu0 %v448
        %v660 = vpop.f32.mrf.mxu0
        %v661 = vadd.f32 0.0, %v660
        %v662 = vpop.f32.mrf.mxu0
        %v663 = vpop.f32.mrf.mxu0
        %v664 = vadd.f32 0.0, %v663
        %v665 = vpop.f32.mrf.mxu0
        %666 = vmatprep.mubr.bf16.mxu0 0
        %667 = vmatmul.mubr.bf16.gmra.mxu0 %v449
        %v668 = vpop.f32.mrf.mxu0
        %v669 = vadd.f32 0.0, %v668
        %v670 = vpop.f32.mrf.mxu0
        %v671 = vpop.f32.mrf.mxu0
        %v672 = vadd.f32 0.0, %v671
        %v673 = vpop.f32.mrf.mxu0
        %674 = vdwg.mxu0
        %v675 = vadd.f32 %v290, %v549
        %v676 = vadd.f32 %v291, %v552
        %v677 = vadd.f32 %v292, %v557
        %v678 = vadd.f32 %v293, %v560
        %v679 = vadd.f32 %v294, %v565
        %v680 = vadd.f32 %v295, %v568
        %v681 = vadd.f32 %v296, %v573
        %v682 = vadd.f32 %v297, %v576
        %v683 = vadd.f32 %v298, %v581
        %v684 = vadd.f32 %v299, %v584
        %v685 = vadd.f32 %v300, %v589
        %v686 = vadd.f32 %v301, %v592
        %v687 = vadd.f32 %v302, %v597
        %v688 = vadd.f32 %v303, %v600
        %v689 = vadd.f32 %v304, %v605
        %v690 = vadd.f32 %v305, %v608
        %v691 = vadd.f32 %v306, %v613
        %v692 = vadd.f32 %v307, %v616
        %v693 = vadd.f32 %v308, %v621
        %v694 = vadd.f32 %v309, %v624
        %v695 = vadd.f32 %v310, %v629
        %v696 = vadd.f32 %v311, %v632
        %v697 = vadd.f32 %v312, %v637
        %v698 = vadd.f32 %v313, %v640
        %v699 = vadd.f32 %v314, %v645
        %v700 = vadd.f32 %v315, %v648
        %v701 = vadd.f32 %v316, %v653
        %v702 = vadd.f32 %v317, %v656
        %v703 = vadd.f32 %v318, %v661
        %v704 = vadd.f32 %v319, %v664
        %v705 = vadd.f32 %v320, %v669
        %v706 = vadd.f32 %v321, %v672
        %707 = vst [vmem:[#allocation2] sm:$0xff] %v675
        %708 = vst [vmem:[#allocation2 + $0x8] sm:$0xff] %v676
        %709 = vst [vmem:[#allocation2 + $0x10] sm:$0xff] %v677
        %710 = vst [vmem:[#allocation2 + $0x18] sm:$0xff] %v678
        %711 = vst [vmem:[#allocation2 + $0x20] sm:$0xff] %v679
        %712 = vst [vmem:[#allocation2 + $0x28] sm:$0xff] %v680
        %713 = vst [vmem:[#allocation2 + $0x30] sm:$0xff] %v681
        %714 = vst [vmem:[#allocation2 + $0x38] sm:$0xff] %v682
        %715 = vst [vmem:[#allocation2 + $0x40] sm:$0xff] %v683
        %716 = vst [vmem:[#allocation2 + $0x48] sm:$0xff] %v684
        %717 = vst [vmem:[#allocation2 + $0x50] sm:$0xff] %v685
        %718 = vst [vmem:[#allocation2 + $0x58] sm:$0xff] %v686
        %719 = vst [vmem:[#allocation2 + $0x60] sm:$0xff] %v687
        %720 = vst [vmem:[#allocation2 + $0x68] sm:$0xff] %v688
        %721 = vst [vmem:[#allocation2 + $0x70] sm:$0xff] %v689
        %722 = vst [vmem:[#allocation2 + $0x78] sm:$0xff] %v690
        %723 = vst [vmem:[#allocation2 + $0x80] sm:$0xff] %v691
        %724 = vst [vmem:[#allocation2 + $0x88] sm:$0xff] %v692
        %725 = vst [vmem:[#allocation2 + $0x90] sm:$0xff] %v693
        %726 = vst [vmem:[#allocation2 + $0x98] sm:$0xff] %v694
        %727 = vst [vmem:[#allocation2 + $0xa0] sm:$0xff] %v695
        %728 = vst [vmem:[#allocation2 + $0xa8] sm:$0xff] %v696
        %729 = vst [vmem:[#allocation2 + $0xb0] sm:$0xff] %v697
        %730 = vst [vmem:[#allocation2 + $0xb8] sm:$0xff] %v698
        %731 = vst [vmem:[#allocation2 + $0xc0] sm:$0xff] %v699
        %732 = vst [vmem:[#allocation2 + $0xc8] sm:$0xff] %v700
        %733 = vst [vmem:[#allocation2 + $0xd0] sm:$0xff] %v701
        %734 = vst [vmem:[#allocation2 + $0xd8] sm:$0xff] %v702
        %735 = vst [vmem:[#allocation2 + $0xe0] sm:$0xff] %v703
        %736 = vst [vmem:[#allocation2 + $0xe8] sm:$0xff] %v704
        %737 = vst [vmem:[#allocation2 + $0xf0] sm:$0xff] %v705
        %738 = vst [vmem:[#allocation2 + $0xf8] sm:$0xff] %v706
        // Predicated region
        $region41: #{darknet53_forward.7} parent=31 // pred_check
          %p739 = pneg %p254
        $region42: #{darknet53_forward.7} parent=31 // pred_check_branch
          %741 = sbr.rel (%p739) target = $region44
        $region43: #{darknet53_forward.7} parent=31 // pred_region
          %v742 = vld [vmem:[#allocation2] sm:$0xff]
          %v743 = vld [vmem:[#allocation2 + $0x8] sm:$0xff]
          %v744 = vld [vmem:[#allocation2 + $0x10] sm:$0xff]
          %v745 = vld [vmem:[#allocation2 + $0x18] sm:$0xff]
          %v746 = vld [vmem:[#allocation2 + $0x20] sm:$0xff]
          %v747 = vld [vmem:[#allocation2 + $0x28] sm:$0xff]
          %v748 = vld [vmem:[#allocation2 + $0x30] sm:$0xff]
          %v749 = vld [vmem:[#allocation2 + $0x38] sm:$0xff]
          %v750 = vld [vmem:[#allocation2 + $0x40] sm:$0xff]
          %v751 = vld [vmem:[#allocation2 + $0x48] sm:$0xff]
          %v752 = vld [vmem:[#allocation2 + $0x50] sm:$0xff]
          %v753 = vld [vmem:[#allocation2 + $0x58] sm:$0xff]
          %v754 = vld [vmem:[#allocation2 + $0x60] sm:$0xff]
          %v755 = vld [vmem:[#allocation2 + $0x68] sm:$0xff]
          %v756 = vld [vmem:[#allocation2 + $0x70] sm:$0xff]
          %v757 = vld [vmem:[#allocation2 + $0x78] sm:$0xff]
          %v758 = vld [vmem:[#allocation2 + $0x80] sm:$0xff]
          %v759 = vld [vmem:[#allocation2 + $0x88] sm:$0xff]
          %v760 = vld [vmem:[#allocation2 + $0x90] sm:$0xff]
          %v761 = vld [vmem:[#allocation2 + $0x98] sm:$0xff]
          %v762 = vld [vmem:[#allocation2 + $0xa0] sm:$0xff]
          %v763 = vld [vmem:[#allocation2 + $0xa8] sm:$0xff]
          %v764 = vld [vmem:[#allocation2 + $0xb0] sm:$0xff]
          %v765 = vld [vmem:[#allocation2 + $0xb8] sm:$0xff]
          %v766 = vld [vmem:[#allocation2 + $0xc0] sm:$0xff]
          %v767 = vld [vmem:[#allocation2 + $0xc8] sm:$0xff]
          %v768 = vld [vmem:[#allocation2 + $0xd0] sm:$0xff]
          %v769 = vld [vmem:[#allocation2 + $0xd8] sm:$0xff]
          %v770 = vld [vmem:[#allocation2 + $0xe0] sm:$0xff]
          %v771 = vld [vmem:[#allocation2 + $0xe8] sm:$0xff]
          %v772 = vld [vmem:[#allocation2 + $0xf0] sm:$0xff]
          %v773 = vld [vmem:[#allocation2 + $0xf8] sm:$0xff]
          %v774 = vld [vmem:[%s243] sm:$0x1]
          %v776 = vlaneseq
          %v777 = vshrl.u32 %v776, 7
          %v778 = vsub.s32 0, %v777
          %v779 = vrot.slane %v774, %v778
          %v781 = vadd.f32 %v742, %v779
          %v782 = vadd.f32 %v743, %v779
          %v783 = vadd.f32 %v744, %v779
          %v784 = vadd.f32 %v745, %v779
          %v785 = vadd.f32 %v746, %v779
          %v786 = vadd.f32 %v747, %v779
          %v787 = vadd.f32 %v748, %v779
          %v788 = vadd.f32 %v749, %v779
          %v789 = vadd.f32 %v750, %v779
          %v790 = vadd.f32 %v751, %v779
          %v791 = vadd.f32 %v752, %v779
          %v792 = vadd.f32 %v753, %v779
          %v793 = vadd.f32 %v754, %v779
          %v794 = vadd.f32 %v755, %v779
          %v795 = vadd.f32 %v756, %v779
          %v796 = vadd.f32 %v757, %v779
          %v797 = vadd.f32 %v758, %v779
          %v798 = vadd.f32 %v759, %v779
          %v799 = vadd.f32 %v760, %v779
          %v800 = vadd.f32 %v761, %v779
          %v801 = vadd.f32 %v762, %v779
          %v802 = vadd.f32 %v763, %v779
          %v803 = vadd.f32 %v764, %v779
          %v804 = vadd.f32 %v765, %v779
          %v805 = vadd.f32 %v766, %v779
          %v806 = vadd.f32 %v767, %v779
          %v807 = vadd.f32 %v768, %v779
          %v808 = vadd.f32 %v769, %v779
          %v809 = vadd.f32 %v770, %v779
          %v810 = vadd.f32 %v771, %v779
          %v811 = vadd.f32 %v772, %v779
          %v812 = vadd.f32 %v773, %v779
          %vm813 = vcmp.ge.f32.partialorder %v781, 0.0
          %vm814 = vcmp.ge.f32.partialorder %v782, 0.0
          %vm815 = vcmp.ge.f32.partialorder %v783, 0.0
          %vm816 = vcmp.ge.f32.partialorder %v784, 0.0
          %vm817 = vcmp.ge.f32.partialorder %v785, 0.0
          %vm818 = vcmp.ge.f32.partialorder %v786, 0.0
          %vm819 = vcmp.ge.f32.partialorder %v787, 0.0
          %vm820 = vcmp.ge.f32.partialorder %v788, 0.0
          %vm821 = vcmp.ge.f32.partialorder %v789, 0.0
          %vm822 = vcmp.ge.f32.partialorder %v790, 0.0
          %vm823 = vcmp.ge.f32.partialorder %v791, 0.0
          %vm824 = vcmp.ge.f32.partialorder %v792, 0.0
          %vm825 = vcmp.ge.f32.partialorder %v793, 0.0
          %vm826 = vcmp.ge.f32.partialorder %v794, 0.0
          %vm827 = vcmp.ge.f32.partialorder %v795, 0.0
          %vm828 = vcmp.ge.f32.partialorder %v796, 0.0
          %vm829 = vcmp.ge.f32.partialorder %v797, 0.0
          %vm830 = vcmp.ge.f32.partialorder %v798, 0.0
          %vm831 = vcmp.ge.f32.partialorder %v799, 0.0
          %vm832 = vcmp.ge.f32.partialorder %v800, 0.0
          %vm833 = vcmp.ge.f32.partialorder %v801, 0.0
          %vm834 = vcmp.ge.f32.partialorder %v802, 0.0
          %vm835 = vcmp.ge.f32.partialorder %v803, 0.0
          %vm836 = vcmp.ge.f32.partialorder %v804, 0.0
          %vm837 = vcmp.ge.f32.partialorder %v805, 0.0
          %vm838 = vcmp.ge.f32.partialorder %v806, 0.0
          %vm839 = vcmp.ge.f32.partialorder %v807, 0.0
          %vm840 = vcmp.ge.f32.partialorder %v808, 0.0
          %vm841 = vcmp.ge.f32.partialorder %v809, 0.0
          %vm842 = vcmp.ge.f32.partialorder %v810, 0.0
          %vm843 = vcmp.ge.f32.partialorder %v811, 0.0
          %vm844 = vcmp.ge.f32.partialorder %v812, 0.0
          %v845 = vmul.f32 %v781, 0.1
          %v846 = vmul.f32 %v782, 0.1
          %v847 = vmul.f32 %v783, 0.1
          %v848 = vmul.f32 %v784, 0.1
          %v849 = vmul.f32 %v785, 0.1
          %v850 = vmul.f32 %v786, 0.1
          %v851 = vmul.f32 %v787, 0.1
          %v852 = vmul.f32 %v788, 0.1
          %v853 = vmul.f32 %v789, 0.1
          %v854 = vmul.f32 %v790, 0.1
          %v855 = vmul.f32 %v791, 0.1
          %v856 = vmul.f32 %v792, 0.1
          %v857 = vmul.f32 %v793, 0.1
          %v858 = vmul.f32 %v794, 0.1
          %v859 = vmul.f32 %v795, 0.1
          %v860 = vmul.f32 %v796, 0.1
          %v861 = vmul.f32 %v797, 0.1
          %v862 = vmul.f32 %v798, 0.1
          %v863 = vmul.f32 %v799, 0.1
          %v864 = vmul.f32 %v800, 0.1
          %v865 = vmul.f32 %v801, 0.1
          %v866 = vmul.f32 %v802, 0.1
          %v867 = vmul.f32 %v803, 0.1
          %v868 = vmul.f32 %v804, 0.1
          %v869 = vmul.f32 %v805, 0.1
          %v870 = vmul.f32 %v806, 0.1
          %v871 = vmul.f32 %v807, 0.1
          %v872 = vmul.f32 %v808, 0.1
          %v873 = vmul.f32 %v809, 0.1
          %v874 = vmul.f32 %v810, 0.1
          %v875 = vmul.f32 %v811, 0.1
          %v876 = vmul.f32 %v812, 0.1
          %v877 = vsel %vm813, %v781, %v845
          %v878 = vsel %vm814, %v782, %v846
          %v879 = vsel %vm815, %v783, %v847
          %v880 = vsel %vm816, %v784, %v848
          %v881 = vsel %vm817, %v785, %v849
          %v882 = vsel %vm818, %v786, %v850
          %v883 = vsel %vm819, %v787, %v851
          %v884 = vsel %vm820, %v788, %v852
          %v885 = vsel %vm821, %v789, %v853
          %v886 = vsel %vm822, %v790, %v854
          %v887 = vsel %vm823, %v791, %v855
          %v888 = vsel %vm824, %v792, %v856
          %v889 = vsel %vm825, %v793, %v857
          %v890 = vsel %vm826, %v794, %v858
          %v891 = vsel %vm827, %v795, %v859
          %v892 = vsel %vm828, %v796, %v860
          %v893 = vsel %vm829, %v797, %v861
          %v894 = vsel %vm830, %v798, %v862
          %v895 = vsel %vm831, %v799, %v863
          %v896 = vsel %vm832, %v800, %v864
          %v897 = vsel %vm833, %v801, %v865
          %v898 = vsel %vm834, %v802, %v866
          %v899 = vsel %vm835, %v803, %v867
          %v900 = vsel %vm836, %v804, %v868
          %v901 = vsel %vm837, %v805, %v869
          %v902 = vsel %vm838, %v806, %v870
          %v903 = vsel %vm839, %v807, %v871
          %v904 = vsel %vm840, %v808, %v872
          %v905 = vsel %vm841, %v809, %v873
          %v906 = vsel %vm842, %v810, %v874
          %v907 = vsel %vm843, %v811, %v875
          %v908 = vsel %vm844, %v812, %v876
          %v909 = vpack.c.bf16 %v878, %v877
          %v910 = vpack.c.bf16 %v880, %v879
          %v911 = vpack.c.bf16 %v882, %v881
          %v912 = vpack.c.bf16 %v884, %v883
          %v913 = vpack.c.bf16 %v886, %v885
          %v914 = vpack.c.bf16 %v888, %v887
          %v915 = vpack.c.bf16 %v890, %v889
          %v916 = vpack.c.bf16 %v892, %v891
          %v917 = vpack.c.bf16 %v894, %v893
          %v918 = vpack.c.bf16 %v896, %v895
          %v919 = vpack.c.bf16 %v898, %v897
          %v920 = vpack.c.bf16 %v900, %v899
          %v921 = vpack.c.bf16 %v902, %v901
          %v922 = vpack.c.bf16 %v904, %v903
          %v923 = vpack.c.bf16 %v906, %v905
          %v924 = vpack.c.bf16 %v908, %v907
          %v941 = vunpack.c.l.b16 %v909
          %v942 = vunpack.c.h.b16 %v909
          %v943 = vunpack.c.l.b16 %v910
          %v944 = vunpack.c.h.b16 %v910
          %v945 = vunpack.c.l.b16 %v911
          %v946 = vunpack.c.h.b16 %v911
          %v947 = vunpack.c.l.b16 %v912
          %v948 = vunpack.c.h.b16 %v912
          %v949 = vunpack.c.l.b16 %v913
          %v950 = vunpack.c.h.b16 %v913
          %v951 = vunpack.c.l.b16 %v914
          %v952 = vunpack.c.h.b16 %v914
          %v953 = vunpack.c.l.b16 %v915
          %v954 = vunpack.c.h.b16 %v915
          %v955 = vunpack.c.l.b16 %v916
          %v956 = vunpack.c.h.b16 %v916
          %v957 = vunpack.c.l.b16 %v917
          %v958 = vunpack.c.h.b16 %v917
          %v959 = vunpack.c.l.b16 %v918
          %v960 = vunpack.c.h.b16 %v918
          %v961 = vunpack.c.l.b16 %v919
          %v962 = vunpack.c.h.b16 %v919
          %v963 = vunpack.c.l.b16 %v920
          %v964 = vunpack.c.h.b16 %v920
          %v965 = vunpack.c.l.b16 %v921
          %v966 = vunpack.c.h.b16 %v921
          %v967 = vunpack.c.l.b16 %v922
          %v968 = vunpack.c.h.b16 %v922
          %v969 = vunpack.c.l.b16 %v923
          %v970 = vunpack.c.h.b16 %v923
          %v971 = vunpack.c.l.b16 %v924
          %v972 = vunpack.c.h.b16 %v924
          %v973 = vpack.c.b16 %v941, %v941
          %v974 = vpack.c.b16 %v942, %v942
          %v975 = vpack.c.b16 %v943, %v943
          %v976 = vpack.c.b16 %v944, %v944
          %v977 = vpack.c.b16 %v945, %v945
          %v978 = vpack.c.b16 %v946, %v946
          %v979 = vpack.c.b16 %v947, %v947
          %v980 = vpack.c.b16 %v948, %v948
          %v981 = vpack.c.b16 %v949, %v949
          %v982 = vpack.c.b16 %v950, %v950
          %v983 = vpack.c.b16 %v951, %v951
          %v984 = vpack.c.b16 %v952, %v952
          %v985 = vpack.c.b16 %v953, %v953
          %v986 = vpack.c.b16 %v954, %v954
          %v987 = vpack.c.b16 %v955, %v955
          %v988 = vpack.c.b16 %v956, %v956
          %v989 = vpack.c.b16 %v957, %v957
          %v990 = vpack.c.b16 %v958, %v958
          %v991 = vpack.c.b16 %v959, %v959
          %v992 = vpack.c.b16 %v960, %v960
          %v993 = vpack.c.b16 %v961, %v961
          %v994 = vpack.c.b16 %v962, %v962
          %v995 = vpack.c.b16 %v963, %v963
          %v996 = vpack.c.b16 %v964, %v964
          %v997 = vpack.c.b16 %v965, %v965
          %v998 = vpack.c.b16 %v966, %v966
          %v999 = vpack.c.b16 %v967, %v967
          %v1000 = vpack.c.b16 %v968, %v968
          %v1001 = vpack.c.b16 %v969, %v969
          %v1002 = vpack.c.b16 %v970, %v970
          %v1003 = vpack.c.b16 %v971, %v971
          %v1004 = vpack.c.b16 %v972, %v972
          %1037 = vst [vmem:[%s251] sm:$0xf] %v973
          %1038 = vst [vmem:[%s251 + $0x4] sm:$0xf] %v974
          %1039 = vst [vmem:[%s251 + $0x8] sm:$0xf] %v975
          %1040 = vst [vmem:[%s251 + $0xc] sm:$0xf] %v976
          %1041 = vst [vmem:[%s251 + $0x10] sm:$0xf] %v977
          %1042 = vst [vmem:[%s251 + $0x14] sm:$0xf] %v978
          %1043 = vst [vmem:[%s251 + $0x18] sm:$0xf] %v979
          %1044 = vst [vmem:[%s251 + $0x1c] sm:$0xf] %v980
          %1045 = vst [vmem:[%s251 + $0x20] sm:$0xf] %v981
          %1046 = vst [vmem:[%s251 + $0x24] sm:$0xf] %v982
          %1047 = vst [vmem:[%s251 + $0x28] sm:$0xf] %v983
          %1048 = vst [vmem:[%s251 + $0x2c] sm:$0xf] %v984
          %1049 = vst [vmem:[%s251 + $0x30] sm:$0xf] %v985
          %1050 = vst [vmem:[%s251 + $0x34] sm:$0xf] %v986
          %1051 = vst [vmem:[%s251 + $0x38] sm:$0xf] %v987
          %1052 = vst [vmem:[%s251 + $0x3c] sm:$0xf] %v988
          %1053 = vst [vmem:[%s251 + $0x40] sm:$0xf] %v989
          %1054 = vst [vmem:[%s251 + $0x44] sm:$0xf] %v990
          %1055 = vst [vmem:[%s251 + $0x48] sm:$0xf] %v991
          %1056 = vst [vmem:[%s251 + $0x4c] sm:$0xf] %v992
          %1057 = vst [vmem:[%s251 + $0x50] sm:$0xf] %v993
          %1058 = vst [vmem:[%s251 + $0x54] sm:$0xf] %v994
          %1059 = vst [vmem:[%s251 + $0x58] sm:$0xf] %v995
          %1060 = vst [vmem:[%s251 + $0x5c] sm:$0xf] %v996
          %1061 = vst [vmem:[%s251 + $0x60] sm:$0xf] %v997
          %1062 = vst [vmem:[%s251 + $0x64] sm:$0xf] %v998
          %1063 = vst [vmem:[%s251 + $0x68] sm:$0xf] %v999
          %1064 = vst [vmem:[%s251 + $0x6c] sm:$0xf] %v1000
          %1065 = vst [vmem:[%s251 + $0x70] sm:$0xf] %v1001
          %1066 = vst [vmem:[%s251 + $0x74] sm:$0xf] %v1002
          %1067 = vst [vmem:[%s251 + $0x78] sm:$0xf] %v1003
          %1068 = vst [vmem:[%s251 + $0x7c] sm:$0xf] %v1004
        $region44: #{darknet53_forward.7} parent=31 // pred_fallthru
          _
        %s1069 = smul.u32 32, %s20
        %p1070 = scmp.lt.s32.totalorder %s1069, 255
        %s1071 = scalar_select %p1070, %s1069, 255
        %p1072 = scmp.lt.s32.totalorder %s21, 0
        %s1073 = scalar_select %p1072, %s21, 0
        %s1074 = sadd.s32 %s1073, %s1071
        %s1075 = smul.addr %s1074, 4
        %s1076 = scalar_lea.vmem %s3, %s1075
        // Predicated region
        $region45: #{darknet53_forward.7} parent=31 // pred_check
          %p1077 = pneg %p136
        $region46: #{darknet53_forward.7} parent=31 // pred_check_branch
          %1079 = sbr.rel (%p1077) target = $region48
        $region47: #{darknet53_forward.7} parent=31 // pred_region
          %s1080 = smul.u32 32, %s20
        $region48: #{darknet53_forward.7} parent=31 // pred_fallthru
          _
      $region32: #{darknet53_forward.7} parent=5 // pred_fallthru
        _
      %p1081 = scmp.le.s32.totalorder 2, %s10
      // Predicated region
      $region49: #{darknet53_forward.7} parent=5 // pred_check
        %p1082 = pneg %p1081
      $region50: #{darknet53_forward.7} parent=5 // pred_check_branch
        %1084 = sbr.rel (%p1082) target = $region52
      $region51: #{darknet53_forward.7} parent=5 // pred_region
        %s1085 = ssub.s32 %s10, 2
        // Predicated region
        $region53: #{darknet53_forward.7} parent=51 // pred_check
          %p1086 = pneg %p142
        $region54: #{darknet53_forward.7} parent=51 // pred_check_branch
          %1088 = sbr.rel (%p1086) target = $region56
        $region55: #{darknet53_forward.7} parent=51 // pred_region
          %s1089 = smul.u32 32, %s23
          %p1090 = scmp.lt.s32.totalorder %s1089, 255
          %s1091 = scalar_select %p1090, %s1089, 255
          %p1092 = scmp.lt.s32.totalorder %s24, 0
          %s1093 = scalar_select %p1092, %s24, 0
          %s1094 = sadd.s32 %s1093, %s1091
          %s1095 = smul.addr %s1094, 4
          %s1096 = scalar_lea.vmem %s3, %s1095
        $region56: #{darknet53_forward.7} parent=51 // pred_fallthru
          _
      $region52: #{darknet53_forward.7} parent=5 // pred_fallthru
        _
    $region6: #{darknet53_forward.7} parent=1 // loop_footer
      %s14 = sadd.s32 1, %s10
    $region7: #{darknet53_forward.7} parent=1 // loop_footer_branch
      %9 = sbr.rel target = $region3
    $region8: #{darknet53_forward.7} parent=1 // loop_exit
      _
    %1097 = vsyncpa [#allocation4], 1
    %s1098 = scalar_lea.sflag [#allocation4], 1
    %1099 = vsyncpa %s1098, 1

// kernel: darknet53_forward.9
$region0: #{darknet53_forward.9}
  #allocation0 [shape = 'u32[]', space=smem, size = 0x4, offset = 0x4, fixed_abs, tag = 'smem constant byte address 0x4 - core index']
  #allocation1 [shape = 'u32[144,128]{1,0:T(1,128)}', space=vmem, size = 0x12000, scoped, tag = 'internal scratch']
  #allocation2 [shape = 'f32[256,128]{1,0:T(8,128)}', space=vmem, size = 0x20000, scoped, tag = 'scratch operand']
  %s0 = inlined_call_operand.vmem [shape: bf16[512,128], index: 0, kind: input, shape index: {}]
  %s1 = inlined_call_operand.vmem [shape: bf16[128,128], index: 1, kind: input, shape index: {}]
  %s2 = inlined_call_operand.vmem [shape: f32[1,128], index: 2, kind: input, shape index: {}]
  %s3 = inlined_call_operand.vmem [shape: bf16[512,128], index: 3, kind: output, shape index: {}]
  %s4 = sld [smem:[#allocation0]]
  $region53: #{darknet53_forward.9} parent=0
    _
  %s6 = ssub.s32 1, %s4
  %s7 = scalar_select 0, %s6, %s4
  loop: start=0, step=1, limit=4
  $region2: #{darknet53_forward.9} parent=0 // loop_pre_header
    _
  $region3: #{darknet53_forward.9} parent=0 // loop_header
    %s9 = sphi 0, %s13
    %p10 = scmp.ge.s32.totalorder %s9, 4
    %s16 = sphi 0, %s35
    %s17 = sphi 0, %s31
    %s18 = sphi 0, %s27
    %s19 = sphi 0, %s16
    %s20 = sphi 0, %s17
    %s21 = sphi 0, %s18
    %s22 = sphi 0, %s19
    %s23 = sphi 0, %s20
    %s24 = sphi 0, %s21
    %s40 = sphi 0, %s42
    %s43 = sphi 0, %s40
    %s44 = sphi 0, %s43
    %s60 = sphi 0, %s44
    %s68 = sphi 0, %s70
    %s71 = sphi 0, %s68
    %s72 = sphi 0, %s71
    %s88 = sphi 0, %s72
    %s94 = sphi 0, %s96
    %s97 = sphi 0, %s94
    %s98 = sphi 0, %s97
    %s114 = sphi 0, %s98
    %s122 = sphi 0, %s124
    %s125 = sphi 0, %s122
    %s126 = sphi 0, %s125
    %s142 = sphi 0, %s126
  $region4: #{darknet53_forward.9} parent=0 // loop_header_branch
    %12 = sbr.rel (%p10) target = $region8
  $region5: #{darknet53_forward.9} parent=0 // loop_body
    %s14 = ssub.s32 %s9, 1
    %s15 = ssub.s32 %s9, 2
    %s25 = sadd.s32 1, %s18
    %p26 = scmp.ge.s32.totalorder %s25, 1
    %s27 = scalar_select %p26, 0, %s25
    %s28 = sadd.s32 1, %s17
    %s29 = scalar_select %p26, %s28, %s17
    %p30 = scmp.ge.s32.totalorder %s29, 1
    %s31 = scalar_select %p30, 0, %s29
    %s32 = sadd.s32 1, %s16
    %s33 = scalar_select %p30, %s32, %s16
    %p34 = scmp.ge.s32.totalorder %s33, 2
    %s35 = scalar_select %p34, 0, %s33
    %s36 = ssub.s32 %s16, %s35
    %s37 = ssub.s32 %s18, %s27
    %s38 = sor.u32 %s36, %s37
    %p39 = scmp.eq.s32.totalorder %s38, 0
    %s41 = sadd.s32 %s40, 1
    %s42 = scalar_select %p39, %s40, %s41
    %p45 = pneg %p39
    %p46 = scmp.eq.s32.totalorder %s9, 1
    %p47 = por %p45, %p46
    %p48 = scmp.ne.s32.totalorder %s40, %s43
    %p49 = scmp.eq.s32.totalorder %s9, 0
    %p50 = por %p48, %p49
    %p51 = scmp.ne.s32.totalorder %s40, %s43
    %p52 = scmp.eq.s32.totalorder %s14, 1
    %p53 = por %p51, %p52
    %p54 = scmp.ne.s32.totalorder %s43, %s44
    %p55 = scmp.eq.s32.totalorder %s14, 0
    %p56 = por %p54, %p55
    %p57 = scmp.ne.s32.totalorder %s43, %s44
    %p58 = scmp.eq.s32.totalorder %s15, 1
    %p59 = por %p57, %p58
    %p61 = scmp.ne.s32.totalorder %s44, %s60
    %p62 = scmp.eq.s32.totalorder %s15, 0
    %p63 = por %p61, %p62
    %s64 = ssub.s32 %s18, %s27
    %s65 = ssub.s32 %s17, %s31
    %s66 = sor.u32 %s64, %s65
    %p67 = scmp.eq.s32.totalorder %s66, 0
    %s69 = sadd.s32 %s68, 1
    %s70 = scalar_select %p67, %s68, %s69
    %p73 = pneg %p67
    %p74 = scmp.eq.s32.totalorder %s9, 1
    %p75 = por %p73, %p74
    %p76 = scmp.ne.s32.totalorder %s68, %s71
    %p77 = scmp.eq.s32.totalorder %s9, 0
    %p78 = por %p76, %p77
    %p79 = scmp.ne.s32.totalorder %s68, %s71
    %p80 = scmp.eq.s32.totalorder %s14, 1
    %p81 = por %p79, %p80
    %p82 = scmp.ne.s32.totalorder %s71, %s72
    %p83 = scmp.eq.s32.totalorder %s14, 0
    %p84 = por %p82, %p83
    %p85 = scmp.ne.s32.totalorder %s71, %s72
    %p86 = scmp.eq.s32.totalorder %s15, 1
    %p87 = por %p85, %p86
    %p89 = scmp.ne.s32.totalorder %s72, %s88
    %p90 = scmp.eq.s32.totalorder %s15, 0
    %p91 = por %p89, %p90
    %s92 = ssub.s32 %s17, %s31
    %p93 = scmp.eq.s32.totalorder %s92, 0
    %s95 = sadd.s32 %s94, 1
    %s96 = scalar_select %p93, %s94, %s95
    %p99 = pneg %p93
    %p100 = scmp.eq.s32.totalorder %s9, 1
    %p101 = por %p99, %p100
    %p102 = scmp.ne.s32.totalorder %s94, %s97
    %p103 = scmp.eq.s32.totalorder %s9, 0
    %p104 = por %p102, %p103
    %p105 = scmp.ne.s32.totalorder %s94, %s97
    %p106 = scmp.eq.s32.totalorder %s14, 1
    %p107 = por %p105, %p106
    %p108 = scmp.ne.s32.totalorder %s97, %s98
    %p109 = scmp.eq.s32.totalorder %s14, 0
    %p110 = por %p108, %p109
    %p111 = scmp.ne.s32.totalorder %s97, %s98
    %p112 = scmp.eq.s32.totalorder %s15, 1
    %p113 = por %p111, %p112
    %p115 = scmp.ne.s32.totalorder %s98, %s114
    %p116 = scmp.eq.s32.totalorder %s15, 0
    %p117 = por %p115, %p116
    %s118 = ssub.s32 %s16, %s35
    %s119 = ssub.s32 %s17, %s31
    %s120 = sor.u32 %s118, %s119
    %p121 = scmp.eq.s32.totalorder %s120, 0
    %s123 = sadd.s32 %s122, 1
    %s124 = scalar_select %p121, %s122, %s123
    %p127 = pneg %p121
    %p128 = scmp.eq.s32.totalorder %s9, 1
    %p129 = por %p127, %p128
    %p130 = scmp.ne.s32.totalorder %s122, %s125
    %p131 = scmp.eq.s32.totalorder %s9, 0
    %p132 = por %p130, %p131
    %p133 = scmp.ne.s32.totalorder %s122, %s125
    %p134 = scmp.eq.s32.totalorder %s14, 1
    %p135 = por %p133, %p134
    %p136 = scmp.ne.s32.totalorder %s125, %s126
    %p137 = scmp.eq.s32.totalorder %s14, 0
    %p138 = por %p136, %p137
    %p139 = scmp.ne.s32.totalorder %s125, %s126
    %p140 = scmp.eq.s32.totalorder %s15, 1
    %p141 = por %p139, %p140
    %p143 = scmp.ne.s32.totalorder %s126, %s142
    %p144 = scmp.eq.s32.totalorder %s15, 0
    %p145 = por %p143, %p144
    %p146 = scmp.le.s32.totalorder 1, %s9
    %p147 = scmp.lt.s32.totalorder %s9, 3
    %p148 = pnand %p146, %p147
    %p149 = pneg %p148
    // Predicated region
    $region9: #{darknet53_forward.9} parent=5 // pred_check
      _
    $region10: #{darknet53_forward.9} parent=5 // pred_check_branch
      %151 = sbr.rel (%p148) target = $region12
    $region11: #{darknet53_forward.9} parent=5 // pred_region
      %s152 = ssub.s32 %s9, 1
      // Predicated region
      $region13: #{darknet53_forward.9} parent=11 // pred_check
        %p153 = pneg %p84
      $region14: #{darknet53_forward.9} parent=11 // pred_check_branch
        %155 = sbr.rel (%p153) target = $region16
      $region15: #{darknet53_forward.9} parent=11 // pred_region
        %s156 = smul.u32 16, %s21
        %p157 = scmp.lt.s32.totalorder %s156, 15
        %s158 = scalar_select %p157, %s156, 15
        %p159 = scmp.lt.s32.totalorder %s20, 0
        %s160 = scalar_select %p159, %s20, 0
        %s161 = sadd.s32 %s160, %s158
        %s162 = smul.addr %s161, 4
        %s163 = scalar_lea.vmem %s1, %s162
        %s164 = smul.u32 16, %s21
      $region16: #{darknet53_forward.9} parent=11 // pred_fallthru
        _
      // Predicated region
      $region17: #{darknet53_forward.9} parent=11 // pred_check
        %p165 = pneg %p110
      $region18: #{darknet53_forward.9} parent=11 // pred_check_branch
        %167 = sbr.rel (%p165) target = $region20
      $region19: #{darknet53_forward.9} parent=11 // pred_region
        %p168 = scmp.lt.s32.totalorder %s20, 0
        %s169 = scalar_select %p168, %s20, 0
        %s170 = scalar_lea.vmem %s2, %s169
      $region20: #{darknet53_forward.9} parent=11 // pred_fallthru
        _
    $region12: #{darknet53_forward.9} parent=5 // pred_fallthru
      _
    %p171 = scmp.lt.s32.totalorder %s9, 2
    // Predicated region
    $region21: #{darknet53_forward.9} parent=5 // pred_check
      %p172 = pneg %p171
    $region22: #{darknet53_forward.9} parent=5 // pred_check_branch
      %174 = sbr.rel (%p172) target = $region24
    $region23: #{darknet53_forward.9} parent=5 // pred_region
      // Predicated region
      $region25: #{darknet53_forward.9} parent=23 // pred_check
        %p175 = pneg %p50
      $region26: #{darknet53_forward.9} parent=23 // pred_check_branch
        %177 = sbr.rel (%p175) target = $region28
      $region27: #{darknet53_forward.9} parent=23 // pred_region
        %s178 = smul.u32 32, %s16
        %p179 = scmp.lt.s32.totalorder %s178, 63
        %s180 = scalar_select %p179, %s178, 63
        %p181 = scmp.lt.s32.totalorder %s18, 0
        %s182 = scalar_select %p181, %s18, 0
        %s183 = sadd.s32 %s182, %s180
        %s184 = smul.addr %s183, 4
        %s185 = scalar_lea.vmem %s0, %s184
        %s186 = smul.u32 32, %s16
      $region28: #{darknet53_forward.9} parent=23 // pred_fallthru
        _
    $region24: #{darknet53_forward.9} parent=5 // pred_fallthru
      _
    %p187 = scmp.le.s32.totalorder 1, %s9
    %p188 = scmp.lt.s32.totalorder %s9, 3
    %p189 = pnand %p187, %p188
    %p190 = pneg %p189
    // Predicated region
    $region29: #{darknet53_forward.9} parent=5 // pred_check
      _
    $region30: #{darknet53_forward.9} parent=5 // pred_check_branch
      %192 = sbr.rel (%p189) target = $region32
    $region31: #{darknet53_forward.9} parent=5 // pred_region
      %s193 = ssub.s32 %s9, 1
      %s194 = smul.u32 32, %s19
      %p195 = scmp.lt.s32.totalorder %s194, 63
      %s196 = scalar_select %p195, %s194, 63
      %p197 = scmp.lt.s32.totalorder %s21, 0
      %s198 = scalar_select %p197, %s21, 0
      %s199 = sadd.s32 %s198, %s196
      %s200 = smul.addr %s199, 4
      %s201 = scalar_lea.vmem %s0, %s200
      %p202 = pneg %p56
      %p203 = pneg %p53
      %s204 = smul.u32 16, %s21
      %p205 = scmp.lt.s32.totalorder %s204, 15
      %s206 = scalar_select %p205, %s204, 15
      %p207 = scmp.lt.s32.totalorder %s20, 0
      %s208 = scalar_select %p207, %s20, 0
      %s209 = sadd.s32 %s208, %s206
      %s210 = smul.addr %s209, 4
      %s211 = scalar_lea.vmem %s1, %s210
      %p212 = pneg %p84
      %p213 = pneg %p81
      %p214 = scmp.lt.s32.totalorder %s20, 0
      %s215 = scalar_select %p214, %s20, 0
      %s216 = scalar_lea.vmem %s2, %s215
      %p217 = pneg %p110
      %p218 = pneg %p107
      %p219 = pneg %p138
      %p220 = pneg %p135
      %s221 = smul.u32 32, %s19
      %p222 = scmp.lt.s32.totalorder %s221, 63
      %s223 = scalar_select %p222, %s221, 63
      %p224 = scmp.lt.s32.totalorder %s20, 0
      %s225 = scalar_select %p224, %s20, 0
      %s226 = sadd.s32 %s225, %s223
      %s227 = smul.addr %s226, 4
      %s228 = scalar_lea.vmem %s3, %s227
      %s229 = smul.u32 32, %s19
      %p230 = scmp.lt.s32.totalorder %s229, 63
      %s231 = scalar_select %p230, %s229, 63
      %p232 = scmp.lt.s32.totalorder %s21, 0
      %s233 = scalar_select %p232, %s21, 0
      %s234 = sadd.s32 %s233, %s231
      %s235 = smul.addr %s234, 4
      %s236 = scalar_lea.vmem %s0, %s235
      %s237 = smul.u32 32, %s19
      %s238 = smul.u32 16, %s21
      %p239 = scmp.lt.s32.totalorder %s238, 15
      %s240 = scalar_select %p239, %s238, 15
      %p241 = scmp.lt.s32.totalorder %s20, 0
      %s242 = scalar_select %p241, %s20, 0
      %s243 = sadd.s32 %s242, %s240
      %s244 = smul.addr %s243, 4
      %s245 = scalar_lea.vmem %s1, %s244
      %s246 = smul.u32 16, %s21
      %p247 = scmp.lt.s32.totalorder %s20, 0
      %s248 = scalar_select %p247, %s20, 0
      %s249 = scalar_lea.vmem %s2, %s248
      %s250 = smul.u32 32, %s19
      %p251 = scmp.lt.s32.totalorder %s250, 63
      %s252 = scalar_select %p251, %s250, 63
      %p253 = scmp.lt.s32.totalorder %s20, 0
      %s254 = scalar_select %p253, %s20, 0
      %s255 = sadd.s32 %s254, %s252
      %s256 = smul.addr %s255, 4
      %s257 = scalar_lea.vmem %s3, %s256
      %s258 = smul.u32 32, %s19
      %p260 = scmp.eq.s32.totalorder %s21, 0
      // Predicated region
      $region33: #{darknet53_forward.9} parent=31 // pred_check
        %p261 = pneg %p260
      $region34: #{darknet53_forward.9} parent=31 // pred_check_branch
        %263 = sbr.rel (%p261) target = $region36
      $region35: #{darknet53_forward.9} parent=31 // pred_region
        %264 = vst [vmem:[#allocation2] sm:$0xff] 0.0
        %265 = vst [vmem:[#allocation2 + $0x8] sm:$0xff] 0.0
        %266 = vst [vmem:[#allocation2 + $0x10] sm:$0xff] 0.0
        %267 = vst [vmem:[#allocation2 + $0x18] sm:$0xff] 0.0
        %268 = vst [vmem:[#allocation2 + $0x20] sm:$0xff] 0.0
        %269 = vst [vmem:[#allocation2 + $0x28] sm:$0xff] 0.0
        %270 = vst [vmem:[#allocation2 + $0x30] sm:$0xff] 0.0
        %271 = vst [vmem:[#allocation2 + $0x38] sm:$0xff] 0.0
        %272 = vst [vmem:[#allocation2 + $0x40] sm:$0xff] 0.0
        %273 = vst [vmem:[#allocation2 + $0x48] sm:$0xff] 0.0
        %274 = vst [vmem:[#allocation2 + $0x50] sm:$0xff] 0.0
        %275 = vst [vmem:[#allocation2 + $0x58] sm:$0xff] 0.0
        %276 = vst [vmem:[#allocation2 + $0x60] sm:$0xff] 0.0
        %277 = vst [vmem:[#allocation2 + $0x68] sm:$0xff] 0.0
        %278 = vst [vmem:[#allocation2 + $0x70] sm:$0xff] 0.0
        %279 = vst [vmem:[#allocation2 + $0x78] sm:$0xff] 0.0
        %280 = vst [vmem:[#allocation2 + $0x80] sm:$0xff] 0.0
        %281 = vst [vmem:[#allocation2 + $0x88] sm:$0xff] 0.0
        %282 = vst [vmem:[#allocation2 + $0x90] sm:$0xff] 0.0
        %283 = vst [vmem:[#allocation2 + $0x98] sm:$0xff] 0.0
        %284 = vst [vmem:[#allocation2 + $0xa0] sm:$0xff] 0.0
        %285 = vst [vmem:[#allocation2 + $0xa8] sm:$0xff] 0.0
        %286 = vst [vmem:[#allocation2 + $0xb0] sm:$0xff] 0.0
        %287 = vst [vmem:[#allocation2 + $0xb8] sm:$0xff] 0.0
        %288 = vst [vmem:[#allocation2 + $0xc0] sm:$0xff] 0.0
        %289 = vst [vmem:[#allocation2 + $0xc8] sm:$0xff] 0.0
        %290 = vst [vmem:[#allocation2 + $0xd0] sm:$0xff] 0.0
        %291 = vst [vmem:[#allocation2 + $0xd8] sm:$0xff] 0.0
        %292 = vst [vmem:[#allocation2 + $0xe0] sm:$0xff] 0.0
        %293 = vst [vmem:[#allocation2 + $0xe8] sm:$0xff] 0.0
        %294 = vst [vmem:[#allocation2 + $0xf0] sm:$0xff] 0.0
        %295 = vst [vmem:[#allocation2 + $0xf8] sm:$0xff] 0.0
      $region36: #{darknet53_forward.9} parent=31 // pred_fallthru
        _
      %v296 = vld [vmem:[#allocation2] sm:$0xff]
      %v297 = vld [vmem:[#allocation2 + $0x8] sm:$0xff]
      %v298 = vld [vmem:[#allocation2 + $0x10] sm:$0xff]
      %v299 = vld [vmem:[#allocation2 + $0x18] sm:$0xff]
      %v300 = vld [vmem:[#allocation2 + $0x20] sm:$0xff]
      %v301 = vld [vmem:[#allocation2 + $0x28] sm:$0xff]
      %v302 = vld [vmem:[#allocation2 + $0x30] sm:$0xff]
      %v303 = vld [vmem:[#allocation2 + $0x38] sm:$0xff]
      %v304 = vld [vmem:[#allocation2 + $0x40] sm:$0xff]
      %v305 = vld [vmem:[#allocation2 + $0x48] sm:$0xff]
      %v306 = vld [vmem:[#allocation2 + $0x50] sm:$0xff]
      %v307 = vld [vmem:[#allocation2 + $0x58] sm:$0xff]
      %v308 = vld [vmem:[#allocation2 + $0x60] sm:$0xff]
      %v309 = vld [vmem:[#allocation2 + $0x68] sm:$0xff]
      %v310 = vld [vmem:[#allocation2 + $0x70] sm:$0xff]
      %v311 = vld [vmem:[#allocation2 + $0x78] sm:$0xff]
      %v312 = vld [vmem:[#allocation2 + $0x80] sm:$0xff]
      %v313 = vld [vmem:[#allocation2 + $0x88] sm:$0xff]
      %v314 = vld [vmem:[#allocation2 + $0x90] sm:$0xff]
      %v315 = vld [vmem:[#allocation2 + $0x98] sm:$0xff]
      %v316 = vld [vmem:[#allocation2 + $0xa0] sm:$0xff]
      %v317 = vld [vmem:[#allocation2 + $0xa8] sm:$0xff]
      %v318 = vld [vmem:[#allocation2 + $0xb0] sm:$0xff]
      %v319 = vld [vmem:[#allocation2 + $0xb8] sm:$0xff]
      %v320 = vld [vmem:[#allocation2 + $0xc0] sm:$0xff]
      %v321 = vld [vmem:[#allocation2 + $0xc8] sm:$0xff]
      %v322 = vld [vmem:[#allocation2 + $0xd0] sm:$0xff]
      %v323 = vld [vmem:[#allocation2 + $0xd8] sm:$0xff]
      %v324 = vld [vmem:[#allocation2 + $0xe0] sm:$0xff]
      %v325 = vld [vmem:[#allocation2 + $0xe8] sm:$0xff]
      %v326 = vld [vmem:[#allocation2 + $0xf0] sm:$0xff]
      %v327 = vld [vmem:[#allocation2 + $0xf8] sm:$0xff]
      %v328 = vld [vmem:[%s236] sm:$0xf]
      %v329 = vld [vmem:[%s236 + $0x4] sm:$0xf]
      %v330 = vld [vmem:[%s236 + $0x8] sm:$0xf]
      %v331 = vld [vmem:[%s236 + $0xc] sm:$0xf]
      %v332 = vld [vmem:[%s236 + $0x10] sm:$0xf]
      %v333 = vld [vmem:[%s236 + $0x14] sm:$0xf]
      %v334 = vld [vmem:[%s236 + $0x18] sm:$0xf]
      %v335 = vld [vmem:[%s236 + $0x1c] sm:$0xf]
      %v336 = vld [vmem:[%s236 + $0x20] sm:$0xf]
      %v337 = vld [vmem:[%s236 + $0x24] sm:$0xf]
      %v338 = vld [vmem:[%s236 + $0x28] sm:$0xf]
      %v339 = vld [vmem:[%s236 + $0x2c] sm:$0xf]
      %v340 = vld [vmem:[%s236 + $0x30] sm:$0xf]
      %v341 = vld [vmem:[%s236 + $0x34] sm:$0xf]
      %v342 = vld [vmem:[%s236 + $0x38] sm:$0xf]
      %v343 = vld [vmem:[%s236 + $0x3c] sm:$0xf]
      %v344 = vld [vmem:[%s236 + $0x40] sm:$0xf]
      %v345 = vld [vmem:[%s236 + $0x44] sm:$0xf]
      %v346 = vld [vmem:[%s236 + $0x48] sm:$0xf]
      %v347 = vld [vmem:[%s236 + $0x4c] sm:$0xf]
      %v348 = vld [vmem:[%s236 + $0x50] sm:$0xf]
      %v349 = vld [vmem:[%s236 + $0x54] sm:$0xf]
      %v350 = vld [vmem:[%s236 + $0x58] sm:$0xf]
      %v351 = vld [vmem:[%s236 + $0x5c] sm:$0xf]
      %v352 = vld [vmem:[%s236 + $0x60] sm:$0xf]
      %v353 = vld [vmem:[%s236 + $0x64] sm:$0xf]
      %v354 = vld [vmem:[%s236 + $0x68] sm:$0xf]
      %v355 = vld [vmem:[%s236 + $0x6c] sm:$0xf]
      %v356 = vld [vmem:[%s236 + $0x70] sm:$0xf]
      %v357 = vld [vmem:[%s236 + $0x74] sm:$0xf]
      %v358 = vld [vmem:[%s236 + $0x78] sm:$0xf]
      %v359 = vld [vmem:[%s236 + $0x7c] sm:$0xf]
      %v360 = vld [vmem:[%s245] sm:$0xf]
      %v361 = vld [vmem:[%s245 + $0x4] sm:$0xf]
      %v362 = vld [vmem:[%s245 + $0x8] sm:$0xf]
      %v363 = vld [vmem:[%s245 + $0xc] sm:$0xf]
      %v364 = vld [vmem:[%s245 + $0x10] sm:$0xf]
      %v365 = vld [vmem:[%s245 + $0x14] sm:$0xf]
      %v366 = vld [vmem:[%s245 + $0x18] sm:$0xf]
      %v367 = vld [vmem:[%s245 + $0x1c] sm:$0xf]
      %v368 = vld [vmem:[%s245 + $0x20] sm:$0xf]
      %v369 = vld [vmem:[%s245 + $0x24] sm:$0xf]
      %v370 = vld [vmem:[%s245 + $0x28] sm:$0xf]
      %v371 = vld [vmem:[%s245 + $0x2c] sm:$0xf]
      %v372 = vld [vmem:[%s245 + $0x30] sm:$0xf]
      %v373 = vld [vmem:[%s245 + $0x34] sm:$0xf]
      %v374 = vld [vmem:[%s245 + $0x38] sm:$0xf]
      %v375 = vld [vmem:[%s245 + $0x3c] sm:$0xf]
      %v408 = vunpack.c.l.b16 %v328
      %v409 = vunpack.c.l.b16 %v329
      %v410 = vunpack.c.l.b16 %v330
      %v411 = vunpack.c.l.b16 %v331
      %v412 = vunpack.c.l.b16 %v332
      %v413 = vunpack.c.l.b16 %v333
      %v414 = vunpack.c.l.b16 %v334
      %v415 = vunpack.c.l.b16 %v335
      %v416 = vunpack.c.l.b16 %v336
      %v417 = vunpack.c.l.b16 %v337
      %v418 = vunpack.c.l.b16 %v338
      %v419 = vunpack.c.l.b16 %v339
      %v420 = vunpack.c.l.b16 %v340
      %v421 = vunpack.c.l.b16 %v341
      %v422 = vunpack.c.l.b16 %v342
      %v423 = vunpack.c.l.b16 %v343
      %v424 = vunpack.c.l.b16 %v344
      %v425 = vunpack.c.l.b16 %v345
      %v426 = vunpack.c.l.b16 %v346
      %v427 = vunpack.c.l.b16 %v347
      %v428 = vunpack.c.l.b16 %v348
      %v429 = vunpack.c.l.b16 %v349
      %v430 = vunpack.c.l.b16 %v350
      %v431 = vunpack.c.l.b16 %v351
      %v432 = vunpack.c.l.b16 %v352
      %v433 = vunpack.c.l.b16 %v353
      %v434 = vunpack.c.l.b16 %v354
      %v435 = vunpack.c.l.b16 %v355
      %v436 = vunpack.c.l.b16 %v356
      %v437 = vunpack.c.l.b16 %v357
      %v438 = vunpack.c.l.b16 %v358
      %v439 = vunpack.c.l.b16 %v359
      %v440 = vpack.c.b16 %v409, %v408
      %v441 = vpack.c.b16 %v411, %v410
      %v442 = vpack.c.b16 %v413, %v412
      %v443 = vpack.c.b16 %v415, %v414
      %v444 = vpack.c.b16 %v417, %v416
      %v445 = vpack.c.b16 %v419, %v418
      %v446 = vpack.c.b16 %v421, %v420
      %v447 = vpack.c.b16 %v423, %v422
      %v448 = vpack.c.b16 %v425, %v424
      %v449 = vpack.c.b16 %v427, %v426
      %v450 = vpack.c.b16 %v429, %v428
      %v451 = vpack.c.b16 %v431, %v430
      %v452 = vpack.c.b16 %v433, %v432
      %v453 = vpack.c.b16 %v435, %v434
      %v454 = vpack.c.b16 %v437, %v436
      %v455 = vpack.c.b16 %v439, %v438
      %v488 = vunpack.c.l.b16 %v360
      %v489 = vunpack.c.l.b16 %v361
      %v490 = vunpack.c.l.b16 %v362
      %v491 = vunpack.c.l.b16 %v363
      %v492 = vunpack.c.l.b16 %v364
      %v493 = vunpack.c.l.b16 %v365
      %v494 = vunpack.c.l.b16 %v366
      %v495 = vunpack.c.l.b16 %v367
      %v496 = vunpack.c.l.b16 %v368
      %v497 = vunpack.c.l.b16 %v369
      %v498 = vunpack.c.l.b16 %v370
      %v499 = vunpack.c.l.b16 %v371
      %v500 = vunpack.c.l.b16 %v372
      %v501 = vunpack.c.l.b16 %v373
      %v502 = vunpack.c.l.b16 %v374
      %v503 = vunpack.c.l.b16 %v375
      %v504 = vpack.c.b16 %v489, %v488
      %v505 = vpack.c.b16 %v491, %v490
      %v506 = vpack.c.b16 %v493, %v492
      %v507 = vpack.c.b16 %v495, %v494
      %v508 = vpack.c.b16 %v497, %v496
      %v509 = vpack.c.b16 %v499, %v498
      %v510 = vpack.c.b16 %v501, %v500
      %v511 = vpack.c.b16 %v503, %v502
      %520 = vmatprep.subr.bf16.mxu0 0
      %521 = vmatpush1.bf16.msra.mxu0 %v511
      %522 = vmatprep.subr.bf16.mxu0 0
      %523 = vmatpush1.bf16.msra.mxu0 %v510
      %524 = vmatprep.subr.bf16.mxu0 0
      %525 = vmatpush1.bf16.msra.mxu0 %v509
      %526 = vmatprep.subr.bf16.mxu0 0
      %527 = vmatpush1.bf16.msra.mxu0 %v508
      %528 = vmatprep.subr.bf16.mxu0 0
      %529 = vmatpush1.bf16.msra.mxu0 %v507
      %530 = vmatprep.subr.bf16.mxu0 0
      %531 = vmatpush1.bf16.msra.mxu0 %v506
      %532 = vmatprep.subr.bf16.mxu0 0
      %533 = vmatpush1.bf16.msra.mxu0 %v505
      %534 = vmatprep.subr.bf16.mxu0 0
      %535 = vmatpush1.bf16.msra.mxu0 %v504
      %536 = vmatprep.subr.bf16.mxu0 0
      %537 = vmatpush2.bf16.msra.mxu0 0
      %538 = vmatprep.subr.bf16.mxu0 0
      %539 = vmatpush2.bf16.msra.mxu0 0
      %540 = vmatprep.subr.bf16.mxu0 0
      %541 = vmatpush2.bf16.msra.mxu0 0
      %542 = vmatprep.subr.bf16.mxu0 0
      %543 = vmatpush2.bf16.msra.mxu0 0
      %544 = vmatprep.subr.bf16.mxu0 0
      %545 = vmatpush2.bf16.msra.mxu0 0
      %546 = vmatprep.subr.bf16.mxu0 0
      %547 = vmatpush2.bf16.msra.mxu0 0
      %548 = vmatprep.subr.bf16.mxu0 0
      %549 = vmatpush2.bf16.msra.mxu0 0
      %550 = vmatprep.subr.bf16.mxu0 0
      %551 = vmatpush2.bf16.msra.mxu0 0
      %552 = vmatprep.mubr.bf16.mxu0 0
      %553 = vmatmul.mubr.bf16.gmra.mxu0 %v440
      %v554 = vpop.f32.mrf.mxu0
      %v555 = vadd.f32 0.0, %v554
      %v556 = vpop.f32.mrf.mxu0
      %v557 = vpop.f32.mrf.mxu0
      %v558 = vadd.f32 0.0, %v557
      %v559 = vpop.f32.mrf.mxu0
      %560 = vmatprep.mubr.bf16.mxu0 0
      %561 = vmatmul.mubr.bf16.gmra.mxu0 %v441
      %v562 = vpop.f32.mrf.mxu0
      %v563 = vadd.f32 0.0, %v562
      %v564 = vpop.f32.mrf.mxu0
      %v565 = vpop.f32.mrf.mxu0
      %v566 = vadd.f32 0.0, %v565
      %v567 = vpop.f32.mrf.mxu0
      %568 = vmatprep.mubr.bf16.mxu0 0
      %569 = vmatmul.mubr.bf16.gmra.mxu0 %v442
      %v570 = vpop.f32.mrf.mxu0
      %v571 = vadd.f32 0.0, %v570
      %v572 = vpop.f32.mrf.mxu0
      %v573 = vpop.f32.mrf.mxu0
      %v574 = vadd.f32 0.0, %v573
      %v575 = vpop.f32.mrf.mxu0
      %576 = vmatprep.mubr.bf16.mxu0 0
      %577 = vmatmul.mubr.bf16.gmra.mxu0 %v443
      %v578 = vpop.f32.mrf.mxu0
      %v579 = vadd.f32 0.0, %v578
      %v580 = vpop.f32.mrf.mxu0
      %v581 = vpop.f32.mrf.mxu0
      %v582 = vadd.f32 0.0, %v581
      %v583 = vpop.f32.mrf.mxu0
      %584 = vmatprep.mubr.bf16.mxu0 0
      %585 = vmatmul.mubr.bf16.gmra.mxu0 %v444
      %v586 = vpop.f32.mrf.mxu0
      %v587 = vadd.f32 0.0, %v586
      %v588 = vpop.f32.mrf.mxu0
      %v589 = vpop.f32.mrf.mxu0
      %v590 = vadd.f32 0.0, %v589
      %v591 = vpop.f32.mrf.mxu0
      %592 = vmatprep.mubr.bf16.mxu0 0
      %593 = vmatmul.mubr.bf16.gmra.mxu0 %v445
      %v594 = vpop.f32.mrf.mxu0
      %v595 = vadd.f32 0.0, %v594
      %v596 = vpop.f32.mrf.mxu0
      %v597 = vpop.f32.mrf.mxu0
      %v598 = vadd.f32 0.0, %v597
      %v599 = vpop.f32.mrf.mxu0
      %600 = vmatprep.mubr.bf16.mxu0 0
      %601 = vmatmul.mubr.bf16.gmra.mxu0 %v446
      %v602 = vpop.f32.mrf.mxu0
      %v603 = vadd.f32 0.0, %v602
      %v604 = vpop.f32.mrf.mxu0
      %v605 = vpop.f32.mrf.mxu0
      %v606 = vadd.f32 0.0, %v605
      %v607 = vpop.f32.mrf.mxu0
      %608 = vmatprep.mubr.bf16.mxu0 0
      %609 = vmatmul.mubr.bf16.gmra.mxu0 %v447
      %v610 = vpop.f32.mrf.mxu0
      %v611 = vadd.f32 0.0, %v610
      %v612 = vpop.f32.mrf.mxu0
      %v613 = vpop.f32.mrf.mxu0
      %v614 = vadd.f32 0.0, %v613
      %v615 = vpop.f32.mrf.mxu0
      %616 = vmatprep.mubr.bf16.mxu0 0
      %617 = vmatmul.mubr.bf16.gmra.mxu0 %v448
      %v618 = vpop.f32.mrf.mxu0
      %v619 = vadd.f32 0.0, %v618
      %v620 = vpop.f32.mrf.mxu0
      %v621 = vpop.f32.mrf.mxu0
      %v622 = vadd.f32 0.0, %v621
      %v623 = vpop.f32.mrf.mxu0
      %624 = vmatprep.mubr.bf16.mxu0 0
      %625 = vmatmul.mubr.bf16.gmra.mxu0 %v449
      %v626 = vpop.f32.mrf.mxu0
      %v627 = vadd.f32 0.0, %v626
      %v628 = vpop.f32.mrf.mxu0
      %v629 = vpop.f32.mrf.mxu0
      %v630 = vadd.f32 0.0, %v629
      %v631 = vpop.f32.mrf.mxu0
      %632 = vmatprep.mubr.bf16.mxu0 0
      %633 = vmatmul.mubr.bf16.gmra.mxu0 %v450
      %v634 = vpop.f32.mrf.mxu0
      %v635 = vadd.f32 0.0, %v634
      %v636 = vpop.f32.mrf.mxu0
      %v637 = vpop.f32.mrf.mxu0
      %v638 = vadd.f32 0.0, %v637
      %v639 = vpop.f32.mrf.mxu0
      %640 = vmatprep.mubr.bf16.mxu0 0
      %641 = vmatmul.mubr.bf16.gmra.mxu0 %v451
      %v642 = vpop.f32.mrf.mxu0
      %v643 = vadd.f32 0.0, %v642
      %v644 = vpop.f32.mrf.mxu0
      %v645 = vpop.f32.mrf.mxu0
      %v646 = vadd.f32 0.0, %v645
      %v647 = vpop.f32.mrf.mxu0
      %648 = vmatprep.mubr.bf16.mxu0 0
      %649 = vmatmul.mubr.bf16.gmra.mxu0 %v452
      %v650 = vpop.f32.mrf.mxu0
      %v651 = vadd.f32 0.0, %v650
      %v652 = vpop.f32.mrf.mxu0
      %v653 = vpop.f32.mrf.mxu0
      %v654 = vadd.f32 0.0, %v653
      %v655 = vpop.f32.mrf.mxu0
      %656 = vmatprep.mubr.bf16.mxu0 0
      %657 = vmatmul.mubr.bf16.gmra.mxu0 %v453
      %v658 = vpop.f32.mrf.mxu0
      %v659 = vadd.f32 0.0, %v658
      %v660 = vpop.f32.mrf.mxu0
      %v661 = vpop.f32.mrf.mxu0
      %v662 = vadd.f32 0.0, %v661
      %v663 = vpop.f32.mrf.mxu0
      %664 = vmatprep.mubr.bf16.mxu0 0
      %665 = vmatmul.mubr.bf16.gmra.mxu0 %v454
      %v666 = vpop.f32.mrf.mxu0
      %v667 = vadd.f32 0.0, %v666
      %v668 = vpop.f32.mrf.mxu0
      %v669 = vpop.f32.mrf.mxu0
      %v670 = vadd.f32 0.0, %v669
      %v671 = vpop.f32.mrf.mxu0
      %672 = vmatprep.mubr.bf16.mxu0 0
      %673 = vmatmul.mubr.bf16.gmra.mxu0 %v455
      %v674 = vpop.f32.mrf.mxu0
      %v675 = vadd.f32 0.0, %v674
      %v676 = vpop.f32.mrf.mxu0
      %v677 = vpop.f32.mrf.mxu0
      %v678 = vadd.f32 0.0, %v677
      %v679 = vpop.f32.mrf.mxu0
      %680 = vdwg.mxu0
      %v681 = vadd.f32 %v296, %v555
      %v682 = vadd.f32 %v297, %v558
      %v683 = vadd.f32 %v298, %v563
      %v684 = vadd.f32 %v299, %v566
      %v685 = vadd.f32 %v300, %v571
      %v686 = vadd.f32 %v301, %v574
      %v687 = vadd.f32 %v302, %v579
      %v688 = vadd.f32 %v303, %v582
      %v689 = vadd.f32 %v304, %v587
      %v690 = vadd.f32 %v305, %v590
      %v691 = vadd.f32 %v306, %v595
      %v692 = vadd.f32 %v307, %v598
      %v693 = vadd.f32 %v308, %v603
      %v694 = vadd.f32 %v309, %v606
      %v695 = vadd.f32 %v310, %v611
      %v696 = vadd.f32 %v311, %v614
      %v697 = vadd.f32 %v312, %v619
      %v698 = vadd.f32 %v313, %v622
      %v699 = vadd.f32 %v314, %v627
      %v700 = vadd.f32 %v315, %v630
      %v701 = vadd.f32 %v316, %v635
      %v702 = vadd.f32 %v317, %v638
      %v703 = vadd.f32 %v318, %v643
      %v704 = vadd.f32 %v319, %v646
      %v705 = vadd.f32 %v320, %v651
      %v706 = vadd.f32 %v321, %v654
      %v707 = vadd.f32 %v322, %v659
      %v708 = vadd.f32 %v323, %v662
      %v709 = vadd.f32 %v324, %v667
      %v710 = vadd.f32 %v325, %v670
      %v711 = vadd.f32 %v326, %v675
      %v712 = vadd.f32 %v327, %v678
      %713 = vst [vmem:[#allocation2] sm:$0xff] %v681
      %714 = vst [vmem:[#allocation2 + $0x8] sm:$0xff] %v682
      %715 = vst [vmem:[#allocation2 + $0x10] sm:$0xff] %v683
      %716 = vst [vmem:[#allocation2 + $0x18] sm:$0xff] %v684
      %717 = vst [vmem:[#allocation2 + $0x20] sm:$0xff] %v685
      %718 = vst [vmem:[#allocation2 + $0x28] sm:$0xff] %v686
      %719 = vst [vmem:[#allocation2 + $0x30] sm:$0xff] %v687
      %720 = vst [vmem:[#allocation2 + $0x38] sm:$0xff] %v688
      %721 = vst [vmem:[#allocation2 + $0x40] sm:$0xff] %v689
      %722 = vst [vmem:[#allocation2 + $0x48] sm:$0xff] %v690
      %723 = vst [vmem:[#allocation2 + $0x50] sm:$0xff] %v691
      %724 = vst [vmem:[#allocation2 + $0x58] sm:$0xff] %v692
      %725 = vst [vmem:[#allocation2 + $0x60] sm:$0xff] %v693
      %726 = vst [vmem:[#allocation2 + $0x68] sm:$0xff] %v694
      %727 = vst [vmem:[#allocation2 + $0x70] sm:$0xff] %v695
      %728 = vst [vmem:[#allocation2 + $0x78] sm:$0xff] %v696
      %729 = vst [vmem:[#allocation2 + $0x80] sm:$0xff] %v697
      %730 = vst [vmem:[#allocation2 + $0x88] sm:$0xff] %v698
      %731 = vst [vmem:[#allocation2 + $0x90] sm:$0xff] %v699
      %732 = vst [vmem:[#allocation2 + $0x98] sm:$0xff] %v700
      %733 = vst [vmem:[#allocation2 + $0xa0] sm:$0xff] %v701
      %734 = vst [vmem:[#allocation2 + $0xa8] sm:$0xff] %v702
      %735 = vst [vmem:[#allocation2 + $0xb0] sm:$0xff] %v703
      %736 = vst [vmem:[#allocation2 + $0xb8] sm:$0xff] %v704
      %737 = vst [vmem:[#allocation2 + $0xc0] sm:$0xff] %v705
      %738 = vst [vmem:[#allocation2 + $0xc8] sm:$0xff] %v706
      %739 = vst [vmem:[#allocation2 + $0xd0] sm:$0xff] %v707
      %740 = vst [vmem:[#allocation2 + $0xd8] sm:$0xff] %v708
      %741 = vst [vmem:[#allocation2 + $0xe0] sm:$0xff] %v709
      %742 = vst [vmem:[#allocation2 + $0xe8] sm:$0xff] %v710
      %743 = vst [vmem:[#allocation2 + $0xf0] sm:$0xff] %v711
      %744 = vst [vmem:[#allocation2 + $0xf8] sm:$0xff] %v712
      // Predicated region
      $region37: #{darknet53_forward.9} parent=31 // pred_check
        %p745 = pneg %p260
      $region38: #{darknet53_forward.9} parent=31 // pred_check_branch
        %747 = sbr.rel (%p745) target = $region40
      $region39: #{darknet53_forward.9} parent=31 // pred_region
        %v748 = vld [vmem:[#allocation2] sm:$0xff]
        %v749 = vld [vmem:[#allocation2 + $0x8] sm:$0xff]
        %v750 = vld [vmem:[#allocation2 + $0x10] sm:$0xff]
        %v751 = vld [vmem:[#allocation2 + $0x18] sm:$0xff]
        %v752 = vld [vmem:[#allocation2 + $0x20] sm:$0xff]
        %v753 = vld [vmem:[#allocation2 + $0x28] sm:$0xff]
        %v754 = vld [vmem:[#allocation2 + $0x30] sm:$0xff]
        %v755 = vld [vmem:[#allocation2 + $0x38] sm:$0xff]
        %v756 = vld [vmem:[#allocation2 + $0x40] sm:$0xff]
        %v757 = vld [vmem:[#allocation2 + $0x48] sm:$0xff]
        %v758 = vld [vmem:[#allocation2 + $0x50] sm:$0xff]
        %v759 = vld [vmem:[#allocation2 + $0x58] sm:$0xff]
        %v760 = vld [vmem:[#allocation2 + $0x60] sm:$0xff]
        %v761 = vld [vmem:[#allocation2 + $0x68] sm:$0xff]
        %v762 = vld [vmem:[#allocation2 + $0x70] sm:$0xff]
        %v763 = vld [vmem:[#allocation2 + $0x78] sm:$0xff]
        %v764 = vld [vmem:[#allocation2 + $0x80] sm:$0xff]
        %v765 = vld [vmem:[#allocation2 + $0x88] sm:$0xff]
        %v766 = vld [vmem:[#allocation2 + $0x90] sm:$0xff]
        %v767 = vld [vmem:[#allocation2 + $0x98] sm:$0xff]
        %v768 = vld [vmem:[#allocation2 + $0xa0] sm:$0xff]
        %v769 = vld [vmem:[#allocation2 + $0xa8] sm:$0xff]
        %v770 = vld [vmem:[#allocation2 + $0xb0] sm:$0xff]
        %v771 = vld [vmem:[#allocation2 + $0xb8] sm:$0xff]
        %v772 = vld [vmem:[#allocation2 + $0xc0] sm:$0xff]
        %v773 = vld [vmem:[#allocation2 + $0xc8] sm:$0xff]
        %v774 = vld [vmem:[#allocation2 + $0xd0] sm:$0xff]
        %v775 = vld [vmem:[#allocation2 + $0xd8] sm:$0xff]
        %v776 = vld [vmem:[#allocation2 + $0xe0] sm:$0xff]
        %v777 = vld [vmem:[#allocation2 + $0xe8] sm:$0xff]
        %v778 = vld [vmem:[#allocation2 + $0xf0] sm:$0xff]
        %v779 = vld [vmem:[#allocation2 + $0xf8] sm:$0xff]
        %v780 = vld [vmem:[%s249] sm:$0x1]
        %v782 = vlaneseq
        %v783 = vshrl.u32 %v782, 7
        %v784 = vsub.s32 0, %v783
        %v785 = vrot.slane %v780, %v784
        %v787 = vadd.f32 %v748, %v785
        %v788 = vadd.f32 %v749, %v785
        %v789 = vadd.f32 %v750, %v785
        %v790 = vadd.f32 %v751, %v785
        %v791 = vadd.f32 %v752, %v785
        %v792 = vadd.f32 %v753, %v785
        %v793 = vadd.f32 %v754, %v785
        %v794 = vadd.f32 %v755, %v785
        %v795 = vadd.f32 %v756, %v785
        %v796 = vadd.f32 %v757, %v785
        %v797 = vadd.f32 %v758, %v785
        %v798 = vadd.f32 %v759, %v785
        %v799 = vadd.f32 %v760, %v785
        %v800 = vadd.f32 %v761, %v785
        %v801 = vadd.f32 %v762, %v785
        %v802 = vadd.f32 %v763, %v785
        %v803 = vadd.f32 %v764, %v785
        %v804 = vadd.f32 %v765, %v785
        %v805 = vadd.f32 %v766, %v785
        %v806 = vadd.f32 %v767, %v785
        %v807 = vadd.f32 %v768, %v785
        %v808 = vadd.f32 %v769, %v785
        %v809 = vadd.f32 %v770, %v785
        %v810 = vadd.f32 %v771, %v785
        %v811 = vadd.f32 %v772, %v785
        %v812 = vadd.f32 %v773, %v785
        %v813 = vadd.f32 %v774, %v785
        %v814 = vadd.f32 %v775, %v785
        %v815 = vadd.f32 %v776, %v785
        %v816 = vadd.f32 %v777, %v785
        %v817 = vadd.f32 %v778, %v785
        %v818 = vadd.f32 %v779, %v785
        %vm819 = vcmp.ge.f32.partialorder %v787, 0.0
        %vm820 = vcmp.ge.f32.partialorder %v788, 0.0
        %vm821 = vcmp.ge.f32.partialorder %v789, 0.0
        %vm822 = vcmp.ge.f32.partialorder %v790, 0.0
        %vm823 = vcmp.ge.f32.partialorder %v791, 0.0
        %vm824 = vcmp.ge.f32.partialorder %v792, 0.0
        %vm825 = vcmp.ge.f32.partialorder %v793, 0.0
        %vm826 = vcmp.ge.f32.partialorder %v794, 0.0
        %vm827 = vcmp.ge.f32.partialorder %v795, 0.0
        %vm828 = vcmp.ge.f32.partialorder %v796, 0.0
        %vm829 = vcmp.ge.f32.partialorder %v797, 0.0
        %vm830 = vcmp.ge.f32.partialorder %v798, 0.0
        %vm831 = vcmp.ge.f32.partialorder %v799, 0.0
        %vm832 = vcmp.ge.f32.partialorder %v800, 0.0
        %vm833 = vcmp.ge.f32.partialorder %v801, 0.0
        %vm834 = vcmp.ge.f32.partialorder %v802, 0.0
        %vm835 = vcmp.ge.f32.partialorder %v803, 0.0
        %vm836 = vcmp.ge.f32.partialorder %v804, 0.0
        %vm837 = vcmp.ge.f32.partialorder %v805, 0.0
        %vm838 = vcmp.ge.f32.partialorder %v806, 0.0
        %vm839 = vcmp.ge.f32.partialorder %v807, 0.0
        %vm840 = vcmp.ge.f32.partialorder %v808, 0.0
        %vm841 = vcmp.ge.f32.partialorder %v809, 0.0
        %vm842 = vcmp.ge.f32.partialorder %v810, 0.0
        %vm843 = vcmp.ge.f32.partialorder %v811, 0.0
        %vm844 = vcmp.ge.f32.partialorder %v812, 0.0
        %vm845 = vcmp.ge.f32.partialorder %v813, 0.0
        %vm846 = vcmp.ge.f32.partialorder %v814, 0.0
        %vm847 = vcmp.ge.f32.partialorder %v815, 0.0
        %vm848 = vcmp.ge.f32.partialorder %v816, 0.0
        %vm849 = vcmp.ge.f32.partialorder %v817, 0.0
        %vm850 = vcmp.ge.f32.partialorder %v818, 0.0
        %v851 = vmul.f32 %v787, 0.1
        %v852 = vmul.f32 %v788, 0.1
        %v853 = vmul.f32 %v789, 0.1
        %v854 = vmul.f32 %v790, 0.1
        %v855 = vmul.f32 %v791, 0.1
        %v856 = vmul.f32 %v792, 0.1
        %v857 = vmul.f32 %v793, 0.1
        %v858 = vmul.f32 %v794, 0.1
        %v859 = vmul.f32 %v795, 0.1
        %v860 = vmul.f32 %v796, 0.1
        %v861 = vmul.f32 %v797, 0.1
        %v862 = vmul.f32 %v798, 0.1
        %v863 = vmul.f32 %v799, 0.1
        %v864 = vmul.f32 %v800, 0.1
        %v865 = vmul.f32 %v801, 0.1
        %v866 = vmul.f32 %v802, 0.1
        %v867 = vmul.f32 %v803, 0.1
        %v868 = vmul.f32 %v804, 0.1
        %v869 = vmul.f32 %v805, 0.1
        %v870 = vmul.f32 %v806, 0.1
        %v871 = vmul.f32 %v807, 0.1
        %v872 = vmul.f32 %v808, 0.1
        %v873 = vmul.f32 %v809, 0.1
        %v874 = vmul.f32 %v810, 0.1
        %v875 = vmul.f32 %v811, 0.1
        %v876 = vmul.f32 %v812, 0.1
        %v877 = vmul.f32 %v813, 0.1
        %v878 = vmul.f32 %v814, 0.1
        %v879 = vmul.f32 %v815, 0.1
        %v880 = vmul.f32 %v816, 0.1
        %v881 = vmul.f32 %v817, 0.1
        %v882 = vmul.f32 %v818, 0.1
        %v883 = vsel %vm819, %v787, %v851
        %v884 = vsel %vm820, %v788, %v852
        %v885 = vsel %vm821, %v789, %v853
        %v886 = vsel %vm822, %v790, %v854
        %v887 = vsel %vm823, %v791, %v855
        %v888 = vsel %vm824, %v792, %v856
        %v889 = vsel %vm825, %v793, %v857
        %v890 = vsel %vm826, %v794, %v858
        %v891 = vsel %vm827, %v795, %v859
        %v892 = vsel %vm828, %v796, %v860
        %v893 = vsel %vm829, %v797, %v861
        %v894 = vsel %vm830, %v798, %v862
        %v895 = vsel %vm831, %v799, %v863
        %v896 = vsel %vm832, %v800, %v864
        %v897 = vsel %vm833, %v801, %v865
        %v898 = vsel %vm834, %v802, %v866
        %v899 = vsel %vm835, %v803, %v867
        %v900 = vsel %vm836, %v804, %v868
        %v901 = vsel %vm837, %v805, %v869
        %v902 = vsel %vm838, %v806, %v870
        %v903 = vsel %vm839, %v807, %v871
        %v904 = vsel %vm840, %v808, %v872
        %v905 = vsel %vm841, %v809, %v873
        %v906 = vsel %vm842, %v810, %v874
        %v907 = vsel %vm843, %v811, %v875
        %v908 = vsel %vm844, %v812, %v876
        %v909 = vsel %vm845, %v813, %v877
        %v910 = vsel %vm846, %v814, %v878
        %v911 = vsel %vm847, %v815, %v879
        %v912 = vsel %vm848, %v816, %v880
        %v913 = vsel %vm849, %v817, %v881
        %v914 = vsel %vm850, %v818, %v882
        %v915 = vpack.c.bf16 %v884, %v883
        %v916 = vpack.c.bf16 %v886, %v885
        %v917 = vpack.c.bf16 %v888, %v887
        %v918 = vpack.c.bf16 %v890, %v889
        %v919 = vpack.c.bf16 %v892, %v891
        %v920 = vpack.c.bf16 %v894, %v893
        %v921 = vpack.c.bf16 %v896, %v895
        %v922 = vpack.c.bf16 %v898, %v897
        %v923 = vpack.c.bf16 %v900, %v899
        %v924 = vpack.c.bf16 %v902, %v901
        %v925 = vpack.c.bf16 %v904, %v903
        %v926 = vpack.c.bf16 %v906, %v905
        %v927 = vpack.c.bf16 %v908, %v907
        %v928 = vpack.c.bf16 %v910, %v909
        %v929 = vpack.c.bf16 %v912, %v911
        %v930 = vpack.c.bf16 %v914, %v913
        %v947 = vunpack.c.l.b16 %v915
        %v948 = vunpack.c.h.b16 %v915
        %v949 = vunpack.c.l.b16 %v916
        %v950 = vunpack.c.h.b16 %v916
        %v951 = vunpack.c.l.b16 %v917
        %v952 = vunpack.c.h.b16 %v917
        %v953 = vunpack.c.l.b16 %v918
        %v954 = vunpack.c.h.b16 %v918
        %v955 = vunpack.c.l.b16 %v919
        %v956 = vunpack.c.h.b16 %v919
        %v957 = vunpack.c.l.b16 %v920
        %v958 = vunpack.c.h.b16 %v920
        %v959 = vunpack.c.l.b16 %v921
        %v960 = vunpack.c.h.b16 %v921
        %v961 = vunpack.c.l.b16 %v922
        %v962 = vunpack.c.h.b16 %v922
        %v963 = vunpack.c.l.b16 %v923
        %v964 = vunpack.c.h.b16 %v923
        %v965 = vunpack.c.l.b16 %v924
        %v966 = vunpack.c.h.b16 %v924
        %v967 = vunpack.c.l.b16 %v925
        %v968 = vunpack.c.h.b16 %v925
        %v969 = vunpack.c.l.b16 %v926
        %v970 = vunpack.c.h.b16 %v926
        %v971 = vunpack.c.l.b16 %v927
        %v972 = vunpack.c.h.b16 %v927
        %v973 = vunpack.c.l.b16 %v928
        %v974 = vunpack.c.h.b16 %v928
        %v975 = vunpack.c.l.b16 %v929
        %v976 = vunpack.c.h.b16 %v929
        %v977 = vunpack.c.l.b16 %v930
        %v978 = vunpack.c.h.b16 %v930
        %v979 = vpack.c.b16 %v947, %v947
        %v980 = vpack.c.b16 %v948, %v948
        %v981 = vpack.c.b16 %v949, %v949
        %v982 = vpack.c.b16 %v950, %v950
        %v983 = vpack.c.b16 %v951, %v951
        %v984 = vpack.c.b16 %v952, %v952
        %v985 = vpack.c.b16 %v953, %v953
        %v986 = vpack.c.b16 %v954, %v954
        %v987 = vpack.c.b16 %v955, %v955
        %v988 = vpack.c.b16 %v956, %v956
        %v989 = vpack.c.b16 %v957, %v957
        %v990 = vpack.c.b16 %v958, %v958
        %v991 = vpack.c.b16 %v959, %v959
        %v992 = vpack.c.b16 %v960, %v960
        %v993 = vpack.c.b16 %v961, %v961
        %v994 = vpack.c.b16 %v962, %v962
        %v995 = vpack.c.b16 %v963, %v963
        %v996 = vpack.c.b16 %v964, %v964
        %v997 = vpack.c.b16 %v965, %v965
        %v998 = vpack.c.b16 %v966, %v966
        %v999 = vpack.c.b16 %v967, %v967
        %v1000 = vpack.c.b16 %v968, %v968
        %v1001 = vpack.c.b16 %v969, %v969
        %v1002 = vpack.c.b16 %v970, %v970
        %v1003 = vpack.c.b16 %v971, %v971
        %v1004 = vpack.c.b16 %v972, %v972
        %v1005 = vpack.c.b16 %v973, %v973
        %v1006 = vpack.c.b16 %v974, %v974
        %v1007 = vpack.c.b16 %v975, %v975
        %v1008 = vpack.c.b16 %v976, %v976
        %v1009 = vpack.c.b16 %v977, %v977
        %v1010 = vpack.c.b16 %v978, %v978
        %1043 = vst [vmem:[%s257] sm:$0xf] %v979
        %1044 = vst [vmem:[%s257 + $0x4] sm:$0xf] %v980
        %1045 = vst [vmem:[%s257 + $0x8] sm:$0xf] %v981
        %1046 = vst [vmem:[%s257 + $0xc] sm:$0xf] %v982
        %1047 = vst [vmem:[%s257 + $0x10] sm:$0xf] %v983
        %1048 = vst [vmem:[%s257 + $0x14] sm:$0xf] %v984
        %1049 = vst [vmem:[%s257 + $0x18] sm:$0xf] %v985
        %1050 = vst [vmem:[%s257 + $0x1c] sm:$0xf] %v986
        %1051 = vst [vmem:[%s257 + $0x20] sm:$0xf] %v987
        %1052 = vst [vmem:[%s257 + $0x24] sm:$0xf] %v988
        %1053 = vst [vmem:[%s257 + $0x28] sm:$0xf] %v989
        %1054 = vst [vmem:[%s257 + $0x2c] sm:$0xf] %v990
        %1055 = vst [vmem:[%s257 + $0x30] sm:$0xf] %v991
        %1056 = vst [vmem:[%s257 + $0x34] sm:$0xf] %v992
        %1057 = vst [vmem:[%s257 + $0x38] sm:$0xf] %v993
        %1058 = vst [vmem:[%s257 + $0x3c] sm:$0xf] %v994
        %1059 = vst [vmem:[%s257 + $0x40] sm:$0xf] %v995
        %1060 = vst [vmem:[%s257 + $0x44] sm:$0xf] %v996
        %1061 = vst [vmem:[%s257 + $0x48] sm:$0xf] %v997
        %1062 = vst [vmem:[%s257 + $0x4c] sm:$0xf] %v998
        %1063 = vst [vmem:[%s257 + $0x50] sm:$0xf] %v999
        %1064 = vst [vmem:[%s257 + $0x54] sm:$0xf] %v1000
        %1065 = vst [vmem:[%s257 + $0x58] sm:$0xf] %v1001
        %1066 = vst [vmem:[%s257 + $0x5c] sm:$0xf] %v1002
        %1067 = vst [vmem:[%s257 + $0x60] sm:$0xf] %v1003
        %1068 = vst [vmem:[%s257 + $0x64] sm:$0xf] %v1004
        %1069 = vst [vmem:[%s257 + $0x68] sm:$0xf] %v1005
        %1070 = vst [vmem:[%s257 + $0x6c] sm:$0xf] %v1006
        %1071 = vst [vmem:[%s257 + $0x70] sm:$0xf] %v1007
        %1072 = vst [vmem:[%s257 + $0x74] sm:$0xf] %v1008
        %1073 = vst [vmem:[%s257 + $0x78] sm:$0xf] %v1009
        %1074 = vst [vmem:[%s257 + $0x7c] sm:$0xf] %v1010
      $region40: #{darknet53_forward.9} parent=31 // pred_fallthru
        _
      %s1075 = smul.u32 32, %s19
      %p1076 = scmp.lt.s32.totalorder %s1075, 63
      %s1077 = scalar_select %p1076, %s1075, 63
      %p1078 = scmp.lt.s32.totalorder %s20, 0
      %s1079 = scalar_select %p1078, %s20, 0
      %s1080 = sadd.s32 %s1079, %s1077
      %s1081 = smul.addr %s1080, 4
      %s1082 = scalar_lea.vmem %s3, %s1081
      // Predicated region
      $region41: #{darknet53_forward.9} parent=31 // pred_check
        %p1083 = pneg %p135
      $region42: #{darknet53_forward.9} parent=31 // pred_check_branch
        %1085 = sbr.rel (%p1083) target = $region44
      $region43: #{darknet53_forward.9} parent=31 // pred_region
        %s1086 = smul.u32 32, %s19
      $region44: #{darknet53_forward.9} parent=31 // pred_fallthru
        _
    $region32: #{darknet53_forward.9} parent=5 // pred_fallthru
      _
    %p1087 = scmp.le.s32.totalorder 2, %s9
    // Predicated region
    $region45: #{darknet53_forward.9} parent=5 // pred_check
      %p1088 = pneg %p1087
    $region46: #{darknet53_forward.9} parent=5 // pred_check_branch
      %1090 = sbr.rel (%p1088) target = $region48
    $region47: #{darknet53_forward.9} parent=5 // pred_region
      %s1091 = ssub.s32 %s9, 2
      // Predicated region
      $region49: #{darknet53_forward.9} parent=47 // pred_check
        %p1092 = pneg %p141
      $region50: #{darknet53_forward.9} parent=47 // pred_check_branch
        %1094 = sbr.rel (%p1092) target = $region52
      $region51: #{darknet53_forward.9} parent=47 // pred_region
        %s1095 = smul.u32 32, %s22
        %p1096 = scmp.lt.s32.totalorder %s1095, 63
        %s1097 = scalar_select %p1096, %s1095, 63
        %p1098 = scmp.lt.s32.totalorder %s23, 0
        %s1099 = scalar_select %p1098, %s23, 0
        %s1100 = sadd.s32 %s1099, %s1097
        %s1101 = smul.addr %s1100, 4
        %s1102 = scalar_lea.vmem %s3, %s1101
      $region52: #{darknet53_forward.9} parent=47 // pred_fallthru
        _
    $region48: #{darknet53_forward.9} parent=5 // pred_fallthru
      _
  $region6: #{darknet53_forward.9} parent=0 // loop_footer
    %s13 = sadd.s32 1, %s9
  $region7: #{darknet53_forward.9} parent=0 // loop_footer_branch
    %8 = sbr.rel target = $region3
  $region8: #{darknet53_forward.9} parent=0 // loop_exit
    _

// kernel: darknet53_forward.8
$region0: #{darknet53_forward.8}
  #allocation0 [shape = 'u32[]', space=smem, size = 0x4, offset = 0x4, fixed_abs, tag = 'smem constant byte address 0x4 - core index']
  #allocation1 [shape = 'u32[144,128]{1,0:T(1,128)}', space=vmem, size = 0x12000, scoped, tag = 'internal scratch']
  #allocation2 [shape = 'f32[256,128]{1,0:T(8,128)}', space=vmem, size = 0x20000, scoped, tag = 'scratch operand']
  %s0 = inlined_call_operand.vmem [shape: bf16[512,384], index: 0, kind: input, shape index: {}]
  %s1 = inlined_call_operand.vmem [shape: bf16[384,128], index: 1, kind: input, shape index: {}]
  %s2 = inlined_call_operand.vmem [shape: f32[1,128], index: 2, kind: input, shape index: {}]
  %s3 = inlined_call_operand.vmem [shape: bf16[512,128], index: 3, kind: output, shape index: {}]
  %s4 = sld [smem:[#allocation0]]
  $region53: #{darknet53_forward.8} parent=0
    _
  %s6 = ssub.s32 1, %s4
  %s7 = scalar_select 0, %s6, %s4
  loop: start=0, step=1, limit=4
  $region2: #{darknet53_forward.8} parent=0 // loop_pre_header
    _
  $region3: #{darknet53_forward.8} parent=0 // loop_header
    %s9 = sphi 0, %s13
    %p10 = scmp.ge.s32.totalorder %s9, 4
    %s16 = sphi 0, %s35
    %s17 = sphi 0, %s31
    %s18 = sphi 0, %s27
    %s19 = sphi 0, %s16
    %s20 = sphi 0, %s17
    %s21 = sphi 0, %s18
    %s22 = sphi 0, %s19
    %s23 = sphi 0, %s20
    %s24 = sphi 0, %s21
    %s40 = sphi 0, %s42
    %s43 = sphi 0, %s40
    %s44 = sphi 0, %s43
    %s60 = sphi 0, %s44
    %s68 = sphi 0, %s70
    %s71 = sphi 0, %s68
    %s72 = sphi 0, %s71
    %s88 = sphi 0, %s72
    %s94 = sphi 0, %s96
    %s97 = sphi 0, %s94
    %s98 = sphi 0, %s97
    %s114 = sphi 0, %s98
    %s122 = sphi 0, %s124
    %s125 = sphi 0, %s122
    %s126 = sphi 0, %s125
    %s142 = sphi 0, %s126
  $region4: #{darknet53_forward.8} parent=0 // loop_header_branch
    %12 = sbr.rel (%p10) target = $region8
  $region5: #{darknet53_forward.8} parent=0 // loop_body
    %s14 = ssub.s32 %s9, 1
    %s15 = ssub.s32 %s9, 2
    %s25 = sadd.s32 1, %s18
    %p26 = scmp.ge.s32.totalorder %s25, 1
    %s27 = scalar_select %p26, 0, %s25
    %s28 = sadd.s32 1, %s17
    %s29 = scalar_select %p26, %s28, %s17
    %p30 = scmp.ge.s32.totalorder %s29, 1
    %s31 = scalar_select %p30, 0, %s29
    %s32 = sadd.s32 1, %s16
    %s33 = scalar_select %p30, %s32, %s16
    %p34 = scmp.ge.s32.totalorder %s33, 2
    %s35 = scalar_select %p34, 0, %s33
    %s36 = ssub.s32 %s16, %s35
    %s37 = ssub.s32 %s18, %s27
    %s38 = sor.u32 %s36, %s37
    %p39 = scmp.eq.s32.totalorder %s38, 0
    %s41 = sadd.s32 %s40, 1
    %s42 = scalar_select %p39, %s40, %s41
    %p45 = pneg %p39
    %p46 = scmp.eq.s32.totalorder %s9, 1
    %p47 = por %p45, %p46
    %p48 = scmp.ne.s32.totalorder %s40, %s43
    %p49 = scmp.eq.s32.totalorder %s9, 0
    %p50 = por %p48, %p49
    %p51 = scmp.ne.s32.totalorder %s40, %s43
    %p52 = scmp.eq.s32.totalorder %s14, 1
    %p53 = por %p51, %p52
    %p54 = scmp.ne.s32.totalorder %s43, %s44
    %p55 = scmp.eq.s32.totalorder %s14, 0
    %p56 = por %p54, %p55
    %p57 = scmp.ne.s32.totalorder %s43, %s44
    %p58 = scmp.eq.s32.totalorder %s15, 1
    %p59 = por %p57, %p58
    %p61 = scmp.ne.s32.totalorder %s44, %s60
    %p62 = scmp.eq.s32.totalorder %s15, 0
    %p63 = por %p61, %p62
    %s64 = ssub.s32 %s18, %s27
    %s65 = ssub.s32 %s17, %s31
    %s66 = sor.u32 %s64, %s65
    %p67 = scmp.eq.s32.totalorder %s66, 0
    %s69 = sadd.s32 %s68, 1
    %s70 = scalar_select %p67, %s68, %s69
    %p73 = pneg %p67
    %p74 = scmp.eq.s32.totalorder %s9, 1
    %p75 = por %p73, %p74
    %p76 = scmp.ne.s32.totalorder %s68, %s71
    %p77 = scmp.eq.s32.totalorder %s9, 0
    %p78 = por %p76, %p77
    %p79 = scmp.ne.s32.totalorder %s68, %s71
    %p80 = scmp.eq.s32.totalorder %s14, 1
    %p81 = por %p79, %p80
    %p82 = scmp.ne.s32.totalorder %s71, %s72
    %p83 = scmp.eq.s32.totalorder %s14, 0
    %p84 = por %p82, %p83
    %p85 = scmp.ne.s32.totalorder %s71, %s72
    %p86 = scmp.eq.s32.totalorder %s15, 1
    %p87 = por %p85, %p86
    %p89 = scmp.ne.s32.totalorder %s72, %s88
    %p90 = scmp.eq.s32.totalorder %s15, 0
    %p91 = por %p89, %p90
    %s92 = ssub.s32 %s17, %s31
    %p93 = scmp.eq.s32.totalorder %s92, 0
    %s95 = sadd.s32 %s94, 1
    %s96 = scalar_select %p93, %s94, %s95
    %p99 = pneg %p93
    %p100 = scmp.eq.s32.totalorder %s9, 1
    %p101 = por %p99, %p100
    %p102 = scmp.ne.s32.totalorder %s94, %s97
    %p103 = scmp.eq.s32.totalorder %s9, 0
    %p104 = por %p102, %p103
    %p105 = scmp.ne.s32.totalorder %s94, %s97
    %p106 = scmp.eq.s32.totalorder %s14, 1
    %p107 = por %p105, %p106
    %p108 = scmp.ne.s32.totalorder %s97, %s98
    %p109 = scmp.eq.s32.totalorder %s14, 0
    %p110 = por %p108, %p109
    %p111 = scmp.ne.s32.totalorder %s97, %s98
    %p112 = scmp.eq.s32.totalorder %s15, 1
    %p113 = por %p111, %p112
    %p115 = scmp.ne.s32.totalorder %s98, %s114
    %p116 = scmp.eq.s32.totalorder %s15, 0
    %p117 = por %p115, %p116
    %s118 = ssub.s32 %s16, %s35
    %s119 = ssub.s32 %s17, %s31
    %s120 = sor.u32 %s118, %s119
    %p121 = scmp.eq.s32.totalorder %s120, 0
    %s123 = sadd.s32 %s122, 1
    %s124 = scalar_select %p121, %s122, %s123
    %p127 = pneg %p121
    %p128 = scmp.eq.s32.totalorder %s9, 1
    %p129 = por %p127, %p128
    %p130 = scmp.ne.s32.totalorder %s122, %s125
    %p131 = scmp.eq.s32.totalorder %s9, 0
    %p132 = por %p130, %p131
    %p133 = scmp.ne.s32.totalorder %s122, %s125
    %p134 = scmp.eq.s32.totalorder %s14, 1
    %p135 = por %p133, %p134
    %p136 = scmp.ne.s32.totalorder %s125, %s126
    %p137 = scmp.eq.s32.totalorder %s14, 0
    %p138 = por %p136, %p137
    %p139 = scmp.ne.s32.totalorder %s125, %s126
    %p140 = scmp.eq.s32.totalorder %s15, 1
    %p141 = por %p139, %p140
    %p143 = scmp.ne.s32.totalorder %s126, %s142
    %p144 = scmp.eq.s32.totalorder %s15, 0
    %p145 = por %p143, %p144
    %p146 = scmp.le.s32.totalorder 1, %s9
    %p147 = scmp.lt.s32.totalorder %s9, 3
    %p148 = pnand %p146, %p147
    %p149 = pneg %p148
    // Predicated region
    $region9: #{darknet53_forward.8} parent=5 // pred_check
      _
    $region10: #{darknet53_forward.8} parent=5 // pred_check_branch
      %151 = sbr.rel (%p148) target = $region12
    $region11: #{darknet53_forward.8} parent=5 // pred_region
      %s152 = ssub.s32 %s9, 1
      // Predicated region
      $region13: #{darknet53_forward.8} parent=11 // pred_check
        %p153 = pneg %p84
      $region14: #{darknet53_forward.8} parent=11 // pred_check_branch
        %155 = sbr.rel (%p153) target = $region16
      $region15: #{darknet53_forward.8} parent=11 // pred_region
        %s156 = smul.u32 48, %s21
        %p157 = scmp.lt.s32.totalorder %s156, 47
        %s158 = scalar_select %p157, %s156, 47
        %p159 = scmp.lt.s32.totalorder %s20, 0
        %s160 = scalar_select %p159, %s20, 0
        %s161 = sadd.s32 %s160, %s158
        %s162 = smul.addr %s161, 4
        %s163 = scalar_lea.vmem %s1, %s162
        %s164 = smul.u32 48, %s21
      $region16: #{darknet53_forward.8} parent=11 // pred_fallthru
        _
      // Predicated region
      $region17: #{darknet53_forward.8} parent=11 // pred_check
        %p165 = pneg %p110
      $region18: #{darknet53_forward.8} parent=11 // pred_check_branch
        %167 = sbr.rel (%p165) target = $region20
      $region19: #{darknet53_forward.8} parent=11 // pred_region
        %p168 = scmp.lt.s32.totalorder %s20, 0
        %s169 = scalar_select %p168, %s20, 0
        %s170 = scalar_lea.vmem %s2, %s169
      $region20: #{darknet53_forward.8} parent=11 // pred_fallthru
        _
    $region12: #{darknet53_forward.8} parent=5 // pred_fallthru
      _
    %p171 = scmp.lt.s32.totalorder %s9, 2
    // Predicated region
    $region21: #{darknet53_forward.8} parent=5 // pred_check
      %p172 = pneg %p171
    $region22: #{darknet53_forward.8} parent=5 // pred_check_branch
      %174 = sbr.rel (%p172) target = $region24
    $region23: #{darknet53_forward.8} parent=5 // pred_region
      // Predicated region
      $region25: #{darknet53_forward.8} parent=23 // pred_check
        %p175 = pneg %p50
      $region26: #{darknet53_forward.8} parent=23 // pred_check_branch
        %177 = sbr.rel (%p175) target = $region28
      $region27: #{darknet53_forward.8} parent=23 // pred_region
        %s178 = smul.u32 32, %s16
        %s179 = smul.u32 3, %s18
        %p180 = scmp.lt.s32.totalorder %s178, 63
        %s181 = scalar_select %p180, %s178, 63
        %p182 = scmp.lt.s32.totalorder %s179, 2
        %s183 = scalar_select %p182, %s179, 2
        %s184 = smul.addr %s181, 3
        %s185 = sadd.s32 %s183, %s184
        %s186 = smul.addr %s185, 4
        %s187 = scalar_lea.vmem %s0, %s186
        %s188 = smul.u32 32, %s16
        %s189 = smul.u32 3, %s18
      $region28: #{darknet53_forward.8} parent=23 // pred_fallthru
        _
    $region24: #{darknet53_forward.8} parent=5 // pred_fallthru
      _
    %p190 = scmp.le.s32.totalorder 1, %s9
    %p191 = scmp.lt.s32.totalorder %s9, 3
    %p192 = pnand %p190, %p191
    %p193 = pneg %p192
    // Predicated region
    $region29: #{darknet53_forward.8} parent=5 // pred_check
      _
    $region30: #{darknet53_forward.8} parent=5 // pred_check_branch
      %195 = sbr.rel (%p192) target = $region32
    $region31: #{darknet53_forward.8} parent=5 // pred_region
      %s196 = ssub.s32 %s9, 1
      %s197 = smul.u32 32, %s19
      %s198 = smul.u32 3, %s21
      %p199 = scmp.lt.s32.totalorder %s197, 63
      %s200 = scalar_select %p199, %s197, 63
      %p201 = scmp.lt.s32.totalorder %s198, 2
      %s202 = scalar_select %p201, %s198, 2
      %s203 = smul.addr %s200, 3
      %s204 = sadd.s32 %s202, %s203
      %s205 = smul.addr %s204, 4
      %s206 = scalar_lea.vmem %s0, %s205
      %p207 = pneg %p56
      %p208 = pneg %p53
      %s209 = smul.u32 48, %s21
      %p210 = scmp.lt.s32.totalorder %s209, 47
      %s211 = scalar_select %p210, %s209, 47
      %p212 = scmp.lt.s32.totalorder %s20, 0
      %s213 = scalar_select %p212, %s20, 0
      %s214 = sadd.s32 %s213, %s211
      %s215 = smul.addr %s214, 4
      %s216 = scalar_lea.vmem %s1, %s215
      %p217 = pneg %p84
      %p218 = pneg %p81
      %p219 = scmp.lt.s32.totalorder %s20, 0
      %s220 = scalar_select %p219, %s20, 0
      %s221 = scalar_lea.vmem %s2, %s220
      %p222 = pneg %p110
      %p223 = pneg %p107
      %p224 = pneg %p138
      %p225 = pneg %p135
      %s226 = smul.u32 32, %s19
      %p227 = scmp.lt.s32.totalorder %s226, 63
      %s228 = scalar_select %p227, %s226, 63
      %p229 = scmp.lt.s32.totalorder %s20, 0
      %s230 = scalar_select %p229, %s20, 0
      %s231 = sadd.s32 %s230, %s228
      %s232 = smul.addr %s231, 4
      %s233 = scalar_lea.vmem %s3, %s232
      %s234 = smul.u32 32, %s19
      %s235 = smul.u32 3, %s21
      %p236 = scmp.lt.s32.totalorder %s234, 63
      %s237 = scalar_select %p236, %s234, 63
      %p238 = scmp.lt.s32.totalorder %s235, 2
      %s239 = scalar_select %p238, %s235, 2
      %s240 = smul.addr %s237, 3
      %s241 = sadd.s32 %s239, %s240
      %s242 = smul.addr %s241, 4
      %s243 = scalar_lea.vmem %s0, %s242
      %s244 = smul.u32 32, %s19
      %s245 = smul.u32 3, %s21
      %s246 = smul.u32 48, %s21
      %p247 = scmp.lt.s32.totalorder %s246, 47
      %s248 = scalar_select %p247, %s246, 47
      %p249 = scmp.lt.s32.totalorder %s20, 0
      %s250 = scalar_select %p249, %s20, 0
      %s251 = sadd.s32 %s250, %s248
      %s252 = smul.addr %s251, 4
      %s253 = scalar_lea.vmem %s1, %s252
      %s254 = smul.u32 48, %s21
      %p255 = scmp.lt.s32.totalorder %s20, 0
      %s256 = scalar_select %p255, %s20, 0
      %s257 = scalar_lea.vmem %s2, %s256
      %s258 = smul.u32 32, %s19
      %p259 = scmp.lt.s32.totalorder %s258, 63
      %s260 = scalar_select %p259, %s258, 63
      %p261 = scmp.lt.s32.totalorder %s20, 0
      %s262 = scalar_select %p261, %s20, 0
      %s263 = sadd.s32 %s262, %s260
      %s264 = smul.addr %s263, 4
      %s265 = scalar_lea.vmem %s3, %s264
      %s266 = smul.u32 32, %s19
      %p268 = scmp.eq.s32.totalorder %s21, 0
      // Predicated region
      $region33: #{darknet53_forward.8} parent=31 // pred_check
        %p269 = pneg %p268
      $region34: #{darknet53_forward.8} parent=31 // pred_check_branch
        %271 = sbr.rel (%p269) target = $region36
      $region35: #{darknet53_forward.8} parent=31 // pred_region
        %272 = vst [vmem:[#allocation2] sm:$0xff] 0.0
        %273 = vst [vmem:[#allocation2 + $0x8] sm:$0xff] 0.0
        %274 = vst [vmem:[#allocation2 + $0x10] sm:$0xff] 0.0
        %275 = vst [vmem:[#allocation2 + $0x18] sm:$0xff] 0.0
        %276 = vst [vmem:[#allocation2 + $0x20] sm:$0xff] 0.0
        %277 = vst [vmem:[#allocation2 + $0x28] sm:$0xff] 0.0
        %278 = vst [vmem:[#allocation2 + $0x30] sm:$0xff] 0.0
        %279 = vst [vmem:[#allocation2 + $0x38] sm:$0xff] 0.0
        %280 = vst [vmem:[#allocation2 + $0x40] sm:$0xff] 0.0
        %281 = vst [vmem:[#allocation2 + $0x48] sm:$0xff] 0.0
        %282 = vst [vmem:[#allocation2 + $0x50] sm:$0xff] 0.0
        %283 = vst [vmem:[#allocation2 + $0x58] sm:$0xff] 0.0
        %284 = vst [vmem:[#allocation2 + $0x60] sm:$0xff] 0.0
        %285 = vst [vmem:[#allocation2 + $0x68] sm:$0xff] 0.0
        %286 = vst [vmem:[#allocation2 + $0x70] sm:$0xff] 0.0
        %287 = vst [vmem:[#allocation2 + $0x78] sm:$0xff] 0.0
        %288 = vst [vmem:[#allocation2 + $0x80] sm:$0xff] 0.0
        %289 = vst [vmem:[#allocation2 + $0x88] sm:$0xff] 0.0
        %290 = vst [vmem:[#allocation2 + $0x90] sm:$0xff] 0.0
        %291 = vst [vmem:[#allocation2 + $0x98] sm:$0xff] 0.0
        %292 = vst [vmem:[#allocation2 + $0xa0] sm:$0xff] 0.0
        %293 = vst [vmem:[#allocation2 + $0xa8] sm:$0xff] 0.0
        %294 = vst [vmem:[#allocation2 + $0xb0] sm:$0xff] 0.0
        %295 = vst [vmem:[#allocation2 + $0xb8] sm:$0xff] 0.0
        %296 = vst [vmem:[#allocation2 + $0xc0] sm:$0xff] 0.0
        %297 = vst [vmem:[#allocation2 + $0xc8] sm:$0xff] 0.0
        %298 = vst [vmem:[#allocation2 + $0xd0] sm:$0xff] 0.0
        %299 = vst [vmem:[#allocation2 + $0xd8] sm:$0xff] 0.0
        %300 = vst [vmem:[#allocation2 + $0xe0] sm:$0xff] 0.0
        %301 = vst [vmem:[#allocation2 + $0xe8] sm:$0xff] 0.0
        %302 = vst [vmem:[#allocation2 + $0xf0] sm:$0xff] 0.0
        %303 = vst [vmem:[#allocation2 + $0xf8] sm:$0xff] 0.0
      $region36: #{darknet53_forward.8} parent=31 // pred_fallthru
        _
      %v304 = vld [vmem:[#allocation2] sm:$0xff]
      %v305 = vld [vmem:[#allocation2 + $0x8] sm:$0xff]
      %v306 = vld [vmem:[#allocation2 + $0x10] sm:$0xff]
      %v307 = vld [vmem:[#allocation2 + $0x18] sm:$0xff]
      %v308 = vld [vmem:[#allocation2 + $0x20] sm:$0xff]
      %v309 = vld [vmem:[#allocation2 + $0x28] sm:$0xff]
      %v310 = vld [vmem:[#allocation2 + $0x30] sm:$0xff]
      %v311 = vld [vmem:[#allocation2 + $0x38] sm:$0xff]
      %v312 = vld [vmem:[#allocation2 + $0x40] sm:$0xff]
      %v313 = vld [vmem:[#allocation2 + $0x48] sm:$0xff]
      %v314 = vld [vmem:[#allocation2 + $0x50] sm:$0xff]
      %v315 = vld [vmem:[#allocation2 + $0x58] sm:$0xff]
      %v316 = vld [vmem:[#allocation2 + $0x60] sm:$0xff]
      %v317 = vld [vmem:[#allocation2 + $0x68] sm:$0xff]
      %v318 = vld [vmem:[#allocation2 + $0x70] sm:$0xff]
      %v319 = vld [vmem:[#allocation2 + $0x78] sm:$0xff]
      %v320 = vld [vmem:[#allocation2 + $0x80] sm:$0xff]
      %v321 = vld [vmem:[#allocation2 + $0x88] sm:$0xff]
      %v322 = vld [vmem:[#allocation2 + $0x90] sm:$0xff]
      %v323 = vld [vmem:[#allocation2 + $0x98] sm:$0xff]
      %v324 = vld [vmem:[#allocation2 + $0xa0] sm:$0xff]
      %v325 = vld [vmem:[#allocation2 + $0xa8] sm:$0xff]
      %v326 = vld [vmem:[#allocation2 + $0xb0] sm:$0xff]
      %v327 = vld [vmem:[#allocation2 + $0xb8] sm:$0xff]
      %v328 = vld [vmem:[#allocation2 + $0xc0] sm:$0xff]
      %v329 = vld [vmem:[#allocation2 + $0xc8] sm:$0xff]
      %v330 = vld [vmem:[#allocation2 + $0xd0] sm:$0xff]
      %v331 = vld [vmem:[#allocation2 + $0xd8] sm:$0xff]
      %v332 = vld [vmem:[#allocation2 + $0xe0] sm:$0xff]
      %v333 = vld [vmem:[#allocation2 + $0xe8] sm:$0xff]
      %v334 = vld [vmem:[#allocation2 + $0xf0] sm:$0xff]
      %v335 = vld [vmem:[#allocation2 + $0xf8] sm:$0xff]
      %v336 = vld [vmem:[%s243] sm:$0xff]
      %v337 = vld [vmem:[%s243 + $0x8] sm:$0xf]
      %v338 = vld [vmem:[%s243 + $0xc] sm:$0xff]
      %v339 = vld [vmem:[%s243 + $0x14] sm:$0xf]
      %v340 = vld [vmem:[%s243 + $0x18] sm:$0xff]
      %v341 = vld [vmem:[%s243 + $0x20] sm:$0xf]
      %v342 = vld [vmem:[%s243 + $0x24] sm:$0xff]
      %v343 = vld [vmem:[%s243 + $0x2c] sm:$0xf]
      %v344 = vld [vmem:[%s243 + $0x30] sm:$0xff]
      %v345 = vld [vmem:[%s243 + $0x38] sm:$0xf]
      %v346 = vld [vmem:[%s243 + $0x3c] sm:$0xff]
      %v347 = vld [vmem:[%s243 + $0x44] sm:$0xf]
      %v348 = vld [vmem:[%s243 + $0x48] sm:$0xff]
      %v349 = vld [vmem:[%s243 + $0x50] sm:$0xf]
      %v350 = vld [vmem:[%s243 + $0x54] sm:$0xff]
      %v351 = vld [vmem:[%s243 + $0x5c] sm:$0xf]
      %v352 = vld [vmem:[%s243 + $0x60] sm:$0xff]
      %v353 = vld [vmem:[%s243 + $0x68] sm:$0xf]
      %v354 = vld [vmem:[%s243 + $0x6c] sm:$0xff]
      %v355 = vld [vmem:[%s243 + $0x74] sm:$0xf]
      %v356 = vld [vmem:[%s243 + $0x78] sm:$0xff]
      %v357 = vld [vmem:[%s243 + $0x80] sm:$0xf]
      %v358 = vld [vmem:[%s243 + $0x84] sm:$0xff]
      %v359 = vld [vmem:[%s243 + $0x8c] sm:$0xf]
      %v360 = vld [vmem:[%s243 + $0x90] sm:$0xff]
      %v361 = vld [vmem:[%s243 + $0x98] sm:$0xf]
      %v362 = vld [vmem:[%s243 + $0x9c] sm:$0xff]
      %v363 = vld [vmem:[%s243 + $0xa4] sm:$0xf]
      %v364 = vld [vmem:[%s243 + $0xa8] sm:$0xff]
      %v365 = vld [vmem:[%s243 + $0xb0] sm:$0xf]
      %v366 = vld [vmem:[%s243 + $0xb4] sm:$0xff]
      %v367 = vld [vmem:[%s243 + $0xbc] sm:$0xf]
      %v368 = vld [vmem:[%s243 + $0xc0] sm:$0xff]
      %v369 = vld [vmem:[%s243 + $0xc8] sm:$0xf]
      %v370 = vld [vmem:[%s243 + $0xcc] sm:$0xff]
      %v371 = vld [vmem:[%s243 + $0xd4] sm:$0xf]
      %v372 = vld [vmem:[%s243 + $0xd8] sm:$0xff]
      %v373 = vld [vmem:[%s243 + $0xe0] sm:$0xf]
      %v374 = vld [vmem:[%s243 + $0xe4] sm:$0xff]
      %v375 = vld [vmem:[%s243 + $0xec] sm:$0xf]
      %v376 = vld [vmem:[%s243 + $0xf0] sm:$0xff]
      %v377 = vld [vmem:[%s243 + $0xf8] sm:$0xf]
      %v378 = vld [vmem:[%s243 + $0xfc] sm:$0xff]
      %v379 = vld [vmem:[%s243 + $0x104] sm:$0xf]
      %v380 = vld [vmem:[%s243 + $0x108] sm:$0xff]
      %v381 = vld [vmem:[%s243 + $0x110] sm:$0xf]
      %v382 = vld [vmem:[%s243 + $0x114] sm:$0xff]
      %v383 = vld [vmem:[%s243 + $0x11c] sm:$0xf]
      %v384 = vld [vmem:[%s243 + $0x120] sm:$0xff]
      %v385 = vld [vmem:[%s243 + $0x128] sm:$0xf]
      %v386 = vld [vmem:[%s243 + $0x12c] sm:$0xff]
      %v387 = vld [vmem:[%s243 + $0x134] sm:$0xf]
      %v388 = vld [vmem:[%s243 + $0x138] sm:$0xff]
      %v389 = vld [vmem:[%s243 + $0x140] sm:$0xf]
      %v390 = vld [vmem:[%s243 + $0x144] sm:$0xff]
      %v391 = vld [vmem:[%s243 + $0x14c] sm:$0xf]
      %v392 = vld [vmem:[%s243 + $0x150] sm:$0xff]
      %v393 = vld [vmem:[%s243 + $0x158] sm:$0xf]
      %v394 = vld [vmem:[%s243 + $0x15c] sm:$0xff]
      %v395 = vld [vmem:[%s243 + $0x164] sm:$0xf]
      %v396 = vld [vmem:[%s243 + $0x168] sm:$0xff]
      %v397 = vld [vmem:[%s243 + $0x170] sm:$0xf]
      %v398 = vld [vmem:[%s243 + $0x174] sm:$0xff]
      %v399 = vld [vmem:[%s243 + $0x17c] sm:$0xf]
      %v400 = vld [vmem:[%s253] sm:$0xf]
      %v401 = vld [vmem:[%s253 + $0x4] sm:$0xf]
      %v402 = vld [vmem:[%s253 + $0x8] sm:$0xf]
      %v403 = vld [vmem:[%s253 + $0xc] sm:$0xf]
      %v404 = vld [vmem:[%s253 + $0x10] sm:$0xf]
      %v405 = vld [vmem:[%s253 + $0x14] sm:$0xf]
      %v406 = vld [vmem:[%s253 + $0x18] sm:$0xf]
      %v407 = vld [vmem:[%s253 + $0x1c] sm:$0xf]
      %v408 = vld [vmem:[%s253 + $0x20] sm:$0xf]
      %v409 = vld [vmem:[%s253 + $0x24] sm:$0xf]
      %v410 = vld [vmem:[%s253 + $0x28] sm:$0xf]
      %v411 = vld [vmem:[%s253 + $0x2c] sm:$0xf]
      %v412 = vld [vmem:[%s253 + $0x30] sm:$0xf]
      %v413 = vld [vmem:[%s253 + $0x34] sm:$0xf]
      %v414 = vld [vmem:[%s253 + $0x38] sm:$0xf]
      %v415 = vld [vmem:[%s253 + $0x3c] sm:$0xf]
      %v416 = vld [vmem:[%s253 + $0x40] sm:$0xf]
      %v417 = vld [vmem:[%s253 + $0x44] sm:$0xf]
      %v418 = vld [vmem:[%s253 + $0x48] sm:$0xf]
      %v419 = vld [vmem:[%s253 + $0x4c] sm:$0xf]
      %v420 = vld [vmem:[%s253 + $0x50] sm:$0xf]
      %v421 = vld [vmem:[%s253 + $0x54] sm:$0xf]
      %v422 = vld [vmem:[%s253 + $0x58] sm:$0xf]
      %v423 = vld [vmem:[%s253 + $0x5c] sm:$0xf]
      %v424 = vld [vmem:[%s253 + $0x60] sm:$0xf]
      %v425 = vld [vmem:[%s253 + $0x64] sm:$0xf]
      %v426 = vld [vmem:[%s253 + $0x68] sm:$0xf]
      %v427 = vld [vmem:[%s253 + $0x6c] sm:$0xf]
      %v428 = vld [vmem:[%s253 + $0x70] sm:$0xf]
      %v429 = vld [vmem:[%s253 + $0x74] sm:$0xf]
      %v430 = vld [vmem:[%s253 + $0x78] sm:$0xf]
      %v431 = vld [vmem:[%s253 + $0x7c] sm:$0xf]
      %v432 = vld [vmem:[%s253 + $0x80] sm:$0xf]
      %v433 = vld [vmem:[%s253 + $0x84] sm:$0xf]
      %v434 = vld [vmem:[%s253 + $0x88] sm:$0xf]
      %v435 = vld [vmem:[%s253 + $0x8c] sm:$0xf]
      %v436 = vld [vmem:[%s253 + $0x90] sm:$0xf]
      %v437 = vld [vmem:[%s253 + $0x94] sm:$0xf]
      %v438 = vld [vmem:[%s253 + $0x98] sm:$0xf]
      %v439 = vld [vmem:[%s253 + $0x9c] sm:$0xf]
      %v440 = vld [vmem:[%s253 + $0xa0] sm:$0xf]
      %v441 = vld [vmem:[%s253 + $0xa4] sm:$0xf]
      %v442 = vld [vmem:[%s253 + $0xa8] sm:$0xf]
      %v443 = vld [vmem:[%s253 + $0xac] sm:$0xf]
      %v444 = vld [vmem:[%s253 + $0xb0] sm:$0xf]
      %v445 = vld [vmem:[%s253 + $0xb4] sm:$0xf]
      %v446 = vld [vmem:[%s253 + $0xb8] sm:$0xf]
      %v447 = vld [vmem:[%s253 + $0xbc] sm:$0xf]
      %v512 = vunpack.c.l.b16 %v336
      %v513 = vunpack.c.h.b16 %v336
      %v514 = vunpack.c.l.b16 %v337
      %v515 = vunpack.c.l.b16 %v338
      %v516 = vunpack.c.h.b16 %v338
      %v517 = vunpack.c.l.b16 %v339
      %v518 = vunpack.c.l.b16 %v340
      %v519 = vunpack.c.h.b16 %v340
      %v520 = vunpack.c.l.b16 %v341
      %v521 = vunpack.c.l.b16 %v342
      %v522 = vunpack.c.h.b16 %v342
      %v523 = vunpack.c.l.b16 %v343
      %v524 = vunpack.c.l.b16 %v344
      %v525 = vunpack.c.h.b16 %v344
      %v526 = vunpack.c.l.b16 %v345
      %v527 = vunpack.c.l.b16 %v346
      %v528 = vunpack.c.h.b16 %v346
      %v529 = vunpack.c.l.b16 %v347
      %v530 = vunpack.c.l.b16 %v348
      %v531 = vunpack.c.h.b16 %v348
      %v532 = vunpack.c.l.b16 %v349
      %v533 = vunpack.c.l.b16 %v350
      %v534 = vunpack.c.h.b16 %v350
      %v535 = vunpack.c.l.b16 %v351
      %v536 = vunpack.c.l.b16 %v352
      %v537 = vunpack.c.h.b16 %v352
      %v538 = vunpack.c.l.b16 %v353
      %v539 = vunpack.c.l.b16 %v354
      %v540 = vunpack.c.h.b16 %v354
      %v541 = vunpack.c.l.b16 %v355
      %v542 = vunpack.c.l.b16 %v356
      %v543 = vunpack.c.h.b16 %v356
      %v544 = vunpack.c.l.b16 %v357
      %v545 = vunpack.c.l.b16 %v358
      %v546 = vunpack.c.h.b16 %v358
      %v547 = vunpack.c.l.b16 %v359
      %v548 = vunpack.c.l.b16 %v360
      %v549 = vunpack.c.h.b16 %v360
      %v550 = vunpack.c.l.b16 %v361
      %v551 = vunpack.c.l.b16 %v362
      %v552 = vunpack.c.h.b16 %v362
      %v553 = vunpack.c.l.b16 %v363
      %v554 = vunpack.c.l.b16 %v364
      %v555 = vunpack.c.h.b16 %v364
      %v556 = vunpack.c.l.b16 %v365
      %v557 = vunpack.c.l.b16 %v366
      %v558 = vunpack.c.h.b16 %v366
      %v559 = vunpack.c.l.b16 %v367
      %v560 = vunpack.c.l.b16 %v368
      %v561 = vunpack.c.h.b16 %v368
      %v562 = vunpack.c.l.b16 %v369
      %v563 = vunpack.c.l.b16 %v370
      %v564 = vunpack.c.h.b16 %v370
      %v565 = vunpack.c.l.b16 %v371
      %v566 = vunpack.c.l.b16 %v372
      %v567 = vunpack.c.h.b16 %v372
      %v568 = vunpack.c.l.b16 %v373
      %v569 = vunpack.c.l.b16 %v374
      %v570 = vunpack.c.h.b16 %v374
      %v571 = vunpack.c.l.b16 %v375
      %v572 = vunpack.c.l.b16 %v376
      %v573 = vunpack.c.h.b16 %v376
      %v574 = vunpack.c.l.b16 %v377
      %v575 = vunpack.c.l.b16 %v378
      %v576 = vunpack.c.h.b16 %v378
      %v577 = vunpack.c.l.b16 %v379
      %v578 = vunpack.c.l.b16 %v380
      %v579 = vunpack.c.h.b16 %v380
      %v580 = vunpack.c.l.b16 %v381
      %v581 = vunpack.c.l.b16 %v382
      %v582 = vunpack.c.h.b16 %v382
      %v583 = vunpack.c.l.b16 %v383
      %v584 = vunpack.c.l.b16 %v384
      %v585 = vunpack.c.h.b16 %v384
      %v586 = vunpack.c.l.b16 %v385
      %v587 = vunpack.c.l.b16 %v386
      %v588 = vunpack.c.h.b16 %v386
      %v589 = vunpack.c.l.b16 %v387
      %v590 = vunpack.c.l.b16 %v388
      %v591 = vunpack.c.h.b16 %v388
      %v592 = vunpack.c.l.b16 %v389
      %v593 = vunpack.c.l.b16 %v390
      %v594 = vunpack.c.h.b16 %v390
      %v595 = vunpack.c.l.b16 %v391
      %v596 = vunpack.c.l.b16 %v392
      %v597 = vunpack.c.h.b16 %v392
      %v598 = vunpack.c.l.b16 %v393
      %v599 = vunpack.c.l.b16 %v394
      %v600 = vunpack.c.h.b16 %v394
      %v601 = vunpack.c.l.b16 %v395
      %v602 = vunpack.c.l.b16 %v396
      %v603 = vunpack.c.h.b16 %v396
      %v604 = vunpack.c.l.b16 %v397
      %v605 = vunpack.c.l.b16 %v398
      %v606 = vunpack.c.h.b16 %v398
      %v607 = vunpack.c.l.b16 %v399
      %v608 = vpack.c.b16 %v515, %v512
      %v609 = vpack.c.b16 %v516, %v513
      %v610 = vpack.c.b16 %v517, %v514
      %v611 = vpack.c.b16 %v521, %v518
      %v612 = vpack.c.b16 %v522, %v519
      %v613 = vpack.c.b16 %v523, %v520
      %v614 = vpack.c.b16 %v527, %v524
      %v615 = vpack.c.b16 %v528, %v525
      %v616 = vpack.c.b16 %v529, %v526
      %v617 = vpack.c.b16 %v533, %v530
      %v618 = vpack.c.b16 %v534, %v531
      %v619 = vpack.c.b16 %v535, %v532
      %v620 = vpack.c.b16 %v539, %v536
      %v621 = vpack.c.b16 %v540, %v537
      %v622 = vpack.c.b16 %v541, %v538
      %v623 = vpack.c.b16 %v545, %v542
      %v624 = vpack.c.b16 %v546, %v543
      %v625 = vpack.c.b16 %v547, %v544
      %v626 = vpack.c.b16 %v551, %v548
      %v627 = vpack.c.b16 %v552, %v549
      %v628 = vpack.c.b16 %v553, %v550
      %v629 = vpack.c.b16 %v557, %v554
      %v630 = vpack.c.b16 %v558, %v555
      %v631 = vpack.c.b16 %v559, %v556
      %v632 = vpack.c.b16 %v563, %v560
      %v633 = vpack.c.b16 %v564, %v561
      %v634 = vpack.c.b16 %v565, %v562
      %v635 = vpack.c.b16 %v569, %v566
      %v636 = vpack.c.b16 %v570, %v567
      %v637 = vpack.c.b16 %v571, %v568
      %v638 = vpack.c.b16 %v575, %v572
      %v639 = vpack.c.b16 %v576, %v573
      %v640 = vpack.c.b16 %v577, %v574
      %v641 = vpack.c.b16 %v581, %v578
      %v642 = vpack.c.b16 %v582, %v579
      %v643 = vpack.c.b16 %v583, %v580
      %v644 = vpack.c.b16 %v587, %v584
      %v645 = vpack.c.b16 %v588, %v585
      %v646 = vpack.c.b16 %v589, %v586
      %v647 = vpack.c.b16 %v593, %v590
      %v648 = vpack.c.b16 %v594, %v591
      %v649 = vpack.c.b16 %v595, %v592
      %v650 = vpack.c.b16 %v599, %v596
      %v651 = vpack.c.b16 %v600, %v597
      %v652 = vpack.c.b16 %v601, %v598
      %v653 = vpack.c.b16 %v605, %v602
      %v654 = vpack.c.b16 %v606, %v603
      %v655 = vpack.c.b16 %v607, %v604
      %v752 = vunpack.c.l.b16 %v400
      %v753 = vunpack.c.l.b16 %v401
      %v754 = vunpack.c.l.b16 %v402
      %v755 = vunpack.c.l.b16 %v403
      %v756 = vunpack.c.l.b16 %v404
      %v757 = vunpack.c.l.b16 %v405
      %v758 = vunpack.c.l.b16 %v406
      %v759 = vunpack.c.l.b16 %v407
      %v760 = vunpack.c.l.b16 %v408
      %v761 = vunpack.c.l.b16 %v409
      %v762 = vunpack.c.l.b16 %v410
      %v763 = vunpack.c.l.b16 %v411
      %v764 = vunpack.c.l.b16 %v412
      %v765 = vunpack.c.l.b16 %v413
      %v766 = vunpack.c.l.b16 %v414
      %v767 = vunpack.c.l.b16 %v415
      %v768 = vunpack.c.l.b16 %v416
      %v769 = vunpack.c.l.b16 %v417
      %v770 = vunpack.c.l.b16 %v418
      %v771 = vunpack.c.l.b16 %v419
      %v772 = vunpack.c.l.b16 %v420
      %v773 = vunpack.c.l.b16 %v421
      %v774 = vunpack.c.l.b16 %v422
      %v775 = vunpack.c.l.b16 %v423
      %v776 = vunpack.c.l.b16 %v424
      %v777 = vunpack.c.l.b16 %v425
      %v778 = vunpack.c.l.b16 %v426
      %v779 = vunpack.c.l.b16 %v427
      %v780 = vunpack.c.l.b16 %v428
      %v781 = vunpack.c.l.b16 %v429
      %v782 = vunpack.c.l.b16 %v430
      %v783 = vunpack.c.l.b16 %v431
      %v784 = vunpack.c.l.b16 %v432
      %v785 = vunpack.c.l.b16 %v433
      %v786 = vunpack.c.l.b16 %v434
      %v787 = vunpack.c.l.b16 %v435
      %v788 = vunpack.c.l.b16 %v436
      %v789 = vunpack.c.l.b16 %v437
      %v790 = vunpack.c.l.b16 %v438
      %v791 = vunpack.c.l.b16 %v439
      %v792 = vunpack.c.l.b16 %v440
      %v793 = vunpack.c.l.b16 %v441
      %v794 = vunpack.c.l.b16 %v442
      %v795 = vunpack.c.l.b16 %v443
      %v796 = vunpack.c.l.b16 %v444
      %v797 = vunpack.c.l.b16 %v445
      %v798 = vunpack.c.l.b16 %v446
      %v799 = vunpack.c.l.b16 %v447
      %v800 = vpack.c.b16 %v753, %v752
      %v801 = vpack.c.b16 %v755, %v754
      %v802 = vpack.c.b16 %v757, %v756
      %v803 = vpack.c.b16 %v759, %v758
      %v804 = vpack.c.b16 %v761, %v760
      %v805 = vpack.c.b16 %v763, %v762
      %v806 = vpack.c.b16 %v765, %v764
      %v807 = vpack.c.b16 %v767, %v766
      %v808 = vpack.c.b16 %v769, %v768
      %v809 = vpack.c.b16 %v771, %v770
      %v810 = vpack.c.b16 %v773, %v772
      %v811 = vpack.c.b16 %v775, %v774
      %v812 = vpack.c.b16 %v777, %v776
      %v813 = vpack.c.b16 %v779, %v778
      %v814 = vpack.c.b16 %v781, %v780
      %v815 = vpack.c.b16 %v783, %v782
      %v816 = vpack.c.b16 %v785, %v784
      %v817 = vpack.c.b16 %v787, %v786
      %v818 = vpack.c.b16 %v789, %v788
      %v819 = vpack.c.b16 %v791, %v790
      %v820 = vpack.c.b16 %v793, %v792
      %v821 = vpack.c.b16 %v795, %v794
      %v822 = vpack.c.b16 %v797, %v796
      %v823 = vpack.c.b16 %v799, %v798
      %848 = vmatprep.subr.bf16.mxu0 0
      %849 = vmatpush1.bf16.msra.mxu0 %v807
      %850 = vmatprep.subr.bf16.mxu0 0
      %851 = vmatpush1.bf16.msra.mxu0 %v806
      %852 = vmatprep.subr.bf16.mxu0 0
      %853 = vmatpush1.bf16.msra.mxu0 %v805
      %854 = vmatprep.subr.bf16.mxu0 0
      %855 = vmatpush1.bf16.msra.mxu0 %v804
      %856 = vmatprep.subr.bf16.mxu0 0
      %857 = vmatpush1.bf16.msra.mxu0 %v803
      %858 = vmatprep.subr.bf16.mxu0 0
      %859 = vmatpush1.bf16.msra.mxu0 %v802
      %860 = vmatprep.subr.bf16.mxu0 0
      %861 = vmatpush1.bf16.msra.mxu0 %v801
      %862 = vmatprep.subr.bf16.mxu0 0
      %863 = vmatpush1.bf16.msra.mxu0 %v800
      %864 = vmatprep.subr.bf16.mxu0 0
      %865 = vmatpush2.bf16.msra.mxu0 %v815
      %866 = vmatprep.subr.bf16.mxu0 0
      %867 = vmatpush2.bf16.msra.mxu0 %v814
      %868 = vmatprep.subr.bf16.mxu0 0
      %869 = vmatpush2.bf16.msra.mxu0 %v813
      %870 = vmatprep.subr.bf16.mxu0 0
      %871 = vmatpush2.bf16.msra.mxu0 %v812
      %872 = vmatprep.subr.bf16.mxu0 0
      %873 = vmatpush2.bf16.msra.mxu0 %v811
      %874 = vmatprep.subr.bf16.mxu0 0
      %875 = vmatpush2.bf16.msra.mxu0 %v810
      %876 = vmatprep.subr.bf16.mxu0 0
      %877 = vmatpush2.bf16.msra.mxu0 %v809
      %878 = vmatprep.subr.bf16.mxu0 0
      %879 = vmatpush2.bf16.msra.mxu0 %v808
      %880 = vmatprep.mubr.bf16.mxu0 %v609
      %881 = vmatmul.mubr.bf16.gmra.mxu0 %v608
      %v882 = vpop.f32.mrf.mxu0
      %v883 = vadd.f32 0.0, %v882
      %v884 = vpop.f32.mrf.mxu0
      %v885 = vpop.f32.mrf.mxu0
      %v886 = vadd.f32 0.0, %v885
      %v887 = vpop.f32.mrf.mxu0
      %888 = vmatprep.mubr.bf16.mxu0 %v612
      %889 = vmatmul.mubr.bf16.gmra.mxu0 %v611
      %v890 = vpop.f32.mrf.mxu0
      %v891 = vadd.f32 0.0, %v890
      %v892 = vpop.f32.mrf.mxu0
      %v893 = vpop.f32.mrf.mxu0
      %v894 = vadd.f32 0.0, %v893
      %v895 = vpop.f32.mrf.mxu0
      %896 = vmatprep.mubr.bf16.mxu0 %v615
      %897 = vmatmul.mubr.bf16.gmra.mxu0 %v614
      %v898 = vpop.f32.mrf.mxu0
      %v899 = vadd.f32 0.0, %v898
      %v900 = vpop.f32.mrf.mxu0
      %v901 = vpop.f32.mrf.mxu0
      %v902 = vadd.f32 0.0, %v901
      %v903 = vpop.f32.mrf.mxu0
      %904 = vmatprep.mubr.bf16.mxu0 %v618
      %905 = vmatmul.mubr.bf16.gmra.mxu0 %v617
      %v906 = vpop.f32.mrf.mxu0
      %v907 = vadd.f32 0.0, %v906
      %v908 = vpop.f32.mrf.mxu0
      %v909 = vpop.f32.mrf.mxu0
      %v910 = vadd.f32 0.0, %v909
      %v911 = vpop.f32.mrf.mxu0
      %912 = vmatprep.mubr.bf16.mxu0 %v621
      %913 = vmatmul.mubr.bf16.gmra.mxu0 %v620
      %v914 = vpop.f32.mrf.mxu0
      %v915 = vadd.f32 0.0, %v914
      %v916 = vpop.f32.mrf.mxu0
      %v917 = vpop.f32.mrf.mxu0
      %v918 = vadd.f32 0.0, %v917
      %v919 = vpop.f32.mrf.mxu0
      %920 = vmatprep.mubr.bf16.mxu0 %v624
      %921 = vmatmul.mubr.bf16.gmra.mxu0 %v623
      %v922 = vpop.f32.mrf.mxu0
      %v923 = vadd.f32 0.0, %v922
      %v924 = vpop.f32.mrf.mxu0
      %v925 = vpop.f32.mrf.mxu0
      %v926 = vadd.f32 0.0, %v925
      %v927 = vpop.f32.mrf.mxu0
      %928 = vmatprep.mubr.bf16.mxu0 %v627
      %929 = vmatmul.mubr.bf16.gmra.mxu0 %v626
      %v930 = vpop.f32.mrf.mxu0
      %v931 = vadd.f32 0.0, %v930
      %v932 = vpop.f32.mrf.mxu0
      %v933 = vpop.f32.mrf.mxu0
      %v934 = vadd.f32 0.0, %v933
      %v935 = vpop.f32.mrf.mxu0
      %936 = vmatprep.mubr.bf16.mxu0 %v630
      %937 = vmatmul.mubr.bf16.gmra.mxu0 %v629
      %v938 = vpop.f32.mrf.mxu0
      %v939 = vadd.f32 0.0, %v938
      %v940 = vpop.f32.mrf.mxu0
      %v941 = vpop.f32.mrf.mxu0
      %v942 = vadd.f32 0.0, %v941
      %v943 = vpop.f32.mrf.mxu0
      %944 = vmatprep.mubr.bf16.mxu0 %v633
      %945 = vmatmul.mubr.bf16.gmra.mxu0 %v632
      %v946 = vpop.f32.mrf.mxu0
      %v947 = vadd.f32 0.0, %v946
      %v948 = vpop.f32.mrf.mxu0
      %v949 = vpop.f32.mrf.mxu0
      %v950 = vadd.f32 0.0, %v949
      %v951 = vpop.f32.mrf.mxu0
      %952 = vmatprep.mubr.bf16.mxu0 %v636
      %953 = vmatmul.mubr.bf16.gmra.mxu0 %v635
      %v954 = vpop.f32.mrf.mxu0
      %v955 = vadd.f32 0.0, %v954
      %v956 = vpop.f32.mrf.mxu0
      %v957 = vpop.f32.mrf.mxu0
      %v958 = vadd.f32 0.0, %v957
      %v959 = vpop.f32.mrf.mxu0
      %960 = vmatprep.mubr.bf16.mxu0 %v639
      %961 = vmatmul.mubr.bf16.gmra.mxu0 %v638
      %v962 = vpop.f32.mrf.mxu0
      %v963 = vadd.f32 0.0, %v962
      %v964 = vpop.f32.mrf.mxu0
      %v965 = vpop.f32.mrf.mxu0
      %v966 = vadd.f32 0.0, %v965
      %v967 = vpop.f32.mrf.mxu0
      %968 = vmatprep.mubr.bf16.mxu0 %v642
      %969 = vmatmul.mubr.bf16.gmra.mxu0 %v641
      %v970 = vpop.f32.mrf.mxu0
      %v971 = vadd.f32 0.0, %v970
      %v972 = vpop.f32.mrf.mxu0
      %v973 = vpop.f32.mrf.mxu0
      %v974 = vadd.f32 0.0, %v973
      %v975 = vpop.f32.mrf.mxu0
      %976 = vmatprep.mubr.bf16.mxu0 %v645
      %977 = vmatmul.mubr.bf16.gmra.mxu0 %v644
      %v978 = vpop.f32.mrf.mxu0
      %v979 = vadd.f32 0.0, %v978
      %v980 = vpop.f32.mrf.mxu0
      %v981 = vpop.f32.mrf.mxu0
      %v982 = vadd.f32 0.0, %v981
      %v983 = vpop.f32.mrf.mxu0
      %984 = vmatprep.mubr.bf16.mxu0 %v648
      %985 = vmatmul.mubr.bf16.gmra.mxu0 %v647
      %v986 = vpop.f32.mrf.mxu0
      %v987 = vadd.f32 0.0, %v986
      %v988 = vpop.f32.mrf.mxu0
      %v989 = vpop.f32.mrf.mxu0
      %v990 = vadd.f32 0.0, %v989
      %v991 = vpop.f32.mrf.mxu0
      %992 = vmatprep.mubr.bf16.mxu0 %v651
      %993 = vmatmul.mubr.bf16.gmra.mxu0 %v650
      %v994 = vpop.f32.mrf.mxu0
      %v995 = vadd.f32 0.0, %v994
      %v996 = vpop.f32.mrf.mxu0
      %v997 = vpop.f32.mrf.mxu0
      %v998 = vadd.f32 0.0, %v997
      %v999 = vpop.f32.mrf.mxu0
      %1000 = vmatprep.mubr.bf16.mxu0 %v654
      %1001 = vmatmul.mubr.bf16.gmra.mxu0 %v653
      %v1002 = vpop.f32.mrf.mxu0
      %v1003 = vadd.f32 0.0, %v1002
      %v1004 = vpop.f32.mrf.mxu0
      %v1005 = vpop.f32.mrf.mxu0
      %v1006 = vadd.f32 0.0, %v1005
      %v1007 = vpop.f32.mrf.mxu0
      %1008 = vdwg.mxu0
      %1009 = vmatprep.subr.bf16.mxu0 0
      %1010 = vmatpush1.bf16.msra.mxu0 %v823
      %1011 = vmatprep.subr.bf16.mxu0 0
      %1012 = vmatpush1.bf16.msra.mxu0 %v822
      %1013 = vmatprep.subr.bf16.mxu0 0
      %1014 = vmatpush1.bf16.msra.mxu0 %v821
      %1015 = vmatprep.subr.bf16.mxu0 0
      %1016 = vmatpush1.bf16.msra.mxu0 %v820
      %1017 = vmatprep.subr.bf16.mxu0 0
      %1018 = vmatpush1.bf16.msra.mxu0 %v819
      %1019 = vmatprep.subr.bf16.mxu0 0
      %1020 = vmatpush1.bf16.msra.mxu0 %v818
      %1021 = vmatprep.subr.bf16.mxu0 0
      %1022 = vmatpush1.bf16.msra.mxu0 %v817
      %1023 = vmatprep.subr.bf16.mxu0 0
      %1024 = vmatpush1.bf16.msra.mxu0 %v816
      %1025 = vmatprep.subr.bf16.mxu0 0
      %1026 = vmatpush2.bf16.msra.mxu0 0
      %1027 = vmatprep.subr.bf16.mxu0 0
      %1028 = vmatpush2.bf16.msra.mxu0 0
      %1029 = vmatprep.subr.bf16.mxu0 0
      %1030 = vmatpush2.bf16.msra.mxu0 0
      %1031 = vmatprep.subr.bf16.mxu0 0
      %1032 = vmatpush2.bf16.msra.mxu0 0
      %1033 = vmatprep.subr.bf16.mxu0 0
      %1034 = vmatpush2.bf16.msra.mxu0 0
      %1035 = vmatprep.subr.bf16.mxu0 0
      %1036 = vmatpush2.bf16.msra.mxu0 0
      %1037 = vmatprep.subr.bf16.mxu0 0
      %1038 = vmatpush2.bf16.msra.mxu0 0
      %1039 = vmatprep.subr.bf16.mxu0 0
      %1040 = vmatpush2.bf16.msra.mxu0 0
      %1041 = vmatprep.mubr.bf16.mxu0 0
      %1042 = vmatmul.mubr.bf16.gmra.mxu0 %v610
      %v1043 = vpop.f32.mrf.mxu0
      %v1044 = vadd.f32 %v883, %v1043
      %v1045 = vpop.f32.mrf.mxu0
      %v1046 = vpop.f32.mrf.mxu0
      %v1047 = vadd.f32 %v886, %v1046
      %v1048 = vpop.f32.mrf.mxu0
      %1049 = vmatprep.mubr.bf16.mxu0 0
      %1050 = vmatmul.mubr.bf16.gmra.mxu0 %v613
      %v1051 = vpop.f32.mrf.mxu0
      %v1052 = vadd.f32 %v891, %v1051
      %v1053 = vpop.f32.mrf.mxu0
      %v1054 = vpop.f32.mrf.mxu0
      %v1055 = vadd.f32 %v894, %v1054
      %v1056 = vpop.f32.mrf.mxu0
      %1057 = vmatprep.mubr.bf16.mxu0 0
      %1058 = vmatmul.mubr.bf16.gmra.mxu0 %v616
      %v1059 = vpop.f32.mrf.mxu0
      %v1060 = vadd.f32 %v899, %v1059
      %v1061 = vpop.f32.mrf.mxu0
      %v1062 = vpop.f32.mrf.mxu0
      %v1063 = vadd.f32 %v902, %v1062
      %v1064 = vpop.f32.mrf.mxu0
      %1065 = vmatprep.mubr.bf16.mxu0 0
      %1066 = vmatmul.mubr.bf16.gmra.mxu0 %v619
      %v1067 = vpop.f32.mrf.mxu0
      %v1068 = vadd.f32 %v907, %v1067
      %v1069 = vpop.f32.mrf.mxu0
      %v1070 = vpop.f32.mrf.mxu0
      %v1071 = vadd.f32 %v910, %v1070
      %v1072 = vpop.f32.mrf.mxu0
      %1073 = vmatprep.mubr.bf16.mxu0 0
      %1074 = vmatmul.mubr.bf16.gmra.mxu0 %v622
      %v1075 = vpop.f32.mrf.mxu0
      %v1076 = vadd.f32 %v915, %v1075
      %v1077 = vpop.f32.mrf.mxu0
      %v1078 = vpop.f32.mrf.mxu0
      %v1079 = vadd.f32 %v918, %v1078
      %v1080 = vpop.f32.mrf.mxu0
      %1081 = vmatprep.mubr.bf16.mxu0 0
      %1082 = vmatmul.mubr.bf16.gmra.mxu0 %v625
      %v1083 = vpop.f32.mrf.mxu0
      %v1084 = vadd.f32 %v923, %v1083
      %v1085 = vpop.f32.mrf.mxu0
      %v1086 = vpop.f32.mrf.mxu0
      %v1087 = vadd.f32 %v926, %v1086
      %v1088 = vpop.f32.mrf.mxu0
      %1089 = vmatprep.mubr.bf16.mxu0 0
      %1090 = vmatmul.mubr.bf16.gmra.mxu0 %v628
      %v1091 = vpop.f32.mrf.mxu0
      %v1092 = vadd.f32 %v931, %v1091
      %v1093 = vpop.f32.mrf.mxu0
      %v1094 = vpop.f32.mrf.mxu0
      %v1095 = vadd.f32 %v934, %v1094
      %v1096 = vpop.f32.mrf.mxu0
      %1097 = vmatprep.mubr.bf16.mxu0 0
      %1098 = vmatmul.mubr.bf16.gmra.mxu0 %v631
      %v1099 = vpop.f32.mrf.mxu0
      %v1100 = vadd.f32 %v939, %v1099
      %v1101 = vpop.f32.mrf.mxu0
      %v1102 = vpop.f32.mrf.mxu0
      %v1103 = vadd.f32 %v942, %v1102
      %v1104 = vpop.f32.mrf.mxu0
      %1105 = vmatprep.mubr.bf16.mxu0 0
      %1106 = vmatmul.mubr.bf16.gmra.mxu0 %v634
      %v1107 = vpop.f32.mrf.mxu0
      %v1108 = vadd.f32 %v947, %v1107
      %v1109 = vpop.f32.mrf.mxu0
      %v1110 = vpop.f32.mrf.mxu0
      %v1111 = vadd.f32 %v950, %v1110
      %v1112 = vpop.f32.mrf.mxu0
      %1113 = vmatprep.mubr.bf16.mxu0 0
      %1114 = vmatmul.mubr.bf16.gmra.mxu0 %v637
      %v1115 = vpop.f32.mrf.mxu0
      %v1116 = vadd.f32 %v955, %v1115
      %v1117 = vpop.f32.mrf.mxu0
      %v1118 = vpop.f32.mrf.mxu0
      %v1119 = vadd.f32 %v958, %v1118
      %v1120 = vpop.f32.mrf.mxu0
      %1121 = vmatprep.mubr.bf16.mxu0 0
      %1122 = vmatmul.mubr.bf16.gmra.mxu0 %v640
      %v1123 = vpop.f32.mrf.mxu0
      %v1124 = vadd.f32 %v963, %v1123
      %v1125 = vpop.f32.mrf.mxu0
      %v1126 = vpop.f32.mrf.mxu0
      %v1127 = vadd.f32 %v966, %v1126
      %v1128 = vpop.f32.mrf.mxu0
      %1129 = vmatprep.mubr.bf16.mxu0 0
      %1130 = vmatmul.mubr.bf16.gmra.mxu0 %v643
      %v1131 = vpop.f32.mrf.mxu0
      %v1132 = vadd.f32 %v971, %v1131
      %v1133 = vpop.f32.mrf.mxu0
      %v1134 = vpop.f32.mrf.mxu0
      %v1135 = vadd.f32 %v974, %v1134
      %v1136 = vpop.f32.mrf.mxu0
      %1137 = vmatprep.mubr.bf16.mxu0 0
      %1138 = vmatmul.mubr.bf16.gmra.mxu0 %v646
      %v1139 = vpop.f32.mrf.mxu0
      %v1140 = vadd.f32 %v979, %v1139
      %v1141 = vpop.f32.mrf.mxu0
      %v1142 = vpop.f32.mrf.mxu0
      %v1143 = vadd.f32 %v982, %v1142
      %v1144 = vpop.f32.mrf.mxu0
      %1145 = vmatprep.mubr.bf16.mxu0 0
      %1146 = vmatmul.mubr.bf16.gmra.mxu0 %v649
      %v1147 = vpop.f32.mrf.mxu0
      %v1148 = vadd.f32 %v987, %v1147
      %v1149 = vpop.f32.mrf.mxu0
      %v1150 = vpop.f32.mrf.mxu0
      %v1151 = vadd.f32 %v990, %v1150
      %v1152 = vpop.f32.mrf.mxu0
      %1153 = vmatprep.mubr.bf16.mxu0 0
      %1154 = vmatmul.mubr.bf16.gmra.mxu0 %v652
      %v1155 = vpop.f32.mrf.mxu0
      %v1156 = vadd.f32 %v995, %v1155
      %v1157 = vpop.f32.mrf.mxu0
      %v1158 = vpop.f32.mrf.mxu0
      %v1159 = vadd.f32 %v998, %v1158
      %v1160 = vpop.f32.mrf.mxu0
      %1161 = vmatprep.mubr.bf16.mxu0 0
      %1162 = vmatmul.mubr.bf16.gmra.mxu0 %v655
      %v1163 = vpop.f32.mrf.mxu0
      %v1164 = vadd.f32 %v1003, %v1163
      %v1165 = vpop.f32.mrf.mxu0
      %v1166 = vpop.f32.mrf.mxu0
      %v1167 = vadd.f32 %v1006, %v1166
      %v1168 = vpop.f32.mrf.mxu0
      %1169 = vdwg.mxu0
      %v1170 = vadd.f32 %v304, %v1044
      %v1171 = vadd.f32 %v305, %v1047
      %v1172 = vadd.f32 %v306, %v1052
      %v1173 = vadd.f32 %v307, %v1055
      %v1174 = vadd.f32 %v308, %v1060
      %v1175 = vadd.f32 %v309, %v1063
      %v1176 = vadd.f32 %v310, %v1068
      %v1177 = vadd.f32 %v311, %v1071
      %v1178 = vadd.f32 %v312, %v1076
      %v1179 = vadd.f32 %v313, %v1079
      %v1180 = vadd.f32 %v314, %v1084
      %v1181 = vadd.f32 %v315, %v1087
      %v1182 = vadd.f32 %v316, %v1092
      %v1183 = vadd.f32 %v317, %v1095
      %v1184 = vadd.f32 %v318, %v1100
      %v1185 = vadd.f32 %v319, %v1103
      %v1186 = vadd.f32 %v320, %v1108
      %v1187 = vadd.f32 %v321, %v1111
      %v1188 = vadd.f32 %v322, %v1116
      %v1189 = vadd.f32 %v323, %v1119
      %v1190 = vadd.f32 %v324, %v1124
      %v1191 = vadd.f32 %v325, %v1127
      %v1192 = vadd.f32 %v326, %v1132
      %v1193 = vadd.f32 %v327, %v1135
      %v1194 = vadd.f32 %v328, %v1140
      %v1195 = vadd.f32 %v329, %v1143
      %v1196 = vadd.f32 %v330, %v1148
      %v1197 = vadd.f32 %v331, %v1151
      %v1198 = vadd.f32 %v332, %v1156
      %v1199 = vadd.f32 %v333, %v1159
      %v1200 = vadd.f32 %v334, %v1164
      %v1201 = vadd.f32 %v335, %v1167
      %1202 = vst [vmem:[#allocation2] sm:$0xff] %v1170
      %1203 = vst [vmem:[#allocation2 + $0x8] sm:$0xff] %v1171
      %1204 = vst [vmem:[#allocation2 + $0x10] sm:$0xff] %v1172
      %1205 = vst [vmem:[#allocation2 + $0x18] sm:$0xff] %v1173
      %1206 = vst [vmem:[#allocation2 + $0x20] sm:$0xff] %v1174
      %1207 = vst [vmem:[#allocation2 + $0x28] sm:$0xff] %v1175
      %1208 = vst [vmem:[#allocation2 + $0x30] sm:$0xff] %v1176
      %1209 = vst [vmem:[#allocation2 + $0x38] sm:$0xff] %v1177
      %1210 = vst [vmem:[#allocation2 + $0x40] sm:$0xff] %v1178
      %1211 = vst [vmem:[#allocation2 + $0x48] sm:$0xff] %v1179
      %1212 = vst [vmem:[#allocation2 + $0x50] sm:$0xff] %v1180
      %1213 = vst [vmem:[#allocation2 + $0x58] sm:$0xff] %v1181
      %1214 = vst [vmem:[#allocation2 + $0x60] sm:$0xff] %v1182
      %1215 = vst [vmem:[#allocation2 + $0x68] sm:$0xff] %v1183
      %1216 = vst [vmem:[#allocation2 + $0x70] sm:$0xff] %v1184
      %1217 = vst [vmem:[#allocation2 + $0x78] sm:$0xff] %v1185
      %1218 = vst [vmem:[#allocation2 + $0x80] sm:$0xff] %v1186
      %1219 = vst [vmem:[#allocation2 + $0x88] sm:$0xff] %v1187
      %1220 = vst [vmem:[#allocation2 + $0x90] sm:$0xff] %v1188
      %1221 = vst [vmem:[#allocation2 + $0x98] sm:$0xff] %v1189
      %1222 = vst [vmem:[#allocation2 + $0xa0] sm:$0xff] %v1190
      %1223 = vst [vmem:[#allocation2 + $0xa8] sm:$0xff] %v1191
      %1224 = vst [vmem:[#allocation2 + $0xb0] sm:$0xff] %v1192
      %1225 = vst [vmem:[#allocation2 + $0xb8] sm:$0xff] %v1193
      %1226 = vst [vmem:[#allocation2 + $0xc0] sm:$0xff] %v1194
      %1227 = vst [vmem:[#allocation2 + $0xc8] sm:$0xff] %v1195
      %1228 = vst [vmem:[#allocation2 + $0xd0] sm:$0xff] %v1196
      %1229 = vst [vmem:[#allocation2 + $0xd8] sm:$0xff] %v1197
      %1230 = vst [vmem:[#allocation2 + $0xe0] sm:$0xff] %v1198
      %1231 = vst [vmem:[#allocation2 + $0xe8] sm:$0xff] %v1199
      %1232 = vst [vmem:[#allocation2 + $0xf0] sm:$0xff] %v1200
      %1233 = vst [vmem:[#allocation2 + $0xf8] sm:$0xff] %v1201
      // Predicated region
      $region37: #{darknet53_forward.8} parent=31 // pred_check
        %p1234 = pneg %p268
      $region38: #{darknet53_forward.8} parent=31 // pred_check_branch
        %1236 = sbr.rel (%p1234) target = $region40
      $region39: #{darknet53_forward.8} parent=31 // pred_region
        %v1237 = vld [vmem:[#allocation2] sm:$0xff]
        %v1238 = vld [vmem:[#allocation2 + $0x8] sm:$0xff]
        %v1239 = vld [vmem:[#allocation2 + $0x10] sm:$0xff]
        %v1240 = vld [vmem:[#allocation2 + $0x18] sm:$0xff]
        %v1241 = vld [vmem:[#allocation2 + $0x20] sm:$0xff]
        %v1242 = vld [vmem:[#allocation2 + $0x28] sm:$0xff]
        %v1243 = vld [vmem:[#allocation2 + $0x30] sm:$0xff]
        %v1244 = vld [vmem:[#allocation2 + $0x38] sm:$0xff]
        %v1245 = vld [vmem:[#allocation2 + $0x40] sm:$0xff]
        %v1246 = vld [vmem:[#allocation2 + $0x48] sm:$0xff]
        %v1247 = vld [vmem:[#allocation2 + $0x50] sm:$0xff]
        %v1248 = vld [vmem:[#allocation2 + $0x58] sm:$0xff]
        %v1249 = vld [vmem:[#allocation2 + $0x60] sm:$0xff]
        %v1250 = vld [vmem:[#allocation2 + $0x68] sm:$0xff]
        %v1251 = vld [vmem:[#allocation2 + $0x70] sm:$0xff]
        %v1252 = vld [vmem:[#allocation2 + $0x78] sm:$0xff]
        %v1253 = vld [vmem:[#allocation2 + $0x80] sm:$0xff]
        %v1254 = vld [vmem:[#allocation2 + $0x88] sm:$0xff]
        %v1255 = vld [vmem:[#allocation2 + $0x90] sm:$0xff]
        %v1256 = vld [vmem:[#allocation2 + $0x98] sm:$0xff]
        %v1257 = vld [vmem:[#allocation2 + $0xa0] sm:$0xff]
        %v1258 = vld [vmem:[#allocation2 + $0xa8] sm:$0xff]
        %v1259 = vld [vmem:[#allocation2 + $0xb0] sm:$0xff]
        %v1260 = vld [vmem:[#allocation2 + $0xb8] sm:$0xff]
        %v1261 = vld [vmem:[#allocation2 + $0xc0] sm:$0xff]
        %v1262 = vld [vmem:[#allocation2 + $0xc8] sm:$0xff]
        %v1263 = vld [vmem:[#allocation2 + $0xd0] sm:$0xff]
        %v1264 = vld [vmem:[#allocation2 + $0xd8] sm:$0xff]
        %v1265 = vld [vmem:[#allocation2 + $0xe0] sm:$0xff]
        %v1266 = vld [vmem:[#allocation2 + $0xe8] sm:$0xff]
        %v1267 = vld [vmem:[#allocation2 + $0xf0] sm:$0xff]
        %v1268 = vld [vmem:[#allocation2 + $0xf8] sm:$0xff]
        %v1269 = vld [vmem:[%s257] sm:$0x1]
        %v1271 = vlaneseq
        %v1272 = vshrl.u32 %v1271, 7
        %v1273 = vsub.s32 0, %v1272
        %v1274 = vrot.slane %v1269, %v1273
        %v1276 = vadd.f32 %v1237, %v1274
        %v1277 = vadd.f32 %v1238, %v1274
        %v1278 = vadd.f32 %v1239, %v1274
        %v1279 = vadd.f32 %v1240, %v1274
        %v1280 = vadd.f32 %v1241, %v1274
        %v1281 = vadd.f32 %v1242, %v1274
        %v1282 = vadd.f32 %v1243, %v1274
        %v1283 = vadd.f32 %v1244, %v1274
        %v1284 = vadd.f32 %v1245, %v1274
        %v1285 = vadd.f32 %v1246, %v1274
        %v1286 = vadd.f32 %v1247, %v1274
        %v1287 = vadd.f32 %v1248, %v1274
        %v1288 = vadd.f32 %v1249, %v1274
        %v1289 = vadd.f32 %v1250, %v1274
        %v1290 = vadd.f32 %v1251, %v1274
        %v1291 = vadd.f32 %v1252, %v1274
        %v1292 = vadd.f32 %v1253, %v1274
        %v1293 = vadd.f32 %v1254, %v1274
        %v1294 = vadd.f32 %v1255, %v1274
        %v1295 = vadd.f32 %v1256, %v1274
        %v1296 = vadd.f32 %v1257, %v1274
        %v1297 = vadd.f32 %v1258, %v1274
        %v1298 = vadd.f32 %v1259, %v1274
        %v1299 = vadd.f32 %v1260, %v1274
        %v1300 = vadd.f32 %v1261, %v1274
        %v1301 = vadd.f32 %v1262, %v1274
        %v1302 = vadd.f32 %v1263, %v1274
        %v1303 = vadd.f32 %v1264, %v1274
        %v1304 = vadd.f32 %v1265, %v1274
        %v1305 = vadd.f32 %v1266, %v1274
        %v1306 = vadd.f32 %v1267, %v1274
        %v1307 = vadd.f32 %v1268, %v1274
        %vm1308 = vcmp.ge.f32.partialorder %v1276, 0.0
        %vm1309 = vcmp.ge.f32.partialorder %v1277, 0.0
        %vm1310 = vcmp.ge.f32.partialorder %v1278, 0.0
        %vm1311 = vcmp.ge.f32.partialorder %v1279, 0.0
        %vm1312 = vcmp.ge.f32.partialorder %v1280, 0.0
        %vm1313 = vcmp.ge.f32.partialorder %v1281, 0.0
        %vm1314 = vcmp.ge.f32.partialorder %v1282, 0.0
        %vm1315 = vcmp.ge.f32.partialorder %v1283, 0.0
        %vm1316 = vcmp.ge.f32.partialorder %v1284, 0.0
        %vm1317 = vcmp.ge.f32.partialorder %v1285, 0.0
        %vm1318 = vcmp.ge.f32.partialorder %v1286, 0.0
        %vm1319 = vcmp.ge.f32.partialorder %v1287, 0.0
        %vm1320 = vcmp.ge.f32.partialorder %v1288, 0.0
        %vm1321 = vcmp.ge.f32.partialorder %v1289, 0.0
        %vm1322 = vcmp.ge.f32.partialorder %v1290, 0.0
        %vm1323 = vcmp.ge.f32.partialorder %v1291, 0.0
        %vm1324 = vcmp.ge.f32.partialorder %v1292, 0.0
        %vm1325 = vcmp.ge.f32.partialorder %v1293, 0.0
        %vm1326 = vcmp.ge.f32.partialorder %v1294, 0.0
        %vm1327 = vcmp.ge.f32.partialorder %v1295, 0.0
        %vm1328 = vcmp.ge.f32.partialorder %v1296, 0.0
        %vm1329 = vcmp.ge.f32.partialorder %v1297, 0.0
        %vm1330 = vcmp.ge.f32.partialorder %v1298, 0.0
        %vm1331 = vcmp.ge.f32.partialorder %v1299, 0.0
        %vm1332 = vcmp.ge.f32.partialorder %v1300, 0.0
        %vm1333 = vcmp.ge.f32.partialorder %v1301, 0.0
        %vm1334 = vcmp.ge.f32.partialorder %v1302, 0.0
        %vm1335 = vcmp.ge.f32.partialorder %v1303, 0.0
        %vm1336 = vcmp.ge.f32.partialorder %v1304, 0.0
        %vm1337 = vcmp.ge.f32.partialorder %v1305, 0.0
        %vm1338 = vcmp.ge.f32.partialorder %v1306, 0.0
        %vm1339 = vcmp.ge.f32.partialorder %v1307, 0.0
        %v1340 = vmul.f32 %v1276, 0.1
        %v1341 = vmul.f32 %v1277, 0.1
        %v1342 = vmul.f32 %v1278, 0.1
        %v1343 = vmul.f32 %v1279, 0.1
        %v1344 = vmul.f32 %v1280, 0.1
        %v1345 = vmul.f32 %v1281, 0.1
        %v1346 = vmul.f32 %v1282, 0.1
        %v1347 = vmul.f32 %v1283, 0.1
        %v1348 = vmul.f32 %v1284, 0.1
        %v1349 = vmul.f32 %v1285, 0.1
        %v1350 = vmul.f32 %v1286, 0.1
        %v1351 = vmul.f32 %v1287, 0.1
        %v1352 = vmul.f32 %v1288, 0.1
        %v1353 = vmul.f32 %v1289, 0.1
        %v1354 = vmul.f32 %v1290, 0.1
        %v1355 = vmul.f32 %v1291, 0.1
        %v1356 = vmul.f32 %v1292, 0.1
        %v1357 = vmul.f32 %v1293, 0.1
        %v1358 = vmul.f32 %v1294, 0.1
        %v1359 = vmul.f32 %v1295, 0.1
        %v1360 = vmul.f32 %v1296, 0.1
        %v1361 = vmul.f32 %v1297, 0.1
        %v1362 = vmul.f32 %v1298, 0.1
        %v1363 = vmul.f32 %v1299, 0.1
        %v1364 = vmul.f32 %v1300, 0.1
        %v1365 = vmul.f32 %v1301, 0.1
        %v1366 = vmul.f32 %v1302, 0.1
        %v1367 = vmul.f32 %v1303, 0.1
        %v1368 = vmul.f32 %v1304, 0.1
        %v1369 = vmul.f32 %v1305, 0.1
        %v1370 = vmul.f32 %v1306, 0.1
        %v1371 = vmul.f32 %v1307, 0.1
        %v1372 = vsel %vm1308, %v1276, %v1340
        %v1373 = vsel %vm1309, %v1277, %v1341
        %v1374 = vsel %vm1310, %v1278, %v1342
        %v1375 = vsel %vm1311, %v1279, %v1343
        %v1376 = vsel %vm1312, %v1280, %v1344
        %v1377 = vsel %vm1313, %v1281, %v1345
        %v1378 = vsel %vm1314, %v1282, %v1346
        %v1379 = vsel %vm1315, %v1283, %v1347
        %v1380 = vsel %vm1316, %v1284, %v1348
        %v1381 = vsel %vm1317, %v1285, %v1349
        %v1382 = vsel %vm1318, %v1286, %v1350
        %v1383 = vsel %vm1319, %v1287, %v1351
        %v1384 = vsel %vm1320, %v1288, %v1352
        %v1385 = vsel %vm1321, %v1289, %v1353
        %v1386 = vsel %vm1322, %v1290, %v1354
        %v1387 = vsel %vm1323, %v1291, %v1355
        %v1388 = vsel %vm1324, %v1292, %v1356
        %v1389 = vsel %vm1325, %v1293, %v1357
        %v1390 = vsel %vm1326, %v1294, %v1358
        %v1391 = vsel %vm1327, %v1295, %v1359
        %v1392 = vsel %vm1328, %v1296, %v1360
        %v1393 = vsel %vm1329, %v1297, %v1361
        %v1394 = vsel %vm1330, %v1298, %v1362
        %v1395 = vsel %vm1331, %v1299, %v1363
        %v1396 = vsel %vm1332, %v1300, %v1364
        %v1397 = vsel %vm1333, %v1301, %v1365
        %v1398 = vsel %vm1334, %v1302, %v1366
        %v1399 = vsel %vm1335, %v1303, %v1367
        %v1400 = vsel %vm1336, %v1304, %v1368
        %v1401 = vsel %vm1337, %v1305, %v1369
        %v1402 = vsel %vm1338, %v1306, %v1370
        %v1403 = vsel %vm1339, %v1307, %v1371
        %v1404 = vpack.c.bf16 %v1373, %v1372
        %v1405 = vpack.c.bf16 %v1375, %v1374
        %v1406 = vpack.c.bf16 %v1377, %v1376
        %v1407 = vpack.c.bf16 %v1379, %v1378
        %v1408 = vpack.c.bf16 %v1381, %v1380
        %v1409 = vpack.c.bf16 %v1383, %v1382
        %v1410 = vpack.c.bf16 %v1385, %v1384
        %v1411 = vpack.c.bf16 %v1387, %v1386
        %v1412 = vpack.c.bf16 %v1389, %v1388
        %v1413 = vpack.c.bf16 %v1391, %v1390
        %v1414 = vpack.c.bf16 %v1393, %v1392
        %v1415 = vpack.c.bf16 %v1395, %v1394
        %v1416 = vpack.c.bf16 %v1397, %v1396
        %v1417 = vpack.c.bf16 %v1399, %v1398
        %v1418 = vpack.c.bf16 %v1401, %v1400
        %v1419 = vpack.c.bf16 %v1403, %v1402
        %v1436 = vunpack.c.l.b16 %v1404
        %v1437 = vunpack.c.h.b16 %v1404
        %v1438 = vunpack.c.l.b16 %v1405
        %v1439 = vunpack.c.h.b16 %v1405
        %v1440 = vunpack.c.l.b16 %v1406
        %v1441 = vunpack.c.h.b16 %v1406
        %v1442 = vunpack.c.l.b16 %v1407
        %v1443 = vunpack.c.h.b16 %v1407
        %v1444 = vunpack.c.l.b16 %v1408
        %v1445 = vunpack.c.h.b16 %v1408
        %v1446 = vunpack.c.l.b16 %v1409
        %v1447 = vunpack.c.h.b16 %v1409
        %v1448 = vunpack.c.l.b16 %v1410
        %v1449 = vunpack.c.h.b16 %v1410
        %v1450 = vunpack.c.l.b16 %v1411
        %v1451 = vunpack.c.h.b16 %v1411
        %v1452 = vunpack.c.l.b16 %v1412
        %v1453 = vunpack.c.h.b16 %v1412
        %v1454 = vunpack.c.l.b16 %v1413
        %v1455 = vunpack.c.h.b16 %v1413
        %v1456 = vunpack.c.l.b16 %v1414
        %v1457 = vunpack.c.h.b16 %v1414
        %v1458 = vunpack.c.l.b16 %v1415
        %v1459 = vunpack.c.h.b16 %v1415
        %v1460 = vunpack.c.l.b16 %v1416
        %v1461 = vunpack.c.h.b16 %v1416
        %v1462 = vunpack.c.l.b16 %v1417
        %v1463 = vunpack.c.h.b16 %v1417
        %v1464 = vunpack.c.l.b16 %v1418
        %v1465 = vunpack.c.h.b16 %v1418
        %v1466 = vunpack.c.l.b16 %v1419
        %v1467 = vunpack.c.h.b16 %v1419
        %v1468 = vpack.c.b16 %v1436, %v1436
        %v1469 = vpack.c.b16 %v1437, %v1437
        %v1470 = vpack.c.b16 %v1438, %v1438
        %v1471 = vpack.c.b16 %v1439, %v1439
        %v1472 = vpack.c.b16 %v1440, %v1440
        %v1473 = vpack.c.b16 %v1441, %v1441
        %v1474 = vpack.c.b16 %v1442, %v1442
        %v1475 = vpack.c.b16 %v1443, %v1443
        %v1476 = vpack.c.b16 %v1444, %v1444
        %v1477 = vpack.c.b16 %v1445, %v1445
        %v1478 = vpack.c.b16 %v1446, %v1446
        %v1479 = vpack.c.b16 %v1447, %v1447
        %v1480 = vpack.c.b16 %v1448, %v1448
        %v1481 = vpack.c.b16 %v1449, %v1449
        %v1482 = vpack.c.b16 %v1450, %v1450
        %v1483 = vpack.c.b16 %v1451, %v1451
        %v1484 = vpack.c.b16 %v1452, %v1452
        %v1485 = vpack.c.b16 %v1453, %v1453
        %v1486 = vpack.c.b16 %v1454, %v1454
        %v1487 = vpack.c.b16 %v1455, %v1455
        %v1488 = vpack.c.b16 %v1456, %v1456
        %v1489 = vpack.c.b16 %v1457, %v1457
        %v1490 = vpack.c.b16 %v1458, %v1458
        %v1491 = vpack.c.b16 %v1459, %v1459
        %v1492 = vpack.c.b16 %v1460, %v1460
        %v1493 = vpack.c.b16 %v1461, %v1461
        %v1494 = vpack.c.b16 %v1462, %v1462
        %v1495 = vpack.c.b16 %v1463, %v1463
        %v1496 = vpack.c.b16 %v1464, %v1464
        %v1497 = vpack.c.b16 %v1465, %v1465
        %v1498 = vpack.c.b16 %v1466, %v1466
        %v1499 = vpack.c.b16 %v1467, %v1467
        %1532 = vst [vmem:[%s265] sm:$0xf] %v1468
        %1533 = vst [vmem:[%s265 + $0x4] sm:$0xf] %v1469
        %1534 = vst [vmem:[%s265 + $0x8] sm:$0xf] %v1470
        %1535 = vst [vmem:[%s265 + $0xc] sm:$0xf] %v1471
        %1536 = vst [vmem:[%s265 + $0x10] sm:$0xf] %v1472
        %1537 = vst [vmem:[%s265 + $0x14] sm:$0xf] %v1473
        %1538 = vst [vmem:[%s265 + $0x18] sm:$0xf] %v1474
        %1539 = vst [vmem:[%s265 + $0x1c] sm:$0xf] %v1475
        %1540 = vst [vmem:[%s265 + $0x20] sm:$0xf] %v1476
        %1541 = vst [vmem:[%s265 + $0x24] sm:$0xf] %v1477
        %1542 = vst [vmem:[%s265 + $0x28] sm:$0xf] %v1478
        %1543 = vst [vmem:[%s265 + $0x2c] sm:$0xf] %v1479
        %1544 = vst [vmem:[%s265 + $0x30] sm:$0xf] %v1480
        %1545 = vst [vmem:[%s265 + $0x34] sm:$0xf] %v1481
        %1546 = vst [vmem:[%s265 + $0x38] sm:$0xf] %v1482
        %1547 = vst [vmem:[%s265 + $0x3c] sm:$0xf] %v1483
        %1548 = vst [vmem:[%s265 + $0x40] sm:$0xf] %v1484
        %1549 = vst [vmem:[%s265 + $0x44] sm:$0xf] %v1485
        %1550 = vst [vmem:[%s265 + $0x48] sm:$0xf] %v1486
        %1551 = vst [vmem:[%s265 + $0x4c] sm:$0xf] %v1487
        %1552 = vst [vmem:[%s265 + $0x50] sm:$0xf] %v1488
        %1553 = vst [vmem:[%s265 + $0x54] sm:$0xf] %v1489
        %1554 = vst [vmem:[%s265 + $0x58] sm:$0xf] %v1490
        %1555 = vst [vmem:[%s265 + $0x5c] sm:$0xf] %v1491
        %1556 = vst [vmem:[%s265 + $0x60] sm:$0xf] %v1492
        %1557 = vst [vmem:[%s265 + $0x64] sm:$0xf] %v1493
        %1558 = vst [vmem:[%s265 + $0x68] sm:$0xf] %v1494
        %1559 = vst [vmem:[%s265 + $0x6c] sm:$0xf] %v1495
        %1560 = vst [vmem:[%s265 + $0x70] sm:$0xf] %v1496
        %1561 = vst [vmem:[%s265 + $0x74] sm:$0xf] %v1497
        %1562 = vst [vmem:[%s265 + $0x78] sm:$0xf] %v1498
        %1563 = vst [vmem:[%s265 + $0x7c] sm:$0xf] %v1499
      $region40: #{darknet53_forward.8} parent=31 // pred_fallthru
        _
      %s1564 = smul.u32 32, %s19
      %p1565 = scmp.lt.s32.totalorder %s1564, 63
      %s1566 = scalar_select %p1565, %s1564, 63
      %p1567 = scmp.lt.s32.totalorder %s20, 0
      %s1568 = scalar_select %p1567, %s20, 0
      %s1569 = sadd.s32 %s1568, %s1566
      %s1570 = smul.addr %s1569, 4
      %s1571 = scalar_lea.vmem %s3, %s1570
      // Predicated region
      $region41: #{darknet53_forward.8} parent=31 // pred_check
        %p1572 = pneg %p135
      $region42: #{darknet53_forward.8} parent=31 // pred_check_branch
        %1574 = sbr.rel (%p1572) target = $region44
      $region43: #{darknet53_forward.8} parent=31 // pred_region
        %s1575 = smul.u32 32, %s19
      $region44: #{darknet53_forward.8} parent=31 // pred_fallthru
        _
    $region32: #{darknet53_forward.8} parent=5 // pred_fallthru
      _
    %p1576 = scmp.le.s32.totalorder 2, %s9
    // Predicated region
    $region45: #{darknet53_forward.8} parent=5 // pred_check
      %p1577 = pneg %p1576
    $region46: #{darknet53_forward.8} parent=5 // pred_check_branch
      %1579 = sbr.rel (%p1577) target = $region48
    $region47: #{darknet53_forward.8} parent=5 // pred_region
      %s1580 = ssub.s32 %s9, 2
      // Predicated region
      $region49: #{darknet53_forward.8} parent=47 // pred_check
        %p1581 = pneg %p141
      $region50: #{darknet53_forward.8} parent=47 // pred_check_branch
        %1583 = sbr.rel (%p1581) target = $region52
      $region51: #{darknet53_forward.8} parent=47 // pred_region
        %s1584 = smul.u32 32, %s22
        %p1585 = scmp.lt.s32.totalorder %s1584, 63
        %s1586 = scalar_select %p1585, %s1584, 63
        %p1587 = scmp.lt.s32.totalorder %s23, 0
        %s1588 = scalar_select %p1587, %s23, 0
        %s1589 = sadd.s32 %s1588, %s1586
        %s1590 = smul.addr %s1589, 4
        %s1591 = scalar_lea.vmem %s3, %s1590
      $region52: #{darknet53_forward.8} parent=47 // pred_fallthru
        _
    $region48: #{darknet53_forward.8} parent=5 // pred_fallthru
      _
  $region6: #{darknet53_forward.8} parent=0 // loop_footer
    %s13 = sadd.s32 1, %s9
  $region7: #{darknet53_forward.8} parent=0 // loop_footer_branch
    %8 = sbr.rel target = $region3
  $region8: #{darknet53_forward.8} parent=0 // loop_exit
    _

// kernel: darknet53_forward.10
$region0: #{darknet53_forward.10}
  #allocation0 [shape = 'u32[]', space=smem, size = 0x4, offset = 0x4, fixed_abs, tag = 'smem constant byte address 0x4 - core index']
  #allocation1 [shape = 'u32[144,128]{1,0:T(1,128)}', space=vmem, size = 0x12000, scoped, tag = 'internal scratch']
  #allocation2 [shape = 'f32[256,128]{1,0:T(8,128)}', space=vmem, size = 0x20000, scoped, tag = 'scratch operand']
  %s0 = inlined_call_operand.vmem [shape: bf16[512,384], index: 0, kind: input, shape index: {}]
  %s1 = inlined_call_operand.vmem [shape: bf16[384,128], index: 1, kind: input, shape index: {}]
  %s2 = inlined_call_operand.vmem [shape: f32[1,128], index: 2, kind: input, shape index: {}]
  %s3 = inlined_call_operand.vmem [shape: bf16[512,128], index: 3, kind: input, shape index: {}]
  %s4 = inlined_call_operand.vmem [shape: bf16[512,128], index: 4, kind: output, shape index: {}]
  %s5 = sld [smem:[#allocation0]]
  $region57: #{darknet53_forward.10} parent=0
    _
  %s7 = ssub.s32 1, %s5
  %s8 = scalar_select 0, %s7, %s5
  loop: start=0, step=1, limit=4
  $region2: #{darknet53_forward.10} parent=0 // loop_pre_header
    _
  $region3: #{darknet53_forward.10} parent=0 // loop_header
    %s10 = sphi 0, %s14
    %p11 = scmp.ge.s32.totalorder %s10, 4
    %s17 = sphi 0, %s36
    %s18 = sphi 0, %s32
    %s19 = sphi 0, %s28
    %s20 = sphi 0, %s17
    %s21 = sphi 0, %s18
    %s22 = sphi 0, %s19
    %s23 = sphi 0, %s20
    %s24 = sphi 0, %s21
    %s25 = sphi 0, %s22
    %s41 = sphi 0, %s43
    %s44 = sphi 0, %s41
    %s45 = sphi 0, %s44
    %s61 = sphi 0, %s45
    %s69 = sphi 0, %s71
    %s72 = sphi 0, %s69
    %s73 = sphi 0, %s72
    %s89 = sphi 0, %s73
    %s95 = sphi 0, %s97
    %s98 = sphi 0, %s95
    %s99 = sphi 0, %s98
    %s115 = sphi 0, %s99
    %s123 = sphi 0, %s125
    %s126 = sphi 0, %s123
    %s127 = sphi 0, %s126
    %s143 = sphi 0, %s127
    %s151 = sphi 0, %s153
    %s154 = sphi 0, %s151
    %s155 = sphi 0, %s154
    %s171 = sphi 0, %s155
  $region4: #{darknet53_forward.10} parent=0 // loop_header_branch
    %13 = sbr.rel (%p11) target = $region8
  $region5: #{darknet53_forward.10} parent=0 // loop_body
    %s15 = ssub.s32 %s10, 1
    %s16 = ssub.s32 %s10, 2
    %s26 = sadd.s32 1, %s19
    %p27 = scmp.ge.s32.totalorder %s26, 1
    %s28 = scalar_select %p27, 0, %s26
    %s29 = sadd.s32 1, %s18
    %s30 = scalar_select %p27, %s29, %s18
    %p31 = scmp.ge.s32.totalorder %s30, 1
    %s32 = scalar_select %p31, 0, %s30
    %s33 = sadd.s32 1, %s17
    %s34 = scalar_select %p31, %s33, %s17
    %p35 = scmp.ge.s32.totalorder %s34, 2
    %s36 = scalar_select %p35, 0, %s34
    %s37 = ssub.s32 %s17, %s36
    %s38 = ssub.s32 %s19, %s28
    %s39 = sor.u32 %s37, %s38
    %p40 = scmp.eq.s32.totalorder %s39, 0
    %s42 = sadd.s32 %s41, 1
    %s43 = scalar_select %p40, %s41, %s42
    %p46 = pneg %p40
    %p47 = scmp.eq.s32.totalorder %s10, 1
    %p48 = por %p46, %p47
    %p49 = scmp.ne.s32.totalorder %s41, %s44
    %p50 = scmp.eq.s32.totalorder %s10, 0
    %p51 = por %p49, %p50
    %p52 = scmp.ne.s32.totalorder %s41, %s44
    %p53 = scmp.eq.s32.totalorder %s15, 1
    %p54 = por %p52, %p53
    %p55 = scmp.ne.s32.totalorder %s44, %s45
    %p56 = scmp.eq.s32.totalorder %s15, 0
    %p57 = por %p55, %p56
    %p58 = scmp.ne.s32.totalorder %s44, %s45
    %p59 = scmp.eq.s32.totalorder %s16, 1
    %p60 = por %p58, %p59
    %p62 = scmp.ne.s32.totalorder %s45, %s61
    %p63 = scmp.eq.s32.totalorder %s16, 0
    %p64 = por %p62, %p63
    %s65 = ssub.s32 %s19, %s28
    %s66 = ssub.s32 %s18, %s32
    %s67 = sor.u32 %s65, %s66
    %p68 = scmp.eq.s32.totalorder %s67, 0
    %s70 = sadd.s32 %s69, 1
    %s71 = scalar_select %p68, %s69, %s70
    %p74 = pneg %p68
    %p75 = scmp.eq.s32.totalorder %s10, 1
    %p76 = por %p74, %p75
    %p77 = scmp.ne.s32.totalorder %s69, %s72
    %p78 = scmp.eq.s32.totalorder %s10, 0
    %p79 = por %p77, %p78
    %p80 = scmp.ne.s32.totalorder %s69, %s72
    %p81 = scmp.eq.s32.totalorder %s15, 1
    %p82 = por %p80, %p81
    %p83 = scmp.ne.s32.totalorder %s72, %s73
    %p84 = scmp.eq.s32.totalorder %s15, 0
    %p85 = por %p83, %p84
    %p86 = scmp.ne.s32.totalorder %s72, %s73
    %p87 = scmp.eq.s32.totalorder %s16, 1
    %p88 = por %p86, %p87
    %p90 = scmp.ne.s32.totalorder %s73, %s89
    %p91 = scmp.eq.s32.totalorder %s16, 0
    %p92 = por %p90, %p91
    %s93 = ssub.s32 %s18, %s32
    %p94 = scmp.eq.s32.totalorder %s93, 0
    %s96 = sadd.s32 %s95, 1
    %s97 = scalar_select %p94, %s95, %s96
    %p100 = pneg %p94
    %p101 = scmp.eq.s32.totalorder %s10, 1
    %p102 = por %p100, %p101
    %p103 = scmp.ne.s32.totalorder %s95, %s98
    %p104 = scmp.eq.s32.totalorder %s10, 0
    %p105 = por %p103, %p104
    %p106 = scmp.ne.s32.totalorder %s95, %s98
    %p107 = scmp.eq.s32.totalorder %s15, 1
    %p108 = por %p106, %p107
    %p109 = scmp.ne.s32.totalorder %s98, %s99
    %p110 = scmp.eq.s32.totalorder %s15, 0
    %p111 = por %p109, %p110
    %p112 = scmp.ne.s32.totalorder %s98, %s99
    %p113 = scmp.eq.s32.totalorder %s16, 1
    %p114 = por %p112, %p113
    %p116 = scmp.ne.s32.totalorder %s99, %s115
    %p117 = scmp.eq.s32.totalorder %s16, 0
    %p118 = por %p116, %p117
    %s119 = ssub.s32 %s17, %s36
    %s120 = ssub.s32 %s18, %s32
    %s121 = sor.u32 %s119, %s120
    %p122 = scmp.eq.s32.totalorder %s121, 0
    %s124 = sadd.s32 %s123, 1
    %s125 = scalar_select %p122, %s123, %s124
    %p128 = pneg %p122
    %p129 = scmp.eq.s32.totalorder %s10, 1
    %p130 = por %p128, %p129
    %p131 = scmp.ne.s32.totalorder %s123, %s126
    %p132 = scmp.eq.s32.totalorder %s10, 0
    %p133 = por %p131, %p132
    %p134 = scmp.ne.s32.totalorder %s123, %s126
    %p135 = scmp.eq.s32.totalorder %s15, 1
    %p136 = por %p134, %p135
    %p137 = scmp.ne.s32.totalorder %s126, %s127
    %p138 = scmp.eq.s32.totalorder %s15, 0
    %p139 = por %p137, %p138
    %p140 = scmp.ne.s32.totalorder %s126, %s127
    %p141 = scmp.eq.s32.totalorder %s16, 1
    %p142 = por %p140, %p141
    %p144 = scmp.ne.s32.totalorder %s127, %s143
    %p145 = scmp.eq.s32.totalorder %s16, 0
    %p146 = por %p144, %p145
    %s147 = ssub.s32 %s17, %s36
    %s148 = ssub.s32 %s18, %s32
    %s149 = sor.u32 %s147, %s148
    %p150 = scmp.eq.s32.totalorder %s149, 0
    %s152 = sadd.s32 %s151, 1
    %s153 = scalar_select %p150, %s151, %s152
    %p156 = pneg %p150
    %p157 = scmp.eq.s32.totalorder %s10, 1
    %p158 = por %p156, %p157
    %p159 = scmp.ne.s32.totalorder %s151, %s154
    %p160 = scmp.eq.s32.totalorder %s10, 0
    %p161 = por %p159, %p160
    %p162 = scmp.ne.s32.totalorder %s151, %s154
    %p163 = scmp.eq.s32.totalorder %s15, 1
    %p164 = por %p162, %p163
    %p165 = scmp.ne.s32.totalorder %s154, %s155
    %p166 = scmp.eq.s32.totalorder %s15, 0
    %p167 = por %p165, %p166
    %p168 = scmp.ne.s32.totalorder %s154, %s155
    %p169 = scmp.eq.s32.totalorder %s16, 1
    %p170 = por %p168, %p169
    %p172 = scmp.ne.s32.totalorder %s155, %s171
    %p173 = scmp.eq.s32.totalorder %s16, 0
    %p174 = por %p172, %p173
    %p175 = scmp.le.s32.totalorder 1, %s10
    %p176 = scmp.lt.s32.totalorder %s10, 3
    %p177 = pnand %p175, %p176
    %p178 = pneg %p177
    // Predicated region
    $region9: #{darknet53_forward.10} parent=5 // pred_check
      _
    $region10: #{darknet53_forward.10} parent=5 // pred_check_branch
      %180 = sbr.rel (%p177) target = $region12
    $region11: #{darknet53_forward.10} parent=5 // pred_region
      %s181 = ssub.s32 %s10, 1
      // Predicated region
      $region13: #{darknet53_forward.10} parent=11 // pred_check
        %p182 = pneg %p85
      $region14: #{darknet53_forward.10} parent=11 // pred_check_branch
        %184 = sbr.rel (%p182) target = $region16
      $region15: #{darknet53_forward.10} parent=11 // pred_region
        %s185 = smul.u32 48, %s22
        %p186 = scmp.lt.s32.totalorder %s185, 47
        %s187 = scalar_select %p186, %s185, 47
        %p188 = scmp.lt.s32.totalorder %s21, 0
        %s189 = scalar_select %p188, %s21, 0
        %s190 = sadd.s32 %s189, %s187
        %s191 = smul.addr %s190, 4
        %s192 = scalar_lea.vmem %s1, %s191
        %s193 = smul.u32 48, %s22
      $region16: #{darknet53_forward.10} parent=11 // pred_fallthru
        _
      // Predicated region
      $region17: #{darknet53_forward.10} parent=11 // pred_check
        %p194 = pneg %p111
      $region18: #{darknet53_forward.10} parent=11 // pred_check_branch
        %196 = sbr.rel (%p194) target = $region20
      $region19: #{darknet53_forward.10} parent=11 // pred_region
        %p197 = scmp.lt.s32.totalorder %s21, 0
        %s198 = scalar_select %p197, %s21, 0
        %s199 = scalar_lea.vmem %s2, %s198
      $region20: #{darknet53_forward.10} parent=11 // pred_fallthru
        _
    $region12: #{darknet53_forward.10} parent=5 // pred_fallthru
      _
    %p200 = scmp.lt.s32.totalorder %s10, 2
    // Predicated region
    $region21: #{darknet53_forward.10} parent=5 // pred_check
      %p201 = pneg %p200
    $region22: #{darknet53_forward.10} parent=5 // pred_check_branch
      %203 = sbr.rel (%p201) target = $region24
    $region23: #{darknet53_forward.10} parent=5 // pred_region
      // Predicated region
      $region25: #{darknet53_forward.10} parent=23 // pred_check
        %p204 = pneg %p51
      $region26: #{darknet53_forward.10} parent=23 // pred_check_branch
        %206 = sbr.rel (%p204) target = $region28
      $region27: #{darknet53_forward.10} parent=23 // pred_region
        %s207 = smul.u32 32, %s17
        %s208 = smul.u32 3, %s19
        %p209 = scmp.lt.s32.totalorder %s207, 63
        %s210 = scalar_select %p209, %s207, 63
        %p211 = scmp.lt.s32.totalorder %s208, 2
        %s212 = scalar_select %p211, %s208, 2
        %s213 = smul.addr %s210, 3
        %s214 = sadd.s32 %s212, %s213
        %s215 = smul.addr %s214, 4
        %s216 = scalar_lea.vmem %s0, %s215
        %s217 = smul.u32 32, %s17
        %s218 = smul.u32 3, %s19
      $region28: #{darknet53_forward.10} parent=23 // pred_fallthru
        _
      // Predicated region
      $region29: #{darknet53_forward.10} parent=23 // pred_check
        %p219 = pneg %p133
      $region30: #{darknet53_forward.10} parent=23 // pred_check_branch
        %221 = sbr.rel (%p219) target = $region32
      $region31: #{darknet53_forward.10} parent=23 // pred_region
        %s222 = smul.u32 32, %s17
        %p223 = scmp.lt.s32.totalorder %s222, 63
        %s224 = scalar_select %p223, %s222, 63
        %p225 = scmp.lt.s32.totalorder %s18, 0
        %s226 = scalar_select %p225, %s18, 0
        %s227 = sadd.s32 %s226, %s224
        %s228 = smul.addr %s227, 4
        %s229 = scalar_lea.vmem %s3, %s228
        %s230 = smul.u32 32, %s17
      $region32: #{darknet53_forward.10} parent=23 // pred_fallthru
        _
    $region24: #{darknet53_forward.10} parent=5 // pred_fallthru
      _
    %p231 = scmp.le.s32.totalorder 1, %s10
    %p232 = scmp.lt.s32.totalorder %s10, 3
    %p233 = pnand %p231, %p232
    %p234 = pneg %p233
    // Predicated region
    $region33: #{darknet53_forward.10} parent=5 // pred_check
      _
    $region34: #{darknet53_forward.10} parent=5 // pred_check_branch
      %236 = sbr.rel (%p233) target = $region36
    $region35: #{darknet53_forward.10} parent=5 // pred_region
      %s237 = ssub.s32 %s10, 1
      %s238 = smul.u32 32, %s20
      %s239 = smul.u32 3, %s22
      %p240 = scmp.lt.s32.totalorder %s238, 63
      %s241 = scalar_select %p240, %s238, 63
      %p242 = scmp.lt.s32.totalorder %s239, 2
      %s243 = scalar_select %p242, %s239, 2
      %s244 = smul.addr %s241, 3
      %s245 = sadd.s32 %s243, %s244
      %s246 = smul.addr %s245, 4
      %s247 = scalar_lea.vmem %s0, %s246
      %p248 = pneg %p57
      %p249 = pneg %p54
      %s250 = smul.u32 48, %s22
      %p251 = scmp.lt.s32.totalorder %s250, 47
      %s252 = scalar_select %p251, %s250, 47
      %p253 = scmp.lt.s32.totalorder %s21, 0
      %s254 = scalar_select %p253, %s21, 0
      %s255 = sadd.s32 %s254, %s252
      %s256 = smul.addr %s255, 4
      %s257 = scalar_lea.vmem %s1, %s256
      %p258 = pneg %p85
      %p259 = pneg %p82
      %p260 = scmp.lt.s32.totalorder %s21, 0
      %s261 = scalar_select %p260, %s21, 0
      %s262 = scalar_lea.vmem %s2, %s261
      %p263 = pneg %p111
      %p264 = pneg %p108
      %s265 = smul.u32 32, %s20
      %p266 = scmp.lt.s32.totalorder %s265, 63
      %s267 = scalar_select %p266, %s265, 63
      %p268 = scmp.lt.s32.totalorder %s21, 0
      %s269 = scalar_select %p268, %s21, 0
      %s270 = sadd.s32 %s269, %s267
      %s271 = smul.addr %s270, 4
      %s272 = scalar_lea.vmem %s3, %s271
      %p273 = pneg %p139
      %p274 = pneg %p136
      %p275 = pneg %p167
      %p276 = pneg %p164
      %s277 = smul.u32 32, %s20
      %p278 = scmp.lt.s32.totalorder %s277, 63
      %s279 = scalar_select %p278, %s277, 63
      %p280 = scmp.lt.s32.totalorder %s21, 0
      %s281 = scalar_select %p280, %s21, 0
      %s282 = sadd.s32 %s281, %s279
      %s283 = smul.addr %s282, 4
      %s284 = scalar_lea.vmem %s4, %s283
      %s285 = smul.u32 32, %s20
      %s286 = smul.u32 3, %s22
      %p287 = scmp.lt.s32.totalorder %s285, 63
      %s288 = scalar_select %p287, %s285, 63
      %p289 = scmp.lt.s32.totalorder %s286, 2
      %s290 = scalar_select %p289, %s286, 2
      %s291 = smul.addr %s288, 3
      %s292 = sadd.s32 %s290, %s291
      %s293 = smul.addr %s292, 4
      %s294 = scalar_lea.vmem %s0, %s293
      %s295 = smul.u32 32, %s20
      %s296 = smul.u32 3, %s22
      %s297 = smul.u32 48, %s22
      %p298 = scmp.lt.s32.totalorder %s297, 47
      %s299 = scalar_select %p298, %s297, 47
      %p300 = scmp.lt.s32.totalorder %s21, 0
      %s301 = scalar_select %p300, %s21, 0
      %s302 = sadd.s32 %s301, %s299
      %s303 = smul.addr %s302, 4
      %s304 = scalar_lea.vmem %s1, %s303
      %s305 = smul.u32 48, %s22
      %p306 = scmp.lt.s32.totalorder %s21, 0
      %s307 = scalar_select %p306, %s21, 0
      %s308 = scalar_lea.vmem %s2, %s307
      %s309 = smul.u32 32, %s20
      %p310 = scmp.lt.s32.totalorder %s309, 63
      %s311 = scalar_select %p310, %s309, 63
      %p312 = scmp.lt.s32.totalorder %s21, 0
      %s313 = scalar_select %p312, %s21, 0
      %s314 = sadd.s32 %s313, %s311
      %s315 = smul.addr %s314, 4
      %s316 = scalar_lea.vmem %s3, %s315
      %s317 = smul.u32 32, %s20
      %s318 = smul.u32 32, %s20
      %p319 = scmp.lt.s32.totalorder %s318, 63
      %s320 = scalar_select %p319, %s318, 63
      %p321 = scmp.lt.s32.totalorder %s21, 0
      %s322 = scalar_select %p321, %s21, 0
      %s323 = sadd.s32 %s322, %s320
      %s324 = smul.addr %s323, 4
      %s325 = scalar_lea.vmem %s4, %s324
      %s326 = smul.u32 32, %s20
      %p328 = scmp.eq.s32.totalorder %s22, 0
      // Predicated region
      $region37: #{darknet53_forward.10} parent=35 // pred_check
        %p329 = pneg %p328
      $region38: #{darknet53_forward.10} parent=35 // pred_check_branch
        %331 = sbr.rel (%p329) target = $region40
      $region39: #{darknet53_forward.10} parent=35 // pred_region
        %332 = vst [vmem:[#allocation2] sm:$0xff] 0.0
        %333 = vst [vmem:[#allocation2 + $0x8] sm:$0xff] 0.0
        %334 = vst [vmem:[#allocation2 + $0x10] sm:$0xff] 0.0
        %335 = vst [vmem:[#allocation2 + $0x18] sm:$0xff] 0.0
        %336 = vst [vmem:[#allocation2 + $0x20] sm:$0xff] 0.0
        %337 = vst [vmem:[#allocation2 + $0x28] sm:$0xff] 0.0
        %338 = vst [vmem:[#allocation2 + $0x30] sm:$0xff] 0.0
        %339 = vst [vmem:[#allocation2 + $0x38] sm:$0xff] 0.0
        %340 = vst [vmem:[#allocation2 + $0x40] sm:$0xff] 0.0
        %341 = vst [vmem:[#allocation2 + $0x48] sm:$0xff] 0.0
        %342 = vst [vmem:[#allocation2 + $0x50] sm:$0xff] 0.0
        %343 = vst [vmem:[#allocation2 + $0x58] sm:$0xff] 0.0
        %344 = vst [vmem:[#allocation2 + $0x60] sm:$0xff] 0.0
        %345 = vst [vmem:[#allocation2 + $0x68] sm:$0xff] 0.0
        %346 = vst [vmem:[#allocation2 + $0x70] sm:$0xff] 0.0
        %347 = vst [vmem:[#allocation2 + $0x78] sm:$0xff] 0.0
        %348 = vst [vmem:[#allocation2 + $0x80] sm:$0xff] 0.0
        %349 = vst [vmem:[#allocation2 + $0x88] sm:$0xff] 0.0
        %350 = vst [vmem:[#allocation2 + $0x90] sm:$0xff] 0.0
        %351 = vst [vmem:[#allocation2 + $0x98] sm:$0xff] 0.0
        %352 = vst [vmem:[#allocation2 + $0xa0] sm:$0xff] 0.0
        %353 = vst [vmem:[#allocation2 + $0xa8] sm:$0xff] 0.0
        %354 = vst [vmem:[#allocation2 + $0xb0] sm:$0xff] 0.0
        %355 = vst [vmem:[#allocation2 + $0xb8] sm:$0xff] 0.0
        %356 = vst [vmem:[#allocation2 + $0xc0] sm:$0xff] 0.0
        %357 = vst [vmem:[#allocation2 + $0xc8] sm:$0xff] 0.0
        %358 = vst [vmem:[#allocation2 + $0xd0] sm:$0xff] 0.0
        %359 = vst [vmem:[#allocation2 + $0xd8] sm:$0xff] 0.0
        %360 = vst [vmem:[#allocation2 + $0xe0] sm:$0xff] 0.0
        %361 = vst [vmem:[#allocation2 + $0xe8] sm:$0xff] 0.0
        %362 = vst [vmem:[#allocation2 + $0xf0] sm:$0xff] 0.0
        %363 = vst [vmem:[#allocation2 + $0xf8] sm:$0xff] 0.0
      $region40: #{darknet53_forward.10} parent=35 // pred_fallthru
        _
      %v364 = vld [vmem:[#allocation2] sm:$0xff]
      %v365 = vld [vmem:[#allocation2 + $0x8] sm:$0xff]
      %v366 = vld [vmem:[#allocation2 + $0x10] sm:$0xff]
      %v367 = vld [vmem:[#allocation2 + $0x18] sm:$0xff]
      %v368 = vld [vmem:[#allocation2 + $0x20] sm:$0xff]
      %v369 = vld [vmem:[#allocation2 + $0x28] sm:$0xff]
      %v370 = vld [vmem:[#allocation2 + $0x30] sm:$0xff]
      %v371 = vld [vmem:[#allocation2 + $0x38] sm:$0xff]
      %v372 = vld [vmem:[#allocation2 + $0x40] sm:$0xff]
      %v373 = vld [vmem:[#allocation2 + $0x48] sm:$0xff]
      %v374 = vld [vmem:[#allocation2 + $0x50] sm:$0xff]
      %v375 = vld [vmem:[#allocation2 + $0x58] sm:$0xff]
      %v376 = vld [vmem:[#allocation2 + $0x60] sm:$0xff]
      %v377 = vld [vmem:[#allocation2 + $0x68] sm:$0xff]
      %v378 = vld [vmem:[#allocation2 + $0x70] sm:$0xff]
      %v379 = vld [vmem:[#allocation2 + $0x78] sm:$0xff]
      %v380 = vld [vmem:[#allocation2 + $0x80] sm:$0xff]
      %v381 = vld [vmem:[#allocation2 + $0x88] sm:$0xff]
      %v382 = vld [vmem:[#allocation2 + $0x90] sm:$0xff]
      %v383 = vld [vmem:[#allocation2 + $0x98] sm:$0xff]
      %v384 = vld [vmem:[#allocation2 + $0xa0] sm:$0xff]
      %v385 = vld [vmem:[#allocation2 + $0xa8] sm:$0xff]
      %v386 = vld [vmem:[#allocation2 + $0xb0] sm:$0xff]
      %v387 = vld [vmem:[#allocation2 + $0xb8] sm:$0xff]
      %v388 = vld [vmem:[#allocation2 + $0xc0] sm:$0xff]
      %v389 = vld [vmem:[#allocation2 + $0xc8] sm:$0xff]
      %v390 = vld [vmem:[#allocation2 + $0xd0] sm:$0xff]
      %v391 = vld [vmem:[#allocation2 + $0xd8] sm:$0xff]
      %v392 = vld [vmem:[#allocation2 + $0xe0] sm:$0xff]
      %v393 = vld [vmem:[#allocation2 + $0xe8] sm:$0xff]
      %v394 = vld [vmem:[#allocation2 + $0xf0] sm:$0xff]
      %v395 = vld [vmem:[#allocation2 + $0xf8] sm:$0xff]
      %v396 = vld [vmem:[%s294] sm:$0xff]
      %v397 = vld [vmem:[%s294 + $0x8] sm:$0xf]
      %v398 = vld [vmem:[%s294 + $0xc] sm:$0xff]
      %v399 = vld [vmem:[%s294 + $0x14] sm:$0xf]
      %v400 = vld [vmem:[%s294 + $0x18] sm:$0xff]
      %v401 = vld [vmem:[%s294 + $0x20] sm:$0xf]
      %v402 = vld [vmem:[%s294 + $0x24] sm:$0xff]
      %v403 = vld [vmem:[%s294 + $0x2c] sm:$0xf]
      %v404 = vld [vmem:[%s294 + $0x30] sm:$0xff]
      %v405 = vld [vmem:[%s294 + $0x38] sm:$0xf]
      %v406 = vld [vmem:[%s294 + $0x3c] sm:$0xff]
      %v407 = vld [vmem:[%s294 + $0x44] sm:$0xf]
      %v408 = vld [vmem:[%s294 + $0x48] sm:$0xff]
      %v409 = vld [vmem:[%s294 + $0x50] sm:$0xf]
      %v410 = vld [vmem:[%s294 + $0x54] sm:$0xff]
      %v411 = vld [vmem:[%s294 + $0x5c] sm:$0xf]
      %v412 = vld [vmem:[%s294 + $0x60] sm:$0xff]
      %v413 = vld [vmem:[%s294 + $0x68] sm:$0xf]
      %v414 = vld [vmem:[%s294 + $0x6c] sm:$0xff]
      %v415 = vld [vmem:[%s294 + $0x74] sm:$0xf]
      %v416 = vld [vmem:[%s294 + $0x78] sm:$0xff]
      %v417 = vld [vmem:[%s294 + $0x80] sm:$0xf]
      %v418 = vld [vmem:[%s294 + $0x84] sm:$0xff]
      %v419 = vld [vmem:[%s294 + $0x8c] sm:$0xf]
      %v420 = vld [vmem:[%s294 + $0x90] sm:$0xff]
      %v421 = vld [vmem:[%s294 + $0x98] sm:$0xf]
      %v422 = vld [vmem:[%s294 + $0x9c] sm:$0xff]
      %v423 = vld [vmem:[%s294 + $0xa4] sm:$0xf]
      %v424 = vld [vmem:[%s294 + $0xa8] sm:$0xff]
      %v425 = vld [vmem:[%s294 + $0xb0] sm:$0xf]
      %v426 = vld [vmem:[%s294 + $0xb4] sm:$0xff]
      %v427 = vld [vmem:[%s294 + $0xbc] sm:$0xf]
      %v428 = vld [vmem:[%s294 + $0xc0] sm:$0xff]
      %v429 = vld [vmem:[%s294 + $0xc8] sm:$0xf]
      %v430 = vld [vmem:[%s294 + $0xcc] sm:$0xff]
      %v431 = vld [vmem:[%s294 + $0xd4] sm:$0xf]
      %v432 = vld [vmem:[%s294 + $0xd8] sm:$0xff]
      %v433 = vld [vmem:[%s294 + $0xe0] sm:$0xf]
      %v434 = vld [vmem:[%s294 + $0xe4] sm:$0xff]
      %v435 = vld [vmem:[%s294 + $0xec] sm:$0xf]
      %v436 = vld [vmem:[%s294 + $0xf0] sm:$0xff]
      %v437 = vld [vmem:[%s294 + $0xf8] sm:$0xf]
      %v438 = vld [vmem:[%s294 + $0xfc] sm:$0xff]
      %v439 = vld [vmem:[%s294 + $0x104] sm:$0xf]
      %v440 = vld [vmem:[%s294 + $0x108] sm:$0xff]
      %v441 = vld [vmem:[%s294 + $0x110] sm:$0xf]
      %v442 = vld [vmem:[%s294 + $0x114] sm:$0xff]
      %v443 = vld [vmem:[%s294 + $0x11c] sm:$0xf]
      %v444 = vld [vmem:[%s294 + $0x120] sm:$0xff]
      %v445 = vld [vmem:[%s294 + $0x128] sm:$0xf]
      %v446 = vld [vmem:[%s294 + $0x12c] sm:$0xff]
      %v447 = vld [vmem:[%s294 + $0x134] sm:$0xf]
      %v448 = vld [vmem:[%s294 + $0x138] sm:$0xff]
      %v449 = vld [vmem:[%s294 + $0x140] sm:$0xf]
      %v450 = vld [vmem:[%s294 + $0x144] sm:$0xff]
      %v451 = vld [vmem:[%s294 + $0x14c] sm:$0xf]
      %v452 = vld [vmem:[%s294 + $0x150] sm:$0xff]
      %v453 = vld [vmem:[%s294 + $0x158] sm:$0xf]
      %v454 = vld [vmem:[%s294 + $0x15c] sm:$0xff]
      %v455 = vld [vmem:[%s294 + $0x164] sm:$0xf]
      %v456 = vld [vmem:[%s294 + $0x168] sm:$0xff]
      %v457 = vld [vmem:[%s294 + $0x170] sm:$0xf]
      %v458 = vld [vmem:[%s294 + $0x174] sm:$0xff]
      %v459 = vld [vmem:[%s294 + $0x17c] sm:$0xf]
      %v460 = vld [vmem:[%s304] sm:$0xf]
      %v461 = vld [vmem:[%s304 + $0x4] sm:$0xf]
      %v462 = vld [vmem:[%s304 + $0x8] sm:$0xf]
      %v463 = vld [vmem:[%s304 + $0xc] sm:$0xf]
      %v464 = vld [vmem:[%s304 + $0x10] sm:$0xf]
      %v465 = vld [vmem:[%s304 + $0x14] sm:$0xf]
      %v466 = vld [vmem:[%s304 + $0x18] sm:$0xf]
      %v467 = vld [vmem:[%s304 + $0x1c] sm:$0xf]
      %v468 = vld [vmem:[%s304 + $0x20] sm:$0xf]
      %v469 = vld [vmem:[%s304 + $0x24] sm:$0xf]
      %v470 = vld [vmem:[%s304 + $0x28] sm:$0xf]
      %v471 = vld [vmem:[%s304 + $0x2c] sm:$0xf]
      %v472 = vld [vmem:[%s304 + $0x30] sm:$0xf]
      %v473 = vld [vmem:[%s304 + $0x34] sm:$0xf]
      %v474 = vld [vmem:[%s304 + $0x38] sm:$0xf]
      %v475 = vld [vmem:[%s304 + $0x3c] sm:$0xf]
      %v476 = vld [vmem:[%s304 + $0x40] sm:$0xf]
      %v477 = vld [vmem:[%s304 + $0x44] sm:$0xf]
      %v478 = vld [vmem:[%s304 + $0x48] sm:$0xf]
      %v479 = vld [vmem:[%s304 + $0x4c] sm:$0xf]
      %v480 = vld [vmem:[%s304 + $0x50] sm:$0xf]
      %v481 = vld [vmem:[%s304 + $0x54] sm:$0xf]
      %v482 = vld [vmem:[%s304 + $0x58] sm:$0xf]
      %v483 = vld [vmem:[%s304 + $0x5c] sm:$0xf]
      %v484 = vld [vmem:[%s304 + $0x60] sm:$0xf]
      %v485 = vld [vmem:[%s304 + $0x64] sm:$0xf]
      %v486 = vld [vmem:[%s304 + $0x68] sm:$0xf]
      %v487 = vld [vmem:[%s304 + $0x6c] sm:$0xf]
      %v488 = vld [vmem:[%s304 + $0x70] sm:$0xf]
      %v489 = vld [vmem:[%s304 + $0x74] sm:$0xf]
      %v490 = vld [vmem:[%s304 + $0x78] sm:$0xf]
      %v491 = vld [vmem:[%s304 + $0x7c] sm:$0xf]
      %v492 = vld [vmem:[%s304 + $0x80] sm:$0xf]
      %v493 = vld [vmem:[%s304 + $0x84] sm:$0xf]
      %v494 = vld [vmem:[%s304 + $0x88] sm:$0xf]
      %v495 = vld [vmem:[%s304 + $0x8c] sm:$0xf]
      %v496 = vld [vmem:[%s304 + $0x90] sm:$0xf]
      %v497 = vld [vmem:[%s304 + $0x94] sm:$0xf]
      %v498 = vld [vmem:[%s304 + $0x98] sm:$0xf]
      %v499 = vld [vmem:[%s304 + $0x9c] sm:$0xf]
      %v500 = vld [vmem:[%s304 + $0xa0] sm:$0xf]
      %v501 = vld [vmem:[%s304 + $0xa4] sm:$0xf]
      %v502 = vld [vmem:[%s304 + $0xa8] sm:$0xf]
      %v503 = vld [vmem:[%s304 + $0xac] sm:$0xf]
      %v504 = vld [vmem:[%s304 + $0xb0] sm:$0xf]
      %v505 = vld [vmem:[%s304 + $0xb4] sm:$0xf]
      %v506 = vld [vmem:[%s304 + $0xb8] sm:$0xf]
      %v507 = vld [vmem:[%s304 + $0xbc] sm:$0xf]
      %v572 = vunpack.c.l.b16 %v396
      %v573 = vunpack.c.h.b16 %v396
      %v574 = vunpack.c.l.b16 %v397
      %v575 = vunpack.c.l.b16 %v398
      %v576 = vunpack.c.h.b16 %v398
      %v577 = vunpack.c.l.b16 %v399
      %v578 = vunpack.c.l.b16 %v400
      %v579 = vunpack.c.h.b16 %v400
      %v580 = vunpack.c.l.b16 %v401
      %v581 = vunpack.c.l.b16 %v402
      %v582 = vunpack.c.h.b16 %v402
      %v583 = vunpack.c.l.b16 %v403
      %v584 = vunpack.c.l.b16 %v404
      %v585 = vunpack.c.h.b16 %v404
      %v586 = vunpack.c.l.b16 %v405
      %v587 = vunpack.c.l.b16 %v406
      %v588 = vunpack.c.h.b16 %v406
      %v589 = vunpack.c.l.b16 %v407
      %v590 = vunpack.c.l.b16 %v408
      %v591 = vunpack.c.h.b16 %v408
      %v592 = vunpack.c.l.b16 %v409
      %v593 = vunpack.c.l.b16 %v410
      %v594 = vunpack.c.h.b16 %v410
      %v595 = vunpack.c.l.b16 %v411
      %v596 = vunpack.c.l.b16 %v412
      %v597 = vunpack.c.h.b16 %v412
      %v598 = vunpack.c.l.b16 %v413
      %v599 = vunpack.c.l.b16 %v414
      %v600 = vunpack.c.h.b16 %v414
      %v601 = vunpack.c.l.b16 %v415
      %v602 = vunpack.c.l.b16 %v416
      %v603 = vunpack.c.h.b16 %v416
      %v604 = vunpack.c.l.b16 %v417
      %v605 = vunpack.c.l.b16 %v418
      %v606 = vunpack.c.h.b16 %v418
      %v607 = vunpack.c.l.b16 %v419
      %v608 = vunpack.c.l.b16 %v420
      %v609 = vunpack.c.h.b16 %v420
      %v610 = vunpack.c.l.b16 %v421
      %v611 = vunpack.c.l.b16 %v422
      %v612 = vunpack.c.h.b16 %v422
      %v613 = vunpack.c.l.b16 %v423
      %v614 = vunpack.c.l.b16 %v424
      %v615 = vunpack.c.h.b16 %v424
      %v616 = vunpack.c.l.b16 %v425
      %v617 = vunpack.c.l.b16 %v426
      %v618 = vunpack.c.h.b16 %v426
      %v619 = vunpack.c.l.b16 %v427
      %v620 = vunpack.c.l.b16 %v428
      %v621 = vunpack.c.h.b16 %v428
      %v622 = vunpack.c.l.b16 %v429
      %v623 = vunpack.c.l.b16 %v430
      %v624 = vunpack.c.h.b16 %v430
      %v625 = vunpack.c.l.b16 %v431
      %v626 = vunpack.c.l.b16 %v432
      %v627 = vunpack.c.h.b16 %v432
      %v628 = vunpack.c.l.b16 %v433
      %v629 = vunpack.c.l.b16 %v434
      %v630 = vunpack.c.h.b16 %v434
      %v631 = vunpack.c.l.b16 %v435
      %v632 = vunpack.c.l.b16 %v436
      %v633 = vunpack.c.h.b16 %v436
      %v634 = vunpack.c.l.b16 %v437
      %v635 = vunpack.c.l.b16 %v438
      %v636 = vunpack.c.h.b16 %v438
      %v637 = vunpack.c.l.b16 %v439
      %v638 = vunpack.c.l.b16 %v440
      %v639 = vunpack.c.h.b16 %v440
      %v640 = vunpack.c.l.b16 %v441
      %v641 = vunpack.c.l.b16 %v442
      %v642 = vunpack.c.h.b16 %v442
      %v643 = vunpack.c.l.b16 %v443
      %v644 = vunpack.c.l.b16 %v444
      %v645 = vunpack.c.h.b16 %v444
      %v646 = vunpack.c.l.b16 %v445
      %v647 = vunpack.c.l.b16 %v446
      %v648 = vunpack.c.h.b16 %v446
      %v649 = vunpack.c.l.b16 %v447
      %v650 = vunpack.c.l.b16 %v448
      %v651 = vunpack.c.h.b16 %v448
      %v652 = vunpack.c.l.b16 %v449
      %v653 = vunpack.c.l.b16 %v450
      %v654 = vunpack.c.h.b16 %v450
      %v655 = vunpack.c.l.b16 %v451
      %v656 = vunpack.c.l.b16 %v452
      %v657 = vunpack.c.h.b16 %v452
      %v658 = vunpack.c.l.b16 %v453
      %v659 = vunpack.c.l.b16 %v454
      %v660 = vunpack.c.h.b16 %v454
      %v661 = vunpack.c.l.b16 %v455
      %v662 = vunpack.c.l.b16 %v456
      %v663 = vunpack.c.h.b16 %v456
      %v664 = vunpack.c.l.b16 %v457
      %v665 = vunpack.c.l.b16 %v458
      %v666 = vunpack.c.h.b16 %v458
      %v667 = vunpack.c.l.b16 %v459
      %v668 = vpack.c.b16 %v575, %v572
      %v669 = vpack.c.b16 %v576, %v573
      %v670 = vpack.c.b16 %v577, %v574
      %v671 = vpack.c.b16 %v581, %v578
      %v672 = vpack.c.b16 %v582, %v579
      %v673 = vpack.c.b16 %v583, %v580
      %v674 = vpack.c.b16 %v587, %v584
      %v675 = vpack.c.b16 %v588, %v585
      %v676 = vpack.c.b16 %v589, %v586
      %v677 = vpack.c.b16 %v593, %v590
      %v678 = vpack.c.b16 %v594, %v591
      %v679 = vpack.c.b16 %v595, %v592
      %v680 = vpack.c.b16 %v599, %v596
      %v681 = vpack.c.b16 %v600, %v597
      %v682 = vpack.c.b16 %v601, %v598
      %v683 = vpack.c.b16 %v605, %v602
      %v684 = vpack.c.b16 %v606, %v603
      %v685 = vpack.c.b16 %v607, %v604
      %v686 = vpack.c.b16 %v611, %v608
      %v687 = vpack.c.b16 %v612, %v609
      %v688 = vpack.c.b16 %v613, %v610
      %v689 = vpack.c.b16 %v617, %v614
      %v690 = vpack.c.b16 %v618, %v615
      %v691 = vpack.c.b16 %v619, %v616
      %v692 = vpack.c.b16 %v623, %v620
      %v693 = vpack.c.b16 %v624, %v621
      %v694 = vpack.c.b16 %v625, %v622
      %v695 = vpack.c.b16 %v629, %v626
      %v696 = vpack.c.b16 %v630, %v627
      %v697 = vpack.c.b16 %v631, %v628
      %v698 = vpack.c.b16 %v635, %v632
      %v699 = vpack.c.b16 %v636, %v633
      %v700 = vpack.c.b16 %v637, %v634
      %v701 = vpack.c.b16 %v641, %v638
      %v702 = vpack.c.b16 %v642, %v639
      %v703 = vpack.c.b16 %v643, %v640
      %v704 = vpack.c.b16 %v647, %v644
      %v705 = vpack.c.b16 %v648, %v645
      %v706 = vpack.c.b16 %v649, %v646
      %v707 = vpack.c.b16 %v653, %v650
      %v708 = vpack.c.b16 %v654, %v651
      %v709 = vpack.c.b16 %v655, %v652
      %v710 = vpack.c.b16 %v659, %v656
      %v711 = vpack.c.b16 %v660, %v657
      %v712 = vpack.c.b16 %v661, %v658
      %v713 = vpack.c.b16 %v665, %v662
      %v714 = vpack.c.b16 %v666, %v663
      %v715 = vpack.c.b16 %v667, %v664
      %v812 = vunpack.c.l.b16 %v460
      %v813 = vunpack.c.l.b16 %v461
      %v814 = vunpack.c.l.b16 %v462
      %v815 = vunpack.c.l.b16 %v463
      %v816 = vunpack.c.l.b16 %v464
      %v817 = vunpack.c.l.b16 %v465
      %v818 = vunpack.c.l.b16 %v466
      %v819 = vunpack.c.l.b16 %v467
      %v820 = vunpack.c.l.b16 %v468
      %v821 = vunpack.c.l.b16 %v469
      %v822 = vunpack.c.l.b16 %v470
      %v823 = vunpack.c.l.b16 %v471
      %v824 = vunpack.c.l.b16 %v472
      %v825 = vunpack.c.l.b16 %v473
      %v826 = vunpack.c.l.b16 %v474
      %v827 = vunpack.c.l.b16 %v475
      %v828 = vunpack.c.l.b16 %v476
      %v829 = vunpack.c.l.b16 %v477
      %v830 = vunpack.c.l.b16 %v478
      %v831 = vunpack.c.l.b16 %v479
      %v832 = vunpack.c.l.b16 %v480
      %v833 = vunpack.c.l.b16 %v481
      %v834 = vunpack.c.l.b16 %v482
      %v835 = vunpack.c.l.b16 %v483
      %v836 = vunpack.c.l.b16 %v484
      %v837 = vunpack.c.l.b16 %v485
      %v838 = vunpack.c.l.b16 %v486
      %v839 = vunpack.c.l.b16 %v487
      %v840 = vunpack.c.l.b16 %v488
      %v841 = vunpack.c.l.b16 %v489
      %v842 = vunpack.c.l.b16 %v490
      %v843 = vunpack.c.l.b16 %v491
      %v844 = vunpack.c.l.b16 %v492
      %v845 = vunpack.c.l.b16 %v493
      %v846 = vunpack.c.l.b16 %v494
      %v847 = vunpack.c.l.b16 %v495
      %v848 = vunpack.c.l.b16 %v496
      %v849 = vunpack.c.l.b16 %v497
      %v850 = vunpack.c.l.b16 %v498
      %v851 = vunpack.c.l.b16 %v499
      %v852 = vunpack.c.l.b16 %v500
      %v853 = vunpack.c.l.b16 %v501
      %v854 = vunpack.c.l.b16 %v502
      %v855 = vunpack.c.l.b16 %v503
      %v856 = vunpack.c.l.b16 %v504
      %v857 = vunpack.c.l.b16 %v505
      %v858 = vunpack.c.l.b16 %v506
      %v859 = vunpack.c.l.b16 %v507
      %v860 = vpack.c.b16 %v813, %v812
      %v861 = vpack.c.b16 %v815, %v814
      %v862 = vpack.c.b16 %v817, %v816
      %v863 = vpack.c.b16 %v819, %v818
      %v864 = vpack.c.b16 %v821, %v820
      %v865 = vpack.c.b16 %v823, %v822
      %v866 = vpack.c.b16 %v825, %v824
      %v867 = vpack.c.b16 %v827, %v826
      %v868 = vpack.c.b16 %v829, %v828
      %v869 = vpack.c.b16 %v831, %v830
      %v870 = vpack.c.b16 %v833, %v832
      %v871 = vpack.c.b16 %v835, %v834
      %v872 = vpack.c.b16 %v837, %v836
      %v873 = vpack.c.b16 %v839, %v838
      %v874 = vpack.c.b16 %v841, %v840
      %v875 = vpack.c.b16 %v843, %v842
      %v876 = vpack.c.b16 %v845, %v844
      %v877 = vpack.c.b16 %v847, %v846
      %v878 = vpack.c.b16 %v849, %v848
      %v879 = vpack.c.b16 %v851, %v850
      %v880 = vpack.c.b16 %v853, %v852
      %v881 = vpack.c.b16 %v855, %v854
      %v882 = vpack.c.b16 %v857, %v856
      %v883 = vpack.c.b16 %v859, %v858
      %908 = vmatprep.subr.bf16.mxu0 0
      %909 = vmatpush1.bf16.msra.mxu0 %v867
      %910 = vmatprep.subr.bf16.mxu0 0
      %911 = vmatpush1.bf16.msra.mxu0 %v866
      %912 = vmatprep.subr.bf16.mxu0 0
      %913 = vmatpush1.bf16.msra.mxu0 %v865
      %914 = vmatprep.subr.bf16.mxu0 0
      %915 = vmatpush1.bf16.msra.mxu0 %v864
      %916 = vmatprep.subr.bf16.mxu0 0
      %917 = vmatpush1.bf16.msra.mxu0 %v863
      %918 = vmatprep.subr.bf16.mxu0 0
      %919 = vmatpush1.bf16.msra.mxu0 %v862
      %920 = vmatprep.subr.bf16.mxu0 0
      %921 = vmatpush1.bf16.msra.mxu0 %v861
      %922 = vmatprep.subr.bf16.mxu0 0
      %923 = vmatpush1.bf16.msra.mxu0 %v860
      %924 = vmatprep.subr.bf16.mxu0 0
      %925 = vmatpush2.bf16.msra.mxu0 %v875
      %926 = vmatprep.subr.bf16.mxu0 0
      %927 = vmatpush2.bf16.msra.mxu0 %v874
      %928 = vmatprep.subr.bf16.mxu0 0
      %929 = vmatpush2.bf16.msra.mxu0 %v873
      %930 = vmatprep.subr.bf16.mxu0 0
      %931 = vmatpush2.bf16.msra.mxu0 %v872
      %932 = vmatprep.subr.bf16.mxu0 0
      %933 = vmatpush2.bf16.msra.mxu0 %v871
      %934 = vmatprep.subr.bf16.mxu0 0
      %935 = vmatpush2.bf16.msra.mxu0 %v870
      %936 = vmatprep.subr.bf16.mxu0 0
      %937 = vmatpush2.bf16.msra.mxu0 %v869
      %938 = vmatprep.subr.bf16.mxu0 0
      %939 = vmatpush2.bf16.msra.mxu0 %v868
      %940 = vmatprep.mubr.bf16.mxu0 %v669
      %941 = vmatmul.mubr.bf16.gmra.mxu0 %v668
      %v942 = vpop.f32.mrf.mxu0
      %v943 = vadd.f32 0.0, %v942
      %v944 = vpop.f32.mrf.mxu0
      %v945 = vpop.f32.mrf.mxu0
      %v946 = vadd.f32 0.0, %v945
      %v947 = vpop.f32.mrf.mxu0
      %948 = vmatprep.mubr.bf16.mxu0 %v672
      %949 = vmatmul.mubr.bf16.gmra.mxu0 %v671
      %v950 = vpop.f32.mrf.mxu0
      %v951 = vadd.f32 0.0, %v950
      %v952 = vpop.f32.mrf.mxu0
      %v953 = vpop.f32.mrf.mxu0
      %v954 = vadd.f32 0.0, %v953
      %v955 = vpop.f32.mrf.mxu0
      %956 = vmatprep.mubr.bf16.mxu0 %v675
      %957 = vmatmul.mubr.bf16.gmra.mxu0 %v674
      %v958 = vpop.f32.mrf.mxu0
      %v959 = vadd.f32 0.0, %v958
      %v960 = vpop.f32.mrf.mxu0
      %v961 = vpop.f32.mrf.mxu0
      %v962 = vadd.f32 0.0, %v961
      %v963 = vpop.f32.mrf.mxu0
      %964 = vmatprep.mubr.bf16.mxu0 %v678
      %965 = vmatmul.mubr.bf16.gmra.mxu0 %v677
      %v966 = vpop.f32.mrf.mxu0
      %v967 = vadd.f32 0.0, %v966
      %v968 = vpop.f32.mrf.mxu0
      %v969 = vpop.f32.mrf.mxu0
      %v970 = vadd.f32 0.0, %v969
      %v971 = vpop.f32.mrf.mxu0
      %972 = vmatprep.mubr.bf16.mxu0 %v681
      %973 = vmatmul.mubr.bf16.gmra.mxu0 %v680
      %v974 = vpop.f32.mrf.mxu0
      %v975 = vadd.f32 0.0, %v974
      %v976 = vpop.f32.mrf.mxu0
      %v977 = vpop.f32.mrf.mxu0
      %v978 = vadd.f32 0.0, %v977
      %v979 = vpop.f32.mrf.mxu0
      %980 = vmatprep.mubr.bf16.mxu0 %v684
      %981 = vmatmul.mubr.bf16.gmra.mxu0 %v683
      %v982 = vpop.f32.mrf.mxu0
      %v983 = vadd.f32 0.0, %v982
      %v984 = vpop.f32.mrf.mxu0
      %v985 = vpop.f32.mrf.mxu0
      %v986 = vadd.f32 0.0, %v985
      %v987 = vpop.f32.mrf.mxu0
      %988 = vmatprep.mubr.bf16.mxu0 %v687
      %989 = vmatmul.mubr.bf16.gmra.mxu0 %v686
      %v990 = vpop.f32.mrf.mxu0
      %v991 = vadd.f32 0.0, %v990
      %v992 = vpop.f32.mrf.mxu0
      %v993 = vpop.f32.mrf.mxu0
      %v994 = vadd.f32 0.0, %v993
      %v995 = vpop.f32.mrf.mxu0
      %996 = vmatprep.mubr.bf16.mxu0 %v690
      %997 = vmatmul.mubr.bf16.gmra.mxu0 %v689
      %v998 = vpop.f32.mrf.mxu0
      %v999 = vadd.f32 0.0, %v998
      %v1000 = vpop.f32.mrf.mxu0
      %v1001 = vpop.f32.mrf.mxu0
      %v1002 = vadd.f32 0.0, %v1001
      %v1003 = vpop.f32.mrf.mxu0
      %1004 = vmatprep.mubr.bf16.mxu0 %v693
      %1005 = vmatmul.mubr.bf16.gmra.mxu0 %v692
      %v1006 = vpop.f32.mrf.mxu0
      %v1007 = vadd.f32 0.0, %v1006
      %v1008 = vpop.f32.mrf.mxu0
      %v1009 = vpop.f32.mrf.mxu0
      %v1010 = vadd.f32 0.0, %v1009
      %v1011 = vpop.f32.mrf.mxu0
      %1012 = vmatprep.mubr.bf16.mxu0 %v696
      %1013 = vmatmul.mubr.bf16.gmra.mxu0 %v695
      %v1014 = vpop.f32.mrf.mxu0
      %v1015 = vadd.f32 0.0, %v1014
      %v1016 = vpop.f32.mrf.mxu0
      %v1017 = vpop.f32.mrf.mxu0
      %v1018 = vadd.f32 0.0, %v1017
      %v1019 = vpop.f32.mrf.mxu0
      %1020 = vmatprep.mubr.bf16.mxu0 %v699
      %1021 = vmatmul.mubr.bf16.gmra.mxu0 %v698
      %v1022 = vpop.f32.mrf.mxu0
      %v1023 = vadd.f32 0.0, %v1022
      %v1024 = vpop.f32.mrf.mxu0
      %v1025 = vpop.f32.mrf.mxu0
      %v1026 = vadd.f32 0.0, %v1025
      %v1027 = vpop.f32.mrf.mxu0
      %1028 = vmatprep.mubr.bf16.mxu0 %v702
      %1029 = vmatmul.mubr.bf16.gmra.mxu0 %v701
      %v1030 = vpop.f32.mrf.mxu0
      %v1031 = vadd.f32 0.0, %v1030
      %v1032 = vpop.f32.mrf.mxu0
      %v1033 = vpop.f32.mrf.mxu0
      %v1034 = vadd.f32 0.0, %v1033
      %v1035 = vpop.f32.mrf.mxu0
      %1036 = vmatprep.mubr.bf16.mxu0 %v705
      %1037 = vmatmul.mubr.bf16.gmra.mxu0 %v704
      %v1038 = vpop.f32.mrf.mxu0
      %v1039 = vadd.f32 0.0, %v1038
      %v1040 = vpop.f32.mrf.mxu0
      %v1041 = vpop.f32.mrf.mxu0
      %v1042 = vadd.f32 0.0, %v1041
      %v1043 = vpop.f32.mrf.mxu0
      %1044 = vmatprep.mubr.bf16.mxu0 %v708
      %1045 = vmatmul.mubr.bf16.gmra.mxu0 %v707
      %v1046 = vpop.f32.mrf.mxu0
      %v1047 = vadd.f32 0.0, %v1046
      %v1048 = vpop.f32.mrf.mxu0
      %v1049 = vpop.f32.mrf.mxu0
      %v1050 = vadd.f32 0.0, %v1049
      %v1051 = vpop.f32.mrf.mxu0
      %1052 = vmatprep.mubr.bf16.mxu0 %v711
      %1053 = vmatmul.mubr.bf16.gmra.mxu0 %v710
      %v1054 = vpop.f32.mrf.mxu0
      %v1055 = vadd.f32 0.0, %v1054
      %v1056 = vpop.f32.mrf.mxu0
      %v1057 = vpop.f32.mrf.mxu0
      %v1058 = vadd.f32 0.0, %v1057
      %v1059 = vpop.f32.mrf.mxu0
      %1060 = vmatprep.mubr.bf16.mxu0 %v714
      %1061 = vmatmul.mubr.bf16.gmra.mxu0 %v713
      %v1062 = vpop.f32.mrf.mxu0
      %v1063 = vadd.f32 0.0, %v1062
      %v1064 = vpop.f32.mrf.mxu0
      %v1065 = vpop.f32.mrf.mxu0
      %v1066 = vadd.f32 0.0, %v1065
      %v1067 = vpop.f32.mrf.mxu0
      %1068 = vdwg.mxu0
      %1069 = vmatprep.subr.bf16.mxu0 0
      %1070 = vmatpush1.bf16.msra.mxu0 %v883
      %1071 = vmatprep.subr.bf16.mxu0 0
      %1072 = vmatpush1.bf16.msra.mxu0 %v882
      %1073 = vmatprep.subr.bf16.mxu0 0
      %1074 = vmatpush1.bf16.msra.mxu0 %v881
      %1075 = vmatprep.subr.bf16.mxu0 0
      %1076 = vmatpush1.bf16.msra.mxu0 %v880
      %1077 = vmatprep.subr.bf16.mxu0 0
      %1078 = vmatpush1.bf16.msra.mxu0 %v879
      %1079 = vmatprep.subr.bf16.mxu0 0
      %1080 = vmatpush1.bf16.msra.mxu0 %v878
      %1081 = vmatprep.subr.bf16.mxu0 0
      %1082 = vmatpush1.bf16.msra.mxu0 %v877
      %1083 = vmatprep.subr.bf16.mxu0 0
      %1084 = vmatpush1.bf16.msra.mxu0 %v876
      %1085 = vmatprep.subr.bf16.mxu0 0
      %1086 = vmatpush2.bf16.msra.mxu0 0
      %1087 = vmatprep.subr.bf16.mxu0 0
      %1088 = vmatpush2.bf16.msra.mxu0 0
      %1089 = vmatprep.subr.bf16.mxu0 0
      %1090 = vmatpush2.bf16.msra.mxu0 0
      %1091 = vmatprep.subr.bf16.mxu0 0
      %1092 = vmatpush2.bf16.msra.mxu0 0
      %1093 = vmatprep.subr.bf16.mxu0 0
      %1094 = vmatpush2.bf16.msra.mxu0 0
      %1095 = vmatprep.subr.bf16.mxu0 0
      %1096 = vmatpush2.bf16.msra.mxu0 0
      %1097 = vmatprep.subr.bf16.mxu0 0
      %1098 = vmatpush2.bf16.msra.mxu0 0
      %1099 = vmatprep.subr.bf16.mxu0 0
      %1100 = vmatpush2.bf16.msra.mxu0 0
      %1101 = vmatprep.mubr.bf16.mxu0 0
      %1102 = vmatmul.mubr.bf16.gmra.mxu0 %v670
      %v1103 = vpop.f32.mrf.mxu0
      %v1104 = vadd.f32 %v943, %v1103
      %v1105 = vpop.f32.mrf.mxu0
      %v1106 = vpop.f32.mrf.mxu0
      %v1107 = vadd.f32 %v946, %v1106
      %v1108 = vpop.f32.mrf.mxu0
      %1109 = vmatprep.mubr.bf16.mxu0 0
      %1110 = vmatmul.mubr.bf16.gmra.mxu0 %v673
      %v1111 = vpop.f32.mrf.mxu0
      %v1112 = vadd.f32 %v951, %v1111
      %v1113 = vpop.f32.mrf.mxu0
      %v1114 = vpop.f32.mrf.mxu0
      %v1115 = vadd.f32 %v954, %v1114
      %v1116 = vpop.f32.mrf.mxu0
      %1117 = vmatprep.mubr.bf16.mxu0 0
      %1118 = vmatmul.mubr.bf16.gmra.mxu0 %v676
      %v1119 = vpop.f32.mrf.mxu0
      %v1120 = vadd.f32 %v959, %v1119
      %v1121 = vpop.f32.mrf.mxu0
      %v1122 = vpop.f32.mrf.mxu0
      %v1123 = vadd.f32 %v962, %v1122
      %v1124 = vpop.f32.mrf.mxu0
      %1125 = vmatprep.mubr.bf16.mxu0 0
      %1126 = vmatmul.mubr.bf16.gmra.mxu0 %v679
      %v1127 = vpop.f32.mrf.mxu0
      %v1128 = vadd.f32 %v967, %v1127
      %v1129 = vpop.f32.mrf.mxu0
      %v1130 = vpop.f32.mrf.mxu0
      %v1131 = vadd.f32 %v970, %v1130
      %v1132 = vpop.f32.mrf.mxu0
      %1133 = vmatprep.mubr.bf16.mxu0 0
      %1134 = vmatmul.mubr.bf16.gmra.mxu0 %v682
      %v1135 = vpop.f32.mrf.mxu0
      %v1136 = vadd.f32 %v975, %v1135
      %v1137 = vpop.f32.mrf.mxu0
      %v1138 = vpop.f32.mrf.mxu0
      %v1139 = vadd.f32 %v978, %v1138
      %v1140 = vpop.f32.mrf.mxu0
      %1141 = vmatprep.mubr.bf16.mxu0 0
      %1142 = vmatmul.mubr.bf16.gmra.mxu0 %v685
      %v1143 = vpop.f32.mrf.mxu0
      %v1144 = vadd.f32 %v983, %v1143
      %v1145 = vpop.f32.mrf.mxu0
      %v1146 = vpop.f32.mrf.mxu0
      %v1147 = vadd.f32 %v986, %v1146
      %v1148 = vpop.f32.mrf.mxu0
      %1149 = vmatprep.mubr.bf16.mxu0 0
      %1150 = vmatmul.mubr.bf16.gmra.mxu0 %v688
      %v1151 = vpop.f32.mrf.mxu0
      %v1152 = vadd.f32 %v991, %v1151
      %v1153 = vpop.f32.mrf.mxu0
      %v1154 = vpop.f32.mrf.mxu0
      %v1155 = vadd.f32 %v994, %v1154
      %v1156 = vpop.f32.mrf.mxu0
      %1157 = vmatprep.mubr.bf16.mxu0 0
      %1158 = vmatmul.mubr.bf16.gmra.mxu0 %v691
      %v1159 = vpop.f32.mrf.mxu0
      %v1160 = vadd.f32 %v999, %v1159
      %v1161 = vpop.f32.mrf.mxu0
      %v1162 = vpop.f32.mrf.mxu0
      %v1163 = vadd.f32 %v1002, %v1162
      %v1164 = vpop.f32.mrf.mxu0
      %1165 = vmatprep.mubr.bf16.mxu0 0
      %1166 = vmatmul.mubr.bf16.gmra.mxu0 %v694
      %v1167 = vpop.f32.mrf.mxu0
      %v1168 = vadd.f32 %v1007, %v1167
      %v1169 = vpop.f32.mrf.mxu0
      %v1170 = vpop.f32.mrf.mxu0
      %v1171 = vadd.f32 %v1010, %v1170
      %v1172 = vpop.f32.mrf.mxu0
      %1173 = vmatprep.mubr.bf16.mxu0 0
      %1174 = vmatmul.mubr.bf16.gmra.mxu0 %v697
      %v1175 = vpop.f32.mrf.mxu0
      %v1176 = vadd.f32 %v1015, %v1175
      %v1177 = vpop.f32.mrf.mxu0
      %v1178 = vpop.f32.mrf.mxu0
      %v1179 = vadd.f32 %v1018, %v1178
      %v1180 = vpop.f32.mrf.mxu0
      %1181 = vmatprep.mubr.bf16.mxu0 0
      %1182 = vmatmul.mubr.bf16.gmra.mxu0 %v700
      %v1183 = vpop.f32.mrf.mxu0
      %v1184 = vadd.f32 %v1023, %v1183
      %v1185 = vpop.f32.mrf.mxu0
      %v1186 = vpop.f32.mrf.mxu0
      %v1187 = vadd.f32 %v1026, %v1186
      %v1188 = vpop.f32.mrf.mxu0
      %1189 = vmatprep.mubr.bf16.mxu0 0
      %1190 = vmatmul.mubr.bf16.gmra.mxu0 %v703
      %v1191 = vpop.f32.mrf.mxu0
      %v1192 = vadd.f32 %v1031, %v1191
      %v1193 = vpop.f32.mrf.mxu0
      %v1194 = vpop.f32.mrf.mxu0
      %v1195 = vadd.f32 %v1034, %v1194
      %v1196 = vpop.f32.mrf.mxu0
      %1197 = vmatprep.mubr.bf16.mxu0 0
      %1198 = vmatmul.mubr.bf16.gmra.mxu0 %v706
      %v1199 = vpop.f32.mrf.mxu0
      %v1200 = vadd.f32 %v1039, %v1199
      %v1201 = vpop.f32.mrf.mxu0
      %v1202 = vpop.f32.mrf.mxu0
      %v1203 = vadd.f32 %v1042, %v1202
      %v1204 = vpop.f32.mrf.mxu0
      %1205 = vmatprep.mubr.bf16.mxu0 0
      %1206 = vmatmul.mubr.bf16.gmra.mxu0 %v709
      %v1207 = vpop.f32.mrf.mxu0
      %v1208 = vadd.f32 %v1047, %v1207
      %v1209 = vpop.f32.mrf.mxu0
      %v1210 = vpop.f32.mrf.mxu0
      %v1211 = vadd.f32 %v1050, %v1210
      %v1212 = vpop.f32.mrf.mxu0
      %1213 = vmatprep.mubr.bf16.mxu0 0
      %1214 = vmatmul.mubr.bf16.gmra.mxu0 %v712
      %v1215 = vpop.f32.mrf.mxu0
      %v1216 = vadd.f32 %v1055, %v1215
      %v1217 = vpop.f32.mrf.mxu0
      %v1218 = vpop.f32.mrf.mxu0
      %v1219 = vadd.f32 %v1058, %v1218
      %v1220 = vpop.f32.mrf.mxu0
      %1221 = vmatprep.mubr.bf16.mxu0 0
      %1222 = vmatmul.mubr.bf16.gmra.mxu0 %v715
      %v1223 = vpop.f32.mrf.mxu0
      %v1224 = vadd.f32 %v1063, %v1223
      %v1225 = vpop.f32.mrf.mxu0
      %v1226 = vpop.f32.mrf.mxu0
      %v1227 = vadd.f32 %v1066, %v1226
      %v1228 = vpop.f32.mrf.mxu0
      %1229 = vdwg.mxu0
      %v1230 = vadd.f32 %v364, %v1104
      %v1231 = vadd.f32 %v365, %v1107
      %v1232 = vadd.f32 %v366, %v1112
      %v1233 = vadd.f32 %v367, %v1115
      %v1234 = vadd.f32 %v368, %v1120
      %v1235 = vadd.f32 %v369, %v1123
      %v1236 = vadd.f32 %v370, %v1128
      %v1237 = vadd.f32 %v371, %v1131
      %v1238 = vadd.f32 %v372, %v1136
      %v1239 = vadd.f32 %v373, %v1139
      %v1240 = vadd.f32 %v374, %v1144
      %v1241 = vadd.f32 %v375, %v1147
      %v1242 = vadd.f32 %v376, %v1152
      %v1243 = vadd.f32 %v377, %v1155
      %v1244 = vadd.f32 %v378, %v1160
      %v1245 = vadd.f32 %v379, %v1163
      %v1246 = vadd.f32 %v380, %v1168
      %v1247 = vadd.f32 %v381, %v1171
      %v1248 = vadd.f32 %v382, %v1176
      %v1249 = vadd.f32 %v383, %v1179
      %v1250 = vadd.f32 %v384, %v1184
      %v1251 = vadd.f32 %v385, %v1187
      %v1252 = vadd.f32 %v386, %v1192
      %v1253 = vadd.f32 %v387, %v1195
      %v1254 = vadd.f32 %v388, %v1200
      %v1255 = vadd.f32 %v389, %v1203
      %v1256 = vadd.f32 %v390, %v1208
      %v1257 = vadd.f32 %v391, %v1211
      %v1258 = vadd.f32 %v392, %v1216
      %v1259 = vadd.f32 %v393, %v1219
      %v1260 = vadd.f32 %v394, %v1224
      %v1261 = vadd.f32 %v395, %v1227
      %1262 = vst [vmem:[#allocation2] sm:$0xff] %v1230
      %1263 = vst [vmem:[#allocation2 + $0x8] sm:$0xff] %v1231
      %1264 = vst [vmem:[#allocation2 + $0x10] sm:$0xff] %v1232
      %1265 = vst [vmem:[#allocation2 + $0x18] sm:$0xff] %v1233
      %1266 = vst [vmem:[#allocation2 + $0x20] sm:$0xff] %v1234
      %1267 = vst [vmem:[#allocation2 + $0x28] sm:$0xff] %v1235
      %1268 = vst [vmem:[#allocation2 + $0x30] sm:$0xff] %v1236
      %1269 = vst [vmem:[#allocation2 + $0x38] sm:$0xff] %v1237
      %1270 = vst [vmem:[#allocation2 + $0x40] sm:$0xff] %v1238
      %1271 = vst [vmem:[#allocation2 + $0x48] sm:$0xff] %v1239
      %1272 = vst [vmem:[#allocation2 + $0x50] sm:$0xff] %v1240
      %1273 = vst [vmem:[#allocation2 + $0x58] sm:$0xff] %v1241
      %1274 = vst [vmem:[#allocation2 + $0x60] sm:$0xff] %v1242
      %1275 = vst [vmem:[#allocation2 + $0x68] sm:$0xff] %v1243
      %1276 = vst [vmem:[#allocation2 + $0x70] sm:$0xff] %v1244
      %1277 = vst [vmem:[#allocation2 + $0x78] sm:$0xff] %v1245
      %1278 = vst [vmem:[#allocation2 + $0x80] sm:$0xff] %v1246
      %1279 = vst [vmem:[#allocation2 + $0x88] sm:$0xff] %v1247
      %1280 = vst [vmem:[#allocation2 + $0x90] sm:$0xff] %v1248
      %1281 = vst [vmem:[#allocation2 + $0x98] sm:$0xff] %v1249
      %1282 = vst [vmem:[#allocation2 + $0xa0] sm:$0xff] %v1250
      %1283 = vst [vmem:[#allocation2 + $0xa8] sm:$0xff] %v1251
      %1284 = vst [vmem:[#allocation2 + $0xb0] sm:$0xff] %v1252
      %1285 = vst [vmem:[#allocation2 + $0xb8] sm:$0xff] %v1253
      %1286 = vst [vmem:[#allocation2 + $0xc0] sm:$0xff] %v1254
      %1287 = vst [vmem:[#allocation2 + $0xc8] sm:$0xff] %v1255
      %1288 = vst [vmem:[#allocation2 + $0xd0] sm:$0xff] %v1256
      %1289 = vst [vmem:[#allocation2 + $0xd8] sm:$0xff] %v1257
      %1290 = vst [vmem:[#allocation2 + $0xe0] sm:$0xff] %v1258
      %1291 = vst [vmem:[#allocation2 + $0xe8] sm:$0xff] %v1259
      %1292 = vst [vmem:[#allocation2 + $0xf0] sm:$0xff] %v1260
      %1293 = vst [vmem:[#allocation2 + $0xf8] sm:$0xff] %v1261
      // Predicated region
      $region41: #{darknet53_forward.10} parent=35 // pred_check
        %p1294 = pneg %p328
      $region42: #{darknet53_forward.10} parent=35 // pred_check_branch
        %1296 = sbr.rel (%p1294) target = $region44
      $region43: #{darknet53_forward.10} parent=35 // pred_region
        %v1297 = vld [vmem:[#allocation2] sm:$0xff]
        %v1298 = vld [vmem:[#allocation2 + $0x8] sm:$0xff]
        %v1299 = vld [vmem:[#allocation2 + $0x10] sm:$0xff]
        %v1300 = vld [vmem:[#allocation2 + $0x18] sm:$0xff]
        %v1301 = vld [vmem:[#allocation2 + $0x20] sm:$0xff]
        %v1302 = vld [vmem:[#allocation2 + $0x28] sm:$0xff]
        %v1303 = vld [vmem:[#allocation2 + $0x30] sm:$0xff]
        %v1304 = vld [vmem:[#allocation2 + $0x38] sm:$0xff]
        %v1305 = vld [vmem:[#allocation2 + $0x40] sm:$0xff]
        %v1306 = vld [vmem:[#allocation2 + $0x48] sm:$0xff]
        %v1307 = vld [vmem:[#allocation2 + $0x50] sm:$0xff]
        %v1308 = vld [vmem:[#allocation2 + $0x58] sm:$0xff]
        %v1309 = vld [vmem:[#allocation2 + $0x60] sm:$0xff]
        %v1310 = vld [vmem:[#allocation2 + $0x68] sm:$0xff]
        %v1311 = vld [vmem:[#allocation2 + $0x70] sm:$0xff]
        %v1312 = vld [vmem:[#allocation2 + $0x78] sm:$0xff]
        %v1313 = vld [vmem:[#allocation2 + $0x80] sm:$0xff]
        %v1314 = vld [vmem:[#allocation2 + $0x88] sm:$0xff]
        %v1315 = vld [vmem:[#allocation2 + $0x90] sm:$0xff]
        %v1316 = vld [vmem:[#allocation2 + $0x98] sm:$0xff]
        %v1317 = vld [vmem:[#allocation2 + $0xa0] sm:$0xff]
        %v1318 = vld [vmem:[#allocation2 + $0xa8] sm:$0xff]
        %v1319 = vld [vmem:[#allocation2 + $0xb0] sm:$0xff]
        %v1320 = vld [vmem:[#allocation2 + $0xb8] sm:$0xff]
        %v1321 = vld [vmem:[#allocation2 + $0xc0] sm:$0xff]
        %v1322 = vld [vmem:[#allocation2 + $0xc8] sm:$0xff]
        %v1323 = vld [vmem:[#allocation2 + $0xd0] sm:$0xff]
        %v1324 = vld [vmem:[#allocation2 + $0xd8] sm:$0xff]
        %v1325 = vld [vmem:[#allocation2 + $0xe0] sm:$0xff]
        %v1326 = vld [vmem:[#allocation2 + $0xe8] sm:$0xff]
        %v1327 = vld [vmem:[#allocation2 + $0xf0] sm:$0xff]
        %v1328 = vld [vmem:[#allocation2 + $0xf8] sm:$0xff]
        %v1329 = vld [vmem:[%s308] sm:$0x1]
        %v1331 = vlaneseq
        %v1332 = vshrl.u32 %v1331, 7
        %v1333 = vsub.s32 0, %v1332
        %v1334 = vrot.slane %v1329, %v1333
        %v1336 = vadd.f32 %v1297, %v1334
        %v1337 = vadd.f32 %v1298, %v1334
        %v1338 = vadd.f32 %v1299, %v1334
        %v1339 = vadd.f32 %v1300, %v1334
        %v1340 = vadd.f32 %v1301, %v1334
        %v1341 = vadd.f32 %v1302, %v1334
        %v1342 = vadd.f32 %v1303, %v1334
        %v1343 = vadd.f32 %v1304, %v1334
        %v1344 = vadd.f32 %v1305, %v1334
        %v1345 = vadd.f32 %v1306, %v1334
        %v1346 = vadd.f32 %v1307, %v1334
        %v1347 = vadd.f32 %v1308, %v1334
        %v1348 = vadd.f32 %v1309, %v1334
        %v1349 = vadd.f32 %v1310, %v1334
        %v1350 = vadd.f32 %v1311, %v1334
        %v1351 = vadd.f32 %v1312, %v1334
        %v1352 = vadd.f32 %v1313, %v1334
        %v1353 = vadd.f32 %v1314, %v1334
        %v1354 = vadd.f32 %v1315, %v1334
        %v1355 = vadd.f32 %v1316, %v1334
        %v1356 = vadd.f32 %v1317, %v1334
        %v1357 = vadd.f32 %v1318, %v1334
        %v1358 = vadd.f32 %v1319, %v1334
        %v1359 = vadd.f32 %v1320, %v1334
        %v1360 = vadd.f32 %v1321, %v1334
        %v1361 = vadd.f32 %v1322, %v1334
        %v1362 = vadd.f32 %v1323, %v1334
        %v1363 = vadd.f32 %v1324, %v1334
        %v1364 = vadd.f32 %v1325, %v1334
        %v1365 = vadd.f32 %v1326, %v1334
        %v1366 = vadd.f32 %v1327, %v1334
        %v1367 = vadd.f32 %v1328, %v1334
        %vm1368 = vcmp.ge.f32.partialorder %v1336, 0.0
        %vm1369 = vcmp.ge.f32.partialorder %v1337, 0.0
        %vm1370 = vcmp.ge.f32.partialorder %v1338, 0.0
        %vm1371 = vcmp.ge.f32.partialorder %v1339, 0.0
        %vm1372 = vcmp.ge.f32.partialorder %v1340, 0.0
        %vm1373 = vcmp.ge.f32.partialorder %v1341, 0.0
        %vm1374 = vcmp.ge.f32.partialorder %v1342, 0.0
        %vm1375 = vcmp.ge.f32.partialorder %v1343, 0.0
        %vm1376 = vcmp.ge.f32.partialorder %v1344, 0.0
        %vm1377 = vcmp.ge.f32.partialorder %v1345, 0.0
        %vm1378 = vcmp.ge.f32.partialorder %v1346, 0.0
        %vm1379 = vcmp.ge.f32.partialorder %v1347, 0.0
        %vm1380 = vcmp.ge.f32.partialorder %v1348, 0.0
        %vm1381 = vcmp.ge.f32.partialorder %v1349, 0.0
        %vm1382 = vcmp.ge.f32.partialorder %v1350, 0.0
        %vm1383 = vcmp.ge.f32.partialorder %v1351, 0.0
        %vm1384 = vcmp.ge.f32.partialorder %v1352, 0.0
        %vm1385 = vcmp.ge.f32.partialorder %v1353, 0.0
        %vm1386 = vcmp.ge.f32.partialorder %v1354, 0.0
        %vm1387 = vcmp.ge.f32.partialorder %v1355, 0.0
        %vm1388 = vcmp.ge.f32.partialorder %v1356, 0.0
        %vm1389 = vcmp.ge.f32.partialorder %v1357, 0.0
        %vm1390 = vcmp.ge.f32.partialorder %v1358, 0.0
        %vm1391 = vcmp.ge.f32.partialorder %v1359, 0.0
        %vm1392 = vcmp.ge.f32.partialorder %v1360, 0.0
        %vm1393 = vcmp.ge.f32.partialorder %v1361, 0.0
        %vm1394 = vcmp.ge.f32.partialorder %v1362, 0.0
        %vm1395 = vcmp.ge.f32.partialorder %v1363, 0.0
        %vm1396 = vcmp.ge.f32.partialorder %v1364, 0.0
        %vm1397 = vcmp.ge.f32.partialorder %v1365, 0.0
        %vm1398 = vcmp.ge.f32.partialorder %v1366, 0.0
        %vm1399 = vcmp.ge.f32.partialorder %v1367, 0.0
        %v1400 = vmul.f32 %v1336, 0.1
        %v1401 = vmul.f32 %v1337, 0.1
        %v1402 = vmul.f32 %v1338, 0.1
        %v1403 = vmul.f32 %v1339, 0.1
        %v1404 = vmul.f32 %v1340, 0.1
        %v1405 = vmul.f32 %v1341, 0.1
        %v1406 = vmul.f32 %v1342, 0.1
        %v1407 = vmul.f32 %v1343, 0.1
        %v1408 = vmul.f32 %v1344, 0.1
        %v1409 = vmul.f32 %v1345, 0.1
        %v1410 = vmul.f32 %v1346, 0.1
        %v1411 = vmul.f32 %v1347, 0.1
        %v1412 = vmul.f32 %v1348, 0.1
        %v1413 = vmul.f32 %v1349, 0.1
        %v1414 = vmul.f32 %v1350, 0.1
        %v1415 = vmul.f32 %v1351, 0.1
        %v1416 = vmul.f32 %v1352, 0.1
        %v1417 = vmul.f32 %v1353, 0.1
        %v1418 = vmul.f32 %v1354, 0.1
        %v1419 = vmul.f32 %v1355, 0.1
        %v1420 = vmul.f32 %v1356, 0.1
        %v1421 = vmul.f32 %v1357, 0.1
        %v1422 = vmul.f32 %v1358, 0.1
        %v1423 = vmul.f32 %v1359, 0.1
        %v1424 = vmul.f32 %v1360, 0.1
        %v1425 = vmul.f32 %v1361, 0.1
        %v1426 = vmul.f32 %v1362, 0.1
        %v1427 = vmul.f32 %v1363, 0.1
        %v1428 = vmul.f32 %v1364, 0.1
        %v1429 = vmul.f32 %v1365, 0.1
        %v1430 = vmul.f32 %v1366, 0.1
        %v1431 = vmul.f32 %v1367, 0.1
        %v1432 = vsel %vm1368, %v1336, %v1400
        %v1433 = vsel %vm1369, %v1337, %v1401
        %v1434 = vsel %vm1370, %v1338, %v1402
        %v1435 = vsel %vm1371, %v1339, %v1403
        %v1436 = vsel %vm1372, %v1340, %v1404
        %v1437 = vsel %vm1373, %v1341, %v1405
        %v1438 = vsel %vm1374, %v1342, %v1406
        %v1439 = vsel %vm1375, %v1343, %v1407
        %v1440 = vsel %vm1376, %v1344, %v1408
        %v1441 = vsel %vm1377, %v1345, %v1409
        %v1442 = vsel %vm1378, %v1346, %v1410
        %v1443 = vsel %vm1379, %v1347, %v1411
        %v1444 = vsel %vm1380, %v1348, %v1412
        %v1445 = vsel %vm1381, %v1349, %v1413
        %v1446 = vsel %vm1382, %v1350, %v1414
        %v1447 = vsel %vm1383, %v1351, %v1415
        %v1448 = vsel %vm1384, %v1352, %v1416
        %v1449 = vsel %vm1385, %v1353, %v1417
        %v1450 = vsel %vm1386, %v1354, %v1418
        %v1451 = vsel %vm1387, %v1355, %v1419
        %v1452 = vsel %vm1388, %v1356, %v1420
        %v1453 = vsel %vm1389, %v1357, %v1421
        %v1454 = vsel %vm1390, %v1358, %v1422
        %v1455 = vsel %vm1391, %v1359, %v1423
        %v1456 = vsel %vm1392, %v1360, %v1424
        %v1457 = vsel %vm1393, %v1361, %v1425
        %v1458 = vsel %vm1394, %v1362, %v1426
        %v1459 = vsel %vm1395, %v1363, %v1427
        %v1460 = vsel %vm1396, %v1364, %v1428
        %v1461 = vsel %vm1397, %v1365, %v1429
        %v1462 = vsel %vm1398, %v1366, %v1430
        %v1463 = vsel %vm1399, %v1367, %v1431
        %v1464 = vld [vmem:[%s316] sm:$0xf]
        %v1465 = vld [vmem:[%s316 + $0x4] sm:$0xf]
        %v1466 = vld [vmem:[%s316 + $0x8] sm:$0xf]
        %v1467 = vld [vmem:[%s316 + $0xc] sm:$0xf]
        %v1468 = vld [vmem:[%s316 + $0x10] sm:$0xf]
        %v1469 = vld [vmem:[%s316 + $0x14] sm:$0xf]
        %v1470 = vld [vmem:[%s316 + $0x18] sm:$0xf]
        %v1471 = vld [vmem:[%s316 + $0x1c] sm:$0xf]
        %v1472 = vld [vmem:[%s316 + $0x20] sm:$0xf]
        %v1473 = vld [vmem:[%s316 + $0x24] sm:$0xf]
        %v1474 = vld [vmem:[%s316 + $0x28] sm:$0xf]
        %v1475 = vld [vmem:[%s316 + $0x2c] sm:$0xf]
        %v1476 = vld [vmem:[%s316 + $0x30] sm:$0xf]
        %v1477 = vld [vmem:[%s316 + $0x34] sm:$0xf]
        %v1478 = vld [vmem:[%s316 + $0x38] sm:$0xf]
        %v1479 = vld [vmem:[%s316 + $0x3c] sm:$0xf]
        %v1480 = vld [vmem:[%s316 + $0x40] sm:$0xf]
        %v1481 = vld [vmem:[%s316 + $0x44] sm:$0xf]
        %v1482 = vld [vmem:[%s316 + $0x48] sm:$0xf]
        %v1483 = vld [vmem:[%s316 + $0x4c] sm:$0xf]
        %v1484 = vld [vmem:[%s316 + $0x50] sm:$0xf]
        %v1485 = vld [vmem:[%s316 + $0x54] sm:$0xf]
        %v1486 = vld [vmem:[%s316 + $0x58] sm:$0xf]
        %v1487 = vld [vmem:[%s316 + $0x5c] sm:$0xf]
        %v1488 = vld [vmem:[%s316 + $0x60] sm:$0xf]
        %v1489 = vld [vmem:[%s316 + $0x64] sm:$0xf]
        %v1490 = vld [vmem:[%s316 + $0x68] sm:$0xf]
        %v1491 = vld [vmem:[%s316 + $0x6c] sm:$0xf]
        %v1492 = vld [vmem:[%s316 + $0x70] sm:$0xf]
        %v1493 = vld [vmem:[%s316 + $0x74] sm:$0xf]
        %v1494 = vld [vmem:[%s316 + $0x78] sm:$0xf]
        %v1495 = vld [vmem:[%s316 + $0x7c] sm:$0xf]
        %v1496 = vunpack.c.l.bf16 %v1464
        %v1497 = vunpack.c.l.bf16 %v1465
        %v1498 = vunpack.c.l.bf16 %v1466
        %v1499 = vunpack.c.l.bf16 %v1467
        %v1500 = vunpack.c.l.bf16 %v1468
        %v1501 = vunpack.c.l.bf16 %v1469
        %v1502 = vunpack.c.l.bf16 %v1470
        %v1503 = vunpack.c.l.bf16 %v1471
        %v1504 = vunpack.c.l.bf16 %v1472
        %v1505 = vunpack.c.l.bf16 %v1473
        %v1506 = vunpack.c.l.bf16 %v1474
        %v1507 = vunpack.c.l.bf16 %v1475
        %v1508 = vunpack.c.l.bf16 %v1476
        %v1509 = vunpack.c.l.bf16 %v1477
        %v1510 = vunpack.c.l.bf16 %v1478
        %v1511 = vunpack.c.l.bf16 %v1479
        %v1512 = vunpack.c.l.bf16 %v1480
        %v1513 = vunpack.c.l.bf16 %v1481
        %v1514 = vunpack.c.l.bf16 %v1482
        %v1515 = vunpack.c.l.bf16 %v1483
        %v1516 = vunpack.c.l.bf16 %v1484
        %v1517 = vunpack.c.l.bf16 %v1485
        %v1518 = vunpack.c.l.bf16 %v1486
        %v1519 = vunpack.c.l.bf16 %v1487
        %v1520 = vunpack.c.l.bf16 %v1488
        %v1521 = vunpack.c.l.bf16 %v1489
        %v1522 = vunpack.c.l.bf16 %v1490
        %v1523 = vunpack.c.l.bf16 %v1491
        %v1524 = vunpack.c.l.bf16 %v1492
        %v1525 = vunpack.c.l.bf16 %v1493
        %v1526 = vunpack.c.l.bf16 %v1494
        %v1527 = vunpack.c.l.bf16 %v1495
        %v1528 = vadd.f32 %v1432, %v1496
        %v1529 = vadd.f32 %v1433, %v1497
        %v1530 = vadd.f32 %v1434, %v1498
        %v1531 = vadd.f32 %v1435, %v1499
        %v1532 = vadd.f32 %v1436, %v1500
        %v1533 = vadd.f32 %v1437, %v1501
        %v1534 = vadd.f32 %v1438, %v1502
        %v1535 = vadd.f32 %v1439, %v1503
        %v1536 = vadd.f32 %v1440, %v1504
        %v1537 = vadd.f32 %v1441, %v1505
        %v1538 = vadd.f32 %v1442, %v1506
        %v1539 = vadd.f32 %v1443, %v1507
        %v1540 = vadd.f32 %v1444, %v1508
        %v1541 = vadd.f32 %v1445, %v1509
        %v1542 = vadd.f32 %v1446, %v1510
        %v1543 = vadd.f32 %v1447, %v1511
        %v1544 = vadd.f32 %v1448, %v1512
        %v1545 = vadd.f32 %v1449, %v1513
        %v1546 = vadd.f32 %v1450, %v1514
        %v1547 = vadd.f32 %v1451, %v1515
        %v1548 = vadd.f32 %v1452, %v1516
        %v1549 = vadd.f32 %v1453, %v1517
        %v1550 = vadd.f32 %v1454, %v1518
        %v1551 = vadd.f32 %v1455, %v1519
        %v1552 = vadd.f32 %v1456, %v1520
        %v1553 = vadd.f32 %v1457, %v1521
        %v1554 = vadd.f32 %v1458, %v1522
        %v1555 = vadd.f32 %v1459, %v1523
        %v1556 = vadd.f32 %v1460, %v1524
        %v1557 = vadd.f32 %v1461, %v1525
        %v1558 = vadd.f32 %v1462, %v1526
        %v1559 = vadd.f32 %v1463, %v1527
        %v1560 = vpack.c.bf16 %v1529, %v1528
        %v1561 = vpack.c.bf16 %v1531, %v1530
        %v1562 = vpack.c.bf16 %v1533, %v1532
        %v1563 = vpack.c.bf16 %v1535, %v1534
        %v1564 = vpack.c.bf16 %v1537, %v1536
        %v1565 = vpack.c.bf16 %v1539, %v1538
        %v1566 = vpack.c.bf16 %v1541, %v1540
        %v1567 = vpack.c.bf16 %v1543, %v1542
        %v1568 = vpack.c.bf16 %v1545, %v1544
        %v1569 = vpack.c.bf16 %v1547, %v1546
        %v1570 = vpack.c.bf16 %v1549, %v1548
        %v1571 = vpack.c.bf16 %v1551, %v1550
        %v1572 = vpack.c.bf16 %v1553, %v1552
        %v1573 = vpack.c.bf16 %v1555, %v1554
        %v1574 = vpack.c.bf16 %v1557, %v1556
        %v1575 = vpack.c.bf16 %v1559, %v1558
        %v1592 = vunpack.c.l.b16 %v1560
        %v1593 = vunpack.c.h.b16 %v1560
        %v1594 = vunpack.c.l.b16 %v1561
        %v1595 = vunpack.c.h.b16 %v1561
        %v1596 = vunpack.c.l.b16 %v1562
        %v1597 = vunpack.c.h.b16 %v1562
        %v1598 = vunpack.c.l.b16 %v1563
        %v1599 = vunpack.c.h.b16 %v1563
        %v1600 = vunpack.c.l.b16 %v1564
        %v1601 = vunpack.c.h.b16 %v1564
        %v1602 = vunpack.c.l.b16 %v1565
        %v1603 = vunpack.c.h.b16 %v1565
        %v1604 = vunpack.c.l.b16 %v1566
        %v1605 = vunpack.c.h.b16 %v1566
        %v1606 = vunpack.c.l.b16 %v1567
        %v1607 = vunpack.c.h.b16 %v1567
        %v1608 = vunpack.c.l.b16 %v1568
        %v1609 = vunpack.c.h.b16 %v1568
        %v1610 = vunpack.c.l.b16 %v1569
        %v1611 = vunpack.c.h.b16 %v1569
        %v1612 = vunpack.c.l.b16 %v1570
        %v1613 = vunpack.c.h.b16 %v1570
        %v1614 = vunpack.c.l.b16 %v1571
        %v1615 = vunpack.c.h.b16 %v1571
        %v1616 = vunpack.c.l.b16 %v1572
        %v1617 = vunpack.c.h.b16 %v1572
        %v1618 = vunpack.c.l.b16 %v1573
        %v1619 = vunpack.c.h.b16 %v1573
        %v1620 = vunpack.c.l.b16 %v1574
        %v1621 = vunpack.c.h.b16 %v1574
        %v1622 = vunpack.c.l.b16 %v1575
        %v1623 = vunpack.c.h.b16 %v1575
        %v1624 = vpack.c.b16 %v1592, %v1592
        %v1625 = vpack.c.b16 %v1593, %v1593
        %v1626 = vpack.c.b16 %v1594, %v1594
        %v1627 = vpack.c.b16 %v1595, %v1595
        %v1628 = vpack.c.b16 %v1596, %v1596
        %v1629 = vpack.c.b16 %v1597, %v1597
        %v1630 = vpack.c.b16 %v1598, %v1598
        %v1631 = vpack.c.b16 %v1599, %v1599
        %v1632 = vpack.c.b16 %v1600, %v1600
        %v1633 = vpack.c.b16 %v1601, %v1601
        %v1634 = vpack.c.b16 %v1602, %v1602
        %v1635 = vpack.c.b16 %v1603, %v1603
        %v1636 = vpack.c.b16 %v1604, %v1604
        %v1637 = vpack.c.b16 %v1605, %v1605
        %v1638 = vpack.c.b16 %v1606, %v1606
        %v1639 = vpack.c.b16 %v1607, %v1607
        %v1640 = vpack.c.b16 %v1608, %v1608
        %v1641 = vpack.c.b16 %v1609, %v1609
        %v1642 = vpack.c.b16 %v1610, %v1610
        %v1643 = vpack.c.b16 %v1611, %v1611
        %v1644 = vpack.c.b16 %v1612, %v1612
        %v1645 = vpack.c.b16 %v1613, %v1613
        %v1646 = vpack.c.b16 %v1614, %v1614
        %v1647 = vpack.c.b16 %v1615, %v1615
        %v1648 = vpack.c.b16 %v1616, %v1616
        %v1649 = vpack.c.b16 %v1617, %v1617
        %v1650 = vpack.c.b16 %v1618, %v1618
        %v1651 = vpack.c.b16 %v1619, %v1619
        %v1652 = vpack.c.b16 %v1620, %v1620
        %v1653 = vpack.c.b16 %v1621, %v1621
        %v1654 = vpack.c.b16 %v1622, %v1622
        %v1655 = vpack.c.b16 %v1623, %v1623
        %1688 = vst [vmem:[%s325] sm:$0xf] %v1624
        %1689 = vst [vmem:[%s325 + $0x4] sm:$0xf] %v1625
        %1690 = vst [vmem:[%s325 + $0x8] sm:$0xf] %v1626
        %1691 = vst [vmem:[%s325 + $0xc] sm:$0xf] %v1627
        %1692 = vst [vmem:[%s325 + $0x10] sm:$0xf] %v1628
        %1693 = vst [vmem:[%s325 + $0x14] sm:$0xf] %v1629
        %1694 = vst [vmem:[%s325 + $0x18] sm:$0xf] %v1630
        %1695 = vst [vmem:[%s325 + $0x1c] sm:$0xf] %v1631
        %1696 = vst [vmem:[%s325 + $0x20] sm:$0xf] %v1632
        %1697 = vst [vmem:[%s325 + $0x24] sm:$0xf] %v1633
        %1698 = vst [vmem:[%s325 + $0x28] sm:$0xf] %v1634
        %1699 = vst [vmem:[%s325 + $0x2c] sm:$0xf] %v1635
        %1700 = vst [vmem:[%s325 + $0x30] sm:$0xf] %v1636
        %1701 = vst [vmem:[%s325 + $0x34] sm:$0xf] %v1637
        %1702 = vst [vmem:[%s325 + $0x38] sm:$0xf] %v1638
        %1703 = vst [vmem:[%s325 + $0x3c] sm:$0xf] %v1639
        %1704 = vst [vmem:[%s325 + $0x40] sm:$0xf] %v1640
        %1705 = vst [vmem:[%s325 + $0x44] sm:$0xf] %v1641
        %1706 = vst [vmem:[%s325 + $0x48] sm:$0xf] %v1642
        %1707 = vst [vmem:[%s325 + $0x4c] sm:$0xf] %v1643
        %1708 = vst [vmem:[%s325 + $0x50] sm:$0xf] %v1644
        %1709 = vst [vmem:[%s325 + $0x54] sm:$0xf] %v1645
        %1710 = vst [vmem:[%s325 + $0x58] sm:$0xf] %v1646
        %1711 = vst [vmem:[%s325 + $0x5c] sm:$0xf] %v1647
        %1712 = vst [vmem:[%s325 + $0x60] sm:$0xf] %v1648
        %1713 = vst [vmem:[%s325 + $0x64] sm:$0xf] %v1649
        %1714 = vst [vmem:[%s325 + $0x68] sm:$0xf] %v1650
        %1715 = vst [vmem:[%s325 + $0x6c] sm:$0xf] %v1651
        %1716 = vst [vmem:[%s325 + $0x70] sm:$0xf] %v1652
        %1717 = vst [vmem:[%s325 + $0x74] sm:$0xf] %v1653
        %1718 = vst [vmem:[%s325 + $0x78] sm:$0xf] %v1654
        %1719 = vst [vmem:[%s325 + $0x7c] sm:$0xf] %v1655
      $region44: #{darknet53_forward.10} parent=35 // pred_fallthru
        _
      %s1720 = smul.u32 32, %s20
      %p1721 = scmp.lt.s32.totalorder %s1720, 63
      %s1722 = scalar_select %p1721, %s1720, 63
      %p1723 = scmp.lt.s32.totalorder %s21, 0
      %s1724 = scalar_select %p1723, %s21, 0
      %s1725 = sadd.s32 %s1724, %s1722
      %s1726 = smul.addr %s1725, 4
      %s1727 = scalar_lea.vmem %s4, %s1726
      // Predicated region
      $region45: #{darknet53_forward.10} parent=35 // pred_check
        %p1728 = pneg %p164
      $region46: #{darknet53_forward.10} parent=35 // pred_check_branch
        %1730 = sbr.rel (%p1728) target = $region48
      $region47: #{darknet53_forward.10} parent=35 // pred_region
        %s1731 = smul.u32 32, %s20
      $region48: #{darknet53_forward.10} parent=35 // pred_fallthru
        _
    $region36: #{darknet53_forward.10} parent=5 // pred_fallthru
      _
    %p1732 = scmp.le.s32.totalorder 2, %s10
    // Predicated region
    $region49: #{darknet53_forward.10} parent=5 // pred_check
      %p1733 = pneg %p1732
    $region50: #{darknet53_forward.10} parent=5 // pred_check_branch
      %1735 = sbr.rel (%p1733) target = $region52
    $region51: #{darknet53_forward.10} parent=5 // pred_region
      %s1736 = ssub.s32 %s10, 2
      // Predicated region
      $region53: #{darknet53_forward.10} parent=51 // pred_check
        %p1737 = pneg %p170
      $region54: #{darknet53_forward.10} parent=51 // pred_check_branch
        %1739 = sbr.rel (%p1737) target = $region56
      $region55: #{darknet53_forward.10} parent=51 // pred_region
        %s1740 = smul.u32 32, %s23
        %p1741 = scmp.lt.s32.totalorder %s1740, 63
        %s1742 = scalar_select %p1741, %s1740, 63
        %p1743 = scmp.lt.s32.totalorder %s24, 0
        %s1744 = scalar_select %p1743, %s24, 0
        %s1745 = sadd.s32 %s1744, %s1742
        %s1746 = smul.addr %s1745, 4
        %s1747 = scalar_lea.vmem %s4, %s1746
      $region56: #{darknet53_forward.10} parent=51 // pred_fallthru
        _
    $region52: #{darknet53_forward.10} parent=5 // pred_fallthru
      _
  $region6: #{darknet53_forward.10} parent=0 // loop_footer
    %s14 = sadd.s32 1, %s10
  $region7: #{darknet53_forward.10} parent=0 // loop_footer_branch
    %9 = sbr.rel target = $region3
  $region8: #{darknet53_forward.10} parent=0 // loop_exit
    _

// kernel: darknet53_forward.11
$region0: #{darknet53_forward.11}
  #allocation0 [shape = 'u32[]', space=smem, size = 0x4, offset = 0x4, fixed_abs, tag = 'smem constant byte address 0x4 - core index']
  #allocation1 [shape = 'u32[144,128]{1,0:T(1,128)}', space=vmem, size = 0x12000, scoped, tag = 'internal scratch']
  #allocation2 [shape = 'f32[128,128]{1,0:T(8,128)}', space=vmem, size = 0x10000, scoped, tag = 'scratch operand']
  %s0 = inlined_call_operand.vmem [shape: bf16[128,640], index: 0, kind: input, shape index: {}]
  %s1 = inlined_call_operand.vmem [shape: bf16[640,128], index: 1, kind: input, shape index: {}]
  %s2 = inlined_call_operand.vmem [shape: f32[1,128], index: 2, kind: input, shape index: {}]
  %s3 = inlined_call_operand.vmem [shape: bf16[128,128], index: 3, kind: output, shape index: {}]
  %s4 = sld [smem:[#allocation0]]
  $region94: #{darknet53_forward.11} parent=0
    _
  %s6 = ssub.s32 1, %s4
  %s7 = scalar_select 0, %s6, %s4
  $region1: #{darknet53_forward.11} parent=0
    #allocation3 [shape = 'u8[65536]{0}', space=vmem, size = 0x10000, scoped, tag = 'input window, operand 0']
    loop: start=0, step=1, limit=7
    $region2: #{darknet53_forward.11} parent=1 // loop_pre_header
      _
    $region3: #{darknet53_forward.11} parent=1 // loop_header
      %s9 = sphi 0, %s13
      %p10 = scmp.ge.s32.totalorder %s9, 7
      %s16 = sphi 0, %s35
      %s17 = sphi 0, %s31
      %s18 = sphi 0, %s27
      %s19 = sphi 0, %s16
      %s20 = sphi 0, %s17
      %s21 = sphi 0, %s18
      %s22 = sphi 0, %s19
      %s23 = sphi 0, %s20
      %s24 = sphi 0, %s21
      %s40 = sphi 0, %s42
      %s43 = sphi 0, %s40
      %s44 = sphi 0, %s43
      %s60 = sphi 0, %s44
      %s68 = sphi 0, %s70
      %s71 = sphi 0, %s68
      %s72 = sphi 0, %s71
      %s88 = sphi 0, %s72
      %s94 = sphi 0, %s96
      %s97 = sphi 0, %s94
      %s98 = sphi 0, %s97
      %s114 = sphi 0, %s98
      %s122 = sphi 0, %s124
      %s125 = sphi 0, %s122
      %s126 = sphi 0, %s125
      %s142 = sphi 0, %s126
    $region4: #{darknet53_forward.11} parent=1 // loop_header_branch
      %12 = sbr.rel (%p10) target = $region8
    $region5: #{darknet53_forward.11} parent=1 // loop_body
      %s14 = ssub.s32 %s9, 1
      %s15 = ssub.s32 %s9, 2
      %s25 = sadd.s32 1, %s18
      %p26 = scmp.ge.s32.totalorder %s25, 5
      %s27 = scalar_select %p26, 0, %s25
      %s28 = sadd.s32 1, %s17
      %s29 = scalar_select %p26, %s28, %s17
      %p30 = scmp.ge.s32.totalorder %s29, 1
      %s31 = scalar_select %p30, 0, %s29
      %s32 = sadd.s32 1, %s16
      %s33 = scalar_select %p30, %s32, %s16
      %p34 = scmp.ge.s32.totalorder %s33, 1
      %s35 = scalar_select %p34, 0, %s33
      %s36 = ssub.s32 %s16, %s35
      %s37 = ssub.s32 %s18, %s27
      %s38 = sor.u32 %s36, %s37
      %p39 = scmp.eq.s32.totalorder %s38, 0
      %s41 = sadd.s32 %s40, 1
      %s42 = scalar_select %p39, %s40, %s41
      %p45 = pneg %p39
      %p46 = scmp.eq.s32.totalorder %s9, 4
      %p47 = por %p45, %p46
      %p48 = scmp.ne.s32.totalorder %s40, %s43
      %p49 = scmp.eq.s32.totalorder %s9, 0
      %p50 = por %p48, %p49
      %p51 = scmp.ne.s32.totalorder %s40, %s43
      %p52 = scmp.eq.s32.totalorder %s14, 4
      %p53 = por %p51, %p52
      %p54 = scmp.ne.s32.totalorder %s43, %s44
      %p55 = scmp.eq.s32.totalorder %s14, 0
      %p56 = por %p54, %p55
      %p57 = scmp.ne.s32.totalorder %s43, %s44
      %p58 = scmp.eq.s32.totalorder %s15, 4
      %p59 = por %p57, %p58
      %p61 = scmp.ne.s32.totalorder %s44, %s60
      %p62 = scmp.eq.s32.totalorder %s15, 0
      %p63 = por %p61, %p62
      %s64 = ssub.s32 %s18, %s27
      %s65 = ssub.s32 %s17, %s31
      %s66 = sor.u32 %s64, %s65
      %p67 = scmp.eq.s32.totalorder %s66, 0
      %s69 = sadd.s32 %s68, 1
      %s70 = scalar_select %p67, %s68, %s69
      %p73 = pneg %p67
      %p74 = scmp.eq.s32.totalorder %s9, 4
      %p75 = por %p73, %p74
      %p76 = scmp.ne.s32.totalorder %s68, %s71
      %p77 = scmp.eq.s32.totalorder %s9, 0
      %p78 = por %p76, %p77
      %p79 = scmp.ne.s32.totalorder %s68, %s71
      %p80 = scmp.eq.s32.totalorder %s14, 4
      %p81 = por %p79, %p80
      %p82 = scmp.ne.s32.totalorder %s71, %s72
      %p83 = scmp.eq.s32.totalorder %s14, 0
      %p84 = por %p82, %p83
      %p85 = scmp.ne.s32.totalorder %s71, %s72
      %p86 = scmp.eq.s32.totalorder %s15, 4
      %p87 = por %p85, %p86
      %p89 = scmp.ne.s32.totalorder %s72, %s88
      %p90 = scmp.eq.s32.totalorder %s15, 0
      %p91 = por %p89, %p90
      %s92 = ssub.s32 %s17, %s31
      %p93 = scmp.eq.s32.totalorder %s92, 0
      %s95 = sadd.s32 %s94, 1
      %s96 = scalar_select %p93, %s94, %s95
      %p99 = pneg %p93
      %p100 = scmp.eq.s32.totalorder %s9, 4
      %p101 = por %p99, %p100
      %p102 = scmp.ne.s32.totalorder %s94, %s97
      %p103 = scmp.eq.s32.totalorder %s9, 0
      %p104 = por %p102, %p103
      %p105 = scmp.ne.s32.totalorder %s94, %s97
      %p106 = scmp.eq.s32.totalorder %s14, 4
      %p107 = por %p105, %p106
      %p108 = scmp.ne.s32.totalorder %s97, %s98
      %p109 = scmp.eq.s32.totalorder %s14, 0
      %p110 = por %p108, %p109
      %p111 = scmp.ne.s32.totalorder %s97, %s98
      %p112 = scmp.eq.s32.totalorder %s15, 4
      %p113 = por %p111, %p112
      %p115 = scmp.ne.s32.totalorder %s98, %s114
      %p116 = scmp.eq.s32.totalorder %s15, 0
      %p117 = por %p115, %p116
      %s118 = ssub.s32 %s16, %s35
      %s119 = ssub.s32 %s17, %s31
      %s120 = sor.u32 %s118, %s119
      %p121 = scmp.eq.s32.totalorder %s120, 0
      %s123 = sadd.s32 %s122, 1
      %s124 = scalar_select %p121, %s122, %s123
      %p127 = pneg %p121
      %p128 = scmp.eq.s32.totalorder %s9, 4
      %p129 = por %p127, %p128
      %p130 = scmp.ne.s32.totalorder %s122, %s125
      %p131 = scmp.eq.s32.totalorder %s9, 0
      %p132 = por %p130, %p131
      %p133 = scmp.ne.s32.totalorder %s122, %s125
      %p134 = scmp.eq.s32.totalorder %s14, 4
      %p135 = por %p133, %p134
      %p136 = scmp.ne.s32.totalorder %s125, %s126
      %p137 = scmp.eq.s32.totalorder %s14, 0
      %p138 = por %p136, %p137
      %p139 = scmp.ne.s32.totalorder %s125, %s126
      %p140 = scmp.eq.s32.totalorder %s15, 4
      %p141 = por %p139, %p140
      %p143 = scmp.ne.s32.totalorder %s126, %s142
      %p144 = scmp.eq.s32.totalorder %s15, 0
      %p145 = por %p143, %p144
      %p146 = scmp.le.s32.totalorder 1, %s9
      %p147 = scmp.lt.s32.totalorder %s9, 6
      %p148 = pnand %p146, %p147
      %p149 = pneg %p148
      // Predicated region
      $region9: #{darknet53_forward.11} parent=5 // pred_check
        _
      $region10: #{darknet53_forward.11} parent=5 // pred_check_branch
        %151 = sbr.rel (%p148) target = $region12
      $region11: #{darknet53_forward.11} parent=5 // pred_region
        %s152 = ssub.s32 %s9, 1
        // Predicated region
        $region13: #{darknet53_forward.11} parent=11 // pred_check
          %p153 = pneg %p110
        $region14: #{darknet53_forward.11} parent=11 // pred_check_branch
          %155 = sbr.rel (%p153) target = $region16
        $region15: #{darknet53_forward.11} parent=11 // pred_region
          %p156 = scmp.lt.s32.totalorder %s20, 0
          %s157 = scalar_select %p156, %s20, 0
          %s158 = scalar_lea.vmem %s2, %s157
        $region16: #{darknet53_forward.11} parent=11 // pred_fallthru
          _
      $region12: #{darknet53_forward.11} parent=5 // pred_fallthru
        _
      %p159 = scmp.lt.s32.totalorder %s9, 5
      // Predicated region
      $region17: #{darknet53_forward.11} parent=5 // pred_check
        %p160 = pneg %p159
      $region18: #{darknet53_forward.11} parent=5 // pred_check_branch
        %162 = sbr.rel (%p160) target = $region20
      $region19: #{darknet53_forward.11} parent=5 // pred_region
        // Predicated region
        $region21: #{darknet53_forward.11} parent=19 // pred_check
          %p163 = pneg %p50
        $region22: #{darknet53_forward.11} parent=19 // pred_check_branch
          %165 = sbr.rel (%p163) target = $region24
        $region23: #{darknet53_forward.11} parent=19 // pred_region
          %s166 = sand.u32 %s40, 1
          %s167 = sand.u32 %s40, 1
          %s168 = smul.addr %s167, 64
          %s169 = scalar_lea.vmem [#allocation3], %s168
          %s170 = smul.u32 16, %s16
          %s171 = smul.addr %s170, 5
          %s172 = sadd.s32 %s18, %s171
          %s173 = smul.addr %s172, 4
          %s174 = scalar_lea.vmem %s0, %s173
          // Predicated region
          $region25: #{darknet53_forward.11} parent=23 // pred_check
            _
          $region26: #{darknet53_forward.11} parent=23 // pred_check_branch
            %176 = sbr.rel (0) target = $region28
          $region27: #{darknet53_forward.11} parent=23 // pred_region
            // Predicated region
            $region29: #{darknet53_forward.11} parent=27 // pred_check
              _
            $region30: #{darknet53_forward.11} parent=27 // pred_check_branch
              %178 = sbr.rel target = $region32
            $region31: #{darknet53_forward.11} parent=27 // pred_region
              // Predicated region
              $region44: #{darknet53_forward.11} parent=31 // pred_check
                _
              $region45: #{darknet53_forward.11} parent=31 // pred_check_branch
                %224 = sbr.rel (0) target = $region47
              $region46: #{darknet53_forward.11} parent=31 // pred_region
                loop: start=0, step=1, limit=1
                $region48: #{darknet53_forward.11} parent=46 // loop_pre_header
                  _
                $region49: #{darknet53_forward.11} parent=46 // loop_header
                  %s226 = sphi 0, %s230
                  %p227 = scmp.ge.s32.totalorder %s226, 1
                  %s231 = sphi %s174, %s174
                  %s232 = sphi %s169, %s169
                $region50: #{darknet53_forward.11} parent=46 // loop_header_branch
                  %229 = sbr.rel (%p227) target = $region54
                $region51: #{darknet53_forward.11} parent=46 // loop_body
                  _
                $region52: #{darknet53_forward.11} parent=46 // loop_footer
                  %s230 = sadd.s32 1, %s226
                $region53: #{darknet53_forward.11} parent=46 // loop_footer_branch
                  %225 = sbr.rel target = $region49
                $region54: #{darknet53_forward.11} parent=46 // loop_exit
                  _
                %s234 = ssub.s32 16, 1
                loop: start=0, step=1, limit=1
                $region55: #{darknet53_forward.11} parent=46 // loop_pre_header
                  _
                $region56: #{darknet53_forward.11} parent=46 // loop_header
                  %s236 = sphi 0, %s240
                  %p237 = scmp.ge.s32.totalorder %s236, 1
                  %s241 = sphi %s174, %s174
                  %s242 = sphi %s169, %s169
                $region57: #{darknet53_forward.11} parent=46 // loop_header_branch
                  %239 = sbr.rel (%p237) target = $region61
                $region58: #{darknet53_forward.11} parent=46 // loop_body
                  %v243 = vld [vmem:[%s241] sm:%s234]
                  %244 = vst [vmem:[%s242] sm:%s234] %v243
                  %v245 = vld [vmem:[%s241 + $0x14] sm:%s234]
                  %246 = vst [vmem:[%s242 + $0x4] sm:%s234] %v245
                  %v247 = vld [vmem:[%s241 + $0x28] sm:%s234]
                  %248 = vst [vmem:[%s242 + $0x8] sm:%s234] %v247
                  %v249 = vld [vmem:[%s241 + $0x3c] sm:%s234]
                  %250 = vst [vmem:[%s242 + $0xc] sm:%s234] %v249
                  %v251 = vld [vmem:[%s241 + $0x50] sm:%s234]
                  %252 = vst [vmem:[%s242 + $0x10] sm:%s234] %v251
                  %v253 = vld [vmem:[%s241 + $0x64] sm:%s234]
                  %254 = vst [vmem:[%s242 + $0x14] sm:%s234] %v253
                  %v255 = vld [vmem:[%s241 + $0x78] sm:%s234]
                  %256 = vst [vmem:[%s242 + $0x18] sm:%s234] %v255
                  %v257 = vld [vmem:[%s241 + $0x8c] sm:%s234]
                  %258 = vst [vmem:[%s242 + $0x1c] sm:%s234] %v257
                  %v259 = vld [vmem:[%s241 + $0xa0] sm:%s234]
                  %260 = vst [vmem:[%s242 + $0x20] sm:%s234] %v259
                  %v261 = vld [vmem:[%s241 + $0xb4] sm:%s234]
                  %262 = vst [vmem:[%s242 + $0x24] sm:%s234] %v261
                  %v263 = vld [vmem:[%s241 + $0xc8] sm:%s234]
                  %264 = vst [vmem:[%s242 + $0x28] sm:%s234] %v263
                  %v265 = vld [vmem:[%s241 + $0xdc] sm:%s234]
                  %266 = vst [vmem:[%s242 + $0x2c] sm:%s234] %v265
                  %v267 = vld [vmem:[%s241 + $0xf0] sm:%s234]
                  %268 = vst [vmem:[%s242 + $0x30] sm:%s234] %v267
                  %v269 = vld [vmem:[%s241 + $0x104] sm:%s234]
                  %270 = vst [vmem:[%s242 + $0x34] sm:%s234] %v269
                  %v271 = vld [vmem:[%s241 + $0x118] sm:%s234]
                  %272 = vst [vmem:[%s242 + $0x38] sm:%s234] %v271
                  %v273 = vld [vmem:[%s241 + $0x12c] sm:%s234]
                  %274 = vst [vmem:[%s242 + $0x3c] sm:%s234] %v273
                $region59: #{darknet53_forward.11} parent=46 // loop_footer
                  %s240 = sadd.s32 1, %s236
                $region60: #{darknet53_forward.11} parent=46 // loop_footer_branch
                  %235 = sbr.rel target = $region56
                $region61: #{darknet53_forward.11} parent=46 // loop_exit
                  _
              $region47: #{darknet53_forward.11} parent=31 // pred_fallthru
                _
            $region32: #{darknet53_forward.11} parent=27 // pred_fallthru
              _
            // Predicated region
            $region33: #{darknet53_forward.11} parent=27 // pred_check
              _
            $region34: #{darknet53_forward.11} parent=27 // pred_check_branch
              %180 = sbr.rel (0) target = $region36
            $region35: #{darknet53_forward.11} parent=27 // pred_region
              %s182 = ssub.s32 16, 1
              loop: start=0, step=1, limit=1
              $region37: #{darknet53_forward.11} parent=35 // loop_pre_header
                _
              $region38: #{darknet53_forward.11} parent=35 // loop_header
                %s184 = sphi 0, %s188
                %p185 = scmp.ge.s32.totalorder %s184, 1
                %s189 = sphi %s174, %s174
                %s190 = sphi %s169, %s169
              $region39: #{darknet53_forward.11} parent=35 // loop_header_branch
                %187 = sbr.rel (%p185) target = $region43
              $region40: #{darknet53_forward.11} parent=35 // loop_body
                %v191 = vld [vmem:[%s189] sm:%s182]
                %192 = vst [vmem:[%s190] sm:%s182] %v191
                %v193 = vld [vmem:[%s189 + $0x14] sm:%s182]
                %194 = vst [vmem:[%s190 + $0x4] sm:%s182] %v193
                %v195 = vld [vmem:[%s189 + $0x28] sm:%s182]
                %196 = vst [vmem:[%s190 + $0x8] sm:%s182] %v195
                %v197 = vld [vmem:[%s189 + $0x3c] sm:%s182]
                %198 = vst [vmem:[%s190 + $0xc] sm:%s182] %v197
                %v199 = vld [vmem:[%s189 + $0x50] sm:%s182]
                %200 = vst [vmem:[%s190 + $0x10] sm:%s182] %v199
                %v201 = vld [vmem:[%s189 + $0x64] sm:%s182]
                %202 = vst [vmem:[%s190 + $0x14] sm:%s182] %v201
                %v203 = vld [vmem:[%s189 + $0x78] sm:%s182]
                %204 = vst [vmem:[%s190 + $0x18] sm:%s182] %v203
                %v205 = vld [vmem:[%s189 + $0x8c] sm:%s182]
                %206 = vst [vmem:[%s190 + $0x1c] sm:%s182] %v205
                %v207 = vld [vmem:[%s189 + $0xa0] sm:%s182]
                %208 = vst [vmem:[%s190 + $0x20] sm:%s182] %v207
                %v209 = vld [vmem:[%s189 + $0xb4] sm:%s182]
                %210 = vst [vmem:[%s190 + $0x24] sm:%s182] %v209
                %v211 = vld [vmem:[%s189 + $0xc8] sm:%s182]
                %212 = vst [vmem:[%s190 + $0x28] sm:%s182] %v211
                %v213 = vld [vmem:[%s189 + $0xdc] sm:%s182]
                %214 = vst [vmem:[%s190 + $0x2c] sm:%s182] %v213
                %v215 = vld [vmem:[%s189 + $0xf0] sm:%s182]
                %216 = vst [vmem:[%s190 + $0x30] sm:%s182] %v215
                %v217 = vld [vmem:[%s189 + $0x104] sm:%s182]
                %218 = vst [vmem:[%s190 + $0x34] sm:%s182] %v217
                %v219 = vld [vmem:[%s189 + $0x118] sm:%s182]
                %220 = vst [vmem:[%s190 + $0x38] sm:%s182] %v219
                %v221 = vld [vmem:[%s189 + $0x12c] sm:%s182]
                %222 = vst [vmem:[%s190 + $0x3c] sm:%s182] %v221
              $region41: #{darknet53_forward.11} parent=35 // loop_footer
                %s188 = sadd.s32 1, %s184
              $region42: #{darknet53_forward.11} parent=35 // loop_footer_branch
                %183 = sbr.rel target = $region38
              $region43: #{darknet53_forward.11} parent=35 // loop_exit
                _
            $region36: #{darknet53_forward.11} parent=27 // pred_fallthru
              _
          $region28: #{darknet53_forward.11} parent=23 // pred_fallthru
            _
          %275 = vnop
        $region24: #{darknet53_forward.11} parent=19 // pred_fallthru
          _
        // Predicated region
        $region62: #{darknet53_forward.11} parent=19 // pred_check
          %p276 = pneg %p78
        $region63: #{darknet53_forward.11} parent=19 // pred_check_branch
          %278 = sbr.rel (%p276) target = $region65
        $region64: #{darknet53_forward.11} parent=19 // pred_region
          %s279 = smul.u32 16, %s18
          %p280 = scmp.lt.s32.totalorder %s279, 79
          %s281 = scalar_select %p280, %s279, 79
          %p282 = scmp.lt.s32.totalorder %s17, 0
          %s283 = scalar_select %p282, %s17, 0
          %s284 = sadd.s32 %s283, %s281
          %s285 = smul.addr %s284, 4
          %s286 = scalar_lea.vmem %s1, %s285
          %s287 = smul.u32 16, %s18
        $region65: #{darknet53_forward.11} parent=19 // pred_fallthru
          _
      $region20: #{darknet53_forward.11} parent=5 // pred_fallthru
        _
      %p288 = scmp.le.s32.totalorder 1, %s9
      %p289 = scmp.lt.s32.totalorder %s9, 6
      %p290 = pnand %p288, %p289
      %p291 = pneg %p290
      // Predicated region
      $region66: #{darknet53_forward.11} parent=5 // pred_check
        _
      $region67: #{darknet53_forward.11} parent=5 // pred_check_branch
        %293 = sbr.rel (%p290) target = $region69
      $region68: #{darknet53_forward.11} parent=5 // pred_region
        %s294 = ssub.s32 %s9, 1
        %s295 = sand.u32 %s43, 1
        %s296 = sand.u32 %s43, 1
        %s297 = smul.addr %s296, 64
        %s298 = scalar_lea.vmem [#allocation3], %s297
        // Predicated region
        $region70: #{darknet53_forward.11} parent=68 // pred_check
          %p299 = pneg %p56
        $region71: #{darknet53_forward.11} parent=68 // pred_check_branch
          %301 = sbr.rel (%p299) target = $region73
        $region72: #{darknet53_forward.11} parent=68 // pred_region
          _
        $region73: #{darknet53_forward.11} parent=68 // pred_fallthru
          _
        %s302 = sand.u32 %s43, 1
        %s303 = sand.u32 %s43, 1
        %s304 = smul.addr %s303, 64
        %s305 = scalar_lea.vmem [#allocation3], %s304
        %p306 = pneg %p56
        %p307 = pneg %p53
        %s308 = smul.u32 16, %s21
        %p309 = scmp.lt.s32.totalorder %s308, 79
        %s310 = scalar_select %p309, %s308, 79
        %p311 = scmp.lt.s32.totalorder %s20, 0
        %s312 = scalar_select %p311, %s20, 0
        %s313 = sadd.s32 %s312, %s310
        %s314 = smul.addr %s313, 4
        %s315 = scalar_lea.vmem %s1, %s314
        %p316 = pneg %p84
        %p317 = pneg %p81
        %p318 = scmp.lt.s32.totalorder %s20, 0
        %s319 = scalar_select %p318, %s20, 0
        %s320 = scalar_lea.vmem %s2, %s319
        %p321 = pneg %p110
        %p322 = pneg %p107
        %p323 = pneg %p138
        %p324 = pneg %p135
        %s325 = smul.u32 16, %s19
        %p326 = scmp.lt.s32.totalorder %s325, 15
        %s327 = scalar_select %p326, %s325, 15
        %p328 = scmp.lt.s32.totalorder %s20, 0
        %s329 = scalar_select %p328, %s20, 0
        %s330 = sadd.s32 %s329, %s327
        %s331 = smul.addr %s330, 4
        %s332 = scalar_lea.vmem %s3, %s331
        %s333 = smul.u32 16, %s19
        %s334 = smul.u32 16, %s21
        %p335 = scmp.lt.s32.totalorder %s334, 79
        %s336 = scalar_select %p335, %s334, 79
        %p337 = scmp.lt.s32.totalorder %s20, 0
        %s338 = scalar_select %p337, %s20, 0
        %s339 = sadd.s32 %s338, %s336
        %s340 = smul.addr %s339, 4
        %s341 = scalar_lea.vmem %s1, %s340
        %s342 = smul.u32 16, %s21
        %p343 = scmp.lt.s32.totalorder %s20, 0
        %s344 = scalar_select %p343, %s20, 0
        %s345 = scalar_lea.vmem %s2, %s344
        %s346 = smul.u32 16, %s19
        %p347 = scmp.lt.s32.totalorder %s346, 15
        %s348 = scalar_select %p347, %s346, 15
        %p349 = scmp.lt.s32.totalorder %s20, 0
        %s350 = scalar_select %p349, %s20, 0
        %s351 = sadd.s32 %s350, %s348
        %s352 = smul.addr %s351, 4
        %s353 = scalar_lea.vmem %s3, %s352
        %s354 = smul.u32 16, %s19
        %p356 = scmp.eq.s32.totalorder %s21, 0
        // Predicated region
        $region74: #{darknet53_forward.11} parent=68 // pred_check
          %p357 = pneg %p356
        $region75: #{darknet53_forward.11} parent=68 // pred_check_branch
          %359 = sbr.rel (%p357) target = $region77
        $region76: #{darknet53_forward.11} parent=68 // pred_region
          %360 = vst [vmem:[#allocation2] sm:$0xff] 0.0
          %361 = vst [vmem:[#allocation2 + $0x8] sm:$0xff] 0.0
          %362 = vst [vmem:[#allocation2 + $0x10] sm:$0xff] 0.0
          %363 = vst [vmem:[#allocation2 + $0x18] sm:$0xff] 0.0
          %364 = vst [vmem:[#allocation2 + $0x20] sm:$0xff] 0.0
          %365 = vst [vmem:[#allocation2 + $0x28] sm:$0xff] 0.0
          %366 = vst [vmem:[#allocation2 + $0x30] sm:$0xff] 0.0
          %367 = vst [vmem:[#allocation2 + $0x38] sm:$0xff] 0.0
          %368 = vst [vmem:[#allocation2 + $0x40] sm:$0xff] 0.0
          %369 = vst [vmem:[#allocation2 + $0x48] sm:$0xff] 0.0
          %370 = vst [vmem:[#allocation2 + $0x50] sm:$0xff] 0.0
          %371 = vst [vmem:[#allocation2 + $0x58] sm:$0xff] 0.0
          %372 = vst [vmem:[#allocation2 + $0x60] sm:$0xff] 0.0
          %373 = vst [vmem:[#allocation2 + $0x68] sm:$0xff] 0.0
          %374 = vst [vmem:[#allocation2 + $0x70] sm:$0xff] 0.0
          %375 = vst [vmem:[#allocation2 + $0x78] sm:$0xff] 0.0
        $region77: #{darknet53_forward.11} parent=68 // pred_fallthru
          _
        %v376 = vld [vmem:[#allocation2] sm:$0xff]
        %v377 = vld [vmem:[#allocation2 + $0x8] sm:$0xff]
        %v378 = vld [vmem:[#allocation2 + $0x10] sm:$0xff]
        %v379 = vld [vmem:[#allocation2 + $0x18] sm:$0xff]
        %v380 = vld [vmem:[#allocation2 + $0x20] sm:$0xff]
        %v381 = vld [vmem:[#allocation2 + $0x28] sm:$0xff]
        %v382 = vld [vmem:[#allocation2 + $0x30] sm:$0xff]
        %v383 = vld [vmem:[#allocation2 + $0x38] sm:$0xff]
        %v384 = vld [vmem:[#allocation2 + $0x40] sm:$0xff]
        %v385 = vld [vmem:[#allocation2 + $0x48] sm:$0xff]
        %v386 = vld [vmem:[#allocation2 + $0x50] sm:$0xff]
        %v387 = vld [vmem:[#allocation2 + $0x58] sm:$0xff]
        %v388 = vld [vmem:[#allocation2 + $0x60] sm:$0xff]
        %v389 = vld [vmem:[#allocation2 + $0x68] sm:$0xff]
        %v390 = vld [vmem:[#allocation2 + $0x70] sm:$0xff]
        %v391 = vld [vmem:[#allocation2 + $0x78] sm:$0xff]
        %v392 = vld [vmem:[%s298] sm:$0xf]
        %v393 = vld [vmem:[%s298 + $0x4] sm:$0xf]
        %v394 = vld [vmem:[%s298 + $0x8] sm:$0xf]
        %v395 = vld [vmem:[%s298 + $0xc] sm:$0xf]
        %v396 = vld [vmem:[%s298 + $0x10] sm:$0xf]
        %v397 = vld [vmem:[%s298 + $0x14] sm:$0xf]
        %v398 = vld [vmem:[%s298 + $0x18] sm:$0xf]
        %v399 = vld [vmem:[%s298 + $0x1c] sm:$0xf]
        %v400 = vld [vmem:[%s298 + $0x20] sm:$0xf]
        %v401 = vld [vmem:[%s298 + $0x24] sm:$0xf]
        %v402 = vld [vmem:[%s298 + $0x28] sm:$0xf]
        %v403 = vld [vmem:[%s298 + $0x2c] sm:$0xf]
        %v404 = vld [vmem:[%s298 + $0x30] sm:$0xf]
        %v405 = vld [vmem:[%s298 + $0x34] sm:$0xf]
        %v406 = vld [vmem:[%s298 + $0x38] sm:$0xf]
        %v407 = vld [vmem:[%s298 + $0x3c] sm:$0xf]
        %v408 = vld [vmem:[%s341] sm:$0xf]
        %v409 = vld [vmem:[%s341 + $0x4] sm:$0xf]
        %v410 = vld [vmem:[%s341 + $0x8] sm:$0xf]
        %v411 = vld [vmem:[%s341 + $0xc] sm:$0xf]
        %v412 = vld [vmem:[%s341 + $0x10] sm:$0xf]
        %v413 = vld [vmem:[%s341 + $0x14] sm:$0xf]
        %v414 = vld [vmem:[%s341 + $0x18] sm:$0xf]
        %v415 = vld [vmem:[%s341 + $0x1c] sm:$0xf]
        %v416 = vld [vmem:[%s341 + $0x20] sm:$0xf]
        %v417 = vld [vmem:[%s341 + $0x24] sm:$0xf]
        %v418 = vld [vmem:[%s341 + $0x28] sm:$0xf]
        %v419 = vld [vmem:[%s341 + $0x2c] sm:$0xf]
        %v420 = vld [vmem:[%s341 + $0x30] sm:$0xf]
        %v421 = vld [vmem:[%s341 + $0x34] sm:$0xf]
        %v422 = vld [vmem:[%s341 + $0x38] sm:$0xf]
        %v423 = vld [vmem:[%s341 + $0x3c] sm:$0xf]
        %v440 = vunpack.c.l.b16 %v392
        %v441 = vunpack.c.l.b16 %v393
        %v442 = vunpack.c.l.b16 %v394
        %v443 = vunpack.c.l.b16 %v395
        %v444 = vunpack.c.l.b16 %v396
        %v445 = vunpack.c.l.b16 %v397
        %v446 = vunpack.c.l.b16 %v398
        %v447 = vunpack.c.l.b16 %v399
        %v448 = vunpack.c.l.b16 %v400
        %v449 = vunpack.c.l.b16 %v401
        %v450 = vunpack.c.l.b16 %v402
        %v451 = vunpack.c.l.b16 %v403
        %v452 = vunpack.c.l.b16 %v404
        %v453 = vunpack.c.l.b16 %v405
        %v454 = vunpack.c.l.b16 %v406
        %v455 = vunpack.c.l.b16 %v407
        %v456 = vpack.c.b16 %v441, %v440
        %v457 = vpack.c.b16 %v443, %v442
        %v458 = vpack.c.b16 %v445, %v444
        %v459 = vpack.c.b16 %v447, %v446
        %v460 = vpack.c.b16 %v449, %v448
        %v461 = vpack.c.b16 %v451, %v450
        %v462 = vpack.c.b16 %v453, %v452
        %v463 = vpack.c.b16 %v455, %v454
        %v488 = vunpack.c.l.b16 %v408
        %v489 = vunpack.c.l.b16 %v409
        %v490 = vunpack.c.l.b16 %v410
        %v491 = vunpack.c.l.b16 %v411
        %v492 = vunpack.c.l.b16 %v412
        %v493 = vunpack.c.l.b16 %v413
        %v494 = vunpack.c.l.b16 %v414
        %v495 = vunpack.c.l.b16 %v415
        %v496 = vunpack.c.l.b16 %v416
        %v497 = vunpack.c.l.b16 %v417
        %v498 = vunpack.c.l.b16 %v418
        %v499 = vunpack.c.l.b16 %v419
        %v500 = vunpack.c.l.b16 %v420
        %v501 = vunpack.c.l.b16 %v421
        %v502 = vunpack.c.l.b16 %v422
        %v503 = vunpack.c.l.b16 %v423
        %v504 = vpack.c.b16 %v489, %v488
        %v505 = vpack.c.b16 %v491, %v490
        %v506 = vpack.c.b16 %v493, %v492
        %v507 = vpack.c.b16 %v495, %v494
        %v508 = vpack.c.b16 %v497, %v496
        %v509 = vpack.c.b16 %v499, %v498
        %v510 = vpack.c.b16 %v501, %v500
        %v511 = vpack.c.b16 %v503, %v502
        %520 = vmatprep.subr.bf16.mxu0 0
        %521 = vmatpush1.bf16.msra.mxu0 %v511
        %522 = vmatprep.subr.bf16.mxu0 0
        %523 = vmatpush1.bf16.msra.mxu0 %v510
        %524 = vmatprep.subr.bf16.mxu0 0
        %525 = vmatpush1.bf16.msra.mxu0 %v509
        %526 = vmatprep.subr.bf16.mxu0 0
        %527 = vmatpush1.bf16.msra.mxu0 %v508
        %528 = vmatprep.subr.bf16.mxu0 0
        %529 = vmatpush1.bf16.msra.mxu0 %v507
        %530 = vmatprep.subr.bf16.mxu0 0
        %531 = vmatpush1.bf16.msra.mxu0 %v506
        %532 = vmatprep.subr.bf16.mxu0 0
        %533 = vmatpush1.bf16.msra.mxu0 %v505
        %534 = vmatprep.subr.bf16.mxu0 0
        %535 = vmatpush1.bf16.msra.mxu0 %v504
        %536 = vmatprep.subr.bf16.mxu0 0
        %537 = vmatpush2.bf16.msra.mxu0 0
        %538 = vmatprep.subr.bf16.mxu0 0
        %539 = vmatpush2.bf16.msra.mxu0 0
        %540 = vmatprep.subr.bf16.mxu0 0
        %541 = vmatpush2.bf16.msra.mxu0 0
        %542 = vmatprep.subr.bf16.mxu0 0
        %543 = vmatpush2.bf16.msra.mxu0 0
        %544 = vmatprep.subr.bf16.mxu0 0
        %545 = vmatpush2.bf16.msra.mxu0 0
        %546 = vmatprep.subr.bf16.mxu0 0
        %547 = vmatpush2.bf16.msra.mxu0 0
        %548 = vmatprep.subr.bf16.mxu0 0
        %549 = vmatpush2.bf16.msra.mxu0 0
        %550 = vmatprep.subr.bf16.mxu0 0
        %551 = vmatpush2.bf16.msra.mxu0 0
        %552 = vmatprep.mubr.bf16.mxu0 0
        %553 = vmatmul.mubr.bf16.gmra.mxu0 %v456
        %v554 = vpop.f32.mrf.mxu0
        %v555 = vadd.f32 0.0, %v554
        %v556 = vpop.f32.mrf.mxu0
        %v557 = vpop.f32.mrf.mxu0
        %v558 = vadd.f32 0.0, %v557
        %v559 = vpop.f32.mrf.mxu0
        %560 = vmatprep.mubr.bf16.mxu0 0
        %561 = vmatmul.mubr.bf16.gmra.mxu0 %v457
        %v562 = vpop.f32.mrf.mxu0
        %v563 = vadd.f32 0.0, %v562
        %v564 = vpop.f32.mrf.mxu0
        %v565 = vpop.f32.mrf.mxu0
        %v566 = vadd.f32 0.0, %v565
        %v567 = vpop.f32.mrf.mxu0
        %568 = vmatprep.mubr.bf16.mxu0 0
        %569 = vmatmul.mubr.bf16.gmra.mxu0 %v458
        %v570 = vpop.f32.mrf.mxu0
        %v571 = vadd.f32 0.0, %v570
        %v572 = vpop.f32.mrf.mxu0
        %v573 = vpop.f32.mrf.mxu0
        %v574 = vadd.f32 0.0, %v573
        %v575 = vpop.f32.mrf.mxu0
        %576 = vmatprep.mubr.bf16.mxu0 0
        %577 = vmatmul.mubr.bf16.gmra.mxu0 %v459
        %v578 = vpop.f32.mrf.mxu0
        %v579 = vadd.f32 0.0, %v578
        %v580 = vpop.f32.mrf.mxu0
        %v581 = vpop.f32.mrf.mxu0
        %v582 = vadd.f32 0.0, %v581
        %v583 = vpop.f32.mrf.mxu0
        %584 = vmatprep.mubr.bf16.mxu0 0
        %585 = vmatmul.mubr.bf16.gmra.mxu0 %v460
        %v586 = vpop.f32.mrf.mxu0
        %v587 = vadd.f32 0.0, %v586
        %v588 = vpop.f32.mrf.mxu0
        %v589 = vpop.f32.mrf.mxu0
        %v590 = vadd.f32 0.0, %v589
        %v591 = vpop.f32.mrf.mxu0
        %592 = vmatprep.mubr.bf16.mxu0 0
        %593 = vmatmul.mubr.bf16.gmra.mxu0 %v461
        %v594 = vpop.f32.mrf.mxu0
        %v595 = vadd.f32 0.0, %v594
        %v596 = vpop.f32.mrf.mxu0
        %v597 = vpop.f32.mrf.mxu0
        %v598 = vadd.f32 0.0, %v597
        %v599 = vpop.f32.mrf.mxu0
        %600 = vmatprep.mubr.bf16.mxu0 0
        %601 = vmatmul.mubr.bf16.gmra.mxu0 %v462
        %v602 = vpop.f32.mrf.mxu0
        %v603 = vadd.f32 0.0, %v602
        %v604 = vpop.f32.mrf.mxu0
        %v605 = vpop.f32.mrf.mxu0
        %v606 = vadd.f32 0.0, %v605
        %v607 = vpop.f32.mrf.mxu0
        %608 = vmatprep.mubr.bf16.mxu0 0
        %609 = vmatmul.mubr.bf16.gmra.mxu0 %v463
        %v610 = vpop.f32.mrf.mxu0
        %v611 = vadd.f32 0.0, %v610
        %v612 = vpop.f32.mrf.mxu0
        %v613 = vpop.f32.mrf.mxu0
        %v614 = vadd.f32 0.0, %v613
        %v615 = vpop.f32.mrf.mxu0
        %616 = vdwg.mxu0
        %v617 = vadd.f32 %v376, %v555
        %v618 = vadd.f32 %v377, %v558
        %v619 = vadd.f32 %v378, %v563
        %v620 = vadd.f32 %v379, %v566
        %v621 = vadd.f32 %v380, %v571
        %v622 = vadd.f32 %v381, %v574
        %v623 = vadd.f32 %v382, %v579
        %v624 = vadd.f32 %v383, %v582
        %v625 = vadd.f32 %v384, %v587
        %v626 = vadd.f32 %v385, %v590
        %v627 = vadd.f32 %v386, %v595
        %v628 = vadd.f32 %v387, %v598
        %v629 = vadd.f32 %v388, %v603
        %v630 = vadd.f32 %v389, %v606
        %v631 = vadd.f32 %v390, %v611
        %v632 = vadd.f32 %v391, %v614
        %633 = vst [vmem:[#allocation2] sm:$0xff] %v617
        %634 = vst [vmem:[#allocation2 + $0x8] sm:$0xff] %v618
        %635 = vst [vmem:[#allocation2 + $0x10] sm:$0xff] %v619
        %636 = vst [vmem:[#allocation2 + $0x18] sm:$0xff] %v620
        %637 = vst [vmem:[#allocation2 + $0x20] sm:$0xff] %v621
        %638 = vst [vmem:[#allocation2 + $0x28] sm:$0xff] %v622
        %639 = vst [vmem:[#allocation2 + $0x30] sm:$0xff] %v623
        %640 = vst [vmem:[#allocation2 + $0x38] sm:$0xff] %v624
        %641 = vst [vmem:[#allocation2 + $0x40] sm:$0xff] %v625
        %642 = vst [vmem:[#allocation2 + $0x48] sm:$0xff] %v626
        %643 = vst [vmem:[#allocation2 + $0x50] sm:$0xff] %v627
        %644 = vst [vmem:[#allocation2 + $0x58] sm:$0xff] %v628
        %645 = vst [vmem:[#allocation2 + $0x60] sm:$0xff] %v629
        %646 = vst [vmem:[#allocation2 + $0x68] sm:$0xff] %v630
        %647 = vst [vmem:[#allocation2 + $0x70] sm:$0xff] %v631
        %648 = vst [vmem:[#allocation2 + $0x78] sm:$0xff] %v632
        %p649 = scmp.eq.s32.totalorder %s21, 4
        // Predicated region
        $region78: #{darknet53_forward.11} parent=68 // pred_check
          %p650 = pneg %p649
        $region79: #{darknet53_forward.11} parent=68 // pred_check_branch
          %652 = sbr.rel (%p650) target = $region81
        $region80: #{darknet53_forward.11} parent=68 // pred_region
          %v653 = vld [vmem:[#allocation2] sm:$0xff]
          %v654 = vld [vmem:[#allocation2 + $0x8] sm:$0xff]
          %v655 = vld [vmem:[#allocation2 + $0x10] sm:$0xff]
          %v656 = vld [vmem:[#allocation2 + $0x18] sm:$0xff]
          %v657 = vld [vmem:[#allocation2 + $0x20] sm:$0xff]
          %v658 = vld [vmem:[#allocation2 + $0x28] sm:$0xff]
          %v659 = vld [vmem:[#allocation2 + $0x30] sm:$0xff]
          %v660 = vld [vmem:[#allocation2 + $0x38] sm:$0xff]
          %v661 = vld [vmem:[#allocation2 + $0x40] sm:$0xff]
          %v662 = vld [vmem:[#allocation2 + $0x48] sm:$0xff]
          %v663 = vld [vmem:[#allocation2 + $0x50] sm:$0xff]
          %v664 = vld [vmem:[#allocation2 + $0x58] sm:$0xff]
          %v665 = vld [vmem:[#allocation2 + $0x60] sm:$0xff]
          %v666 = vld [vmem:[#allocation2 + $0x68] sm:$0xff]
          %v667 = vld [vmem:[#allocation2 + $0x70] sm:$0xff]
          %v668 = vld [vmem:[#allocation2 + $0x78] sm:$0xff]
          %v669 = vld [vmem:[%s345] sm:$0x1]
          %v671 = vlaneseq
          %v672 = vshrl.u32 %v671, 7
          %v673 = vsub.s32 0, %v672
          %v674 = vrot.slane %v669, %v673
          %v676 = vadd.f32 %v653, %v674
          %v677 = vadd.f32 %v654, %v674
          %v678 = vadd.f32 %v655, %v674
          %v679 = vadd.f32 %v656, %v674
          %v680 = vadd.f32 %v657, %v674
          %v681 = vadd.f32 %v658, %v674
          %v682 = vadd.f32 %v659, %v674
          %v683 = vadd.f32 %v660, %v674
          %v684 = vadd.f32 %v661, %v674
          %v685 = vadd.f32 %v662, %v674
          %v686 = vadd.f32 %v663, %v674
          %v687 = vadd.f32 %v664, %v674
          %v688 = vadd.f32 %v665, %v674
          %v689 = vadd.f32 %v666, %v674
          %v690 = vadd.f32 %v667, %v674
          %v691 = vadd.f32 %v668, %v674
          %vm692 = vcmp.ge.f32.partialorder %v676, 0.0
          %vm693 = vcmp.ge.f32.partialorder %v677, 0.0
          %vm694 = vcmp.ge.f32.partialorder %v678, 0.0
          %vm695 = vcmp.ge.f32.partialorder %v679, 0.0
          %vm696 = vcmp.ge.f32.partialorder %v680, 0.0
          %vm697 = vcmp.ge.f32.partialorder %v681, 0.0
          %vm698 = vcmp.ge.f32.partialorder %v682, 0.0
          %vm699 = vcmp.ge.f32.partialorder %v683, 0.0
          %vm700 = vcmp.ge.f32.partialorder %v684, 0.0
          %vm701 = vcmp.ge.f32.partialorder %v685, 0.0
          %vm702 = vcmp.ge.f32.partialorder %v686, 0.0
          %vm703 = vcmp.ge.f32.partialorder %v687, 0.0
          %vm704 = vcmp.ge.f32.partialorder %v688, 0.0
          %vm705 = vcmp.ge.f32.partialorder %v689, 0.0
          %vm706 = vcmp.ge.f32.partialorder %v690, 0.0
          %vm707 = vcmp.ge.f32.partialorder %v691, 0.0
          %v708 = vmul.f32 %v676, 0.1
          %v709 = vmul.f32 %v677, 0.1
          %v710 = vmul.f32 %v678, 0.1
          %v711 = vmul.f32 %v679, 0.1
          %v712 = vmul.f32 %v680, 0.1
          %v713 = vmul.f32 %v681, 0.1
          %v714 = vmul.f32 %v682, 0.1
          %v715 = vmul.f32 %v683, 0.1
          %v716 = vmul.f32 %v684, 0.1
          %v717 = vmul.f32 %v685, 0.1
          %v718 = vmul.f32 %v686, 0.1
          %v719 = vmul.f32 %v687, 0.1
          %v720 = vmul.f32 %v688, 0.1
          %v721 = vmul.f32 %v689, 0.1
          %v722 = vmul.f32 %v690, 0.1
          %v723 = vmul.f32 %v691, 0.1
          %v724 = vsel %vm692, %v676, %v708
          %v725 = vsel %vm693, %v677, %v709
          %v726 = vsel %vm694, %v678, %v710
          %v727 = vsel %vm695, %v679, %v711
          %v728 = vsel %vm696, %v680, %v712
          %v729 = vsel %vm697, %v681, %v713
          %v730 = vsel %vm698, %v682, %v714
          %v731 = vsel %vm699, %v683, %v715
          %v732 = vsel %vm700, %v684, %v716
          %v733 = vsel %vm701, %v685, %v717
          %v734 = vsel %vm702, %v686, %v718
          %v735 = vsel %vm703, %v687, %v719
          %v736 = vsel %vm704, %v688, %v720
          %v737 = vsel %vm705, %v689, %v721
          %v738 = vsel %vm706, %v690, %v722
          %v739 = vsel %vm707, %v691, %v723
          %v740 = vpack.c.bf16 %v725, %v724
          %v741 = vpack.c.bf16 %v727, %v726
          %v742 = vpack.c.bf16 %v729, %v728
          %v743 = vpack.c.bf16 %v731, %v730
          %v744 = vpack.c.bf16 %v733, %v732
          %v745 = vpack.c.bf16 %v735, %v734
          %v746 = vpack.c.bf16 %v737, %v736
          %v747 = vpack.c.bf16 %v739, %v738
          %v756 = vunpack.c.l.b16 %v740
          %v757 = vunpack.c.h.b16 %v740
          %v758 = vunpack.c.l.b16 %v741
          %v759 = vunpack.c.h.b16 %v741
          %v760 = vunpack.c.l.b16 %v742
          %v761 = vunpack.c.h.b16 %v742
          %v762 = vunpack.c.l.b16 %v743
          %v763 = vunpack.c.h.b16 %v743
          %v764 = vunpack.c.l.b16 %v744
          %v765 = vunpack.c.h.b16 %v744
          %v766 = vunpack.c.l.b16 %v745
          %v767 = vunpack.c.h.b16 %v745
          %v768 = vunpack.c.l.b16 %v746
          %v769 = vunpack.c.h.b16 %v746
          %v770 = vunpack.c.l.b16 %v747
          %v771 = vunpack.c.h.b16 %v747
          %v772 = vpack.c.b16 %v756, %v756
          %v773 = vpack.c.b16 %v757, %v757
          %v774 = vpack.c.b16 %v758, %v758
          %v775 = vpack.c.b16 %v759, %v759
          %v776 = vpack.c.b16 %v760, %v760
          %v777 = vpack.c.b16 %v761, %v761
          %v778 = vpack.c.b16 %v762, %v762
          %v779 = vpack.c.b16 %v763, %v763
          %v780 = vpack.c.b16 %v764, %v764
          %v781 = vpack.c.b16 %v765, %v765
          %v782 = vpack.c.b16 %v766, %v766
          %v783 = vpack.c.b16 %v767, %v767
          %v784 = vpack.c.b16 %v768, %v768
          %v785 = vpack.c.b16 %v769, %v769
          %v786 = vpack.c.b16 %v770, %v770
          %v787 = vpack.c.b16 %v771, %v771
          %804 = vst [vmem:[%s353] sm:$0xf] %v772
          %805 = vst [vmem:[%s353 + $0x4] sm:$0xf] %v773
          %806 = vst [vmem:[%s353 + $0x8] sm:$0xf] %v774
          %807 = vst [vmem:[%s353 + $0xc] sm:$0xf] %v775
          %808 = vst [vmem:[%s353 + $0x10] sm:$0xf] %v776
          %809 = vst [vmem:[%s353 + $0x14] sm:$0xf] %v777
          %810 = vst [vmem:[%s353 + $0x18] sm:$0xf] %v778
          %811 = vst [vmem:[%s353 + $0x1c] sm:$0xf] %v779
          %812 = vst [vmem:[%s353 + $0x20] sm:$0xf] %v780
          %813 = vst [vmem:[%s353 + $0x24] sm:$0xf] %v781
          %814 = vst [vmem:[%s353 + $0x28] sm:$0xf] %v782
          %815 = vst [vmem:[%s353 + $0x2c] sm:$0xf] %v783
          %816 = vst [vmem:[%s353 + $0x30] sm:$0xf] %v784
          %817 = vst [vmem:[%s353 + $0x34] sm:$0xf] %v785
          %818 = vst [vmem:[%s353 + $0x38] sm:$0xf] %v786
          %819 = vst [vmem:[%s353 + $0x3c] sm:$0xf] %v787
        $region81: #{darknet53_forward.11} parent=68 // pred_fallthru
          _
        %s820 = smul.u32 16, %s19
        %p821 = scmp.lt.s32.totalorder %s820, 15
        %s822 = scalar_select %p821, %s820, 15
        %p823 = scmp.lt.s32.totalorder %s20, 0
        %s824 = scalar_select %p823, %s20, 0
        %s825 = sadd.s32 %s824, %s822
        %s826 = smul.addr %s825, 4
        %s827 = scalar_lea.vmem %s3, %s826
        // Predicated region
        $region82: #{darknet53_forward.11} parent=68 // pred_check
          %p828 = pneg %p135
        $region83: #{darknet53_forward.11} parent=68 // pred_check_branch
          %830 = sbr.rel (%p828) target = $region85
        $region84: #{darknet53_forward.11} parent=68 // pred_region
          %s831 = smul.u32 16, %s19
        $region85: #{darknet53_forward.11} parent=68 // pred_fallthru
          _
        // Predicated region
        $region86: #{darknet53_forward.11} parent=68 // pred_check
          %p832 = pneg %p135
        $region87: #{darknet53_forward.11} parent=68 // pred_check_branch
          %834 = sbr.rel (%p832) target = $region89
        $region88: #{darknet53_forward.11} parent=68 // pred_region
          %s835 = smul.u32 16, %s19
          %p836 = scmp.lt.s32.totalorder %s835, 15
          %s837 = scalar_select %p836, %s835, 15
          %p838 = scmp.lt.s32.totalorder %s20, 0
          %s839 = scalar_select %p838, %s20, 0
          %s840 = sadd.s32 %s839, %s837
          %s841 = smul.addr %s840, 4
          %s842 = scalar_lea.vmem %s3, %s841
        $region89: #{darknet53_forward.11} parent=68 // pred_fallthru
          _
      $region69: #{darknet53_forward.11} parent=5 // pred_fallthru
        _
      %p843 = scmp.le.s32.totalorder 2, %s9
      // Predicated region
      $region90: #{darknet53_forward.11} parent=5 // pred_check
        %p844 = pneg %p843
      $region91: #{darknet53_forward.11} parent=5 // pred_check_branch
        %846 = sbr.rel (%p844) target = $region93
      $region92: #{darknet53_forward.11} parent=5 // pred_region
        %s847 = ssub.s32 %s9, 2
      $region93: #{darknet53_forward.11} parent=5 // pred_fallthru
        _
    $region6: #{darknet53_forward.11} parent=1 // loop_footer
      %s13 = sadd.s32 1, %s9
    $region7: #{darknet53_forward.11} parent=1 // loop_footer_branch
      %8 = sbr.rel target = $region3
    $region8: #{darknet53_forward.11} parent=1 // loop_exit
      _

// kernel: darknet53_forward.12
$region0: #{darknet53_forward.12}
  #allocation0 [shape = 'u32[]', space=smem, size = 0x4, offset = 0x4, fixed_abs, tag = 'smem constant byte address 0x4 - core index']
  #allocation1 [shape = 'u32[144,128]{1,0:T(1,128)}', space=vmem, size = 0x12000, scoped, tag = 'internal scratch']
  #allocation2 [shape = 'f32[128,128]{1,0:T(8,128)}', space=vmem, size = 0x10000, scoped, tag = 'scratch operand']
  %s0 = inlined_call_operand.vmem [shape: bf16[128,128], index: 0, kind: input, shape index: {}]
  %s1 = inlined_call_operand.vmem [shape: bf16[128,128], index: 1, kind: input, shape index: {}]
  %s2 = inlined_call_operand.vmem [shape: f32[1,128], index: 2, kind: input, shape index: {}]
  %s3 = inlined_call_operand.vmem [shape: bf16[128,128], index: 3, kind: output, shape index: {}]
  %s4 = sld [smem:[#allocation0]]
  $region30: #{darknet53_forward.12} parent=0
    _
  %s6 = ssub.s32 1, %s4
  %s7 = scalar_select 0, %s6, %s4
  // Predicated region
  $region2: #{darknet53_forward.12} parent=0 // pred_check
    _
  $region3: #{darknet53_forward.12} parent=0 // pred_check_branch
    %9 = sbr.rel (0) target = $region5
  $region4: #{darknet53_forward.12} parent=0 // pred_region
    _
  $region5: #{darknet53_forward.12} parent=0 // pred_fallthru
    _
  // Predicated region
  $region6: #{darknet53_forward.12} parent=0 // pred_check
    _
  $region7: #{darknet53_forward.12} parent=0 // pred_check_branch
    %11 = sbr.rel (0) target = $region9
  $region8: #{darknet53_forward.12} parent=0 // pred_region
    _
  $region9: #{darknet53_forward.12} parent=0 // pred_fallthru
    _
  // Predicated region
  $region10: #{darknet53_forward.12} parent=0 // pred_check
    _
  $region11: #{darknet53_forward.12} parent=0 // pred_check_branch
    %13 = sbr.rel (0) target = $region13
  $region12: #{darknet53_forward.12} parent=0 // pred_region
    _
  $region13: #{darknet53_forward.12} parent=0 // pred_fallthru
    _
  %p15 = scmp.eq.s32.totalorder 0, 0
  // Predicated region
  $region14: #{darknet53_forward.12} parent=0 // pred_check
    %p16 = pneg %p15
  $region15: #{darknet53_forward.12} parent=0 // pred_check_branch
    %18 = sbr.rel (%p16) target = $region17
  $region16: #{darknet53_forward.12} parent=0 // pred_region
    %19 = vst [vmem:[#allocation2] sm:$0xff] 0.0
    %20 = vst [vmem:[#allocation2 + $0x8] sm:$0xff] 0.0
    %21 = vst [vmem:[#allocation2 + $0x10] sm:$0xff] 0.0
    %22 = vst [vmem:[#allocation2 + $0x18] sm:$0xff] 0.0
    %23 = vst [vmem:[#allocation2 + $0x20] sm:$0xff] 0.0
    %24 = vst [vmem:[#allocation2 + $0x28] sm:$0xff] 0.0
    %25 = vst [vmem:[#allocation2 + $0x30] sm:$0xff] 0.0
    %26 = vst [vmem:[#allocation2 + $0x38] sm:$0xff] 0.0
    %27 = vst [vmem:[#allocation2 + $0x40] sm:$0xff] 0.0
    %28 = vst [vmem:[#allocation2 + $0x48] sm:$0xff] 0.0
    %29 = vst [vmem:[#allocation2 + $0x50] sm:$0xff] 0.0
    %30 = vst [vmem:[#allocation2 + $0x58] sm:$0xff] 0.0
    %31 = vst [vmem:[#allocation2 + $0x60] sm:$0xff] 0.0
    %32 = vst [vmem:[#allocation2 + $0x68] sm:$0xff] 0.0
    %33 = vst [vmem:[#allocation2 + $0x70] sm:$0xff] 0.0
    %34 = vst [vmem:[#allocation2 + $0x78] sm:$0xff] 0.0
  $region17: #{darknet53_forward.12} parent=0 // pred_fallthru
    _
  %v35 = vld [vmem:[#allocation2] sm:$0xff]
  %v36 = vld [vmem:[#allocation2 + $0x8] sm:$0xff]
  %v37 = vld [vmem:[#allocation2 + $0x10] sm:$0xff]
  %v38 = vld [vmem:[#allocation2 + $0x18] sm:$0xff]
  %v39 = vld [vmem:[#allocation2 + $0x20] sm:$0xff]
  %v40 = vld [vmem:[#allocation2 + $0x28] sm:$0xff]
  %v41 = vld [vmem:[#allocation2 + $0x30] sm:$0xff]
  %v42 = vld [vmem:[#allocation2 + $0x38] sm:$0xff]
  %v43 = vld [vmem:[#allocation2 + $0x40] sm:$0xff]
  %v44 = vld [vmem:[#allocation2 + $0x48] sm:$0xff]
  %v45 = vld [vmem:[#allocation2 + $0x50] sm:$0xff]
  %v46 = vld [vmem:[#allocation2 + $0x58] sm:$0xff]
  %v47 = vld [vmem:[#allocation2 + $0x60] sm:$0xff]
  %v48 = vld [vmem:[#allocation2 + $0x68] sm:$0xff]
  %v49 = vld [vmem:[#allocation2 + $0x70] sm:$0xff]
  %v50 = vld [vmem:[#allocation2 + $0x78] sm:$0xff]
  %v51 = vld [vmem:[%s0] sm:$0xf]
  %v52 = vld [vmem:[%s0 + $0x4] sm:$0xf]
  %v53 = vld [vmem:[%s0 + $0x8] sm:$0xf]
  %v54 = vld [vmem:[%s0 + $0xc] sm:$0xf]
  %v55 = vld [vmem:[%s0 + $0x10] sm:$0xf]
  %v56 = vld [vmem:[%s0 + $0x14] sm:$0xf]
  %v57 = vld [vmem:[%s0 + $0x18] sm:$0xf]
  %v58 = vld [vmem:[%s0 + $0x1c] sm:$0xf]
  %v59 = vld [vmem:[%s0 + $0x20] sm:$0xf]
  %v60 = vld [vmem:[%s0 + $0x24] sm:$0xf]
  %v61 = vld [vmem:[%s0 + $0x28] sm:$0xf]
  %v62 = vld [vmem:[%s0 + $0x2c] sm:$0xf]
  %v63 = vld [vmem:[%s0 + $0x30] sm:$0xf]
  %v64 = vld [vmem:[%s0 + $0x34] sm:$0xf]
  %v65 = vld [vmem:[%s0 + $0x38] sm:$0xf]
  %v66 = vld [vmem:[%s0 + $0x3c] sm:$0xf]
  %v67 = vld [vmem:[%s1] sm:$0xf]
  %v68 = vld [vmem:[%s1 + $0x4] sm:$0xf]
  %v69 = vld [vmem:[%s1 + $0x8] sm:$0xf]
  %v70 = vld [vmem:[%s1 + $0xc] sm:$0xf]
  %v71 = vld [vmem:[%s1 + $0x10] sm:$0xf]
  %v72 = vld [vmem:[%s1 + $0x14] sm:$0xf]
  %v73 = vld [vmem:[%s1 + $0x18] sm:$0xf]
  %v74 = vld [vmem:[%s1 + $0x1c] sm:$0xf]
  %v75 = vld [vmem:[%s1 + $0x20] sm:$0xf]
  %v76 = vld [vmem:[%s1 + $0x24] sm:$0xf]
  %v77 = vld [vmem:[%s1 + $0x28] sm:$0xf]
  %v78 = vld [vmem:[%s1 + $0x2c] sm:$0xf]
  %v79 = vld [vmem:[%s1 + $0x30] sm:$0xf]
  %v80 = vld [vmem:[%s1 + $0x34] sm:$0xf]
  %v81 = vld [vmem:[%s1 + $0x38] sm:$0xf]
  %v82 = vld [vmem:[%s1 + $0x3c] sm:$0xf]
  %v99 = vunpack.c.l.b16 %v51
  %v100 = vunpack.c.l.b16 %v52
  %v101 = vunpack.c.l.b16 %v53
  %v102 = vunpack.c.l.b16 %v54
  %v103 = vunpack.c.l.b16 %v55
  %v104 = vunpack.c.l.b16 %v56
  %v105 = vunpack.c.l.b16 %v57
  %v106 = vunpack.c.l.b16 %v58
  %v107 = vunpack.c.l.b16 %v59
  %v108 = vunpack.c.l.b16 %v60
  %v109 = vunpack.c.l.b16 %v61
  %v110 = vunpack.c.l.b16 %v62
  %v111 = vunpack.c.l.b16 %v63
  %v112 = vunpack.c.l.b16 %v64
  %v113 = vunpack.c.l.b16 %v65
  %v114 = vunpack.c.l.b16 %v66
  %v115 = vpack.c.b16 %v100, %v99
  %v116 = vpack.c.b16 %v102, %v101
  %v117 = vpack.c.b16 %v104, %v103
  %v118 = vpack.c.b16 %v106, %v105
  %v119 = vpack.c.b16 %v108, %v107
  %v120 = vpack.c.b16 %v110, %v109
  %v121 = vpack.c.b16 %v112, %v111
  %v122 = vpack.c.b16 %v114, %v113
  %v147 = vunpack.c.l.b16 %v67
  %v148 = vunpack.c.l.b16 %v68
  %v149 = vunpack.c.l.b16 %v69
  %v150 = vunpack.c.l.b16 %v70
  %v151 = vunpack.c.l.b16 %v71
  %v152 = vunpack.c.l.b16 %v72
  %v153 = vunpack.c.l.b16 %v73
  %v154 = vunpack.c.l.b16 %v74
  %v155 = vunpack.c.l.b16 %v75
  %v156 = vunpack.c.l.b16 %v76
  %v157 = vunpack.c.l.b16 %v77
  %v158 = vunpack.c.l.b16 %v78
  %v159 = vunpack.c.l.b16 %v79
  %v160 = vunpack.c.l.b16 %v80
  %v161 = vunpack.c.l.b16 %v81
  %v162 = vunpack.c.l.b16 %v82
  %v163 = vpack.c.b16 %v148, %v147
  %v164 = vpack.c.b16 %v150, %v149
  %v165 = vpack.c.b16 %v152, %v151
  %v166 = vpack.c.b16 %v154, %v153
  %v167 = vpack.c.b16 %v156, %v155
  %v168 = vpack.c.b16 %v158, %v157
  %v169 = vpack.c.b16 %v160, %v159
  %v170 = vpack.c.b16 %v162, %v161
  %179 = vmatprep.subr.bf16.mxu0 0
  %180 = vmatpush1.bf16.msra.mxu0 %v170
  %181 = vmatprep.subr.bf16.mxu0 0
  %182 = vmatpush1.bf16.msra.mxu0 %v169
  %183 = vmatprep.subr.bf16.mxu0 0
  %184 = vmatpush1.bf16.msra.mxu0 %v168
  %185 = vmatprep.subr.bf16.mxu0 0
  %186 = vmatpush1.bf16.msra.mxu0 %v167
  %187 = vmatprep.subr.bf16.mxu0 0
  %188 = vmatpush1.bf16.msra.mxu0 %v166
  %189 = vmatprep.subr.bf16.mxu0 0
  %190 = vmatpush1.bf16.msra.mxu0 %v165
  %191 = vmatprep.subr.bf16.mxu0 0
  %192 = vmatpush1.bf16.msra.mxu0 %v164
  %193 = vmatprep.subr.bf16.mxu0 0
  %194 = vmatpush1.bf16.msra.mxu0 %v163
  %195 = vmatprep.subr.bf16.mxu0 0
  %196 = vmatpush2.bf16.msra.mxu0 0
  %197 = vmatprep.subr.bf16.mxu0 0
  %198 = vmatpush2.bf16.msra.mxu0 0
  %199 = vmatprep.subr.bf16.mxu0 0
  %200 = vmatpush2.bf16.msra.mxu0 0
  %201 = vmatprep.subr.bf16.mxu0 0
  %202 = vmatpush2.bf16.msra.mxu0 0
  %203 = vmatprep.subr.bf16.mxu0 0
  %204 = vmatpush2.bf16.msra.mxu0 0
  %205 = vmatprep.subr.bf16.mxu0 0
  %206 = vmatpush2.bf16.msra.mxu0 0
  %207 = vmatprep.subr.bf16.mxu0 0
  %208 = vmatpush2.bf16.msra.mxu0 0
  %209 = vmatprep.subr.bf16.mxu0 0
  %210 = vmatpush2.bf16.msra.mxu0 0
  %211 = vmatprep.mubr.bf16.mxu0 0
  %212 = vmatmul.mubr.bf16.gmra.mxu0 %v115
  %v213 = vpop.f32.mrf.mxu0
  %v214 = vadd.f32 0.0, %v213
  %v215 = vpop.f32.mrf.mxu0
  %v216 = vpop.f32.mrf.mxu0
  %v217 = vadd.f32 0.0, %v216
  %v218 = vpop.f32.mrf.mxu0
  %219 = vmatprep.mubr.bf16.mxu0 0
  %220 = vmatmul.mubr.bf16.gmra.mxu0 %v116
  %v221 = vpop.f32.mrf.mxu0
  %v222 = vadd.f32 0.0, %v221
  %v223 = vpop.f32.mrf.mxu0
  %v224 = vpop.f32.mrf.mxu0
  %v225 = vadd.f32 0.0, %v224
  %v226 = vpop.f32.mrf.mxu0
  %227 = vmatprep.mubr.bf16.mxu0 0
  %228 = vmatmul.mubr.bf16.gmra.mxu0 %v117
  %v229 = vpop.f32.mrf.mxu0
  %v230 = vadd.f32 0.0, %v229
  %v231 = vpop.f32.mrf.mxu0
  %v232 = vpop.f32.mrf.mxu0
  %v233 = vadd.f32 0.0, %v232
  %v234 = vpop.f32.mrf.mxu0
  %235 = vmatprep.mubr.bf16.mxu0 0
  %236 = vmatmul.mubr.bf16.gmra.mxu0 %v118
  %v237 = vpop.f32.mrf.mxu0
  %v238 = vadd.f32 0.0, %v237
  %v239 = vpop.f32.mrf.mxu0
  %v240 = vpop.f32.mrf.mxu0
  %v241 = vadd.f32 0.0, %v240
  %v242 = vpop.f32.mrf.mxu0
  %243 = vmatprep.mubr.bf16.mxu0 0
  %244 = vmatmul.mubr.bf16.gmra.mxu0 %v119
  %v245 = vpop.f32.mrf.mxu0
  %v246 = vadd.f32 0.0, %v245
  %v247 = vpop.f32.mrf.mxu0
  %v248 = vpop.f32.mrf.mxu0
  %v249 = vadd.f32 0.0, %v248
  %v250 = vpop.f32.mrf.mxu0
  %251 = vmatprep.mubr.bf16.mxu0 0
  %252 = vmatmul.mubr.bf16.gmra.mxu0 %v120
  %v253 = vpop.f32.mrf.mxu0
  %v254 = vadd.f32 0.0, %v253
  %v255 = vpop.f32.mrf.mxu0
  %v256 = vpop.f32.mrf.mxu0
  %v257 = vadd.f32 0.0, %v256
  %v258 = vpop.f32.mrf.mxu0
  %259 = vmatprep.mubr.bf16.mxu0 0
  %260 = vmatmul.mubr.bf16.gmra.mxu0 %v121
  %v261 = vpop.f32.mrf.mxu0
  %v262 = vadd.f32 0.0, %v261
  %v263 = vpop.f32.mrf.mxu0
  %v264 = vpop.f32.mrf.mxu0
  %v265 = vadd.f32 0.0, %v264
  %v266 = vpop.f32.mrf.mxu0
  %267 = vmatprep.mubr.bf16.mxu0 0
  %268 = vmatmul.mubr.bf16.gmra.mxu0 %v122
  %v269 = vpop.f32.mrf.mxu0
  %v270 = vadd.f32 0.0, %v269
  %v271 = vpop.f32.mrf.mxu0
  %v272 = vpop.f32.mrf.mxu0
  %v273 = vadd.f32 0.0, %v272
  %v274 = vpop.f32.mrf.mxu0
  %275 = vdwg.mxu0
  %v276 = vadd.f32 %v35, %v214
  %v277 = vadd.f32 %v36, %v217
  %v278 = vadd.f32 %v37, %v222
  %v279 = vadd.f32 %v38, %v225
  %v280 = vadd.f32 %v39, %v230
  %v281 = vadd.f32 %v40, %v233
  %v282 = vadd.f32 %v41, %v238
  %v283 = vadd.f32 %v42, %v241
  %v284 = vadd.f32 %v43, %v246
  %v285 = vadd.f32 %v44, %v249
  %v286 = vadd.f32 %v45, %v254
  %v287 = vadd.f32 %v46, %v257
  %v288 = vadd.f32 %v47, %v262
  %v289 = vadd.f32 %v48, %v265
  %v290 = vadd.f32 %v49, %v270
  %v291 = vadd.f32 %v50, %v273
  %292 = vst [vmem:[#allocation2] sm:$0xff] %v276
  %293 = vst [vmem:[#allocation2 + $0x8] sm:$0xff] %v277
  %294 = vst [vmem:[#allocation2 + $0x10] sm:$0xff] %v278
  %295 = vst [vmem:[#allocation2 + $0x18] sm:$0xff] %v279
  %296 = vst [vmem:[#allocation2 + $0x20] sm:$0xff] %v280
  %297 = vst [vmem:[#allocation2 + $0x28] sm:$0xff] %v281
  %298 = vst [vmem:[#allocation2 + $0x30] sm:$0xff] %v282
  %299 = vst [vmem:[#allocation2 + $0x38] sm:$0xff] %v283
  %300 = vst [vmem:[#allocation2 + $0x40] sm:$0xff] %v284
  %301 = vst [vmem:[#allocation2 + $0x48] sm:$0xff] %v285
  %302 = vst [vmem:[#allocation2 + $0x50] sm:$0xff] %v286
  %303 = vst [vmem:[#allocation2 + $0x58] sm:$0xff] %v287
  %304 = vst [vmem:[#allocation2 + $0x60] sm:$0xff] %v288
  %305 = vst [vmem:[#allocation2 + $0x68] sm:$0xff] %v289
  %306 = vst [vmem:[#allocation2 + $0x70] sm:$0xff] %v290
  %307 = vst [vmem:[#allocation2 + $0x78] sm:$0xff] %v291
  // Predicated region
  $region18: #{darknet53_forward.12} parent=0 // pred_check
    %p308 = pneg %p15
  $region19: #{darknet53_forward.12} parent=0 // pred_check_branch
    %310 = sbr.rel (%p308) target = $region21
  $region20: #{darknet53_forward.12} parent=0 // pred_region
    %v311 = vld [vmem:[#allocation2] sm:$0xff]
    %v312 = vld [vmem:[#allocation2 + $0x8] sm:$0xff]
    %v313 = vld [vmem:[#allocation2 + $0x10] sm:$0xff]
    %v314 = vld [vmem:[#allocation2 + $0x18] sm:$0xff]
    %v315 = vld [vmem:[#allocation2 + $0x20] sm:$0xff]
    %v316 = vld [vmem:[#allocation2 + $0x28] sm:$0xff]
    %v317 = vld [vmem:[#allocation2 + $0x30] sm:$0xff]
    %v318 = vld [vmem:[#allocation2 + $0x38] sm:$0xff]
    %v319 = vld [vmem:[#allocation2 + $0x40] sm:$0xff]
    %v320 = vld [vmem:[#allocation2 + $0x48] sm:$0xff]
    %v321 = vld [vmem:[#allocation2 + $0x50] sm:$0xff]
    %v322 = vld [vmem:[#allocation2 + $0x58] sm:$0xff]
    %v323 = vld [vmem:[#allocation2 + $0x60] sm:$0xff]
    %v324 = vld [vmem:[#allocation2 + $0x68] sm:$0xff]
    %v325 = vld [vmem:[#allocation2 + $0x70] sm:$0xff]
    %v326 = vld [vmem:[#allocation2 + $0x78] sm:$0xff]
    %v327 = vld [vmem:[%s2] sm:$0x1]
    %v329 = vlaneseq
    %v330 = vshrl.u32 %v329, 7
    %v331 = vsub.s32 0, %v330
    %v332 = vrot.slane %v327, %v331
    %v334 = vadd.f32 %v311, %v332
    %v335 = vadd.f32 %v312, %v332
    %v336 = vadd.f32 %v313, %v332
    %v337 = vadd.f32 %v314, %v332
    %v338 = vadd.f32 %v315, %v332
    %v339 = vadd.f32 %v316, %v332
    %v340 = vadd.f32 %v317, %v332
    %v341 = vadd.f32 %v318, %v332
    %v342 = vadd.f32 %v319, %v332
    %v343 = vadd.f32 %v320, %v332
    %v344 = vadd.f32 %v321, %v332
    %v345 = vadd.f32 %v322, %v332
    %v346 = vadd.f32 %v323, %v332
    %v347 = vadd.f32 %v324, %v332
    %v348 = vadd.f32 %v325, %v332
    %v349 = vadd.f32 %v326, %v332
    %vm350 = vcmp.ge.f32.partialorder %v334, 0.0
    %vm351 = vcmp.ge.f32.partialorder %v335, 0.0
    %vm352 = vcmp.ge.f32.partialorder %v336, 0.0
    %vm353 = vcmp.ge.f32.partialorder %v337, 0.0
    %vm354 = vcmp.ge.f32.partialorder %v338, 0.0
    %vm355 = vcmp.ge.f32.partialorder %v339, 0.0
    %vm356 = vcmp.ge.f32.partialorder %v340, 0.0
    %vm357 = vcmp.ge.f32.partialorder %v341, 0.0
    %vm358 = vcmp.ge.f32.partialorder %v342, 0.0
    %vm359 = vcmp.ge.f32.partialorder %v343, 0.0
    %vm360 = vcmp.ge.f32.partialorder %v344, 0.0
    %vm361 = vcmp.ge.f32.partialorder %v345, 0.0
    %vm362 = vcmp.ge.f32.partialorder %v346, 0.0
    %vm363 = vcmp.ge.f32.partialorder %v347, 0.0
    %vm364 = vcmp.ge.f32.partialorder %v348, 0.0
    %vm365 = vcmp.ge.f32.partialorder %v349, 0.0
    %v366 = vmul.f32 %v334, 0.1
    %v367 = vmul.f32 %v335, 0.1
    %v368 = vmul.f32 %v336, 0.1
    %v369 = vmul.f32 %v337, 0.1
    %v370 = vmul.f32 %v338, 0.1
    %v371 = vmul.f32 %v339, 0.1
    %v372 = vmul.f32 %v340, 0.1
    %v373 = vmul.f32 %v341, 0.1
    %v374 = vmul.f32 %v342, 0.1
    %v375 = vmul.f32 %v343, 0.1
    %v376 = vmul.f32 %v344, 0.1
    %v377 = vmul.f32 %v345, 0.1
    %v378 = vmul.f32 %v346, 0.1
    %v379 = vmul.f32 %v347, 0.1
    %v380 = vmul.f32 %v348, 0.1
    %v381 = vmul.f32 %v349, 0.1
    %v382 = vsel %vm350, %v334, %v366
    %v383 = vsel %vm351, %v335, %v367
    %v384 = vsel %vm352, %v336, %v368
    %v385 = vsel %vm353, %v337, %v369
    %v386 = vsel %vm354, %v338, %v370
    %v387 = vsel %vm355, %v339, %v371
    %v388 = vsel %vm356, %v340, %v372
    %v389 = vsel %vm357, %v341, %v373
    %v390 = vsel %vm358, %v342, %v374
    %v391 = vsel %vm359, %v343, %v375
    %v392 = vsel %vm360, %v344, %v376
    %v393 = vsel %vm361, %v345, %v377
    %v394 = vsel %vm362, %v346, %v378
    %v395 = vsel %vm363, %v347, %v379
    %v396 = vsel %vm364, %v348, %v380
    %v397 = vsel %vm365, %v349, %v381
    %v398 = vpack.c.bf16 %v383, %v382
    %v399 = vpack.c.bf16 %v385, %v384
    %v400 = vpack.c.bf16 %v387, %v386
    %v401 = vpack.c.bf16 %v389, %v388
    %v402 = vpack.c.bf16 %v391, %v390
    %v403 = vpack.c.bf16 %v393, %v392
    %v404 = vpack.c.bf16 %v395, %v394
    %v405 = vpack.c.bf16 %v397, %v396
    %v414 = vunpack.c.l.b16 %v398
    %v415 = vunpack.c.h.b16 %v398
    %v416 = vunpack.c.l.b16 %v399
    %v417 = vunpack.c.h.b16 %v399
    %v418 = vunpack.c.l.b16 %v400
    %v419 = vunpack.c.h.b16 %v400
    %v420 = vunpack.c.l.b16 %v401
    %v421 = vunpack.c.h.b16 %v401
    %v422 = vunpack.c.l.b16 %v402
    %v423 = vunpack.c.h.b16 %v402
    %v424 = vunpack.c.l.b16 %v403
    %v425 = vunpack.c.h.b16 %v403
    %v426 = vunpack.c.l.b16 %v404
    %v427 = vunpack.c.h.b16 %v404
    %v428 = vunpack.c.l.b16 %v405
    %v429 = vunpack.c.h.b16 %v405
    %v430 = vpack.c.b16 %v414, %v414
    %v431 = vpack.c.b16 %v415, %v415
    %v432 = vpack.c.b16 %v416, %v416
    %v433 = vpack.c.b16 %v417, %v417
    %v434 = vpack.c.b16 %v418, %v418
    %v435 = vpack.c.b16 %v419, %v419
    %v436 = vpack.c.b16 %v420, %v420
    %v437 = vpack.c.b16 %v421, %v421
    %v438 = vpack.c.b16 %v422, %v422
    %v439 = vpack.c.b16 %v423, %v423
    %v440 = vpack.c.b16 %v424, %v424
    %v441 = vpack.c.b16 %v425, %v425
    %v442 = vpack.c.b16 %v426, %v426
    %v443 = vpack.c.b16 %v427, %v427
    %v444 = vpack.c.b16 %v428, %v428
    %v445 = vpack.c.b16 %v429, %v429
    %462 = vst [vmem:[%s3] sm:$0xf] %v430
    %463 = vst [vmem:[%s3 + $0x4] sm:$0xf] %v431
    %464 = vst [vmem:[%s3 + $0x8] sm:$0xf] %v432
    %465 = vst [vmem:[%s3 + $0xc] sm:$0xf] %v433
    %466 = vst [vmem:[%s3 + $0x10] sm:$0xf] %v434
    %467 = vst [vmem:[%s3 + $0x14] sm:$0xf] %v435
    %468 = vst [vmem:[%s3 + $0x18] sm:$0xf] %v436
    %469 = vst [vmem:[%s3 + $0x1c] sm:$0xf] %v437
    %470 = vst [vmem:[%s3 + $0x20] sm:$0xf] %v438
    %471 = vst [vmem:[%s3 + $0x24] sm:$0xf] %v439
    %472 = vst [vmem:[%s3 + $0x28] sm:$0xf] %v440
    %473 = vst [vmem:[%s3 + $0x2c] sm:$0xf] %v441
    %474 = vst [vmem:[%s3 + $0x30] sm:$0xf] %v442
    %475 = vst [vmem:[%s3 + $0x34] sm:$0xf] %v443
    %476 = vst [vmem:[%s3 + $0x38] sm:$0xf] %v444
    %477 = vst [vmem:[%s3 + $0x3c] sm:$0xf] %v445
  $region21: #{darknet53_forward.12} parent=0 // pred_fallthru
    _
  // Predicated region
  $region22: #{darknet53_forward.12} parent=0 // pred_check
    _
  $region23: #{darknet53_forward.12} parent=0 // pred_check_branch
    %479 = sbr.rel (0) target = $region25
  $region24: #{darknet53_forward.12} parent=0 // pred_region
    _
  $region25: #{darknet53_forward.12} parent=0 // pred_fallthru
    _
  // Predicated region
  $region26: #{darknet53_forward.12} parent=0 // pred_check
    _
  $region27: #{darknet53_forward.12} parent=0 // pred_check_branch
    %481 = sbr.rel (0) target = $region29
  $region28: #{darknet53_forward.12} parent=0 // pred_region
    _
  $region29: #{darknet53_forward.12} parent=0 // pred_fallthru
    _

// kernel: darknet53_forward.13
$region0: #{darknet53_forward.13}
  #allocation0 [shape = 'u32[]', space=smem, size = 0x4, offset = 0x4, fixed_abs, tag = 'smem constant byte address 0x4 - core index']
  #allocation1 [shape = 'u32[144,128]{1,0:T(1,128)}', space=vmem, size = 0x12000, scoped, tag = 'internal scratch']
  #allocation2 [shape = 'f32[128,128]{1,0:T(8,128)}', space=vmem, size = 0x10000, scoped, tag = 'scratch operand']
  %s0 = inlined_call_operand.vmem [shape: bf16[128,640], index: 0, kind: input, shape index: {}]
  %s1 = inlined_call_operand.vmem [shape: bf16[640,128], index: 1, kind: input, shape index: {}]
  %s2 = inlined_call_operand.vmem [shape: f32[1,128], index: 2, kind: input, shape index: {}]
  %s3 = inlined_call_operand.vmem [shape: bf16[128,128], index: 3, kind: input, shape index: {}]
  %s4 = inlined_call_operand.vmem [shape: bf16[128,128], index: 4, kind: output, shape index: {}]
  %s5 = sld [smem:[#allocation0]]
  $region98: #{darknet53_forward.13} parent=0
    _
  %s7 = ssub.s32 1, %s5
  %s8 = scalar_select 0, %s7, %s5
  $region1: #{darknet53_forward.13} parent=0
    #allocation3 [shape = 'u8[65536]{0}', space=vmem, size = 0x10000, scoped, tag = 'input window, operand 0']
    loop: start=0, step=1, limit=7
    $region2: #{darknet53_forward.13} parent=1 // loop_pre_header
      _
    $region3: #{darknet53_forward.13} parent=1 // loop_header
      %s10 = sphi 0, %s14
      %p11 = scmp.ge.s32.totalorder %s10, 7
      %s17 = sphi 0, %s36
      %s18 = sphi 0, %s32
      %s19 = sphi 0, %s28
      %s20 = sphi 0, %s17
      %s21 = sphi 0, %s18
      %s22 = sphi 0, %s19
      %s23 = sphi 0, %s20
      %s24 = sphi 0, %s21
      %s25 = sphi 0, %s22
      %s41 = sphi 0, %s43
      %s44 = sphi 0, %s41
      %s45 = sphi 0, %s44
      %s61 = sphi 0, %s45
      %s69 = sphi 0, %s71
      %s72 = sphi 0, %s69
      %s73 = sphi 0, %s72
      %s89 = sphi 0, %s73
      %s95 = sphi 0, %s97
      %s98 = sphi 0, %s95
      %s99 = sphi 0, %s98
      %s115 = sphi 0, %s99
      %s123 = sphi 0, %s125
      %s126 = sphi 0, %s123
      %s127 = sphi 0, %s126
      %s143 = sphi 0, %s127
      %s151 = sphi 0, %s153
      %s154 = sphi 0, %s151
      %s155 = sphi 0, %s154
      %s171 = sphi 0, %s155
    $region4: #{darknet53_forward.13} parent=1 // loop_header_branch
      %13 = sbr.rel (%p11) target = $region8
    $region5: #{darknet53_forward.13} parent=1 // loop_body
      %s15 = ssub.s32 %s10, 1
      %s16 = ssub.s32 %s10, 2
      %s26 = sadd.s32 1, %s19
      %p27 = scmp.ge.s32.totalorder %s26, 5
      %s28 = scalar_select %p27, 0, %s26
      %s29 = sadd.s32 1, %s18
      %s30 = scalar_select %p27, %s29, %s18
      %p31 = scmp.ge.s32.totalorder %s30, 1
      %s32 = scalar_select %p31, 0, %s30
      %s33 = sadd.s32 1, %s17
      %s34 = scalar_select %p31, %s33, %s17
      %p35 = scmp.ge.s32.totalorder %s34, 1
      %s36 = scalar_select %p35, 0, %s34
      %s37 = ssub.s32 %s17, %s36
      %s38 = ssub.s32 %s19, %s28
      %s39 = sor.u32 %s37, %s38
      %p40 = scmp.eq.s32.totalorder %s39, 0
      %s42 = sadd.s32 %s41, 1
      %s43 = scalar_select %p40, %s41, %s42
      %p46 = pneg %p40
      %p47 = scmp.eq.s32.totalorder %s10, 4
      %p48 = por %p46, %p47
      %p49 = scmp.ne.s32.totalorder %s41, %s44
      %p50 = scmp.eq.s32.totalorder %s10, 0
      %p51 = por %p49, %p50
      %p52 = scmp.ne.s32.totalorder %s41, %s44
      %p53 = scmp.eq.s32.totalorder %s15, 4
      %p54 = por %p52, %p53
      %p55 = scmp.ne.s32.totalorder %s44, %s45
      %p56 = scmp.eq.s32.totalorder %s15, 0
      %p57 = por %p55, %p56
      %p58 = scmp.ne.s32.totalorder %s44, %s45
      %p59 = scmp.eq.s32.totalorder %s16, 4
      %p60 = por %p58, %p59
      %p62 = scmp.ne.s32.totalorder %s45, %s61
      %p63 = scmp.eq.s32.totalorder %s16, 0
      %p64 = por %p62, %p63
      %s65 = ssub.s32 %s19, %s28
      %s66 = ssub.s32 %s18, %s32
      %s67 = sor.u32 %s65, %s66
      %p68 = scmp.eq.s32.totalorder %s67, 0
      %s70 = sadd.s32 %s69, 1
      %s71 = scalar_select %p68, %s69, %s70
      %p74 = pneg %p68
      %p75 = scmp.eq.s32.totalorder %s10, 4
      %p76 = por %p74, %p75
      %p77 = scmp.ne.s32.totalorder %s69, %s72
      %p78 = scmp.eq.s32.totalorder %s10, 0
      %p79 = por %p77, %p78
      %p80 = scmp.ne.s32.totalorder %s69, %s72
      %p81 = scmp.eq.s32.totalorder %s15, 4
      %p82 = por %p80, %p81
      %p83 = scmp.ne.s32.totalorder %s72, %s73
      %p84 = scmp.eq.s32.totalorder %s15, 0
      %p85 = por %p83, %p84
      %p86 = scmp.ne.s32.totalorder %s72, %s73
      %p87 = scmp.eq.s32.totalorder %s16, 4
      %p88 = por %p86, %p87
      %p90 = scmp.ne.s32.totalorder %s73, %s89
      %p91 = scmp.eq.s32.totalorder %s16, 0
      %p92 = por %p90, %p91
      %s93 = ssub.s32 %s18, %s32
      %p94 = scmp.eq.s32.totalorder %s93, 0
      %s96 = sadd.s32 %s95, 1
      %s97 = scalar_select %p94, %s95, %s96
      %p100 = pneg %p94
      %p101 = scmp.eq.s32.totalorder %s10, 4
      %p102 = por %p100, %p101
      %p103 = scmp.ne.s32.totalorder %s95, %s98
      %p104 = scmp.eq.s32.totalorder %s10, 0
      %p105 = por %p103, %p104
      %p106 = scmp.ne.s32.totalorder %s95, %s98
      %p107 = scmp.eq.s32.totalorder %s15, 4
      %p108 = por %p106, %p107
      %p109 = scmp.ne.s32.totalorder %s98, %s99
      %p110 = scmp.eq.s32.totalorder %s15, 0
      %p111 = por %p109, %p110
      %p112 = scmp.ne.s32.totalorder %s98, %s99
      %p113 = scmp.eq.s32.totalorder %s16, 4
      %p114 = por %p112, %p113
      %p116 = scmp.ne.s32.totalorder %s99, %s115
      %p117 = scmp.eq.s32.totalorder %s16, 0
      %p118 = por %p116, %p117
      %s119 = ssub.s32 %s17, %s36
      %s120 = ssub.s32 %s18, %s32
      %s121 = sor.u32 %s119, %s120
      %p122 = scmp.eq.s32.totalorder %s121, 0
      %s124 = sadd.s32 %s123, 1
      %s125 = scalar_select %p122, %s123, %s124
      %p128 = pneg %p122
      %p129 = scmp.eq.s32.totalorder %s10, 4
      %p130 = por %p128, %p129
      %p131 = scmp.ne.s32.totalorder %s123, %s126
      %p132 = scmp.eq.s32.totalorder %s10, 0
      %p133 = por %p131, %p132
      %p134 = scmp.ne.s32.totalorder %s123, %s126
      %p135 = scmp.eq.s32.totalorder %s15, 4
      %p136 = por %p134, %p135
      %p137 = scmp.ne.s32.totalorder %s126, %s127
      %p138 = scmp.eq.s32.totalorder %s15, 0
      %p139 = por %p137, %p138
      %p140 = scmp.ne.s32.totalorder %s126, %s127
      %p141 = scmp.eq.s32.totalorder %s16, 4
      %p142 = por %p140, %p141
      %p144 = scmp.ne.s32.totalorder %s127, %s143
      %p145 = scmp.eq.s32.totalorder %s16, 0
      %p146 = por %p144, %p145
      %s147 = ssub.s32 %s17, %s36
      %s148 = ssub.s32 %s18, %s32
      %s149 = sor.u32 %s147, %s148
      %p150 = scmp.eq.s32.totalorder %s149, 0
      %s152 = sadd.s32 %s151, 1
      %s153 = scalar_select %p150, %s151, %s152
      %p156 = pneg %p150
      %p157 = scmp.eq.s32.totalorder %s10, 4
      %p158 = por %p156, %p157
      %p159 = scmp.ne.s32.totalorder %s151, %s154
      %p160 = scmp.eq.s32.totalorder %s10, 0
      %p161 = por %p159, %p160
      %p162 = scmp.ne.s32.totalorder %s151, %s154
      %p163 = scmp.eq.s32.totalorder %s15, 4
      %p164 = por %p162, %p163
      %p165 = scmp.ne.s32.totalorder %s154, %s155
      %p166 = scmp.eq.s32.totalorder %s15, 0
      %p167 = por %p165, %p166
      %p168 = scmp.ne.s32.totalorder %s154, %s155
      %p169 = scmp.eq.s32.totalorder %s16, 4
      %p170 = por %p168, %p169
      %p172 = scmp.ne.s32.totalorder %s155, %s171
      %p173 = scmp.eq.s32.totalorder %s16, 0
      %p174 = por %p172, %p173
      %p175 = scmp.le.s32.totalorder 1, %s10
      %p176 = scmp.lt.s32.totalorder %s10, 6
      %p177 = pnand %p175, %p176
      %p178 = pneg %p177
      // Predicated region
      $region9: #{darknet53_forward.13} parent=5 // pred_check
        _
      $region10: #{darknet53_forward.13} parent=5 // pred_check_branch
        %180 = sbr.rel (%p177) target = $region12
      $region11: #{darknet53_forward.13} parent=5 // pred_region
        %s181 = ssub.s32 %s10, 1
        // Predicated region
        $region13: #{darknet53_forward.13} parent=11 // pred_check
          %p182 = pneg %p111
        $region14: #{darknet53_forward.13} parent=11 // pred_check_branch
          %184 = sbr.rel (%p182) target = $region16
        $region15: #{darknet53_forward.13} parent=11 // pred_region
          %p185 = scmp.lt.s32.totalorder %s21, 0
          %s186 = scalar_select %p185, %s21, 0
          %s187 = scalar_lea.vmem %s2, %s186
        $region16: #{darknet53_forward.13} parent=11 // pred_fallthru
          _
        // Predicated region
        $region17: #{darknet53_forward.13} parent=11 // pred_check
          %p188 = pneg %p139
        $region18: #{darknet53_forward.13} parent=11 // pred_check_branch
          %190 = sbr.rel (%p188) target = $region20
        $region19: #{darknet53_forward.13} parent=11 // pred_region
          %s191 = smul.u32 16, %s20
          %p192 = scmp.lt.s32.totalorder %s191, 15
          %s193 = scalar_select %p192, %s191, 15
          %p194 = scmp.lt.s32.totalorder %s21, 0
          %s195 = scalar_select %p194, %s21, 0
          %s196 = sadd.s32 %s195, %s193
          %s197 = smul.addr %s196, 4
          %s198 = scalar_lea.vmem %s3, %s197
          %s199 = smul.u32 16, %s20
        $region20: #{darknet53_forward.13} parent=11 // pred_fallthru
          _
      $region12: #{darknet53_forward.13} parent=5 // pred_fallthru
        _
      %p200 = scmp.lt.s32.totalorder %s10, 5
      // Predicated region
      $region21: #{darknet53_forward.13} parent=5 // pred_check
        %p201 = pneg %p200
      $region22: #{darknet53_forward.13} parent=5 // pred_check_branch
        %203 = sbr.rel (%p201) target = $region24
      $region23: #{darknet53_forward.13} parent=5 // pred_region
        // Predicated region
        $region25: #{darknet53_forward.13} parent=23 // pred_check
          %p204 = pneg %p51
        $region26: #{darknet53_forward.13} parent=23 // pred_check_branch
          %206 = sbr.rel (%p204) target = $region28
        $region27: #{darknet53_forward.13} parent=23 // pred_region
          %s207 = sand.u32 %s41, 1
          %s208 = sand.u32 %s41, 1
          %s209 = smul.addr %s208, 64
          %s210 = scalar_lea.vmem [#allocation3], %s209
          %s211 = smul.u32 16, %s17
          %s212 = smul.addr %s211, 5
          %s213 = sadd.s32 %s19, %s212
          %s214 = smul.addr %s213, 4
          %s215 = scalar_lea.vmem %s0, %s214
          // Predicated region
          $region29: #{darknet53_forward.13} parent=27 // pred_check
            _
          $region30: #{darknet53_forward.13} parent=27 // pred_check_branch
            %217 = sbr.rel (0) target = $region32
          $region31: #{darknet53_forward.13} parent=27 // pred_region
            // Predicated region
            $region33: #{darknet53_forward.13} parent=31 // pred_check
              _
            $region34: #{darknet53_forward.13} parent=31 // pred_check_branch
              %219 = sbr.rel target = $region36
            $region35: #{darknet53_forward.13} parent=31 // pred_region
              // Predicated region
              $region48: #{darknet53_forward.13} parent=35 // pred_check
                _
              $region49: #{darknet53_forward.13} parent=35 // pred_check_branch
                %265 = sbr.rel (0) target = $region51
              $region50: #{darknet53_forward.13} parent=35 // pred_region
                loop: start=0, step=1, limit=1
                $region52: #{darknet53_forward.13} parent=50 // loop_pre_header
                  _
                $region53: #{darknet53_forward.13} parent=50 // loop_header
                  %s267 = sphi 0, %s271
                  %p268 = scmp.ge.s32.totalorder %s267, 1
                  %s272 = sphi %s215, %s215
                  %s273 = sphi %s210, %s210
                $region54: #{darknet53_forward.13} parent=50 // loop_header_branch
                  %270 = sbr.rel (%p268) target = $region58
                $region55: #{darknet53_forward.13} parent=50 // loop_body
                  _
                $region56: #{darknet53_forward.13} parent=50 // loop_footer
                  %s271 = sadd.s32 1, %s267
                $region57: #{darknet53_forward.13} parent=50 // loop_footer_branch
                  %266 = sbr.rel target = $region53
                $region58: #{darknet53_forward.13} parent=50 // loop_exit
                  _
                %s275 = ssub.s32 16, 1
                loop: start=0, step=1, limit=1
                $region59: #{darknet53_forward.13} parent=50 // loop_pre_header
                  _
                $region60: #{darknet53_forward.13} parent=50 // loop_header
                  %s277 = sphi 0, %s281
                  %p278 = scmp.ge.s32.totalorder %s277, 1
                  %s282 = sphi %s215, %s215
                  %s283 = sphi %s210, %s210
                $region61: #{darknet53_forward.13} parent=50 // loop_header_branch
                  %280 = sbr.rel (%p278) target = $region65
                $region62: #{darknet53_forward.13} parent=50 // loop_body
                  %v284 = vld [vmem:[%s282] sm:%s275]
                  %285 = vst [vmem:[%s283] sm:%s275] %v284
                  %v286 = vld [vmem:[%s282 + $0x14] sm:%s275]
                  %287 = vst [vmem:[%s283 + $0x4] sm:%s275] %v286
                  %v288 = vld [vmem:[%s282 + $0x28] sm:%s275]
                  %289 = vst [vmem:[%s283 + $0x8] sm:%s275] %v288
                  %v290 = vld [vmem:[%s282 + $0x3c] sm:%s275]
                  %291 = vst [vmem:[%s283 + $0xc] sm:%s275] %v290
                  %v292 = vld [vmem:[%s282 + $0x50] sm:%s275]
                  %293 = vst [vmem:[%s283 + $0x10] sm:%s275] %v292
                  %v294 = vld [vmem:[%s282 + $0x64] sm:%s275]
                  %295 = vst [vmem:[%s283 + $0x14] sm:%s275] %v294
                  %v296 = vld [vmem:[%s282 + $0x78] sm:%s275]
                  %297 = vst [vmem:[%s283 + $0x18] sm:%s275] %v296
                  %v298 = vld [vmem:[%s282 + $0x8c] sm:%s275]
                  %299 = vst [vmem:[%s283 + $0x1c] sm:%s275] %v298
                  %v300 = vld [vmem:[%s282 + $0xa0] sm:%s275]
                  %301 = vst [vmem:[%s283 + $0x20] sm:%s275] %v300
                  %v302 = vld [vmem:[%s282 + $0xb4] sm:%s275]
                  %303 = vst [vmem:[%s283 + $0x24] sm:%s275] %v302
                  %v304 = vld [vmem:[%s282 + $0xc8] sm:%s275]
                  %305 = vst [vmem:[%s283 + $0x28] sm:%s275] %v304
                  %v306 = vld [vmem:[%s282 + $0xdc] sm:%s275]
                  %307 = vst [vmem:[%s283 + $0x2c] sm:%s275] %v306
                  %v308 = vld [vmem:[%s282 + $0xf0] sm:%s275]
                  %309 = vst [vmem:[%s283 + $0x30] sm:%s275] %v308
                  %v310 = vld [vmem:[%s282 + $0x104] sm:%s275]
                  %311 = vst [vmem:[%s283 + $0x34] sm:%s275] %v310
                  %v312 = vld [vmem:[%s282 + $0x118] sm:%s275]
                  %313 = vst [vmem:[%s283 + $0x38] sm:%s275] %v312
                  %v314 = vld [vmem:[%s282 + $0x12c] sm:%s275]
                  %315 = vst [vmem:[%s283 + $0x3c] sm:%s275] %v314
                $region63: #{darknet53_forward.13} parent=50 // loop_footer
                  %s281 = sadd.s32 1, %s277
                $region64: #{darknet53_forward.13} parent=50 // loop_footer_branch
                  %276 = sbr.rel target = $region60
                $region65: #{darknet53_forward.13} parent=50 // loop_exit
                  _
              $region51: #{darknet53_forward.13} parent=35 // pred_fallthru
                _
            $region36: #{darknet53_forward.13} parent=31 // pred_fallthru
              _
            // Predicated region
            $region37: #{darknet53_forward.13} parent=31 // pred_check
              _
            $region38: #{darknet53_forward.13} parent=31 // pred_check_branch
              %221 = sbr.rel (0) target = $region40
            $region39: #{darknet53_forward.13} parent=31 // pred_region
              %s223 = ssub.s32 16, 1
              loop: start=0, step=1, limit=1
              $region41: #{darknet53_forward.13} parent=39 // loop_pre_header
                _
              $region42: #{darknet53_forward.13} parent=39 // loop_header
                %s225 = sphi 0, %s229
                %p226 = scmp.ge.s32.totalorder %s225, 1
                %s230 = sphi %s215, %s215
                %s231 = sphi %s210, %s210
              $region43: #{darknet53_forward.13} parent=39 // loop_header_branch
                %228 = sbr.rel (%p226) target = $region47
              $region44: #{darknet53_forward.13} parent=39 // loop_body
                %v232 = vld [vmem:[%s230] sm:%s223]
                %233 = vst [vmem:[%s231] sm:%s223] %v232
                %v234 = vld [vmem:[%s230 + $0x14] sm:%s223]
                %235 = vst [vmem:[%s231 + $0x4] sm:%s223] %v234
                %v236 = vld [vmem:[%s230 + $0x28] sm:%s223]
                %237 = vst [vmem:[%s231 + $0x8] sm:%s223] %v236
                %v238 = vld [vmem:[%s230 + $0x3c] sm:%s223]
                %239 = vst [vmem:[%s231 + $0xc] sm:%s223] %v238
                %v240 = vld [vmem:[%s230 + $0x50] sm:%s223]
                %241 = vst [vmem:[%s231 + $0x10] sm:%s223] %v240
                %v242 = vld [vmem:[%s230 + $0x64] sm:%s223]
                %243 = vst [vmem:[%s231 + $0x14] sm:%s223] %v242
                %v244 = vld [vmem:[%s230 + $0x78] sm:%s223]
                %245 = vst [vmem:[%s231 + $0x18] sm:%s223] %v244
                %v246 = vld [vmem:[%s230 + $0x8c] sm:%s223]
                %247 = vst [vmem:[%s231 + $0x1c] sm:%s223] %v246
                %v248 = vld [vmem:[%s230 + $0xa0] sm:%s223]
                %249 = vst [vmem:[%s231 + $0x20] sm:%s223] %v248
                %v250 = vld [vmem:[%s230 + $0xb4] sm:%s223]
                %251 = vst [vmem:[%s231 + $0x24] sm:%s223] %v250
                %v252 = vld [vmem:[%s230 + $0xc8] sm:%s223]
                %253 = vst [vmem:[%s231 + $0x28] sm:%s223] %v252
                %v254 = vld [vmem:[%s230 + $0xdc] sm:%s223]
                %255 = vst [vmem:[%s231 + $0x2c] sm:%s223] %v254
                %v256 = vld [vmem:[%s230 + $0xf0] sm:%s223]
                %257 = vst [vmem:[%s231 + $0x30] sm:%s223] %v256
                %v258 = vld [vmem:[%s230 + $0x104] sm:%s223]
                %259 = vst [vmem:[%s231 + $0x34] sm:%s223] %v258
                %v260 = vld [vmem:[%s230 + $0x118] sm:%s223]
                %261 = vst [vmem:[%s231 + $0x38] sm:%s223] %v260
                %v262 = vld [vmem:[%s230 + $0x12c] sm:%s223]
                %263 = vst [vmem:[%s231 + $0x3c] sm:%s223] %v262
              $region45: #{darknet53_forward.13} parent=39 // loop_footer
                %s229 = sadd.s32 1, %s225
              $region46: #{darknet53_forward.13} parent=39 // loop_footer_branch
                %224 = sbr.rel target = $region42
              $region47: #{darknet53_forward.13} parent=39 // loop_exit
                _
            $region40: #{darknet53_forward.13} parent=31 // pred_fallthru
              _
          $region32: #{darknet53_forward.13} parent=27 // pred_fallthru
            _
          %316 = vnop
        $region28: #{darknet53_forward.13} parent=23 // pred_fallthru
          _
        // Predicated region
        $region66: #{darknet53_forward.13} parent=23 // pred_check
          %p317 = pneg %p79
        $region67: #{darknet53_forward.13} parent=23 // pred_check_branch
          %319 = sbr.rel (%p317) target = $region69
        $region68: #{darknet53_forward.13} parent=23 // pred_region
          %s320 = smul.u32 16, %s19
          %p321 = scmp.lt.s32.totalorder %s320, 79
          %s322 = scalar_select %p321, %s320, 79
          %p323 = scmp.lt.s32.totalorder %s18, 0
          %s324 = scalar_select %p323, %s18, 0
          %s325 = sadd.s32 %s324, %s322
          %s326 = smul.addr %s325, 4
          %s327 = scalar_lea.vmem %s1, %s326
          %s328 = smul.u32 16, %s19
        $region69: #{darknet53_forward.13} parent=23 // pred_fallthru
          _
      $region24: #{darknet53_forward.13} parent=5 // pred_fallthru
        _
      %p329 = scmp.le.s32.totalorder 1, %s10
      %p330 = scmp.lt.s32.totalorder %s10, 6
      %p331 = pnand %p329, %p330
      %p332 = pneg %p331
      // Predicated region
      $region70: #{darknet53_forward.13} parent=5 // pred_check
        _
      $region71: #{darknet53_forward.13} parent=5 // pred_check_branch
        %334 = sbr.rel (%p331) target = $region73
      $region72: #{darknet53_forward.13} parent=5 // pred_region
        %s335 = ssub.s32 %s10, 1
        %s336 = sand.u32 %s44, 1
        %s337 = sand.u32 %s44, 1
        %s338 = smul.addr %s337, 64
        %s339 = scalar_lea.vmem [#allocation3], %s338
        // Predicated region
        $region74: #{darknet53_forward.13} parent=72 // pred_check
          %p340 = pneg %p57
        $region75: #{darknet53_forward.13} parent=72 // pred_check_branch
          %342 = sbr.rel (%p340) target = $region77
        $region76: #{darknet53_forward.13} parent=72 // pred_region
          _
        $region77: #{darknet53_forward.13} parent=72 // pred_fallthru
          _
        %s343 = sand.u32 %s44, 1
        %s344 = sand.u32 %s44, 1
        %s345 = smul.addr %s344, 64
        %s346 = scalar_lea.vmem [#allocation3], %s345
        %p347 = pneg %p57
        %p348 = pneg %p54
        %s349 = smul.u32 16, %s22
        %p350 = scmp.lt.s32.totalorder %s349, 79
        %s351 = scalar_select %p350, %s349, 79
        %p352 = scmp.lt.s32.totalorder %s21, 0
        %s353 = scalar_select %p352, %s21, 0
        %s354 = sadd.s32 %s353, %s351
        %s355 = smul.addr %s354, 4
        %s356 = scalar_lea.vmem %s1, %s355
        %p357 = pneg %p85
        %p358 = pneg %p82
        %p359 = scmp.lt.s32.totalorder %s21, 0
        %s360 = scalar_select %p359, %s21, 0
        %s361 = scalar_lea.vmem %s2, %s360
        %p362 = pneg %p111
        %p363 = pneg %p108
        %s364 = smul.u32 16, %s20
        %p365 = scmp.lt.s32.totalorder %s364, 15
        %s366 = scalar_select %p365, %s364, 15
        %p367 = scmp.lt.s32.totalorder %s21, 0
        %s368 = scalar_select %p367, %s21, 0
        %s369 = sadd.s32 %s368, %s366
        %s370 = smul.addr %s369, 4
        %s371 = scalar_lea.vmem %s3, %s370
        %p372 = pneg %p139
        %p373 = pneg %p136
        %p374 = pneg %p167
        %p375 = pneg %p164
        %s376 = smul.u32 16, %s20
        %p377 = scmp.lt.s32.totalorder %s376, 15
        %s378 = scalar_select %p377, %s376, 15
        %p379 = scmp.lt.s32.totalorder %s21, 0
        %s380 = scalar_select %p379, %s21, 0
        %s381 = sadd.s32 %s380, %s378
        %s382 = smul.addr %s381, 4
        %s383 = scalar_lea.vmem %s4, %s382
        %s384 = smul.u32 16, %s20
        %s385 = smul.u32 16, %s22
        %p386 = scmp.lt.s32.totalorder %s385, 79
        %s387 = scalar_select %p386, %s385, 79
        %p388 = scmp.lt.s32.totalorder %s21, 0
        %s389 = scalar_select %p388, %s21, 0
        %s390 = sadd.s32 %s389, %s387
        %s391 = smul.addr %s390, 4
        %s392 = scalar_lea.vmem %s1, %s391
        %s393 = smul.u32 16, %s22
        %p394 = scmp.lt.s32.totalorder %s21, 0
        %s395 = scalar_select %p394, %s21, 0
        %s396 = scalar_lea.vmem %s2, %s395
        %s397 = smul.u32 16, %s20
        %p398 = scmp.lt.s32.totalorder %s397, 15
        %s399 = scalar_select %p398, %s397, 15
        %p400 = scmp.lt.s32.totalorder %s21, 0
        %s401 = scalar_select %p400, %s21, 0
        %s402 = sadd.s32 %s401, %s399
        %s403 = smul.addr %s402, 4
        %s404 = scalar_lea.vmem %s3, %s403
        %s405 = smul.u32 16, %s20
        %s406 = smul.u32 16, %s20
        %p407 = scmp.lt.s32.totalorder %s406, 15
        %s408 = scalar_select %p407, %s406, 15
        %p409 = scmp.lt.s32.totalorder %s21, 0
        %s410 = scalar_select %p409, %s21, 0
        %s411 = sadd.s32 %s410, %s408
        %s412 = smul.addr %s411, 4
        %s413 = scalar_lea.vmem %s4, %s412
        %s414 = smul.u32 16, %s20
        %p416 = scmp.eq.s32.totalorder %s22, 0
        // Predicated region
        $region78: #{darknet53_forward.13} parent=72 // pred_check
          %p417 = pneg %p416
        $region79: #{darknet53_forward.13} parent=72 // pred_check_branch
          %419 = sbr.rel (%p417) target = $region81
        $region80: #{darknet53_forward.13} parent=72 // pred_region
          %420 = vst [vmem:[#allocation2] sm:$0xff] 0.0
          %421 = vst [vmem:[#allocation2 + $0x8] sm:$0xff] 0.0
          %422 = vst [vmem:[#allocation2 + $0x10] sm:$0xff] 0.0
          %423 = vst [vmem:[#allocation2 + $0x18] sm:$0xff] 0.0
          %424 = vst [vmem:[#allocation2 + $0x20] sm:$0xff] 0.0
          %425 = vst [vmem:[#allocation2 + $0x28] sm:$0xff] 0.0
          %426 = vst [vmem:[#allocation2 + $0x30] sm:$0xff] 0.0
          %427 = vst [vmem:[#allocation2 + $0x38] sm:$0xff] 0.0
          %428 = vst [vmem:[#allocation2 + $0x40] sm:$0xff] 0.0
          %429 = vst [vmem:[#allocation2 + $0x48] sm:$0xff] 0.0
          %430 = vst [vmem:[#allocation2 + $0x50] sm:$0xff] 0.0
          %431 = vst [vmem:[#allocation2 + $0x58] sm:$0xff] 0.0
          %432 = vst [vmem:[#allocation2 + $0x60] sm:$0xff] 0.0
          %433 = vst [vmem:[#allocation2 + $0x68] sm:$0xff] 0.0
          %434 = vst [vmem:[#allocation2 + $0x70] sm:$0xff] 0.0
          %435 = vst [vmem:[#allocation2 + $0x78] sm:$0xff] 0.0
        $region81: #{darknet53_forward.13} parent=72 // pred_fallthru
          _
        %v436 = vld [vmem:[#allocation2] sm:$0xff]
        %v437 = vld [vmem:[#allocation2 + $0x8] sm:$0xff]
        %v438 = vld [vmem:[#allocation2 + $0x10] sm:$0xff]
        %v439 = vld [vmem:[#allocation2 + $0x18] sm:$0xff]
        %v440 = vld [vmem:[#allocation2 + $0x20] sm:$0xff]
        %v441 = vld [vmem:[#allocation2 + $0x28] sm:$0xff]
        %v442 = vld [vmem:[#allocation2 + $0x30] sm:$0xff]
        %v443 = vld [vmem:[#allocation2 + $0x38] sm:$0xff]
        %v444 = vld [vmem:[#allocation2 + $0x40] sm:$0xff]
        %v445 = vld [vmem:[#allocation2 + $0x48] sm:$0xff]
        %v446 = vld [vmem:[#allocation2 + $0x50] sm:$0xff]
        %v447 = vld [vmem:[#allocation2 + $0x58] sm:$0xff]
        %v448 = vld [vmem:[#allocation2 + $0x60] sm:$0xff]
        %v449 = vld [vmem:[#allocation2 + $0x68] sm:$0xff]
        %v450 = vld [vmem:[#allocation2 + $0x70] sm:$0xff]
        %v451 = vld [vmem:[#allocation2 + $0x78] sm:$0xff]
        %v452 = vld [vmem:[%s339] sm:$0xf]
        %v453 = vld [vmem:[%s339 + $0x4] sm:$0xf]
        %v454 = vld [vmem:[%s339 + $0x8] sm:$0xf]
        %v455 = vld [vmem:[%s339 + $0xc] sm:$0xf]
        %v456 = vld [vmem:[%s339 + $0x10] sm:$0xf]
        %v457 = vld [vmem:[%s339 + $0x14] sm:$0xf]
        %v458 = vld [vmem:[%s339 + $0x18] sm:$0xf]
        %v459 = vld [vmem:[%s339 + $0x1c] sm:$0xf]
        %v460 = vld [vmem:[%s339 + $0x20] sm:$0xf]
        %v461 = vld [vmem:[%s339 + $0x24] sm:$0xf]
        %v462 = vld [vmem:[%s339 + $0x28] sm:$0xf]
        %v463 = vld [vmem:[%s339 + $0x2c] sm:$0xf]
        %v464 = vld [vmem:[%s339 + $0x30] sm:$0xf]
        %v465 = vld [vmem:[%s339 + $0x34] sm:$0xf]
        %v466 = vld [vmem:[%s339 + $0x38] sm:$0xf]
        %v467 = vld [vmem:[%s339 + $0x3c] sm:$0xf]
        %v468 = vld [vmem:[%s392] sm:$0xf]
        %v469 = vld [vmem:[%s392 + $0x4] sm:$0xf]
        %v470 = vld [vmem:[%s392 + $0x8] sm:$0xf]
        %v471 = vld [vmem:[%s392 + $0xc] sm:$0xf]
        %v472 = vld [vmem:[%s392 + $0x10] sm:$0xf]
        %v473 = vld [vmem:[%s392 + $0x14] sm:$0xf]
        %v474 = vld [vmem:[%s392 + $0x18] sm:$0xf]
        %v475 = vld [vmem:[%s392 + $0x1c] sm:$0xf]
        %v476 = vld [vmem:[%s392 + $0x20] sm:$0xf]
        %v477 = vld [vmem:[%s392 + $0x24] sm:$0xf]
        %v478 = vld [vmem:[%s392 + $0x28] sm:$0xf]
        %v479 = vld [vmem:[%s392 + $0x2c] sm:$0xf]
        %v480 = vld [vmem:[%s392 + $0x30] sm:$0xf]
        %v481 = vld [vmem:[%s392 + $0x34] sm:$0xf]
        %v482 = vld [vmem:[%s392 + $0x38] sm:$0xf]
        %v483 = vld [vmem:[%s392 + $0x3c] sm:$0xf]
        %v500 = vunpack.c.l.b16 %v452
        %v501 = vunpack.c.l.b16 %v453
        %v502 = vunpack.c.l.b16 %v454
        %v503 = vunpack.c.l.b16 %v455
        %v504 = vunpack.c.l.b16 %v456
        %v505 = vunpack.c.l.b16 %v457
        %v506 = vunpack.c.l.b16 %v458
        %v507 = vunpack.c.l.b16 %v459
        %v508 = vunpack.c.l.b16 %v460
        %v509 = vunpack.c.l.b16 %v461
        %v510 = vunpack.c.l.b16 %v462
        %v511 = vunpack.c.l.b16 %v463
        %v512 = vunpack.c.l.b16 %v464
        %v513 = vunpack.c.l.b16 %v465
        %v514 = vunpack.c.l.b16 %v466
        %v515 = vunpack.c.l.b16 %v467
        %v516 = vpack.c.b16 %v501, %v500
        %v517 = vpack.c.b16 %v503, %v502
        %v518 = vpack.c.b16 %v505, %v504
        %v519 = vpack.c.b16 %v507, %v506
        %v520 = vpack.c.b16 %v509, %v508
        %v521 = vpack.c.b16 %v511, %v510
        %v522 = vpack.c.b16 %v513, %v512
        %v523 = vpack.c.b16 %v515, %v514
        %v548 = vunpack.c.l.b16 %v468
        %v549 = vunpack.c.l.b16 %v469
        %v550 = vunpack.c.l.b16 %v470
        %v551 = vunpack.c.l.b16 %v471
        %v552 = vunpack.c.l.b16 %v472
        %v553 = vunpack.c.l.b16 %v473
        %v554 = vunpack.c.l.b16 %v474
        %v555 = vunpack.c.l.b16 %v475
        %v556 = vunpack.c.l.b16 %v476
        %v557 = vunpack.c.l.b16 %v477
        %v558 = vunpack.c.l.b16 %v478
        %v559 = vunpack.c.l.b16 %v479
        %v560 = vunpack.c.l.b16 %v480
        %v561 = vunpack.c.l.b16 %v481
        %v562 = vunpack.c.l.b16 %v482
        %v563 = vunpack.c.l.b16 %v483
        %v564 = vpack.c.b16 %v549, %v548
        %v565 = vpack.c.b16 %v551, %v550
        %v566 = vpack.c.b16 %v553, %v552
        %v567 = vpack.c.b16 %v555, %v554
        %v568 = vpack.c.b16 %v557, %v556
        %v569 = vpack.c.b16 %v559, %v558
        %v570 = vpack.c.b16 %v561, %v560
        %v571 = vpack.c.b16 %v563, %v562
        %580 = vmatprep.subr.bf16.mxu0 0
        %581 = vmatpush1.bf16.msra.mxu0 %v571
        %582 = vmatprep.subr.bf16.mxu0 0
        %583 = vmatpush1.bf16.msra.mxu0 %v570
        %584 = vmatprep.subr.bf16.mxu0 0
        %585 = vmatpush1.bf16.msra.mxu0 %v569
        %586 = vmatprep.subr.bf16.mxu0 0
        %587 = vmatpush1.bf16.msra.mxu0 %v568
        %588 = vmatprep.subr.bf16.mxu0 0
        %589 = vmatpush1.bf16.msra.mxu0 %v567
        %590 = vmatprep.subr.bf16.mxu0 0
        %591 = vmatpush1.bf16.msra.mxu0 %v566
        %592 = vmatprep.subr.bf16.mxu0 0
        %593 = vmatpush1.bf16.msra.mxu0 %v565
        %594 = vmatprep.subr.bf16.mxu0 0
        %595 = vmatpush1.bf16.msra.mxu0 %v564
        %596 = vmatprep.subr.bf16.mxu0 0
        %597 = vmatpush2.bf16.msra.mxu0 0
        %598 = vmatprep.subr.bf16.mxu0 0
        %599 = vmatpush2.bf16.msra.mxu0 0
        %600 = vmatprep.subr.bf16.mxu0 0
        %601 = vmatpush2.bf16.msra.mxu0 0
        %602 = vmatprep.subr.bf16.mxu0 0
        %603 = vmatpush2.bf16.msra.mxu0 0
        %604 = vmatprep.subr.bf16.mxu0 0
        %605 = vmatpush2.bf16.msra.mxu0 0
        %606 = vmatprep.subr.bf16.mxu0 0
        %607 = vmatpush2.bf16.msra.mxu0 0
        %608 = vmatprep.subr.bf16.mxu0 0
        %609 = vmatpush2.bf16.msra.mxu0 0
        %610 = vmatprep.subr.bf16.mxu0 0
        %611 = vmatpush2.bf16.msra.mxu0 0
        %612 = vmatprep.mubr.bf16.mxu0 0
        %613 = vmatmul.mubr.bf16.gmra.mxu0 %v516
        %v614 = vpop.f32.mrf.mxu0
        %v615 = vadd.f32 0.0, %v614
        %v616 = vpop.f32.mrf.mxu0
        %v617 = vpop.f32.mrf.mxu0
        %v618 = vadd.f32 0.0, %v617
        %v619 = vpop.f32.mrf.mxu0
        %620 = vmatprep.mubr.bf16.mxu0 0
        %621 = vmatmul.mubr.bf16.gmra.mxu0 %v517
        %v622 = vpop.f32.mrf.mxu0
        %v623 = vadd.f32 0.0, %v622
        %v624 = vpop.f32.mrf.mxu0
        %v625 = vpop.f32.mrf.mxu0
        %v626 = vadd.f32 0.0, %v625
        %v627 = vpop.f32.mrf.mxu0
        %628 = vmatprep.mubr.bf16.mxu0 0
        %629 = vmatmul.mubr.bf16.gmra.mxu0 %v518
        %v630 = vpop.f32.mrf.mxu0
        %v631 = vadd.f32 0.0, %v630
        %v632 = vpop.f32.mrf.mxu0
        %v633 = vpop.f32.mrf.mxu0
        %v634 = vadd.f32 0.0, %v633
        %v635 = vpop.f32.mrf.mxu0
        %636 = vmatprep.mubr.bf16.mxu0 0
        %637 = vmatmul.mubr.bf16.gmra.mxu0 %v519
        %v638 = vpop.f32.mrf.mxu0
        %v639 = vadd.f32 0.0, %v638
        %v640 = vpop.f32.mrf.mxu0
        %v641 = vpop.f32.mrf.mxu0
        %v642 = vadd.f32 0.0, %v641
        %v643 = vpop.f32.mrf.mxu0
        %644 = vmatprep.mubr.bf16.mxu0 0
        %645 = vmatmul.mubr.bf16.gmra.mxu0 %v520
        %v646 = vpop.f32.mrf.mxu0
        %v647 = vadd.f32 0.0, %v646
        %v648 = vpop.f32.mrf.mxu0
        %v649 = vpop.f32.mrf.mxu0
        %v650 = vadd.f32 0.0, %v649
        %v651 = vpop.f32.mrf.mxu0
        %652 = vmatprep.mubr.bf16.mxu0 0
        %653 = vmatmul.mubr.bf16.gmra.mxu0 %v521
        %v654 = vpop.f32.mrf.mxu0
        %v655 = vadd.f32 0.0, %v654
        %v656 = vpop.f32.mrf.mxu0
        %v657 = vpop.f32.mrf.mxu0
        %v658 = vadd.f32 0.0, %v657
        %v659 = vpop.f32.mrf.mxu0
        %660 = vmatprep.mubr.bf16.mxu0 0
        %661 = vmatmul.mubr.bf16.gmra.mxu0 %v522
        %v662 = vpop.f32.mrf.mxu0
        %v663 = vadd.f32 0.0, %v662
        %v664 = vpop.f32.mrf.mxu0
        %v665 = vpop.f32.mrf.mxu0
        %v666 = vadd.f32 0.0, %v665
        %v667 = vpop.f32.mrf.mxu0
        %668 = vmatprep.mubr.bf16.mxu0 0
        %669 = vmatmul.mubr.bf16.gmra.mxu0 %v523
        %v670 = vpop.f32.mrf.mxu0
        %v671 = vadd.f32 0.0, %v670
        %v672 = vpop.f32.mrf.mxu0
        %v673 = vpop.f32.mrf.mxu0
        %v674 = vadd.f32 0.0, %v673
        %v675 = vpop.f32.mrf.mxu0
        %676 = vdwg.mxu0
        %v677 = vadd.f32 %v436, %v615
        %v678 = vadd.f32 %v437, %v618
        %v679 = vadd.f32 %v438, %v623
        %v680 = vadd.f32 %v439, %v626
        %v681 = vadd.f32 %v440, %v631
        %v682 = vadd.f32 %v441, %v634
        %v683 = vadd.f32 %v442, %v639
        %v684 = vadd.f32 %v443, %v642
        %v685 = vadd.f32 %v444, %v647
        %v686 = vadd.f32 %v445, %v650
        %v687 = vadd.f32 %v446, %v655
        %v688 = vadd.f32 %v447, %v658
        %v689 = vadd.f32 %v448, %v663
        %v690 = vadd.f32 %v449, %v666
        %v691 = vadd.f32 %v450, %v671
        %v692 = vadd.f32 %v451, %v674
        %693 = vst [vmem:[#allocation2] sm:$0xff] %v677
        %694 = vst [vmem:[#allocation2 + $0x8] sm:$0xff] %v678
        %695 = vst [vmem:[#allocation2 + $0x10] sm:$0xff] %v679
        %696 = vst [vmem:[#allocation2 + $0x18] sm:$0xff] %v680
        %697 = vst [vmem:[#allocation2 + $0x20] sm:$0xff] %v681
        %698 = vst [vmem:[#allocation2 + $0x28] sm:$0xff] %v682
        %699 = vst [vmem:[#allocation2 + $0x30] sm:$0xff] %v683
        %700 = vst [vmem:[#allocation2 + $0x38] sm:$0xff] %v684
        %701 = vst [vmem:[#allocation2 + $0x40] sm:$0xff] %v685
        %702 = vst [vmem:[#allocation2 + $0x48] sm:$0xff] %v686
        %703 = vst [vmem:[#allocation2 + $0x50] sm:$0xff] %v687
        %704 = vst [vmem:[#allocation2 + $0x58] sm:$0xff] %v688
        %705 = vst [vmem:[#allocation2 + $0x60] sm:$0xff] %v689
        %706 = vst [vmem:[#allocation2 + $0x68] sm:$0xff] %v690
        %707 = vst [vmem:[#allocation2 + $0x70] sm:$0xff] %v691
        %708 = vst [vmem:[#allocation2 + $0x78] sm:$0xff] %v692
        %p709 = scmp.eq.s32.totalorder %s22, 4
        // Predicated region
        $region82: #{darknet53_forward.13} parent=72 // pred_check
          %p710 = pneg %p709
        $region83: #{darknet53_forward.13} parent=72 // pred_check_branch
          %712 = sbr.rel (%p710) target = $region85
        $region84: #{darknet53_forward.13} parent=72 // pred_region
          %v713 = vld [vmem:[#allocation2] sm:$0xff]
          %v714 = vld [vmem:[#allocation2 + $0x8] sm:$0xff]
          %v715 = vld [vmem:[#allocation2 + $0x10] sm:$0xff]
          %v716 = vld [vmem:[#allocation2 + $0x18] sm:$0xff]
          %v717 = vld [vmem:[#allocation2 + $0x20] sm:$0xff]
          %v718 = vld [vmem:[#allocation2 + $0x28] sm:$0xff]
          %v719 = vld [vmem:[#allocation2 + $0x30] sm:$0xff]
          %v720 = vld [vmem:[#allocation2 + $0x38] sm:$0xff]
          %v721 = vld [vmem:[#allocation2 + $0x40] sm:$0xff]
          %v722 = vld [vmem:[#allocation2 + $0x48] sm:$0xff]
          %v723 = vld [vmem:[#allocation2 + $0x50] sm:$0xff]
          %v724 = vld [vmem:[#allocation2 + $0x58] sm:$0xff]
          %v725 = vld [vmem:[#allocation2 + $0x60] sm:$0xff]
          %v726 = vld [vmem:[#allocation2 + $0x68] sm:$0xff]
          %v727 = vld [vmem:[#allocation2 + $0x70] sm:$0xff]
          %v728 = vld [vmem:[#allocation2 + $0x78] sm:$0xff]
          %v729 = vld [vmem:[%s396] sm:$0x1]
          %v731 = vlaneseq
          %v732 = vshrl.u32 %v731, 7
          %v733 = vsub.s32 0, %v732
          %v734 = vrot.slane %v729, %v733
          %v736 = vadd.f32 %v713, %v734
          %v737 = vadd.f32 %v714, %v734
          %v738 = vadd.f32 %v715, %v734
          %v739 = vadd.f32 %v716, %v734
          %v740 = vadd.f32 %v717, %v734
          %v741 = vadd.f32 %v718, %v734
          %v742 = vadd.f32 %v719, %v734
          %v743 = vadd.f32 %v720, %v734
          %v744 = vadd.f32 %v721, %v734
          %v745 = vadd.f32 %v722, %v734
          %v746 = vadd.f32 %v723, %v734
          %v747 = vadd.f32 %v724, %v734
          %v748 = vadd.f32 %v725, %v734
          %v749 = vadd.f32 %v726, %v734
          %v750 = vadd.f32 %v727, %v734
          %v751 = vadd.f32 %v728, %v734
          %vm752 = vcmp.ge.f32.partialorder %v736, 0.0
          %vm753 = vcmp.ge.f32.partialorder %v737, 0.0
          %vm754 = vcmp.ge.f32.partialorder %v738, 0.0
          %vm755 = vcmp.ge.f32.partialorder %v739, 0.0
          %vm756 = vcmp.ge.f32.partialorder %v740, 0.0
          %vm757 = vcmp.ge.f32.partialorder %v741, 0.0
          %vm758 = vcmp.ge.f32.partialorder %v742, 0.0
          %vm759 = vcmp.ge.f32.partialorder %v743, 0.0
          %vm760 = vcmp.ge.f32.partialorder %v744, 0.0
          %vm761 = vcmp.ge.f32.partialorder %v745, 0.0
          %vm762 = vcmp.ge.f32.partialorder %v746, 0.0
          %vm763 = vcmp.ge.f32.partialorder %v747, 0.0
          %vm764 = vcmp.ge.f32.partialorder %v748, 0.0
          %vm765 = vcmp.ge.f32.partialorder %v749, 0.0
          %vm766 = vcmp.ge.f32.partialorder %v750, 0.0
          %vm767 = vcmp.ge.f32.partialorder %v751, 0.0
          %v768 = vmul.f32 %v736, 0.1
          %v769 = vmul.f32 %v737, 0.1
          %v770 = vmul.f32 %v738, 0.1
          %v771 = vmul.f32 %v739, 0.1
          %v772 = vmul.f32 %v740, 0.1
          %v773 = vmul.f32 %v741, 0.1
          %v774 = vmul.f32 %v742, 0.1
          %v775 = vmul.f32 %v743, 0.1
          %v776 = vmul.f32 %v744, 0.1
          %v777 = vmul.f32 %v745, 0.1
          %v778 = vmul.f32 %v746, 0.1
          %v779 = vmul.f32 %v747, 0.1
          %v780 = vmul.f32 %v748, 0.1
          %v781 = vmul.f32 %v749, 0.1
          %v782 = vmul.f32 %v750, 0.1
          %v783 = vmul.f32 %v751, 0.1
          %v784 = vsel %vm752, %v736, %v768
          %v785 = vsel %vm753, %v737, %v769
          %v786 = vsel %vm754, %v738, %v770
          %v787 = vsel %vm755, %v739, %v771
          %v788 = vsel %vm756, %v740, %v772
          %v789 = vsel %vm757, %v741, %v773
          %v790 = vsel %vm758, %v742, %v774
          %v791 = vsel %vm759, %v743, %v775
          %v792 = vsel %vm760, %v744, %v776
          %v793 = vsel %vm761, %v745, %v777
          %v794 = vsel %vm762, %v746, %v778
          %v795 = vsel %vm763, %v747, %v779
          %v796 = vsel %vm764, %v748, %v780
          %v797 = vsel %vm765, %v749, %v781
          %v798 = vsel %vm766, %v750, %v782
          %v799 = vsel %vm767, %v751, %v783
          %v800 = vld [vmem:[%s404] sm:$0xf]
          %v801 = vld [vmem:[%s404 + $0x4] sm:$0xf]
          %v802 = vld [vmem:[%s404 + $0x8] sm:$0xf]
          %v803 = vld [vmem:[%s404 + $0xc] sm:$0xf]
          %v804 = vld [vmem:[%s404 + $0x10] sm:$0xf]
          %v805 = vld [vmem:[%s404 + $0x14] sm:$0xf]
          %v806 = vld [vmem:[%s404 + $0x18] sm:$0xf]
          %v807 = vld [vmem:[%s404 + $0x1c] sm:$0xf]
          %v808 = vld [vmem:[%s404 + $0x20] sm:$0xf]
          %v809 = vld [vmem:[%s404 + $0x24] sm:$0xf]
          %v810 = vld [vmem:[%s404 + $0x28] sm:$0xf]
          %v811 = vld [vmem:[%s404 + $0x2c] sm:$0xf]
          %v812 = vld [vmem:[%s404 + $0x30] sm:$0xf]
          %v813 = vld [vmem:[%s404 + $0x34] sm:$0xf]
          %v814 = vld [vmem:[%s404 + $0x38] sm:$0xf]
          %v815 = vld [vmem:[%s404 + $0x3c] sm:$0xf]
          %v816 = vunpack.c.l.bf16 %v800
          %v817 = vunpack.c.l.bf16 %v801
          %v818 = vunpack.c.l.bf16 %v802
          %v819 = vunpack.c.l.bf16 %v803
          %v820 = vunpack.c.l.bf16 %v804
          %v821 = vunpack.c.l.bf16 %v805
          %v822 = vunpack.c.l.bf16 %v806
          %v823 = vunpack.c.l.bf16 %v807
          %v824 = vunpack.c.l.bf16 %v808
          %v825 = vunpack.c.l.bf16 %v809
          %v826 = vunpack.c.l.bf16 %v810
          %v827 = vunpack.c.l.bf16 %v811
          %v828 = vunpack.c.l.bf16 %v812
          %v829 = vunpack.c.l.bf16 %v813
          %v830 = vunpack.c.l.bf16 %v814
          %v831 = vunpack.c.l.bf16 %v815
          %v832 = vadd.f32 %v784, %v816
          %v833 = vadd.f32 %v785, %v817
          %v834 = vadd.f32 %v786, %v818
          %v835 = vadd.f32 %v787, %v819
          %v836 = vadd.f32 %v788, %v820
          %v837 = vadd.f32 %v789, %v821
          %v838 = vadd.f32 %v790, %v822
          %v839 = vadd.f32 %v791, %v823
          %v840 = vadd.f32 %v792, %v824
          %v841 = vadd.f32 %v793, %v825
          %v842 = vadd.f32 %v794, %v826
          %v843 = vadd.f32 %v795, %v827
          %v844 = vadd.f32 %v796, %v828
          %v845 = vadd.f32 %v797, %v829
          %v846 = vadd.f32 %v798, %v830
          %v847 = vadd.f32 %v799, %v831
          %v848 = vpack.c.bf16 %v833, %v832
          %v849 = vpack.c.bf16 %v835, %v834
          %v850 = vpack.c.bf16 %v837, %v836
          %v851 = vpack.c.bf16 %v839, %v838
          %v852 = vpack.c.bf16 %v841, %v840
          %v853 = vpack.c.bf16 %v843, %v842
          %v854 = vpack.c.bf16 %v845, %v844
          %v855 = vpack.c.bf16 %v847, %v846
          %v864 = vunpack.c.l.b16 %v848
          %v865 = vunpack.c.h.b16 %v848
          %v866 = vunpack.c.l.b16 %v849
          %v867 = vunpack.c.h.b16 %v849
          %v868 = vunpack.c.l.b16 %v850
          %v869 = vunpack.c.h.b16 %v850
          %v870 = vunpack.c.l.b16 %v851
          %v871 = vunpack.c.h.b16 %v851
          %v872 = vunpack.c.l.b16 %v852
          %v873 = vunpack.c.h.b16 %v852
          %v874 = vunpack.c.l.b16 %v853
          %v875 = vunpack.c.h.b16 %v853
          %v876 = vunpack.c.l.b16 %v854
          %v877 = vunpack.c.h.b16 %v854
          %v878 = vunpack.c.l.b16 %v855
          %v879 = vunpack.c.h.b16 %v855
          %v880 = vpack.c.b16 %v864, %v864
          %v881 = vpack.c.b16 %v865, %v865
          %v882 = vpack.c.b16 %v866, %v866
          %v883 = vpack.c.b16 %v867, %v867
          %v884 = vpack.c.b16 %v868, %v868
          %v885 = vpack.c.b16 %v869, %v869
          %v886 = vpack.c.b16 %v870, %v870
          %v887 = vpack.c.b16 %v871, %v871
          %v888 = vpack.c.b16 %v872, %v872
          %v889 = vpack.c.b16 %v873, %v873
          %v890 = vpack.c.b16 %v874, %v874
          %v891 = vpack.c.b16 %v875, %v875
          %v892 = vpack.c.b16 %v876, %v876
          %v893 = vpack.c.b16 %v877, %v877
          %v894 = vpack.c.b16 %v878, %v878
          %v895 = vpack.c.b16 %v879, %v879
          %912 = vst [vmem:[%s413] sm:$0xf] %v880
          %913 = vst [vmem:[%s413 + $0x4] sm:$0xf] %v881
          %914 = vst [vmem:[%s413 + $0x8] sm:$0xf] %v882
          %915 = vst [vmem:[%s413 + $0xc] sm:$0xf] %v883
          %916 = vst [vmem:[%s413 + $0x10] sm:$0xf] %v884
          %917 = vst [vmem:[%s413 + $0x14] sm:$0xf] %v885
          %918 = vst [vmem:[%s413 + $0x18] sm:$0xf] %v886
          %919 = vst [vmem:[%s413 + $0x1c] sm:$0xf] %v887
          %920 = vst [vmem:[%s413 + $0x20] sm:$0xf] %v888
          %921 = vst [vmem:[%s413 + $0x24] sm:$0xf] %v889
          %922 = vst [vmem:[%s413 + $0x28] sm:$0xf] %v890
          %923 = vst [vmem:[%s413 + $0x2c] sm:$0xf] %v891
          %924 = vst [vmem:[%s413 + $0x30] sm:$0xf] %v892
          %925 = vst [vmem:[%s413 + $0x34] sm:$0xf] %v893
          %926 = vst [vmem:[%s413 + $0x38] sm:$0xf] %v894
          %927 = vst [vmem:[%s413 + $0x3c] sm:$0xf] %v895
        $region85: #{darknet53_forward.13} parent=72 // pred_fallthru
          _
        %s928 = smul.u32 16, %s20
        %p929 = scmp.lt.s32.totalorder %s928, 15
        %s930 = scalar_select %p929, %s928, 15
        %p931 = scmp.lt.s32.totalorder %s21, 0
        %s932 = scalar_select %p931, %s21, 0
        %s933 = sadd.s32 %s932, %s930
        %s934 = smul.addr %s933, 4
        %s935 = scalar_lea.vmem %s4, %s934
        // Predicated region
        $region86: #{darknet53_forward.13} parent=72 // pred_check
          %p936 = pneg %p164
        $region87: #{darknet53_forward.13} parent=72 // pred_check_branch
          %938 = sbr.rel (%p936) target = $region89
        $region88: #{darknet53_forward.13} parent=72 // pred_region
          %s939 = smul.u32 16, %s20
        $region89: #{darknet53_forward.13} parent=72 // pred_fallthru
          _
        // Predicated region
        $region90: #{darknet53_forward.13} parent=72 // pred_check
          %p940 = pneg %p164
        $region91: #{darknet53_forward.13} parent=72 // pred_check_branch
          %942 = sbr.rel (%p940) target = $region93
        $region92: #{darknet53_forward.13} parent=72 // pred_region
          %s943 = smul.u32 16, %s20
          %p944 = scmp.lt.s32.totalorder %s943, 15
          %s945 = scalar_select %p944, %s943, 15
          %p946 = scmp.lt.s32.totalorder %s21, 0
          %s947 = scalar_select %p946, %s21, 0
          %s948 = sadd.s32 %s947, %s945
          %s949 = smul.addr %s948, 4
          %s950 = scalar_lea.vmem %s4, %s949
        $region93: #{darknet53_forward.13} parent=72 // pred_fallthru
          _
      $region73: #{darknet53_forward.13} parent=5 // pred_fallthru
        _
      %p951 = scmp.le.s32.totalorder 2, %s10
      // Predicated region
      $region94: #{darknet53_forward.13} parent=5 // pred_check
        %p952 = pneg %p951
      $region95: #{darknet53_forward.13} parent=5 // pred_check_branch
        %954 = sbr.rel (%p952) target = $region97
      $region96: #{darknet53_forward.13} parent=5 // pred_region
        %s955 = ssub.s32 %s10, 2
      $region97: #{darknet53_forward.13} parent=5 // pred_fallthru
        _
    $region6: #{darknet53_forward.13} parent=1 // loop_footer
      %s14 = sadd.s32 1, %s10
    $region7: #{darknet53_forward.13} parent=1 // loop_footer_branch
      %9 = sbr.rel target = $region3
    $region8: #{darknet53_forward.13} parent=1 // loop_exit
      _

</llo_original>
